<compile_context>
chip_gen: v7x
topology: tpu7x:2x2x1
jax: 0.10.0
libtpu: 0.0.40
codegen_flags: <defaults>
</compile_context>

<pallas_src>
import jax
import jax.numpy as jnp
from jax.experimental import pallas as pl
from jax.experimental.pallas import tpu as pltpu


def _make_fused_kernel(H, W, L, nb_img):
    HW = H * W
    NHW = nb_img * HW

    # Static (lane shift, needs-boundary-mask) per 3x3 tap, ky-major order.
    taps = []
    for ky in range(3):
        for kx in range(3):
            sy, sx = ky - 1, kx - 1
            taps.append(((-(sy * W + sx)) % NHW, not (sy == 0 and sx == 0)))

    def kernel(idx_ref, x_ref, mask_ref, pool_ref, fw_ref, fb_ref,
               cwt_ref, cb_ref, o_ref, a_ref):
        # idx_ref  : SMEM (1,) int32         sampled depth (scalar prefetch)
        # x_ref    : VMEM (C, NHW)           nb_img images folded on lanes
        # mask_ref : VMEM (9, NHW) f32       precomputed per-tap boundary masks
        # pool_ref : VMEM (nb_img, NHW) f32  per-image GAP matrix (entries 1/HW)
        # fw_ref   : VMEM (L, 9, C, C)       per-tap conv weights
        # fb_ref   : VMEM (L, C, 1)          conv biases
        # cwt_ref  : VMEM (K, C)             classifiers[depth] weight (transposed)
        # cb_ref   : VMEM (K, 1)             classifiers[depth] bias
        # o_ref    : VMEM (K, nb_img)        logits (transposed; fixed in wrapper)
        # a_ref    : VMEM (C, NHW) f32       resident activation (scratch)
        depth = idx_ref[0]
        a_ref[...] = x_ref[...].astype(jnp.float32)

        # Hoist the boundary-mask rows once; reused by every layer (no per-layer
        # iota/div/mod/compare work in the kernel at all).
        mask_rows = [mask_ref[t:t + 1, :] if m else None
                     for t, (_, m) in enumerate(taps)]

        # Statically unrolled depth chain under pl.when: skipped layers cost a
        # predicate only, and the scheduler can interleave rolls, mask
        # multiplies and MXU pushes across taps.
        for i in range(L):
            @pl.when(depth >= i)
            def _run_layer(i=i):
                a = a_ref[...]                                   # (C, NHW)
                acc = None
                # 3x3 "same" conv as 9 per-tap (C,C)@(C,NHW) MXU dots on the
                # lane-rolled activation; no im2col staging buffer in VMEM.
                for t, (shift, needs_mask) in enumerate(taps):
                    sh = a if shift == 0 else pltpu.roll(a, shift=shift, axis=1)
                    if needs_mask:
                        sh = sh * mask_rows[t]     # zero padding + image seams
                    d = jnp.dot(fw_ref[i, t], sh,
                                preferred_element_type=jnp.float32)
                    acc = d if acc is None else acc + d
                a_ref[...] = jnp.maximum(acc + fb_ref[i], 0.0)   # bias + ReLU

        # classifiers[depth]: global-average-pool + Linear, both on the MXU.
        a = a_ref[...]
        pooled = jax.lax.dot_general(                            # (C, nb_img)
            a, pool_ref[...], dimension_numbers=(((1,), (1,)), ((), ())),
            preferred_element_type=jnp.float32)
        logits_t = jnp.dot(cwt_ref[...], pooled,                 # (K, nb_img)
                           preferred_element_type=jnp.float32) + cb_ref[...]
        o_ref[...] = logits_t.astype(o_ref.dtype)

    return kernel


def _fused_forward(x_nchw, key, alpha, fw, fb, cwt, cb, idx_start,
                   batch_blocks=1):
    N, C, H, W = x_nchw.shape
    HW = H * W
    L = fw.shape[0]
    K = cwt.shape[1]
    assert N % batch_blocks == 0
    nb_img = N // batch_blocks
    NHW = nb_img * HW

    # EXP3 depth sampling (torch.multinomial(alpha, 1).item() + idx_start),
    # kept on-device as a traced scalar; clamped to the valid depth range.
    depth = jax.random.categorical(key, jnp.log(alpha)) + idx_start
    depth = jnp.clip(depth, 0, L - 1).astype(jnp.int32).reshape(1)

    # Fold the batch into the lane axis: (BB, C, nb_img*HW); image j of a block
    # occupies lanes [j*HW, (j+1)*HW) for every channel.
    x_folded = (x_nchw.reshape(batch_blocks, nb_img, C, HW)
                .transpose(0, 2, 1, 3).reshape(batch_blocks, C, NHW))

    # Precomputed per-tap boundary masks (implement the conv's zero "same"
    # padding AND zero the folded-image seams) and the per-image GAP matrix.
    # Pure functions of static shapes -> constants under jit.
    pos = jnp.arange(NHW, dtype=jnp.int32)
    q = pos % HW
    yy = q // W
    xx = q % W
    rows = []
    for ky in range(3):
        for kx in range(3):
            sy, sx = ky - 1, kx - 1
            valid = ((yy + sy >= 0) & (yy + sy < H) &
                     (xx + sx >= 0) & (xx + sx < W))
            rows.append(valid.astype(jnp.float32))
    masks = jnp.stack(rows, axis=0)                                  # (9, NHW)
    img_id = pos // HW
    pool_t = ((img_id[None, :] == jnp.arange(nb_img, dtype=jnp.int32)[:, None])
              .astype(jnp.float32) / float(HW))                     # (nb, NHW)

    out = pl.pallas_call(
        _make_fused_kernel(H, W, L, nb_img),
        out_shape=jax.ShapeDtypeStruct((batch_blocks, K, nb_img), x_nchw.dtype),
        grid_spec=pltpu.PrefetchScalarGridSpec(
            num_scalar_prefetch=1,
            grid=(batch_blocks,),
            in_specs=[
                pl.BlockSpec((None, C, NHW), lambda n, d: (n, 0, 0)),
                pl.BlockSpec((9, NHW), lambda n, d: (0, 0)),
                pl.BlockSpec((nb_img, NHW), lambda n, d: (0, 0)),
                pl.BlockSpec((L, 9, C, C), lambda n, d: (0, 0, 0, 0)),
                pl.BlockSpec((L, C, 1), lambda n, d: (0, 0, 0)),
                # Only classifiers[depth] is ever read: index with the
                # scalar-prefetched depth instead of DMAing the full tables.
                pl.BlockSpec((None, K, C), lambda n, d: (d[0], 0, 0)),
                pl.BlockSpec((None, K, 1), lambda n, d: (d[0], 0, 0)),
            ],
            out_specs=pl.BlockSpec((None, K, nb_img), lambda n, d: (n, 0, 0)),
            scratch_shapes=[pltpu.VMEM((C, NHW), jnp.float32)],
        ),
        compiler_params=pltpu.CompilerParams(
            dimension_semantics=("parallel",)),   # v7x: batch_blocks>=2 feeds both TCs
    )(depth, x_folded, masks, pool_t, fw, fb, cwt, cb)

    # (BB, K, nb) -> (N, K): tiny layout plumbing outside the kernel.
    return out.transpose(0, 2, 1).reshape(N, K)


class NNOnlinePallas:
    """Forward pass of NN_Online with a concrete 'jump_avg' composition."""

    def __init__(self, channels=4, num_classes=10, explore_range=4, seed=0):
        self.explore_range = explore_range
        self.idx_start = 0
        # alpha initialized uniform, like nn.Parameter(ones / explore_range)
        self.alpha = jnp.ones((explore_range,), jnp.float32) / explore_range

        L, C, K = explore_range, channels, num_classes
        kf, kc = jax.random.split(jax.random.PRNGKey(seed))
        # PyTorch-style (O, I, kH, kW) conv weights (kept for the reference).
        self.w_oihw = 0.25 * jax.random.normal(kf, (L, C, C, 3, 3), jnp.float32)
        self.feat_b = (0.01 * jnp.arange(1, L + 1, dtype=jnp.float32)[:, None]
                       * jnp.ones((1, C), jnp.float32))                 # (L, C)
        self.cls_w = 0.25 * jax.random.normal(kc, (L, C, K), jnp.float32)
        self.cls_b = (0.01 * jnp.arange(1, L + 1, dtype=jnp.float32)[:, None]
                      * jnp.ones((1, K), jnp.float32))                  # (L, K)

        # One-time repack into the kernel's per-tap / transposed layouts:
        #   fw[l, ky*3+kx, o, i] = w_oihw[l, o, i, ky, kx]
        self.fw = jnp.transpose(self.w_oihw, (0, 3, 4, 1, 2)).reshape(L, 9, C, C)
        self.fb = self.feat_b.reshape(L, C, 1)
        self.cwt = jnp.transpose(self.cls_w, (0, 2, 1))                 # (L, K, C)
        self.cb = self.cls_b.reshape(L, K, 1)

        self._fwd = jax.jit(_fused_forward, static_argnames=("batch_blocks",))

    def forward(self, x_nchw, key):
        assert x_nchw.ndim == 4, 'The input should be a batched 2D image'
        # Fully folded grid (batch_blocks=1): best for single-TC v5e/v6e.
        return self._fwd(x_nchw, key, self.alpha, self.fw, self.fb,
                         self.cwt, self.cb, self.idx_start, batch_blocks=1)


def _reference_forward(x_nchw, depth, w_oihw, feat_b, cls_w, cls_b):
    """Pure-JAX/XLA reference of the same composition (for the self-check)."""
    x = x_nchw
    for i in range(depth + 1):
        x = jax.lax.conv_general_dilated(
            x, w_oihw[i], window_strides=(1, 1), padding='SAME',
            dimension_numbers=('NCHW', 'OIHW', 'NCHW'),
            precision=jax.lax.Precision.HIGHEST)
        x = jnp.maximum(x + feat_b[i].reshape(1, -1, 1, 1), 0.0)
    pooled = jnp.mean(x, axis=(2, 3))                                   # (N, C)
    return (jnp.dot(pooled, cls_w[depth],
                    precision=jax.lax.Precision.HIGHEST)
            + cls_b[depth][None, :])


if __name__ == "__main__":
    root = jax.random.PRNGKey(0)
    k_x, k_idx = jax.random.split(root)

    N, C, H, W = 2, 4, 16, 16
    num_classes = 10
    x = jax.random.normal(k_x, (N, C, H, W), jnp.float32)   # NCHW, like PyTorch

    model = NNOnlinePallas(channels=C, num_classes=num_classes,
                           explore_range=4, seed=0)
    out = model.forward(x, k_idx)
    out = jax.block_until_ready(out)

    assert out.shape == (N, num_classes), out.shape
    assert bool(jnp.all(jnp.isfinite(out)))

    # Cross-check against the XLA reference at the same sampled depth
    # (jax.random is deterministic and jit-invariant, so this matches the
    # depth sampled inside the fused forward's wrapper).
    depth = int(jnp.clip(jax.random.categorical(k_idx, jnp.log(model.alpha))
                         + model.idx_start, 0, model.explore_range - 1))
    ref = _reference_forward(x, depth, model.w_oihw, model.feat_b,
                             model.cls_w, model.cls_b)
    assert jnp.allclose(out, ref, rtol=1e-4, atol=1e-4), \
        float(jnp.max(jnp.abs(out - ref)))

    print("KERNEL_OK")
</pallas_src>

<mosaic_0001>
module attributes {stable_mosaic.version = 11 : i64} {
  func.func @kernel(%arg0: i32, %arg1: memref<1xi32, #tpu.memory_space<smem>>, %arg2: memref<1x4x512xf32, #tpu.memory_space<vmem>>, %arg3: memref<9x512xf32, #tpu.memory_space<vmem>>, %arg4: memref<2x512xf32, #tpu.memory_space<vmem>>, %arg5: memref<4x9x4x4xf32, #tpu.memory_space<vmem>>, %arg6: memref<4x4x1xf32, #tpu.memory_space<vmem>>, %arg7: memref<1x10x4xf32, #tpu.memory_space<vmem>>, %arg8: memref<1x10x1xf32, #tpu.memory_space<vmem>>, %arg9: memref<1x10x2xf32, #tpu.memory_space<vmem>>, %arg10: memref<4x512xf32, #tpu.memory_space<vmem>>) attributes {dimension_semantics = [#tpu.dimension_semantics<parallel>], iteration_bounds = array<i64: 1>, scalar_prefetch = 1 : i64, scratch_operands = 1 : i64, tpu.core_type = #tpu.core_type<tc>, window_params = [{transform_indices = @transform_0, window_bounds = array<i64: 1, 4, 512>}, {pipeline_mode = #tpu.pipeline_mode<synchronous>, transform_indices = @transform_1, window_bounds = array<i64: 9, 512>}, {pipeline_mode = #tpu.pipeline_mode<synchronous>, transform_indices = @transform_2, window_bounds = array<i64: 2, 512>}, {pipeline_mode = #tpu.pipeline_mode<synchronous>, transform_indices = @transform_3, window_bounds = array<i64: 4, 9, 4, 4>}, {pipeline_mode = #tpu.pipeline_mode<synchronous>, transform_indices = @transform_4, window_bounds = array<i64: 4, 4, 1>}, {transform_indices = @transform_5, window_bounds = array<i64: 1, 10, 4>}, {transform_indices = @transform_6, window_bounds = array<i64: 1, 10, 1>}, {transform_indices = @transform_7, window_bounds = array<i64: 1, 10, 2>}]} {
    %c0 = arith.constant 0 : index
    %0 = memref.load %arg1[%c0] : memref<1xi32, #tpu.memory_space<smem>>
    %c0_0 = arith.constant 0 : index
    %c0_1 = arith.constant 0 : index
    %c0_2 = arith.constant 0 : index
    %1 = vector.load %arg2[%c0_0, %c0_1, %c0_2] : memref<1x4x512xf32, #tpu.memory_space<vmem>>, vector<1x4x512xf32>
    %2 = vector.shape_cast %1 : vector<1x4x512xf32> to vector<4x512xf32>
    %c0_3 = arith.constant 0 : index
    %c0_4 = arith.constant 0 : index
    %3 = vector.load %arg10[%c0_3, %c0_4] : memref<4x512xf32, #tpu.memory_space<vmem>>, vector<4x512xf32>
    tpu.vector_store %arg10[%c0_3, %c0_4], %2 {strides = array<i32>} : memref<4x512xf32, #tpu.memory_space<vmem>>, vector<4x512xf32>,
    %c0_5 = arith.constant 0 : index
    %c0_6 = arith.constant 0 : index
    %4 = vector.load %arg3[%c0_5, %c0_6] : memref<9x512xf32, #tpu.memory_space<vmem>>, vector<1x512xf32>
    %c1 = arith.constant 1 : index
    %c0_7 = arith.constant 0 : index
    %5 = vector.load %arg3[%c1, %c0_7] : memref<9x512xf32, #tpu.memory_space<vmem>>, vector<1x512xf32>
    %c2 = arith.constant 2 : index
    %c0_8 = arith.constant 0 : index
    %6 = vector.load %arg3[%c2, %c0_8] : memref<9x512xf32, #tpu.memory_space<vmem>>, vector<1x512xf32>
    %c3 = arith.constant 3 : index
    %c0_9 = arith.constant 0 : index
    %7 = vector.load %arg3[%c3, %c0_9] : memref<9x512xf32, #tpu.memory_space<vmem>>, vector<1x512xf32>
    %c5 = arith.constant 5 : index
    %c0_10 = arith.constant 0 : index
    %8 = vector.load %arg3[%c5, %c0_10] : memref<9x512xf32, #tpu.memory_space<vmem>>, vector<1x512xf32>
    %c6 = arith.constant 6 : index
    %c0_11 = arith.constant 0 : index
    %9 = vector.load %arg3[%c6, %c0_11] : memref<9x512xf32, #tpu.memory_space<vmem>>, vector<1x512xf32>
    %c7 = arith.constant 7 : index
    %c0_12 = arith.constant 0 : index
    %10 = vector.load %arg3[%c7, %c0_12] : memref<9x512xf32, #tpu.memory_space<vmem>>, vector<1x512xf32>
    %c8 = arith.constant 8 : index
    %c0_13 = arith.constant 0 : index
    %11 = vector.load %arg3[%c8, %c0_13] : memref<9x512xf32, #tpu.memory_space<vmem>>, vector<1x512xf32>
    %c0_i32 = arith.constant 0 : i32
    %12 = arith.cmpi sge, %0, %c0_i32 : i32
    %13 = arith.extui %12 : i1 to i32
    %c0_i32_14 = arith.constant 0 : i32
    %14 = arith.cmpi ne, %13, %c0_i32_14 : i32
    scf.if %14 {
      %c0_32 = arith.constant 0 : index
      %c0_33 = arith.constant 0 : index
      %37 = vector.load %arg10[%c0_32, %c0_33] : memref<4x512xf32, #tpu.memory_space<vmem>>, vector<4x512xf32>
      %c17_i32 = arith.constant 17 : i32
      %38 = tpu.dynamic_rotate %37 by %c17_i32 dim 1 : vector<4x512xf32>, i32 -> vector<4x512xf32>
      %39 = vector.broadcast %4 : vector<1x512xf32> to vector<4x512xf32>
      %40 = arith.mulf %38, %39 : vector<4x512xf32>
      %c0_34 = arith.constant 0 : index
      %c0_35 = arith.constant 0 : index
      %c0_36 = arith.constant 0 : index
      %c0_37 = arith.constant 0 : index
      %41 = vector.load %arg5[%c0_34, %c0_35, %c0_36, %c0_37] : memref<4x9x4x4xf32, #tpu.memory_space<vmem>>, vector<1x1x4x4xf32>
      %42 = vector.shape_cast %41 : vector<1x1x4x4xf32> to vector<4x4xf32>
      %cst_38 = arith.constant dense<0.000000e+00> : vector<4x512xf32>
      %43 = tpu.matmul %42, %40, %cst_38 {dimension_numbers = #tpu.dot_dimension_numbers<[1], [0], [0], [1], [0, 0, 1, 1], [], []>} : vector<4x4xf32>, vector<4x512xf32>, vector<4x512xf32> -> vector<4x512xf32>
      %c16_i32 = arith.constant 16 : i32
      %44 = tpu.dynamic_rotate %37 by %c16_i32 dim 1 : vector<4x512xf32>, i32 -> vector<4x512xf32>
      %45 = vector.broadcast %5 : vector<1x512xf32> to vector<4x512xf32>
      %46 = arith.mulf %44, %45 : vector<4x512xf32>
      %c0_39 = arith.constant 0 : index
      %c1_40 = arith.constant 1 : index
      %c0_41 = arith.constant 0 : index
      %c0_42 = arith.constant 0 : index
      %47 = vector.load %arg5[%c0_39, %c1_40, %c0_41, %c0_42] : memref<4x9x4x4xf32, #tpu.memory_space<vmem>>, vector<1x1x4x4xf32>
      %48 = vector.shape_cast %47 : vector<1x1x4x4xf32> to vector<4x4xf32>
      %cst_43 = arith.constant dense<0.000000e+00> : vector<4x512xf32>
      %49 = tpu.matmul %48, %46, %cst_43 {dimension_numbers = #tpu.dot_dimension_numbers<[1], [0], [0], [1], [0, 0, 1, 1], [], []>} : vector<4x4xf32>, vector<4x512xf32>, vector<4x512xf32> -> vector<4x512xf32>
      %50 = arith.addf %43, %49 : vector<4x512xf32>
      %c15_i32 = arith.constant 15 : i32
      %51 = tpu.dynamic_rotate %37 by %c15_i32 dim 1 : vector<4x512xf32>, i32 -> vector<4x512xf32>
      %52 = vector.broadcast %6 : vector<1x512xf32> to vector<4x512xf32>
      %53 = arith.mulf %51, %52 : vector<4x512xf32>
      %c0_44 = arith.constant 0 : index
      %c2_45 = arith.constant 2 : index
      %c0_46 = arith.constant 0 : index
      %c0_47 = arith.constant 0 : index
      %54 = vector.load %arg5[%c0_44, %c2_45, %c0_46, %c0_47] : memref<4x9x4x4xf32, #tpu.memory_space<vmem>>, vector<1x1x4x4xf32>
      %55 = vector.shape_cast %54 : vector<1x1x4x4xf32> to vector<4x4xf32>
      %cst_48 = arith.constant dense<0.000000e+00> : vector<4x512xf32>
      %56 = tpu.matmul %55, %53, %cst_48 {dimension_numbers = #tpu.dot_dimension_numbers<[1], [0], [0], [1], [0, 0, 1, 1], [], []>} : vector<4x4xf32>, vector<4x512xf32>, vector<4x512xf32> -> vector<4x512xf32>
      %57 = arith.addf %50, %56 : vector<4x512xf32>
      %c1_i32_49 = arith.constant 1 : i32
      %58 = tpu.dynamic_rotate %37 by %c1_i32_49 dim 1 : vector<4x512xf32>, i32 -> vector<4x512xf32>
      %59 = vector.broadcast %7 : vector<1x512xf32> to vector<4x512xf32>
      %60 = arith.mulf %58, %59 : vector<4x512xf32>
      %c0_50 = arith.constant 0 : index
      %c3_51 = arith.constant 3 : index
      %c0_52 = arith.constant 0 : index
      %c0_53 = arith.constant 0 : index
      %61 = vector.load %arg5[%c0_50, %c3_51, %c0_52, %c0_53] : memref<4x9x4x4xf32, #tpu.memory_space<vmem>>, vector<1x1x4x4xf32>
      %62 = vector.shape_cast %61 : vector<1x1x4x4xf32> to vector<4x4xf32>
      %cst_54 = arith.constant dense<0.000000e+00> : vector<4x512xf32>
      %63 = tpu.matmul %62, %60, %cst_54 {dimension_numbers = #tpu.dot_dimension_numbers<[1], [0], [0], [1], [0, 0, 1, 1], [], []>} : vector<4x4xf32>, vector<4x512xf32>, vector<4x512xf32> -> vector<4x512xf32>
      %64 = arith.addf %57, %63 : vector<4x512xf32>
      %c0_55 = arith.constant 0 : index
      %c4 = arith.constant 4 : index
      %c0_56 = arith.constant 0 : index
      %c0_57 = arith.constant 0 : index
      %65 = vector.load %arg5[%c0_55, %c4, %c0_56, %c0_57] : memref<4x9x4x4xf32, #tpu.memory_space<vmem>>, vector<1x1x4x4xf32>
      %66 = vector.shape_cast %65 : vector<1x1x4x4xf32> to vector<4x4xf32>
      %cst_58 = arith.constant dense<0.000000e+00> : vector<4x512xf32>
      %67 = tpu.matmul %66, %37, %cst_58 {dimension_numbers = #tpu.dot_dimension_numbers<[1], [0], [0], [1], [0, 0, 1, 1], [], []>} : vector<4x4xf32>, vector<4x512xf32>, vector<4x512xf32> -> vector<4x512xf32>
      %68 = arith.addf %64, %67 : vector<4x512xf32>
      %c511_i32 = arith.constant 511 : i32
      %69 = tpu.dynamic_rotate %37 by %c511_i32 dim 1 : vector<4x512xf32>, i32 -> vector<4x512xf32>
      %70 = vector.broadcast %8 : vector<1x512xf32> to vector<4x512xf32>
      %71 = arith.mulf %69, %70 : vector<4x512xf32>
      %c0_59 = arith.constant 0 : index
      %c5_60 = arith.constant 5 : index
      %c0_61 = arith.constant 0 : index
      %c0_62 = arith.constant 0 : index
      %72 = vector.load %arg5[%c0_59, %c5_60, %c0_61, %c0_62] : memref<4x9x4x4xf32, #tpu.memory_space<vmem>>, vector<1x1x4x4xf32>
      %73 = vector.shape_cast %72 : vector<1x1x4x4xf32> to vector<4x4xf32>
      %cst_63 = arith.constant dense<0.000000e+00> : vector<4x512xf32>
      %74 = tpu.matmul %73, %71, %cst_63 {dimension_numbers = #tpu.dot_dimension_numbers<[1], [0], [0], [1], [0, 0, 1, 1], [], []>} : vector<4x4xf32>, vector<4x512xf32>, vector<4x512xf32> -> vector<4x512xf32>
      %75 = arith.addf %68, %74 : vector<4x512xf32>
      %c497_i32 = arith.constant 497 : i32
      %76 = tpu.dynamic_rotate %37 by %c497_i32 dim 1 : vector<4x512xf32>, i32 -> vector<4x512xf32>
      %77 = vector.broadcast %9 : vector<1x512xf32> to vector<4x512xf32>
      %78 = arith.mulf %76, %77 : vector<4x512xf32>
      %c0_64 = arith.constant 0 : index
      %c6_65 = arith.constant 6 : index
      %c0_66 = arith.constant 0 : index
      %c0_67 = arith.constant 0 : index
      %79 = vector.load %arg5[%c0_64, %c6_65, %c0_66, %c0_67] : memref<4x9x4x4xf32, #tpu.memory_space<vmem>>, vector<1x1x4x4xf32>
      %80 = vector.shape_cast %79 : vector<1x1x4x4xf32> to vector<4x4xf32>
      %cst_68 = arith.constant dense<0.000000e+00> : vector<4x512xf32>
      %81 = tpu.matmul %80, %78, %cst_68 {dimension_numbers = #tpu.dot_dimension_numbers<[1], [0], [0], [1], [0, 0, 1, 1], [], []>} : vector<4x4xf32>, vector<4x512xf32>, vector<4x512xf32> -> vector<4x512xf32>
      %82 = arith.addf %75, %81 : vector<4x512xf32>
      %c496_i32 = arith.constant 496 : i32
      %83 = tpu.dynamic_rotate %37 by %c496_i32 dim 1 : vector<4x512xf32>, i32 -> vector<4x512xf32>
      %84 = vector.broadcast %10 : vector<1x512xf32> to vector<4x512xf32>
      %85 = arith.mulf %83, %84 : vector<4x512xf32>
      %c0_69 = arith.constant 0 : index
      %c7_70 = arith.constant 7 : index
      %c0_71 = arith.constant 0 : index
      %c0_72 = arith.constant 0 : index
      %86 = vector.load %arg5[%c0_69, %c7_70, %c0_71, %c0_72] : memref<4x9x4x4xf32, #tpu.memory_space<vmem>>, vector<1x1x4x4xf32>
      %87 = vector.shape_cast %86 : vector<1x1x4x4xf32> to vector<4x4xf32>
      %cst_73 = arith.constant dense<0.000000e+00> : vector<4x512xf32>
      %88 = tpu.matmul %87, %85, %cst_73 {dimension_numbers = #tpu.dot_dimension_numbers<[1], [0], [0], [1], [0, 0, 1, 1], [], []>} : vector<4x4xf32>, vector<4x512xf32>, vector<4x512xf32> -> vector<4x512xf32>
      %89 = arith.addf %82, %88 : vector<4x512xf32>
      %c495_i32 = arith.constant 495 : i32
      %90 = tpu.dynamic_rotate %37 by %c495_i32 dim 1 : vector<4x512xf32>, i32 -> vector<4x512xf32>
      %91 = vector.broadcast %11 : vector<1x512xf32> to vector<4x512xf32>
      %92 = arith.mulf %90, %91 : vector<4x512xf32>
      %c0_74 = arith.constant 0 : index
      %c8_75 = arith.constant 8 : index
      %c0_76 = arith.constant 0 : index
      %c0_77 = arith.constant 0 : index
      %93 = vector.load %arg5[%c0_74, %c8_75, %c0_76, %c0_77] : memref<4x9x4x4xf32, #tpu.memory_space<vmem>>, vector<1x1x4x4xf32>
      %94 = vector.shape_cast %93 : vector<1x1x4x4xf32> to vector<4x4xf32>
      %cst_78 = arith.constant dense<0.000000e+00> : vector<4x512xf32>
      %95 = tpu.matmul %94, %92, %cst_78 {dimension_numbers = #tpu.dot_dimension_numbers<[1], [0], [0], [1], [0, 0, 1, 1], [], []>} : vector<4x4xf32>, vector<4x512xf32>, vector<4x512xf32> -> vector<4x512xf32>
      %96 = arith.addf %89, %95 : vector<4x512xf32>
      %c0_79 = arith.constant 0 : index
      %c0_80 = arith.constant 0 : index
      %c0_81 = arith.constant 0 : index
      %97 = vector.load %arg6[%c0_79, %c0_80, %c0_81] : memref<4x4x1xf32, #tpu.memory_space<vmem>>, vector<1x4x1xf32>
      %98 = vector.shape_cast %97 : vector<1x4x1xf32> to vector<4x1xf32>
      %99 = vector.broadcast %98 : vector<4x1xf32> to vector<4x512xf32>
      %100 = arith.addf %96, %99 : vector<4x512xf32>
      %cst_82 = arith.constant 0.000000e+00 : f32
      %101 = vector.broadcast %cst_82 : f32 to vector<4x512xf32>
      %102 = arith.maximumf %100, %101 : vector<4x512xf32>
      %c0_83 = arith.constant 0 : index
      %c0_84 = arith.constant 0 : index
      %103 = vector.load %arg10[%c0_83, %c0_84] : memref<4x512xf32, #tpu.memory_space<vmem>>, vector<4x512xf32>
      tpu.vector_store %arg10[%c0_83, %c0_84], %102 {strides = array<i32>} : memref<4x512xf32, #tpu.memory_space<vmem>>, vector<4x512xf32>,
    } else {
    }
    %c1_i32 = arith.constant 1 : i32
    %15 = arith.cmpi sge, %0, %c1_i32 : i32
    %16 = arith.extui %15 : i1 to i32
    %c0_i32_15 = arith.constant 0 : i32
    %17 = arith.cmpi ne, %16, %c0_i32_15 : i32
    scf.if %17 {
      %c0_32 = arith.constant 0 : index
      %c0_33 = arith.constant 0 : index
      %37 = vector.load %arg10[%c0_32, %c0_33] : memref<4x512xf32, #tpu.memory_space<vmem>>, vector<4x512xf32>
      %c17_i32 = arith.constant 17 : i32
      %38 = tpu.dynamic_rotate %37 by %c17_i32 dim 1 : vector<4x512xf32>, i32 -> vector<4x512xf32>
      %39 = vector.broadcast %4 : vector<1x512xf32> to vector<4x512xf32>
      %40 = arith.mulf %38, %39 : vector<4x512xf32>
      %c1_34 = arith.constant 1 : index
      %c0_35 = arith.constant 0 : index
      %c0_36 = arith.constant 0 : index
      %c0_37 = arith.constant 0 : index
      %41 = vector.load %arg5[%c1_34, %c0_35, %c0_36, %c0_37] : memref<4x9x4x4xf32, #tpu.memory_space<vmem>>, vector<1x1x4x4xf32>
      %42 = vector.shape_cast %41 : vector<1x1x4x4xf32> to vector<4x4xf32>
      %cst_38 = arith.constant dense<0.000000e+00> : vector<4x512xf32>
      %43 = tpu.matmul %42, %40, %cst_38 {dimension_numbers = #tpu.dot_dimension_numbers<[1], [0], [0], [1], [0, 0, 1, 1], [], []>} : vector<4x4xf32>, vector<4x512xf32>, vector<4x512xf32> -> vector<4x512xf32>
      %c16_i32 = arith.constant 16 : i32
      %44 = tpu.dynamic_rotate %37 by %c16_i32 dim 1 : vector<4x512xf32>, i32 -> vector<4x512xf32>
      %45 = vector.broadcast %5 : vector<1x512xf32> to vector<4x512xf32>
      %46 = arith.mulf %44, %45 : vector<4x512xf32>
      %c1_39 = arith.constant 1 : index
      %c1_40 = arith.constant 1 : index
      %c0_41 = arith.constant 0 : index
      %c0_42 = arith.constant 0 : index
      %47 = vector.load %arg5[%c1_39, %c1_40, %c0_41, %c0_42] : memref<4x9x4x4xf32, #tpu.memory_space<vmem>>, vector<1x1x4x4xf32>
      %48 = vector.shape_cast %47 : vector<1x1x4x4xf32> to vector<4x4xf32>
      %cst_43 = arith.constant dense<0.000000e+00> : vector<4x512xf32>
      %49 = tpu.matmul %48, %46, %cst_43 {dimension_numbers = #tpu.dot_dimension_numbers<[1], [0], [0], [1], [0, 0, 1, 1], [], []>} : vector<4x4xf32>, vector<4x512xf32>, vector<4x512xf32> -> vector<4x512xf32>
      %50 = arith.addf %43, %49 : vector<4x512xf32>
      %c15_i32 = arith.constant 15 : i32
      %51 = tpu.dynamic_rotate %37 by %c15_i32 dim 1 : vector<4x512xf32>, i32 -> vector<4x512xf32>
      %52 = vector.broadcast %6 : vector<1x512xf32> to vector<4x512xf32>
      %53 = arith.mulf %51, %52 : vector<4x512xf32>
      %c1_44 = arith.constant 1 : index
      %c2_45 = arith.constant 2 : index
      %c0_46 = arith.constant 0 : index
      %c0_47 = arith.constant 0 : index
      %54 = vector.load %arg5[%c1_44, %c2_45, %c0_46, %c0_47] : memref<4x9x4x4xf32, #tpu.memory_space<vmem>>, vector<1x1x4x4xf32>
      %55 = vector.shape_cast %54 : vector<1x1x4x4xf32> to vector<4x4xf32>
      %cst_48 = arith.constant dense<0.000000e+00> : vector<4x512xf32>
      %56 = tpu.matmul %55, %53, %cst_48 {dimension_numbers = #tpu.dot_dimension_numbers<[1], [0], [0], [1], [0, 0, 1, 1], [], []>} : vector<4x4xf32>, vector<4x512xf32>, vector<4x512xf32> -> vector<4x512xf32>
      %57 = arith.addf %50, %56 : vector<4x512xf32>
      %c1_i32_49 = arith.constant 1 : i32
      %58 = tpu.dynamic_rotate %37 by %c1_i32_49 dim 1 : vector<4x512xf32>, i32 -> vector<4x512xf32>
      %59 = vector.broadcast %7 : vector<1x512xf32> to vector<4x512xf32>
      %60 = arith.mulf %58, %59 : vector<4x512xf32>
      %c1_50 = arith.constant 1 : index
      %c3_51 = arith.constant 3 : index
      %c0_52 = arith.constant 0 : index
      %c0_53 = arith.constant 0 : index
      %61 = vector.load %arg5[%c1_50, %c3_51, %c0_52, %c0_53] : memref<4x9x4x4xf32, #tpu.memory_space<vmem>>, vector<1x1x4x4xf32>
      %62 = vector.shape_cast %61 : vector<1x1x4x4xf32> to vector<4x4xf32>
      %cst_54 = arith.constant dense<0.000000e+00> : vector<4x512xf32>
      %63 = tpu.matmul %62, %60, %cst_54 {dimension_numbers = #tpu.dot_dimension_numbers<[1], [0], [0], [1], [0, 0, 1, 1], [], []>} : vector<4x4xf32>, vector<4x512xf32>, vector<4x512xf32> -> vector<4x512xf32>
      %64 = arith.addf %57, %63 : vector<4x512xf32>
      %c1_55 = arith.constant 1 : index
      %c4 = arith.constant 4 : index
      %c0_56 = arith.constant 0 : index
      %c0_57 = arith.constant 0 : index
      %65 = vector.load %arg5[%c1_55, %c4, %c0_56, %c0_57] : memref<4x9x4x4xf32, #tpu.memory_space<vmem>>, vector<1x1x4x4xf32>
      %66 = vector.shape_cast %65 : vector<1x1x4x4xf32> to vector<4x4xf32>
      %cst_58 = arith.constant dense<0.000000e+00> : vector<4x512xf32>
      %67 = tpu.matmul %66, %37, %cst_58 {dimension_numbers = #tpu.dot_dimension_numbers<[1], [0], [0], [1], [0, 0, 1, 1], [], []>} : vector<4x4xf32>, vector<4x512xf32>, vector<4x512xf32> -> vector<4x512xf32>
      %68 = arith.addf %64, %67 : vector<4x512xf32>
      %c511_i32 = arith.constant 511 : i32
      %69 = tpu.dynamic_rotate %37 by %c511_i32 dim 1 : vector<4x512xf32>, i32 -> vector<4x512xf32>
      %70 = vector.broadcast %8 : vector<1x512xf32> to vector<4x512xf32>
      %71 = arith.mulf %69, %70 : vector<4x512xf32>
      %c1_59 = arith.constant 1 : index
      %c5_60 = arith.constant 5 : index
      %c0_61 = arith.constant 0 : index
      %c0_62 = arith.constant 0 : index
      %72 = vector.load %arg5[%c1_59, %c5_60, %c0_61, %c0_62] : memref<4x9x4x4xf32, #tpu.memory_space<vmem>>, vector<1x1x4x4xf32>
      %73 = vector.shape_cast %72 : vector<1x1x4x4xf32> to vector<4x4xf32>
      %cst_63 = arith.constant dense<0.000000e+00> : vector<4x512xf32>
      %74 = tpu.matmul %73, %71, %cst_63 {dimension_numbers = #tpu.dot_dimension_numbers<[1], [0], [0], [1], [0, 0, 1, 1], [], []>} : vector<4x4xf32>, vector<4x512xf32>, vector<4x512xf32> -> vector<4x512xf32>
      %75 = arith.addf %68, %74 : vector<4x512xf32>
      %c497_i32 = arith.constant 497 : i32
      %76 = tpu.dynamic_rotate %37 by %c497_i32 dim 1 : vector<4x512xf32>, i32 -> vector<4x512xf32>
      %77 = vector.broadcast %9 : vector<1x512xf32> to vector<4x512xf32>
      %78 = arith.mulf %76, %77 : vector<4x512xf32>
      %c1_64 = arith.constant 1 : index
      %c6_65 = arith.constant 6 : index
      %c0_66 = arith.constant 0 : index
      %c0_67 = arith.constant 0 : index
      %79 = vector.load %arg5[%c1_64, %c6_65, %c0_66, %c0_67] : memref<4x9x4x4xf32, #tpu.memory_space<vmem>>, vector<1x1x4x4xf32>
      %80 = vector.shape_cast %79 : vector<1x1x4x4xf32> to vector<4x4xf32>
      %cst_68 = arith.constant dense<0.000000e+00> : vector<4x512xf32>
      %81 = tpu.matmul %80, %78, %cst_68 {dimension_numbers = #tpu.dot_dimension_numbers<[1], [0], [0], [1], [0, 0, 1, 1], [], []>} : vector<4x4xf32>, vector<4x512xf32>, vector<4x512xf32> -> vector<4x512xf32>
      %82 = arith.addf %75, %81 : vector<4x512xf32>
      %c496_i32 = arith.constant 496 : i32
      %83 = tpu.dynamic_rotate %37 by %c496_i32 dim 1 : vector<4x512xf32>, i32 -> vector<4x512xf32>
      %84 = vector.broadcast %10 : vector<1x512xf32> to vector<4x512xf32>
      %85 = arith.mulf %83, %84 : vector<4x512xf32>
      %c1_69 = arith.constant 1 : index
      %c7_70 = arith.constant 7 : index
      %c0_71 = arith.constant 0 : index
      %c0_72 = arith.constant 0 : index
      %86 = vector.load %arg5[%c1_69, %c7_70, %c0_71, %c0_72] : memref<4x9x4x4xf32, #tpu.memory_space<vmem>>, vector<1x1x4x4xf32>
      %87 = vector.shape_cast %86 : vector<1x1x4x4xf32> to vector<4x4xf32>
      %cst_73 = arith.constant dense<0.000000e+00> : vector<4x512xf32>
      %88 = tpu.matmul %87, %85, %cst_73 {dimension_numbers = #tpu.dot_dimension_numbers<[1], [0], [0], [1], [0, 0, 1, 1], [], []>} : vector<4x4xf32>, vector<4x512xf32>, vector<4x512xf32> -> vector<4x512xf32>
      %89 = arith.addf %82, %88 : vector<4x512xf32>
      %c495_i32 = arith.constant 495 : i32
      %90 = tpu.dynamic_rotate %37 by %c495_i32 dim 1 : vector<4x512xf32>, i32 -> vector<4x512xf32>
      %91 = vector.broadcast %11 : vector<1x512xf32> to vector<4x512xf32>
      %92 = arith.mulf %90, %91 : vector<4x512xf32>
      %c1_74 = arith.constant 1 : index
      %c8_75 = arith.constant 8 : index
      %c0_76 = arith.constant 0 : index
      %c0_77 = arith.constant 0 : index
      %93 = vector.load %arg5[%c1_74, %c8_75, %c0_76, %c0_77] : memref<4x9x4x4xf32, #tpu.memory_space<vmem>>, vector<1x1x4x4xf32>
      %94 = vector.shape_cast %93 : vector<1x1x4x4xf32> to vector<4x4xf32>
      %cst_78 = arith.constant dense<0.000000e+00> : vector<4x512xf32>
      %95 = tpu.matmul %94, %92, %cst_78 {dimension_numbers = #tpu.dot_dimension_numbers<[1], [0], [0], [1], [0, 0, 1, 1], [], []>} : vector<4x4xf32>, vector<4x512xf32>, vector<4x512xf32> -> vector<4x512xf32>
      %96 = arith.addf %89, %95 : vector<4x512xf32>
      %c1_79 = arith.constant 1 : index
      %c0_80 = arith.constant 0 : index
      %c0_81 = arith.constant 0 : index
      %97 = vector.load %arg6[%c1_79, %c0_80, %c0_81] : memref<4x4x1xf32, #tpu.memory_space<vmem>>, vector<1x4x1xf32>
      %98 = vector.shape_cast %97 : vector<1x4x1xf32> to vector<4x1xf32>
      %99 = vector.broadcast %98 : vector<4x1xf32> to vector<4x512xf32>
      %100 = arith.addf %96, %99 : vector<4x512xf32>
      %cst_82 = arith.constant 0.000000e+00 : f32
      %101 = vector.broadcast %cst_82 : f32 to vector<4x512xf32>
      %102 = arith.maximumf %100, %101 : vector<4x512xf32>
      %c0_83 = arith.constant 0 : index
      %c0_84 = arith.constant 0 : index
      %103 = vector.load %arg10[%c0_83, %c0_84] : memref<4x512xf32, #tpu.memory_space<vmem>>, vector<4x512xf32>
      tpu.vector_store %arg10[%c0_83, %c0_84], %102 {strides = array<i32>} : memref<4x512xf32, #tpu.memory_space<vmem>>, vector<4x512xf32>,
    } else {
    }
    %c2_i32 = arith.constant 2 : i32
    %18 = arith.cmpi sge, %0, %c2_i32 : i32
    %19 = arith.extui %18 : i1 to i32
    %c0_i32_16 = arith.constant 0 : i32
    %20 = arith.cmpi ne, %19, %c0_i32_16 : i32
    scf.if %20 {
      %c0_32 = arith.constant 0 : index
      %c0_33 = arith.constant 0 : index
      %37 = vector.load %arg10[%c0_32, %c0_33] : memref<4x512xf32, #tpu.memory_space<vmem>>, vector<4x512xf32>
      %c17_i32 = arith.constant 17 : i32
      %38 = tpu.dynamic_rotate %37 by %c17_i32 dim 1 : vector<4x512xf32>, i32 -> vector<4x512xf32>
      %39 = vector.broadcast %4 : vector<1x512xf32> to vector<4x512xf32>
      %40 = arith.mulf %38, %39 : vector<4x512xf32>
      %c2_34 = arith.constant 2 : index
      %c0_35 = arith.constant 0 : index
      %c0_36 = arith.constant 0 : index
      %c0_37 = arith.constant 0 : index
      %41 = vector.load %arg5[%c2_34, %c0_35, %c0_36, %c0_37] : memref<4x9x4x4xf32, #tpu.memory_space<vmem>>, vector<1x1x4x4xf32>
      %42 = vector.shape_cast %41 : vector<1x1x4x4xf32> to vector<4x4xf32>
      %cst_38 = arith.constant dense<0.000000e+00> : vector<4x512xf32>
      %43 = tpu.matmul %42, %40, %cst_38 {dimension_numbers = #tpu.dot_dimension_numbers<[1], [0], [0], [1], [0, 0, 1, 1], [], []>} : vector<4x4xf32>, vector<4x512xf32>, vector<4x512xf32> -> vector<4x512xf32>
      %c16_i32 = arith.constant 16 : i32
      %44 = tpu.dynamic_rotate %37 by %c16_i32 dim 1 : vector<4x512xf32>, i32 -> vector<4x512xf32>
      %45 = vector.broadcast %5 : vector<1x512xf32> to vector<4x512xf32>
      %46 = arith.mulf %44, %45 : vector<4x512xf32>
      %c2_39 = arith.constant 2 : index
      %c1_40 = arith.constant 1 : index
      %c0_41 = arith.constant 0 : index
      %c0_42 = arith.constant 0 : index
      %47 = vector.load %arg5[%c2_39, %c1_40, %c0_41, %c0_42] : memref<4x9x4x4xf32, #tpu.memory_space<vmem>>, vector<1x1x4x4xf32>
      %48 = vector.shape_cast %47 : vector<1x1x4x4xf32> to vector<4x4xf32>
      %cst_43 = arith.constant dense<0.000000e+00> : vector<4x512xf32>
      %49 = tpu.matmul %48, %46, %cst_43 {dimension_numbers = #tpu.dot_dimension_numbers<[1], [0], [0], [1], [0, 0, 1, 1], [], []>} : vector<4x4xf32>, vector<4x512xf32>, vector<4x512xf32> -> vector<4x512xf32>
      %50 = arith.addf %43, %49 : vector<4x512xf32>
      %c15_i32 = arith.constant 15 : i32
      %51 = tpu.dynamic_rotate %37 by %c15_i32 dim 1 : vector<4x512xf32>, i32 -> vector<4x512xf32>
      %52 = vector.broadcast %6 : vector<1x512xf32> to vector<4x512xf32>
      %53 = arith.mulf %51, %52 : vector<4x512xf32>
      %c2_44 = arith.constant 2 : index
      %c2_45 = arith.constant 2 : index
      %c0_46 = arith.constant 0 : index
      %c0_47 = arith.constant 0 : index
      %54 = vector.load %arg5[%c2_44, %c2_45, %c0_46, %c0_47] : memref<4x9x4x4xf32, #tpu.memory_space<vmem>>, vector<1x1x4x4xf32>
      %55 = vector.shape_cast %54 : vector<1x1x4x4xf32> to vector<4x4xf32>
      %cst_48 = arith.constant dense<0.000000e+00> : vector<4x512xf32>
      %56 = tpu.matmul %55, %53, %cst_48 {dimension_numbers = #tpu.dot_dimension_numbers<[1], [0], [0], [1], [0, 0, 1, 1], [], []>} : vector<4x4xf32>, vector<4x512xf32>, vector<4x512xf32> -> vector<4x512xf32>
      %57 = arith.addf %50, %56 : vector<4x512xf32>
      %c1_i32_49 = arith.constant 1 : i32
      %58 = tpu.dynamic_rotate %37 by %c1_i32_49 dim 1 : vector<4x512xf32>, i32 -> vector<4x512xf32>
      %59 = vector.broadcast %7 : vector<1x512xf32> to vector<4x512xf32>
      %60 = arith.mulf %58, %59 : vector<4x512xf32>
      %c2_50 = arith.constant 2 : index
      %c3_51 = arith.constant 3 : index
      %c0_52 = arith.constant 0 : index
      %c0_53 = arith.constant 0 : index
      %61 = vector.load %arg5[%c2_50, %c3_51, %c0_52, %c0_53] : memref<4x9x4x4xf32, #tpu.memory_space<vmem>>, vector<1x1x4x4xf32>
      %62 = vector.shape_cast %61 : vector<1x1x4x4xf32> to vector<4x4xf32>
      %cst_54 = arith.constant dense<0.000000e+00> : vector<4x512xf32>
      %63 = tpu.matmul %62, %60, %cst_54 {dimension_numbers = #tpu.dot_dimension_numbers<[1], [0], [0], [1], [0, 0, 1, 1], [], []>} : vector<4x4xf32>, vector<4x512xf32>, vector<4x512xf32> -> vector<4x512xf32>
      %64 = arith.addf %57, %63 : vector<4x512xf32>
      %c2_55 = arith.constant 2 : index
      %c4 = arith.constant 4 : index
      %c0_56 = arith.constant 0 : index
      %c0_57 = arith.constant 0 : index
      %65 = vector.load %arg5[%c2_55, %c4, %c0_56, %c0_57] : memref<4x9x4x4xf32, #tpu.memory_space<vmem>>, vector<1x1x4x4xf32>
      %66 = vector.shape_cast %65 : vector<1x1x4x4xf32> to vector<4x4xf32>
      %cst_58 = arith.constant dense<0.000000e+00> : vector<4x512xf32>
      %67 = tpu.matmul %66, %37, %cst_58 {dimension_numbers = #tpu.dot_dimension_numbers<[1], [0], [0], [1], [0, 0, 1, 1], [], []>} : vector<4x4xf32>, vector<4x512xf32>, vector<4x512xf32> -> vector<4x512xf32>
      %68 = arith.addf %64, %67 : vector<4x512xf32>
      %c511_i32 = arith.constant 511 : i32
      %69 = tpu.dynamic_rotate %37 by %c511_i32 dim 1 : vector<4x512xf32>, i32 -> vector<4x512xf32>
      %70 = vector.broadcast %8 : vector<1x512xf32> to vector<4x512xf32>
      %71 = arith.mulf %69, %70 : vector<4x512xf32>
      %c2_59 = arith.constant 2 : index
      %c5_60 = arith.constant 5 : index
      %c0_61 = arith.constant 0 : index
      %c0_62 = arith.constant 0 : index
      %72 = vector.load %arg5[%c2_59, %c5_60, %c0_61, %c0_62] : memref<4x9x4x4xf32, #tpu.memory_space<vmem>>, vector<1x1x4x4xf32>
      %73 = vector.shape_cast %72 : vector<1x1x4x4xf32> to vector<4x4xf32>
      %cst_63 = arith.constant dense<0.000000e+00> : vector<4x512xf32>
      %74 = tpu.matmul %73, %71, %cst_63 {dimension_numbers = #tpu.dot_dimension_numbers<[1], [0], [0], [1], [0, 0, 1, 1], [], []>} : vector<4x4xf32>, vector<4x512xf32>, vector<4x512xf32> -> vector<4x512xf32>
      %75 = arith.addf %68, %74 : vector<4x512xf32>
      %c497_i32 = arith.constant 497 : i32
      %76 = tpu.dynamic_rotate %37 by %c497_i32 dim 1 : vector<4x512xf32>, i32 -> vector<4x512xf32>
      %77 = vector.broadcast %9 : vector<1x512xf32> to vector<4x512xf32>
      %78 = arith.mulf %76, %77 : vector<4x512xf32>
      %c2_64 = arith.constant 2 : index
      %c6_65 = arith.constant 6 : index
      %c0_66 = arith.constant 0 : index
      %c0_67 = arith.constant 0 : index
      %79 = vector.load %arg5[%c2_64, %c6_65, %c0_66, %c0_67] : memref<4x9x4x4xf32, #tpu.memory_space<vmem>>, vector<1x1x4x4xf32>
      %80 = vector.shape_cast %79 : vector<1x1x4x4xf32> to vector<4x4xf32>
      %cst_68 = arith.constant dense<0.000000e+00> : vector<4x512xf32>
      %81 = tpu.matmul %80, %78, %cst_68 {dimension_numbers = #tpu.dot_dimension_numbers<[1], [0], [0], [1], [0, 0, 1, 1], [], []>} : vector<4x4xf32>, vector<4x512xf32>, vector<4x512xf32> -> vector<4x512xf32>
      %82 = arith.addf %75, %81 : vector<4x512xf32>
      %c496_i32 = arith.constant 496 : i32
      %83 = tpu.dynamic_rotate %37 by %c496_i32 dim 1 : vector<4x512xf32>, i32 -> vector<4x512xf32>
      %84 = vector.broadcast %10 : vector<1x512xf32> to vector<4x512xf32>
      %85 = arith.mulf %83, %84 : vector<4x512xf32>
      %c2_69 = arith.constant 2 : index
      %c7_70 = arith.constant 7 : index
      %c0_71 = arith.constant 0 : index
      %c0_72 = arith.constant 0 : index
      %86 = vector.load %arg5[%c2_69, %c7_70, %c0_71, %c0_72] : memref<4x9x4x4xf32, #tpu.memory_space<vmem>>, vector<1x1x4x4xf32>
      %87 = vector.shape_cast %86 : vector<1x1x4x4xf32> to vector<4x4xf32>
      %cst_73 = arith.constant dense<0.000000e+00> : vector<4x512xf32>
      %88 = tpu.matmul %87, %85, %cst_73 {dimension_numbers = #tpu.dot_dimension_numbers<[1], [0], [0], [1], [0, 0, 1, 1], [], []>} : vector<4x4xf32>, vector<4x512xf32>, vector<4x512xf32> -> vector<4x512xf32>
      %89 = arith.addf %82, %88 : vector<4x512xf32>
      %c495_i32 = arith.constant 495 : i32
      %90 = tpu.dynamic_rotate %37 by %c495_i32 dim 1 : vector<4x512xf32>, i32 -> vector<4x512xf32>
      %91 = vector.broadcast %11 : vector<1x512xf32> to vector<4x512xf32>
      %92 = arith.mulf %90, %91 : vector<4x512xf32>
      %c2_74 = arith.constant 2 : index
      %c8_75 = arith.constant 8 : index
      %c0_76 = arith.constant 0 : index
      %c0_77 = arith.constant 0 : index
      %93 = vector.load %arg5[%c2_74, %c8_75, %c0_76, %c0_77] : memref<4x9x4x4xf32, #tpu.memory_space<vmem>>, vector<1x1x4x4xf32>
      %94 = vector.shape_cast %93 : vector<1x1x4x4xf32> to vector<4x4xf32>
      %cst_78 = arith.constant dense<0.000000e+00> : vector<4x512xf32>
      %95 = tpu.matmul %94, %92, %cst_78 {dimension_numbers = #tpu.dot_dimension_numbers<[1], [0], [0], [1], [0, 0, 1, 1], [], []>} : vector<4x4xf32>, vector<4x512xf32>, vector<4x512xf32> -> vector<4x512xf32>
      %96 = arith.addf %89, %95 : vector<4x512xf32>
      %c2_79 = arith.constant 2 : index
      %c0_80 = arith.constant 0 : index
      %c0_81 = arith.constant 0 : index
      %97 = vector.load %arg6[%c2_79, %c0_80, %c0_81] : memref<4x4x1xf32, #tpu.memory_space<vmem>>, vector<1x4x1xf32>
      %98 = vector.shape_cast %97 : vector<1x4x1xf32> to vector<4x1xf32>
      %99 = vector.broadcast %98 : vector<4x1xf32> to vector<4x512xf32>
      %100 = arith.addf %96, %99 : vector<4x512xf32>
      %cst_82 = arith.constant 0.000000e+00 : f32
      %101 = vector.broadcast %cst_82 : f32 to vector<4x512xf32>
      %102 = arith.maximumf %100, %101 : vector<4x512xf32>
      %c0_83 = arith.constant 0 : index
      %c0_84 = arith.constant 0 : index
      %103 = vector.load %arg10[%c0_83, %c0_84] : memref<4x512xf32, #tpu.memory_space<vmem>>, vector<4x512xf32>
      tpu.vector_store %arg10[%c0_83, %c0_84], %102 {strides = array<i32>} : memref<4x512xf32, #tpu.memory_space<vmem>>, vector<4x512xf32>,
    } else {
    }
    %c3_i32 = arith.constant 3 : i32
    %21 = arith.cmpi sge, %0, %c3_i32 : i32
    %22 = arith.extui %21 : i1 to i32
    %c0_i32_17 = arith.constant 0 : i32
    %23 = arith.cmpi ne, %22, %c0_i32_17 : i32
    scf.if %23 {
      %c0_32 = arith.constant 0 : index
      %c0_33 = arith.constant 0 : index
      %37 = vector.load %arg10[%c0_32, %c0_33] : memref<4x512xf32, #tpu.memory_space<vmem>>, vector<4x512xf32>
      %c17_i32 = arith.constant 17 : i32
      %38 = tpu.dynamic_rotate %37 by %c17_i32 dim 1 : vector<4x512xf32>, i32 -> vector<4x512xf32>
      %39 = vector.broadcast %4 : vector<1x512xf32> to vector<4x512xf32>
      %40 = arith.mulf %38, %39 : vector<4x512xf32>
      %c3_34 = arith.constant 3 : index
      %c0_35 = arith.constant 0 : index
      %c0_36 = arith.constant 0 : index
      %c0_37 = arith.constant 0 : index
      %41 = vector.load %arg5[%c3_34, %c0_35, %c0_36, %c0_37] : memref<4x9x4x4xf32, #tpu.memory_space<vmem>>, vector<1x1x4x4xf32>
      %42 = vector.shape_cast %41 : vector<1x1x4x4xf32> to vector<4x4xf32>
      %cst_38 = arith.constant dense<0.000000e+00> : vector<4x512xf32>
      %43 = tpu.matmul %42, %40, %cst_38 {dimension_numbers = #tpu.dot_dimension_numbers<[1], [0], [0], [1], [0, 0, 1, 1], [], []>} : vector<4x4xf32>, vector<4x512xf32>, vector<4x512xf32> -> vector<4x512xf32>
      %c16_i32 = arith.constant 16 : i32
      %44 = tpu.dynamic_rotate %37 by %c16_i32 dim 1 : vector<4x512xf32>, i32 -> vector<4x512xf32>
      %45 = vector.broadcast %5 : vector<1x512xf32> to vector<4x512xf32>
      %46 = arith.mulf %44, %45 : vector<4x512xf32>
      %c3_39 = arith.constant 3 : index
      %c1_40 = arith.constant 1 : index
      %c0_41 = arith.constant 0 : index
      %c0_42 = arith.constant 0 : index
      %47 = vector.load %arg5[%c3_39, %c1_40, %c0_41, %c0_42] : memref<4x9x4x4xf32, #tpu.memory_space<vmem>>, vector<1x1x4x4xf32>
      %48 = vector.shape_cast %47 : vector<1x1x4x4xf32> to vector<4x4xf32>
      %cst_43 = arith.constant dense<0.000000e+00> : vector<4x512xf32>
      %49 = tpu.matmul %48, %46, %cst_43 {dimension_numbers = #tpu.dot_dimension_numbers<[1], [0], [0], [1], [0, 0, 1, 1], [], []>} : vector<4x4xf32>, vector<4x512xf32>, vector<4x512xf32> -> vector<4x512xf32>
      %50 = arith.addf %43, %49 : vector<4x512xf32>
      %c15_i32 = arith.constant 15 : i32
      %51 = tpu.dynamic_rotate %37 by %c15_i32 dim 1 : vector<4x512xf32>, i32 -> vector<4x512xf32>
      %52 = vector.broadcast %6 : vector<1x512xf32> to vector<4x512xf32>
      %53 = arith.mulf %51, %52 : vector<4x512xf32>
      %c3_44 = arith.constant 3 : index
      %c2_45 = arith.constant 2 : index
      %c0_46 = arith.constant 0 : index
      %c0_47 = arith.constant 0 : index
      %54 = vector.load %arg5[%c3_44, %c2_45, %c0_46, %c0_47] : memref<4x9x4x4xf32, #tpu.memory_space<vmem>>, vector<1x1x4x4xf32>
      %55 = vector.shape_cast %54 : vector<1x1x4x4xf32> to vector<4x4xf32>
      %cst_48 = arith.constant dense<0.000000e+00> : vector<4x512xf32>
      %56 = tpu.matmul %55, %53, %cst_48 {dimension_numbers = #tpu.dot_dimension_numbers<[1], [0], [0], [1], [0, 0, 1, 1], [], []>} : vector<4x4xf32>, vector<4x512xf32>, vector<4x512xf32> -> vector<4x512xf32>
      %57 = arith.addf %50, %56 : vector<4x512xf32>
      %c1_i32_49 = arith.constant 1 : i32
      %58 = tpu.dynamic_rotate %37 by %c1_i32_49 dim 1 : vector<4x512xf32>, i32 -> vector<4x512xf32>
      %59 = vector.broadcast %7 : vector<1x512xf32> to vector<4x512xf32>
      %60 = arith.mulf %58, %59 : vector<4x512xf32>
      %c3_50 = arith.constant 3 : index
      %c3_51 = arith.constant 3 : index
      %c0_52 = arith.constant 0 : index
      %c0_53 = arith.constant 0 : index
      %61 = vector.load %arg5[%c3_50, %c3_51, %c0_52, %c0_53] : memref<4x9x4x4xf32, #tpu.memory_space<vmem>>, vector<1x1x4x4xf32>
      %62 = vector.shape_cast %61 : vector<1x1x4x4xf32> to vector<4x4xf32>
      %cst_54 = arith.constant dense<0.000000e+00> : vector<4x512xf32>
      %63 = tpu.matmul %62, %60, %cst_54 {dimension_numbers = #tpu.dot_dimension_numbers<[1], [0], [0], [1], [0, 0, 1, 1], [], []>} : vector<4x4xf32>, vector<4x512xf32>, vector<4x512xf32> -> vector<4x512xf32>
      %64 = arith.addf %57, %63 : vector<4x512xf32>
      %c3_55 = arith.constant 3 : index
      %c4 = arith.constant 4 : index
      %c0_56 = arith.constant 0 : index
      %c0_57 = arith.constant 0 : index
      %65 = vector.load %arg5[%c3_55, %c4, %c0_56, %c0_57] : memref<4x9x4x4xf32, #tpu.memory_space<vmem>>, vector<1x1x4x4xf32>
      %66 = vector.shape_cast %65 : vector<1x1x4x4xf32> to vector<4x4xf32>
      %cst_58 = arith.constant dense<0.000000e+00> : vector<4x512xf32>
      %67 = tpu.matmul %66, %37, %cst_58 {dimension_numbers = #tpu.dot_dimension_numbers<[1], [0], [0], [1], [0, 0, 1, 1], [], []>} : vector<4x4xf32>, vector<4x512xf32>, vector<4x512xf32> -> vector<4x512xf32>
      %68 = arith.addf %64, %67 : vector<4x512xf32>
      %c511_i32 = arith.constant 511 : i32
      %69 = tpu.dynamic_rotate %37 by %c511_i32 dim 1 : vector<4x512xf32>, i32 -> vector<4x512xf32>
      %70 = vector.broadcast %8 : vector<1x512xf32> to vector<4x512xf32>
      %71 = arith.mulf %69, %70 : vector<4x512xf32>
      %c3_59 = arith.constant 3 : index
      %c5_60 = arith.constant 5 : index
      %c0_61 = arith.constant 0 : index
      %c0_62 = arith.constant 0 : index
      %72 = vector.load %arg5[%c3_59, %c5_60, %c0_61, %c0_62] : memref<4x9x4x4xf32, #tpu.memory_space<vmem>>, vector<1x1x4x4xf32>
      %73 = vector.shape_cast %72 : vector<1x1x4x4xf32> to vector<4x4xf32>
      %cst_63 = arith.constant dense<0.000000e+00> : vector<4x512xf32>
      %74 = tpu.matmul %73, %71, %cst_63 {dimension_numbers = #tpu.dot_dimension_numbers<[1], [0], [0], [1], [0, 0, 1, 1], [], []>} : vector<4x4xf32>, vector<4x512xf32>, vector<4x512xf32> -> vector<4x512xf32>
      %75 = arith.addf %68, %74 : vector<4x512xf32>
      %c497_i32 = arith.constant 497 : i32
      %76 = tpu.dynamic_rotate %37 by %c497_i32 dim 1 : vector<4x512xf32>, i32 -> vector<4x512xf32>
      %77 = vector.broadcast %9 : vector<1x512xf32> to vector<4x512xf32>
      %78 = arith.mulf %76, %77 : vector<4x512xf32>
      %c3_64 = arith.constant 3 : index
      %c6_65 = arith.constant 6 : index
      %c0_66 = arith.constant 0 : index
      %c0_67 = arith.constant 0 : index
      %79 = vector.load %arg5[%c3_64, %c6_65, %c0_66, %c0_67] : memref<4x9x4x4xf32, #tpu.memory_space<vmem>>, vector<1x1x4x4xf32>
      %80 = vector.shape_cast %79 : vector<1x1x4x4xf32> to vector<4x4xf32>
      %cst_68 = arith.constant dense<0.000000e+00> : vector<4x512xf32>
      %81 = tpu.matmul %80, %78, %cst_68 {dimension_numbers = #tpu.dot_dimension_numbers<[1], [0], [0], [1], [0, 0, 1, 1], [], []>} : vector<4x4xf32>, vector<4x512xf32>, vector<4x512xf32> -> vector<4x512xf32>
      %82 = arith.addf %75, %81 : vector<4x512xf32>
      %c496_i32 = arith.constant 496 : i32
      %83 = tpu.dynamic_rotate %37 by %c496_i32 dim 1 : vector<4x512xf32>, i32 -> vector<4x512xf32>
      %84 = vector.broadcast %10 : vector<1x512xf32> to vector<4x512xf32>
      %85 = arith.mulf %83, %84 : vector<4x512xf32>
      %c3_69 = arith.constant 3 : index
      %c7_70 = arith.constant 7 : index
      %c0_71 = arith.constant 0 : index
      %c0_72 = arith.constant 0 : index
      %86 = vector.load %arg5[%c3_69, %c7_70, %c0_71, %c0_72] : memref<4x9x4x4xf32, #tpu.memory_space<vmem>>, vector<1x1x4x4xf32>
      %87 = vector.shape_cast %86 : vector<1x1x4x4xf32> to vector<4x4xf32>
      %cst_73 = arith.constant dense<0.000000e+00> : vector<4x512xf32>
      %88 = tpu.matmul %87, %85, %cst_73 {dimension_numbers = #tpu.dot_dimension_numbers<[1], [0], [0], [1], [0, 0, 1, 1], [], []>} : vector<4x4xf32>, vector<4x512xf32>, vector<4x512xf32> -> vector<4x512xf32>
      %89 = arith.addf %82, %88 : vector<4x512xf32>
      %c495_i32 = arith.constant 495 : i32
      %90 = tpu.dynamic_rotate %37 by %c495_i32 dim 1 : vector<4x512xf32>, i32 -> vector<4x512xf32>
      %91 = vector.broadcast %11 : vector<1x512xf32> to vector<4x512xf32>
      %92 = arith.mulf %90, %91 : vector<4x512xf32>
      %c3_74 = arith.constant 3 : index
      %c8_75 = arith.constant 8 : index
      %c0_76 = arith.constant 0 : index
      %c0_77 = arith.constant 0 : index
      %93 = vector.load %arg5[%c3_74, %c8_75, %c0_76, %c0_77] : memref<4x9x4x4xf32, #tpu.memory_space<vmem>>, vector<1x1x4x4xf32>
      %94 = vector.shape_cast %93 : vector<1x1x4x4xf32> to vector<4x4xf32>
      %cst_78 = arith.constant dense<0.000000e+00> : vector<4x512xf32>
      %95 = tpu.matmul %94, %92, %cst_78 {dimension_numbers = #tpu.dot_dimension_numbers<[1], [0], [0], [1], [0, 0, 1, 1], [], []>} : vector<4x4xf32>, vector<4x512xf32>, vector<4x512xf32> -> vector<4x512xf32>
      %96 = arith.addf %89, %95 : vector<4x512xf32>
      %c3_79 = arith.constant 3 : index
      %c0_80 = arith.constant 0 : index
      %c0_81 = arith.constant 0 : index
      %97 = vector.load %arg6[%c3_79, %c0_80, %c0_81] : memref<4x4x1xf32, #tpu.memory_space<vmem>>, vector<1x4x1xf32>
      %98 = vector.shape_cast %97 : vector<1x4x1xf32> to vector<4x1xf32>
      %99 = vector.broadcast %98 : vector<4x1xf32> to vector<4x512xf32>
      %100 = arith.addf %96, %99 : vector<4x512xf32>
      %cst_82 = arith.constant 0.000000e+00 : f32
      %101 = vector.broadcast %cst_82 : f32 to vector<4x512xf32>
      %102 = arith.maximumf %100, %101 : vector<4x512xf32>
      %c0_83 = arith.constant 0 : index
      %c0_84 = arith.constant 0 : index
      %103 = vector.load %arg10[%c0_83, %c0_84] : memref<4x512xf32, #tpu.memory_space<vmem>>, vector<4x512xf32>
      tpu.vector_store %arg10[%c0_83, %c0_84], %102 {strides = array<i32>} : memref<4x512xf32, #tpu.memory_space<vmem>>, vector<4x512xf32>,
    } else {
    }
    %c0_18 = arith.constant 0 : index
    %c0_19 = arith.constant 0 : index
    %24 = vector.load %arg10[%c0_18, %c0_19] : memref<4x512xf32, #tpu.memory_space<vmem>>, vector<4x512xf32>
    %c0_20 = arith.constant 0 : index
    %c0_21 = arith.constant 0 : index
    %25 = vector.load %arg4[%c0_20, %c0_21] : memref<2x512xf32, #tpu.memory_space<vmem>>, vector<2x512xf32>
    %cst = arith.constant dense<0.000000e+00> : vector<4x2xf32>
    %26 = tpu.matmul %24, %25, %cst {dimension_numbers = #tpu.dot_dimension_numbers<[1], [1], [0], [0], [0, 0, 1, 0], [], []>} : vector<4x512xf32>, vector<2x512xf32>, vector<4x2xf32> -> vector<4x2xf32>
    %c0_22 = arith.constant 0 : index
    %c0_23 = arith.constant 0 : index
    %c0_24 = arith.constant 0 : index
    %27 = vector.load %arg7[%c0_22, %c0_23, %c0_24] : memref<1x10x4xf32, #tpu.memory_space<vmem>>, vector<1x10x4xf32>
    %28 = vector.shape_cast %27 : vector<1x10x4xf32> to vector<10x4xf32>
    %cst_25 = arith.constant dense<0.000000e+00> : vector<10x2xf32>
    %29 = tpu.matmul %28, %26, %cst_25 {dimension_numbers = #tpu.dot_dimension_numbers<[1], [0], [0], [1], [0, 0, 1, 1], [], []>} : vector<10x4xf32>, vector<4x2xf32>, vector<10x2xf32> -> vector<10x2xf32>
    %c0_26 = arith.constant 0 : index
    %c0_27 = arith.constant 0 : index
    %c0_28 = arith.constant 0 : index
    %30 = vector.load %arg8[%c0_26, %c0_27, %c0_28] : memref<1x10x1xf32, #tpu.memory_space<vmem>>, vector<1x10x1xf32>
    %31 = vector.shape_cast %30 : vector<1x10x1xf32> to vector<10x1xf32>
    %32 = vector.broadcast %31 : vector<10x1xf32> to vector<10x2xf32>
    %33 = arith.addf %29, %32 : vector<10x2xf32>
    %c0_29 = arith.constant 0 : index
    %c0_30 = arith.constant 0 : index
    %c0_31 = arith.constant 0 : index
    %34 = vector.load %arg9[%c0_29, %c0_30, %c0_31] : memref<1x10x2xf32, #tpu.memory_space<vmem>>, vector<1x10x2xf32>
    %35 = vector.shape_cast %34 : vector<1x10x2xf32> to vector<10x2xf32>
    %36 = vector.shape_cast %33 : vector<10x2xf32> to vector<1x10x2xf32>
    tpu.vector_store %arg9[%c0_29, %c0_30, %c0_31], %36 {strides = array<i32>} : memref<1x10x2xf32, #tpu.memory_space<vmem>>, vector<1x10x2xf32>,
    return
  }
  func.func @transform_0(%arg0: i32, %arg1: memref<1xi32, #tpu.memory_space<smem>>) -> (i32, i32, i32) {
    %c0_i32 = arith.constant 0 : i32
    %c0_i32_0 = arith.constant 0 : i32
    %c0_i32_1 = arith.constant 0 : i32
    return %arg0, %c0_i32, %c0_i32_0 : i32, i32, i32
  }
  func.func @transform_1(%arg0: i32, %arg1: memref<1xi32, #tpu.memory_space<smem>>) -> (i32, i32) {
    %c0_i32 = arith.constant 0 : i32
    %c0_i32_0 = arith.constant 0 : i32
    %c0_i32_1 = arith.constant 0 : i32
    return %c0_i32, %c0_i32_0 : i32, i32
  }
  func.func @transform_2(%arg0: i32, %arg1: memref<1xi32, #tpu.memory_space<smem>>) -> (i32, i32) {
    %c0_i32 = arith.constant 0 : i32
    %c0_i32_0 = arith.constant 0 : i32
    %c0_i32_1 = arith.constant 0 : i32
    return %c0_i32, %c0_i32_0 : i32, i32
  }
  func.func @transform_3(%arg0: i32, %arg1: memref<1xi32, #tpu.memory_space<smem>>) -> (i32, i32, i32, i32) {
    %c0_i32 = arith.constant 0 : i32
    %c0_i32_0 = arith.constant 0 : i32
    %c0_i32_1 = arith.constant 0 : i32
    %c0_i32_2 = arith.constant 0 : i32
    %c0_i32_3 = arith.constant 0 : i32
    return %c0_i32, %c0_i32_0, %c0_i32_1, %c0_i32_2 : i32, i32, i32, i32
  }
  func.func @transform_4(%arg0: i32, %arg1: memref<1xi32, #tpu.memory_space<smem>>) -> (i32, i32, i32) {
    %c0_i32 = arith.constant 0 : i32
    %c0_i32_0 = arith.constant 0 : i32
    %c0_i32_1 = arith.constant 0 : i32
    %c0_i32_2 = arith.constant 0 : i32
    return %c0_i32, %c0_i32_0, %c0_i32_1 : i32, i32, i32
  }
  func.func @transform_5(%arg0: i32, %arg1: memref<1xi32, #tpu.memory_space<smem>>) -> (i32, i32, i32) {
    %c0 = arith.constant 0 : index
    %0 = memref.load %arg1[%c0] : memref<1xi32, #tpu.memory_space<smem>>
    %c0_i32 = arith.constant 0 : i32
    %c0_i32_0 = arith.constant 0 : i32
    %c0_i32_1 = arith.constant 0 : i32
    return %0, %c0_i32, %c0_i32_0 : i32, i32, i32
  }
  func.func @transform_6(%arg0: i32, %arg1: memref<1xi32, #tpu.memory_space<smem>>) -> (i32, i32, i32) {
    %c0 = arith.constant 0 : index
    %0 = memref.load %arg1[%c0] : memref<1xi32, #tpu.memory_space<smem>>
    %c0_i32 = arith.constant 0 : i32
    %c0_i32_0 = arith.constant 0 : i32
    %c0_i32_1 = arith.constant 0 : i32
    return %0, %c0_i32, %c0_i32_0 : i32, i32, i32
  }
  func.func @transform_7(%arg0: i32, %arg1: memref<1xi32, #tpu.memory_space<smem>>) -> (i32, i32, i32) {
    %c0_i32 = arith.constant 0 : i32
    %c0_i32_0 = arith.constant 0 : i32
    %c0_i32_1 = arith.constant 0 : i32
    return %arg0, %c0_i32, %c0_i32_0 : i32, i32, i32
  }
}

</mosaic_0001>

<llo_original>
// kernel: _fused_forward.1
$region0: #{_fused_forward.1}
  #allocation0 [shape = 'u32[]', space=smem, size = 0x4, offset = 0x4, fixed_abs, tag = 'smem constant byte address 0x4 - core index']
  #allocation1 [shape = 'u32[144,128]{1,0:T(1,128)}', space=vmem, size = 0x12000, scoped, tag = 'internal scratch']
  #allocation2 [shape = 'f32[4,512]{1,0:T(4,128)}', space=vmem, size = 0x2000, scoped, tag = 'scratch operand']
  #allocation3 [shape = 's32[1]{0}', space=sflag, size = 0x4, scoped, tag = 'scoped memory for _fused_forward.1']
  #allocation4 [shape = 's32[1]{0:T(128)S(6)}', space=smem, size = 0x200, scoped, tag = 'prefetched SMEM operand 0']
  %s0 = inlined_call_operand.<no memory space> [shape: s32[1], index: 0, kind: input, shape index: {}]
  %s1 = inlined_call_operand.vmem [shape: f32[1,4,512], index: 1, kind: input, shape index: {}]
  %s2 = inlined_call_operand.vmem [shape: f32[9,512], index: 2, kind: input, shape index: {}]
  %s3 = inlined_call_operand.vmem [shape: f32[2,512], index: 3, kind: input, shape index: {}]
  %s4 = inlined_call_operand.vmem [shape: f32[4,9,4,4], index: 4, kind: input, shape index: {}]
  %s5 = inlined_call_operand.vmem [shape: f32[4,4,1], index: 5, kind: input, shape index: {}]
  %s6 = inlined_call_operand.vmem [shape: f32[4,10,4], index: 6, kind: input, shape index: {}]
  %s7 = inlined_call_operand.vmem [shape: f32[4,10,1], index: 7, kind: input, shape index: {}]
  %s8 = inlined_call_operand.vmem [shape: f32[1,10,2], index: 8, kind: output, shape index: {}]
  %s9 = sld [smem:[#allocation0]]
  $region54: #{_fused_forward.1} parent=0
    _
  %s11 = ssub.s32 1, %s9
  %s12 = scalar_select 0, %s11, %s9
  %13 = sst [smem:[#allocation4]] %s0
  // Predicated region
  $region2: #{_fused_forward.1} parent=0 // pred_check
    _
  $region3: #{_fused_forward.1} parent=0 // pred_check_branch
    %15 = sbr.rel (0) target = $region5
  $region4: #{_fused_forward.1} parent=0 // pred_region
    _
  $region5: #{_fused_forward.1} parent=0 // pred_fallthru
    _
  // Predicated region
  $region6: #{_fused_forward.1} parent=0 // pred_check
    _
  $region7: #{_fused_forward.1} parent=0 // pred_check_branch
    %17 = sbr.rel (0) target = $region9
  $region8: #{_fused_forward.1} parent=0 // pred_region
    _
  $region9: #{_fused_forward.1} parent=0 // pred_fallthru
    _
  // Predicated region
  $region10: #{_fused_forward.1} parent=0 // pred_check
    _
  $region11: #{_fused_forward.1} parent=0 // pred_check_branch
    %19 = sbr.rel (0) target = $region13
  $region12: #{_fused_forward.1} parent=0 // pred_region
    _
  $region13: #{_fused_forward.1} parent=0 // pred_fallthru
    _
  // Predicated region
  $region14: #{_fused_forward.1} parent=0 // pred_check
    _
  $region15: #{_fused_forward.1} parent=0 // pred_check_branch
    %21 = sbr.rel (0) target = $region17
  $region16: #{_fused_forward.1} parent=0 // pred_region
    _
  $region17: #{_fused_forward.1} parent=0 // pred_fallthru
    _
  // Predicated region
  $region18: #{_fused_forward.1} parent=0 // pred_check
    _
  $region19: #{_fused_forward.1} parent=0 // pred_check_branch
    %23 = sbr.rel (0) target = $region21
  $region20: #{_fused_forward.1} parent=0 // pred_region
    _
  $region21: #{_fused_forward.1} parent=0 // pred_fallthru
    _
  // Predicated region
  $region22: #{_fused_forward.1} parent=0 // pred_check
    _
  $region23: #{_fused_forward.1} parent=0 // pred_check_branch
    %25 = sbr.rel (0) target = $region25
  $region24: #{_fused_forward.1} parent=0 // pred_region
    %s26 = sld [smem:[#allocation4]]
    %p27 = scmp.lt.s32.totalorder %s26, 3
    %s28 = scalar_select %p27, %s26, 3
    %s29 = smul.addr %s28, 2
    %s30 = smul.addr %s29, 8
    %s31 = scalar_lea.vmem %s6, %s30
    %s32 = sld [smem:[#allocation4]]
  $region25: #{_fused_forward.1} parent=0 // pred_fallthru
    _
  // Predicated region
  $region26: #{_fused_forward.1} parent=0 // pred_check
    _
  $region27: #{_fused_forward.1} parent=0 // pred_check_branch
    %34 = sbr.rel (0) target = $region29
  $region28: #{_fused_forward.1} parent=0 // pred_region
    %s35 = sld [smem:[#allocation4]]
    %p36 = scmp.lt.s32.totalorder %s35, 3
    %s37 = scalar_select %p36, %s35, 3
    %s38 = smul.addr %s37, 2
    %s39 = smul.addr %s38, 8
    %s40 = scalar_lea.vmem %s7, %s39
    %s41 = sld [smem:[#allocation4]]
  $region29: #{_fused_forward.1} parent=0 // pred_fallthru
    _
  %s42 = sld [smem:[#allocation4]]
  %p43 = scmp.lt.s32.totalorder %s42, 3
  %s44 = scalar_select %p43, %s42, 3
  %s45 = smul.addr %s44, 2
  %s46 = smul.addr %s45, 8
  %s47 = scalar_lea.vmem %s6, %s46
  %s48 = sld [smem:[#allocation4]]
  %p49 = scmp.lt.s32.totalorder %s48, 3
  %s50 = scalar_select %p49, %s48, 3
  %s51 = smul.addr %s50, 2
  %s52 = smul.addr %s51, 8
  %s53 = scalar_lea.vmem %s7, %s52
  %s54 = sld [smem:[#allocation4]]
  %p55 = scmp.lt.s32.totalorder %s54, 3
  %s56 = scalar_select %p55, %s54, 3
  %s57 = smul.addr %s56, 2
  %s58 = smul.addr %s57, 8
  %s59 = scalar_lea.vmem %s6, %s58
  %s60 = sld [smem:[#allocation4]]
  %s61 = sld [smem:[#allocation4]]
  %p62 = scmp.lt.s32.totalorder %s61, 3
  %s63 = scalar_select %p62, %s61, 3
  %s64 = smul.addr %s63, 2
  %s65 = smul.addr %s64, 8
  %s66 = scalar_lea.vmem %s7, %s65
  %s67 = sld [smem:[#allocation4]]
  %s68 = sld [smem:[#allocation4]]
  %v69 = vld [vmem:[%s1] sm:$0xff]
  %v70 = vld [vmem:[%s1 + $0x8] sm:$0xff]
  %71 = vst [vmem:[#allocation2] sm:$0xff] %v69
  %72 = vst [vmem:[#allocation2 + $0x8] sm:$0xff] %v70
  %v73 = vld [vmem:[%s2] ss:$8 sm:$0xf]
  %s74 = scalar_lea.vmem %s2, 1
  %v75 = vld [vmem:[%s74] ss:$8 sm:$0xf]
  %s76 = scalar_lea.vmem %s2, 2
  %v77 = vld [vmem:[%s76] ss:$8 sm:$0xf]
  %s78 = scalar_lea.vmem %s2, 3
  %v79 = vld [vmem:[%s78] ss:$8 sm:$0xf]
  %s80 = scalar_lea.vmem %s2, 5
  %v81 = vld [vmem:[%s80] ss:$8 sm:$0xf]
  %s82 = scalar_lea.vmem %s2, 6
  %v83 = vld [vmem:[%s82] ss:$8 sm:$0xf]
  %s84 = scalar_lea.vmem %s2, 7
  %v85 = vld [vmem:[%s84] ss:$8 sm:$0xf]
  %s86 = scalar_lea.vmem %s2, 32
  %v87 = vld [vmem:[%s86] ss:$8 sm:$0xf]
  %p88 = scmp.ge.s32.totalorder %s68, 0
  // Predicated region
  $region30: #{_fused_forward.1} parent=0 // pred_check
    %p89 = pneg %p88
  $region31: #{_fused_forward.1} parent=0 // pred_check_branch
    %91 = sbr.rel (%p89) target = $region33
  $region32: #{_fused_forward.1} parent=0 // pred_region
    %v92 = vld [vmem:[#allocation2] sm:$0xff]
    %v93 = vld [vmem:[#allocation2 + $0x8] sm:$0xff]
    %v96 = vcombine.high %v92, %v92
    %v97 = vcombine.high %v93, %v93
    %100 = vrot.lane.b32.xlu0 %v92, 17
    %v101 = vpop.permute.xlu0 %100
    %102 = vrot.lane.b32.xlu0 %v96, 17
    %v103 = vpop.permute.xlu0 %102
    %104 = vrot.lane.b32.xlu0 %v93, 17
    %v105 = vpop.permute.xlu0 %104
    %106 = vrot.lane.b32.xlu0 %v97, 17
    %v107 = vpop.permute.xlu0 %106
    %v108 = vlaneseq
    %v109 = vand.u32 %v108, 127
    %vm110 = vcmp.lt.s32.totalorder %v109, 17
    %v111 = vsel %vm110, %v105, %v107
    %v112 = vsel %vm110, %v103, %v105
    %v113 = vsel %vm110, %v101, %v103
    %v114 = vsel %vm110, %v107, %v101
    %v116 = vlaneseq
    %v117 = vshrl.u32 %v116, 7
    %v118 = vsub.s32 0, %v117
    %v119 = vrot.slane %v73, %v118
    %v120 = vlaneseq
    %v121 = vshrl.u32 %v120, 7
    %v122 = vsub.s32 1, %v121
    %v123 = vrot.slane %v73, %v122
    %v124 = vlaneseq
    %v125 = vshrl.u32 %v124, 7
    %v126 = vsub.s32 2, %v125
    %v127 = vrot.slane %v73, %v126
    %v128 = vlaneseq
    %v129 = vshrl.u32 %v128, 7
    %v130 = vsub.s32 3, %v129
    %v131 = vrot.slane %v73, %v130
    %v136 = vmul.f32 %v114, %v119
    %v137 = vmul.f32 %v113, %v123
    %v138 = vmul.f32 %v112, %v127
    %v139 = vmul.f32 %v111, %v131
    %v140 = vld [vmem:[%s4] sm:$0xf]
    %141 = vrot.lane.b32.xlu0 %v92, 16
    %v142 = vpop.permute.xlu0 %141
    %143 = vrot.lane.b32.xlu0 %v96, 16
    %v144 = vpop.permute.xlu0 %143
    %145 = vrot.lane.b32.xlu0 %v93, 16
    %v146 = vpop.permute.xlu0 %145
    %147 = vrot.lane.b32.xlu0 %v97, 16
    %v148 = vpop.permute.xlu0 %147
    %vm149 = vcmp.lt.s32.totalorder %v109, 16
    %v150 = vsel %vm149, %v146, %v148
    %v151 = vsel %vm149, %v144, %v146
    %v152 = vsel %vm149, %v142, %v144
    %v153 = vsel %vm149, %v148, %v142
    %v155 = vlaneseq
    %v156 = vshrl.u32 %v155, 7
    %v157 = vsub.s32 0, %v156
    %v158 = vrot.slane %v75, %v157
    %v159 = vlaneseq
    %v160 = vshrl.u32 %v159, 7
    %v161 = vsub.s32 1, %v160
    %v162 = vrot.slane %v75, %v161
    %v163 = vlaneseq
    %v164 = vshrl.u32 %v163, 7
    %v165 = vsub.s32 2, %v164
    %v166 = vrot.slane %v75, %v165
    %v167 = vlaneseq
    %v168 = vshrl.u32 %v167, 7
    %v169 = vsub.s32 3, %v168
    %v170 = vrot.slane %v75, %v169
    %v175 = vmul.f32 %v153, %v158
    %v176 = vmul.f32 %v152, %v162
    %v177 = vmul.f32 %v151, %v166
    %v178 = vmul.f32 %v150, %v170
    %s179 = scalar_lea.vmem %s4, 4
    %v180 = vld [vmem:[%s179] sm:$0xf]
    %vm181 = vcmask 31744
    %v183 = vsel %vm181, %v180, 0
    %vm185 = vcmask 1043456
    %v187 = vsel %vm185, %v175, 0
    %v190 = vsel %vm185, %v176, 0
    %v193 = vsel %vm185, %v177, 0
    %v196 = vsel %vm185, %v178, 0
    %198 = vmatprep.subr.mxu0 %v190
    %199 = vmatpush1.msra.mxu0 %v187
    %200 = vmatprep.subr.mxu0 0.0
    %201 = vmatpush1.msra.mxu0 0.0
    %202 = vmatprep.subr.mxu0 0.0
    %203 = vmatpush1.msra.mxu0 0.0
    %204 = vmatprep.subr.mxu0 0.0
    %205 = vmatpush1.msra.mxu0 0.0
    %206 = vmatprep.subr.mxu0 0.0
    %207 = vmatpush1.msra.mxu0 0.0
    %208 = vmatprep.subr.mxu0 0.0
    %209 = vmatpush1.msra.mxu0 0.0
    %210 = vmatprep.subr.mxu0 0.0
    %211 = vmatpush1.msra.mxu0 0.0
    %212 = vmatprep.subr.mxu0 0.0
    %213 = vmatpush1.msra.mxu0 0.0
    %214 = vmatprep.subr.mxu0 0.0
    %215 = vmatpush1.msra.mxu0 0.0
    %216 = vmatprep.subr.mxu0 0.0
    %217 = vmatpush1.msra.mxu0 0.0
    %218 = vmatprep.subr.mxu0 0.0
    %219 = vmatpush1.msra.mxu0 0.0
    %220 = vmatprep.subr.mxu0 0.0
    %221 = vmatpush1.msra.mxu0 0.0
    %222 = vmatprep.subr.mxu0 0.0
    %223 = vmatpush1.msra.mxu0 0.0
    %224 = vmatprep.subr.mxu0 0.0
    %225 = vmatpush1.msra.mxu0 0.0
    %226 = vmatprep.subr.mxu0 0.0
    %227 = vmatpush1.msra.mxu0 0.0
    %228 = vmatprep.subr.mxu0 0.0
    %229 = vmatpush1.msra.mxu0 0.0
    %230 = vmatprep.subr.mxu0 0.0
    %231 = vmatpush1.msra.mxu0 0.0
    %232 = vmatprep.subr.mxu0 0.0
    %233 = vmatpush1.msra.mxu0 0.0
    %234 = vmatprep.subr.mxu0 0.0
    %235 = vmatpush1.msra.mxu0 0.0
    %236 = vmatprep.subr.mxu0 0.0
    %237 = vmatpush1.msra.mxu0 0.0
    %238 = vmatprep.subr.mxu0 0.0
    %239 = vmatpush1.msra.mxu0 0.0
    %240 = vmatprep.subr.mxu0 0.0
    %241 = vmatpush1.msra.mxu0 0.0
    %242 = vmatprep.subr.mxu0 0.0
    %243 = vmatpush1.msra.mxu0 0.0
    %244 = vmatprep.subr.mxu0 0.0
    %245 = vmatpush1.msra.mxu0 0.0
    %246 = vmatprep.subr.mxu0 0.0
    %247 = vmatpush1.msra.mxu0 0.0
    %248 = vmatprep.subr.mxu0 0.0
    %249 = vmatpush1.msra.mxu0 0.0
    %250 = vmatprep.subr.mxu0 0.0
    %251 = vmatpush1.msra.mxu0 0.0
    %252 = vmatprep.subr.mxu0 0.0
    %253 = vmatpush1.msra.mxu0 0.0
    %254 = vmatprep.subr.mxu0 0.0
    %255 = vmatpush1.msra.mxu0 0.0
    %256 = vmatprep.subr.mxu0 0.0
    %257 = vmatpush1.msra.mxu0 0.0
    %258 = vmatprep.subr.mxu0 0.0
    %259 = vmatpush1.msra.mxu0 0.0
    %260 = vmatprep.subr.mxu0 0.0
    %261 = vmatpush1.msra.mxu0 0.0
    %262 = vmatprep.mubr.f32.mxu0 0.0
    %263 = vmatmul.mubr.f32.gmra.mrb[0].mxu0 %v183
    %v264 = vpop.f32.mrb[0].mxu0
    %v265 = vadd.f32 0.0, %v264
    %v266 = vpop.f32.mrb[0].mxu0
    %v267 = vadd.f32 0.0, %v266
    %268 = vdwg.mxu0
    %269 = vmatprep.subr.mxu0 %v196
    %270 = vmatpush1.msra.mxu0 %v193
    %271 = vmatprep.subr.mxu0 0.0
    %272 = vmatpush1.msra.mxu0 0.0
    %273 = vmatprep.subr.mxu0 0.0
    %274 = vmatpush1.msra.mxu0 0.0
    %275 = vmatprep.subr.mxu0 0.0
    %276 = vmatpush1.msra.mxu0 0.0
    %277 = vmatprep.subr.mxu0 0.0
    %278 = vmatpush1.msra.mxu0 0.0
    %279 = vmatprep.subr.mxu0 0.0
    %280 = vmatpush1.msra.mxu0 0.0
    %281 = vmatprep.subr.mxu0 0.0
    %282 = vmatpush1.msra.mxu0 0.0
    %283 = vmatprep.subr.mxu0 0.0
    %284 = vmatpush1.msra.mxu0 0.0
    %285 = vmatprep.subr.mxu0 0.0
    %286 = vmatpush1.msra.mxu0 0.0
    %287 = vmatprep.subr.mxu0 0.0
    %288 = vmatpush1.msra.mxu0 0.0
    %289 = vmatprep.subr.mxu0 0.0
    %290 = vmatpush1.msra.mxu0 0.0
    %291 = vmatprep.subr.mxu0 0.0
    %292 = vmatpush1.msra.mxu0 0.0
    %293 = vmatprep.subr.mxu0 0.0
    %294 = vmatpush1.msra.mxu0 0.0
    %295 = vmatprep.subr.mxu0 0.0
    %296 = vmatpush1.msra.mxu0 0.0
    %297 = vmatprep.subr.mxu0 0.0
    %298 = vmatpush1.msra.mxu0 0.0
    %299 = vmatprep.subr.mxu0 0.0
    %300 = vmatpush1.msra.mxu0 0.0
    %301 = vmatprep.subr.mxu0 0.0
    %302 = vmatpush1.msra.mxu0 0.0
    %303 = vmatprep.subr.mxu0 0.0
    %304 = vmatpush1.msra.mxu0 0.0
    %305 = vmatprep.subr.mxu0 0.0
    %306 = vmatpush1.msra.mxu0 0.0
    %307 = vmatprep.subr.mxu0 0.0
    %308 = vmatpush1.msra.mxu0 0.0
    %309 = vmatprep.subr.mxu0 0.0
    %310 = vmatpush1.msra.mxu0 0.0
    %311 = vmatprep.subr.mxu0 0.0
    %312 = vmatpush1.msra.mxu0 0.0
    %313 = vmatprep.subr.mxu0 0.0
    %314 = vmatpush1.msra.mxu0 0.0
    %315 = vmatprep.subr.mxu0 0.0
    %316 = vmatpush1.msra.mxu0 0.0
    %317 = vmatprep.subr.mxu0 0.0
    %318 = vmatpush1.msra.mxu0 0.0
    %319 = vmatprep.subr.mxu0 0.0
    %320 = vmatpush1.msra.mxu0 0.0
    %321 = vmatprep.subr.mxu0 0.0
    %322 = vmatpush1.msra.mxu0 0.0
    %323 = vmatprep.subr.mxu0 0.0
    %324 = vmatpush1.msra.mxu0 0.0
    %325 = vmatprep.subr.mxu0 0.0
    %326 = vmatpush1.msra.mxu0 0.0
    %327 = vmatprep.subr.mxu0 0.0
    %328 = vmatpush1.msra.mxu0 0.0
    %329 = vmatprep.subr.mxu0 0.0
    %330 = vmatpush1.msra.mxu0 0.0
    %331 = vmatprep.subr.mxu0 0.0
    %332 = vmatpush1.msra.mxu0 0.0
    %333 = vmatprep.mubr.f32.mxu0 0.0
    %334 = vmatmul.mubr.f32.gmra.mrb[0].mxu0 %v183
    %v335 = vpop.f32.mrb[0].mxu0
    %v336 = vadd.f32 0.0, %v335
    %v337 = vpop.f32.mrb[0].mxu0
    %v338 = vadd.f32 0.0, %v337
    %339 = vdwg.mxu0
    %v341 = vsel %vm181, %v140, 0
    %v344 = vsel %vm185, %v136, 0
    %v347 = vsel %vm185, %v137, 0
    %v350 = vsel %vm185, %v138, 0
    %v353 = vsel %vm185, %v139, 0
    %355 = vmatprep.subr.mxu0 %v347
    %356 = vmatpush1.msra.mxu0 %v344
    %357 = vmatprep.subr.mxu0 0.0
    %358 = vmatpush1.msra.mxu0 0.0
    %359 = vmatprep.subr.mxu0 0.0
    %360 = vmatpush1.msra.mxu0 0.0
    %361 = vmatprep.subr.mxu0 0.0
    %362 = vmatpush1.msra.mxu0 0.0
    %363 = vmatprep.subr.mxu0 0.0
    %364 = vmatpush1.msra.mxu0 0.0
    %365 = vmatprep.subr.mxu0 0.0
    %366 = vmatpush1.msra.mxu0 0.0
    %367 = vmatprep.subr.mxu0 0.0
    %368 = vmatpush1.msra.mxu0 0.0
    %369 = vmatprep.subr.mxu0 0.0
    %370 = vmatpush1.msra.mxu0 0.0
    %371 = vmatprep.subr.mxu0 0.0
    %372 = vmatpush1.msra.mxu0 0.0
    %373 = vmatprep.subr.mxu0 0.0
    %374 = vmatpush1.msra.mxu0 0.0
    %375 = vmatprep.subr.mxu0 0.0
    %376 = vmatpush1.msra.mxu0 0.0
    %377 = vmatprep.subr.mxu0 0.0
    %378 = vmatpush1.msra.mxu0 0.0
    %379 = vmatprep.subr.mxu0 0.0
    %380 = vmatpush1.msra.mxu0 0.0
    %381 = vmatprep.subr.mxu0 0.0
    %382 = vmatpush1.msra.mxu0 0.0
    %383 = vmatprep.subr.mxu0 0.0
    %384 = vmatpush1.msra.mxu0 0.0
    %385 = vmatprep.subr.mxu0 0.0
    %386 = vmatpush1.msra.mxu0 0.0
    %387 = vmatprep.subr.mxu0 0.0
    %388 = vmatpush1.msra.mxu0 0.0
    %389 = vmatprep.subr.mxu0 0.0
    %390 = vmatpush1.msra.mxu0 0.0
    %391 = vmatprep.subr.mxu0 0.0
    %392 = vmatpush1.msra.mxu0 0.0
    %393 = vmatprep.subr.mxu0 0.0
    %394 = vmatpush1.msra.mxu0 0.0
    %395 = vmatprep.subr.mxu0 0.0
    %396 = vmatpush1.msra.mxu0 0.0
    %397 = vmatprep.subr.mxu0 0.0
    %398 = vmatpush1.msra.mxu0 0.0
    %399 = vmatprep.subr.mxu0 0.0
    %400 = vmatpush1.msra.mxu0 0.0
    %401 = vmatprep.subr.mxu0 0.0
    %402 = vmatpush1.msra.mxu0 0.0
    %403 = vmatprep.subr.mxu0 0.0
    %404 = vmatpush1.msra.mxu0 0.0
    %405 = vmatprep.subr.mxu0 0.0
    %406 = vmatpush1.msra.mxu0 0.0
    %407 = vmatprep.subr.mxu0 0.0
    %408 = vmatpush1.msra.mxu0 0.0
    %409 = vmatprep.subr.mxu0 0.0
    %410 = vmatpush1.msra.mxu0 0.0
    %411 = vmatprep.subr.mxu0 0.0
    %412 = vmatpush1.msra.mxu0 0.0
    %413 = vmatprep.subr.mxu0 0.0
    %414 = vmatpush1.msra.mxu0 0.0
    %415 = vmatprep.subr.mxu0 0.0
    %416 = vmatpush1.msra.mxu0 0.0
    %417 = vmatprep.subr.mxu0 0.0
    %418 = vmatpush1.msra.mxu0 0.0
    %419 = vmatprep.mubr.f32.mxu0 0.0
    %420 = vmatmul.mubr.f32.gmra.mrb[0].mxu0 %v341
    %v421 = vpop.f32.mrb[0].mxu0
    %v422 = vadd.f32 %v265, %v421
    %v423 = vpop.f32.mrb[0].mxu0
    %v424 = vadd.f32 %v267, %v423
    %425 = vdwg.mxu0
    %426 = vmatprep.subr.mxu0 %v353
    %427 = vmatpush1.msra.mxu0 %v350
    %428 = vmatprep.subr.mxu0 0.0
    %429 = vmatpush1.msra.mxu0 0.0
    %430 = vmatprep.subr.mxu0 0.0
    %431 = vmatpush1.msra.mxu0 0.0
    %432 = vmatprep.subr.mxu0 0.0
    %433 = vmatpush1.msra.mxu0 0.0
    %434 = vmatprep.subr.mxu0 0.0
    %435 = vmatpush1.msra.mxu0 0.0
    %436 = vmatprep.subr.mxu0 0.0
    %437 = vmatpush1.msra.mxu0 0.0
    %438 = vmatprep.subr.mxu0 0.0
    %439 = vmatpush1.msra.mxu0 0.0
    %440 = vmatprep.subr.mxu0 0.0
    %441 = vmatpush1.msra.mxu0 0.0
    %442 = vmatprep.subr.mxu0 0.0
    %443 = vmatpush1.msra.mxu0 0.0
    %444 = vmatprep.subr.mxu0 0.0
    %445 = vmatpush1.msra.mxu0 0.0
    %446 = vmatprep.subr.mxu0 0.0
    %447 = vmatpush1.msra.mxu0 0.0
    %448 = vmatprep.subr.mxu0 0.0
    %449 = vmatpush1.msra.mxu0 0.0
    %450 = vmatprep.subr.mxu0 0.0
    %451 = vmatpush1.msra.mxu0 0.0
    %452 = vmatprep.subr.mxu0 0.0
    %453 = vmatpush1.msra.mxu0 0.0
    %454 = vmatprep.subr.mxu0 0.0
    %455 = vmatpush1.msra.mxu0 0.0
    %456 = vmatprep.subr.mxu0 0.0
    %457 = vmatpush1.msra.mxu0 0.0
    %458 = vmatprep.subr.mxu0 0.0
    %459 = vmatpush1.msra.mxu0 0.0
    %460 = vmatprep.subr.mxu0 0.0
    %461 = vmatpush1.msra.mxu0 0.0
    %462 = vmatprep.subr.mxu0 0.0
    %463 = vmatpush1.msra.mxu0 0.0
    %464 = vmatprep.subr.mxu0 0.0
    %465 = vmatpush1.msra.mxu0 0.0
    %466 = vmatprep.subr.mxu0 0.0
    %467 = vmatpush1.msra.mxu0 0.0
    %468 = vmatprep.subr.mxu0 0.0
    %469 = vmatpush1.msra.mxu0 0.0
    %470 = vmatprep.subr.mxu0 0.0
    %471 = vmatpush1.msra.mxu0 0.0
    %472 = vmatprep.subr.mxu0 0.0
    %473 = vmatpush1.msra.mxu0 0.0
    %474 = vmatprep.subr.mxu0 0.0
    %475 = vmatpush1.msra.mxu0 0.0
    %476 = vmatprep.subr.mxu0 0.0
    %477 = vmatpush1.msra.mxu0 0.0
    %478 = vmatprep.subr.mxu0 0.0
    %479 = vmatpush1.msra.mxu0 0.0
    %480 = vmatprep.subr.mxu0 0.0
    %481 = vmatpush1.msra.mxu0 0.0
    %482 = vmatprep.subr.mxu0 0.0
    %483 = vmatpush1.msra.mxu0 0.0
    %484 = vmatprep.subr.mxu0 0.0
    %485 = vmatpush1.msra.mxu0 0.0
    %486 = vmatprep.subr.mxu0 0.0
    %487 = vmatpush1.msra.mxu0 0.0
    %488 = vmatprep.subr.mxu0 0.0
    %489 = vmatpush1.msra.mxu0 0.0
    %490 = vmatprep.mubr.f32.mxu0 0.0
    %491 = vmatmul.mubr.f32.gmra.mrb[0].mxu0 %v341
    %v492 = vpop.f32.mrb[0].mxu0
    %v493 = vadd.f32 %v336, %v492
    %v494 = vpop.f32.mrb[0].mxu0
    %v495 = vadd.f32 %v338, %v494
    %496 = vdwg.mxu0
    %497 = vrot.lane.b32.xlu0 %v92, 15
    %v498 = vpop.permute.xlu0 %497
    %499 = vrot.lane.b32.xlu0 %v96, 15
    %v500 = vpop.permute.xlu0 %499
    %501 = vrot.lane.b32.xlu0 %v93, 15
    %v502 = vpop.permute.xlu0 %501
    %503 = vrot.lane.b32.xlu0 %v97, 15
    %v504 = vpop.permute.xlu0 %503
    %vm505 = vcmp.lt.s32.totalorder %v109, 15
    %v506 = vsel %vm505, %v502, %v504
    %v507 = vsel %vm505, %v500, %v502
    %v508 = vsel %vm505, %v498, %v500
    %v509 = vsel %vm505, %v504, %v498
    %v511 = vlaneseq
    %v512 = vshrl.u32 %v511, 7
    %v513 = vsub.s32 0, %v512
    %v514 = vrot.slane %v77, %v513
    %v515 = vlaneseq
    %v516 = vshrl.u32 %v515, 7
    %v517 = vsub.s32 1, %v516
    %v518 = vrot.slane %v77, %v517
    %v519 = vlaneseq
    %v520 = vshrl.u32 %v519, 7
    %v521 = vsub.s32 2, %v520
    %v522 = vrot.slane %v77, %v521
    %v523 = vlaneseq
    %v524 = vshrl.u32 %v523, 7
    %v525 = vsub.s32 3, %v524
    %v526 = vrot.slane %v77, %v525
    %v531 = vmul.f32 %v509, %v514
    %v532 = vmul.f32 %v508, %v518
    %v533 = vmul.f32 %v507, %v522
    %v534 = vmul.f32 %v506, %v526
    %s535 = scalar_lea.vmem %s4, 8
    %v536 = vld [vmem:[%s535] sm:$0xf]
    %v538 = vsel %vm181, %v536, 0
    %v541 = vsel %vm185, %v531, 0
    %v544 = vsel %vm185, %v532, 0
    %v547 = vsel %vm185, %v533, 0
    %v550 = vsel %vm185, %v534, 0
    %552 = vmatprep.subr.mxu0 %v544
    %553 = vmatpush1.msra.mxu0 %v541
    %554 = vmatprep.subr.mxu0 0.0
    %555 = vmatpush1.msra.mxu0 0.0
    %556 = vmatprep.subr.mxu0 0.0
    %557 = vmatpush1.msra.mxu0 0.0
    %558 = vmatprep.subr.mxu0 0.0
    %559 = vmatpush1.msra.mxu0 0.0
    %560 = vmatprep.subr.mxu0 0.0
    %561 = vmatpush1.msra.mxu0 0.0
    %562 = vmatprep.subr.mxu0 0.0
    %563 = vmatpush1.msra.mxu0 0.0
    %564 = vmatprep.subr.mxu0 0.0
    %565 = vmatpush1.msra.mxu0 0.0
    %566 = vmatprep.subr.mxu0 0.0
    %567 = vmatpush1.msra.mxu0 0.0
    %568 = vmatprep.subr.mxu0 0.0
    %569 = vmatpush1.msra.mxu0 0.0
    %570 = vmatprep.subr.mxu0 0.0
    %571 = vmatpush1.msra.mxu0 0.0
    %572 = vmatprep.subr.mxu0 0.0
    %573 = vmatpush1.msra.mxu0 0.0
    %574 = vmatprep.subr.mxu0 0.0
    %575 = vmatpush1.msra.mxu0 0.0
    %576 = vmatprep.subr.mxu0 0.0
    %577 = vmatpush1.msra.mxu0 0.0
    %578 = vmatprep.subr.mxu0 0.0
    %579 = vmatpush1.msra.mxu0 0.0
    %580 = vmatprep.subr.mxu0 0.0
    %581 = vmatpush1.msra.mxu0 0.0
    %582 = vmatprep.subr.mxu0 0.0
    %583 = vmatpush1.msra.mxu0 0.0
    %584 = vmatprep.subr.mxu0 0.0
    %585 = vmatpush1.msra.mxu0 0.0
    %586 = vmatprep.subr.mxu0 0.0
    %587 = vmatpush1.msra.mxu0 0.0
    %588 = vmatprep.subr.mxu0 0.0
    %589 = vmatpush1.msra.mxu0 0.0
    %590 = vmatprep.subr.mxu0 0.0
    %591 = vmatpush1.msra.mxu0 0.0
    %592 = vmatprep.subr.mxu0 0.0
    %593 = vmatpush1.msra.mxu0 0.0
    %594 = vmatprep.subr.mxu0 0.0
    %595 = vmatpush1.msra.mxu0 0.0
    %596 = vmatprep.subr.mxu0 0.0
    %597 = vmatpush1.msra.mxu0 0.0
    %598 = vmatprep.subr.mxu0 0.0
    %599 = vmatpush1.msra.mxu0 0.0
    %600 = vmatprep.subr.mxu0 0.0
    %601 = vmatpush1.msra.mxu0 0.0
    %602 = vmatprep.subr.mxu0 0.0
    %603 = vmatpush1.msra.mxu0 0.0
    %604 = vmatprep.subr.mxu0 0.0
    %605 = vmatpush1.msra.mxu0 0.0
    %606 = vmatprep.subr.mxu0 0.0
    %607 = vmatpush1.msra.mxu0 0.0
    %608 = vmatprep.subr.mxu0 0.0
    %609 = vmatpush1.msra.mxu0 0.0
    %610 = vmatprep.subr.mxu0 0.0
    %611 = vmatpush1.msra.mxu0 0.0
    %612 = vmatprep.subr.mxu0 0.0
    %613 = vmatpush1.msra.mxu0 0.0
    %614 = vmatprep.subr.mxu0 0.0
    %615 = vmatpush1.msra.mxu0 0.0
    %616 = vmatprep.mubr.f32.mxu0 0.0
    %617 = vmatmul.mubr.f32.gmra.mrb[0].mxu0 %v538
    %v618 = vpop.f32.mrb[0].mxu0
    %v619 = vadd.f32 0.0, %v618
    %v620 = vpop.f32.mrb[0].mxu0
    %v621 = vadd.f32 0.0, %v620
    %622 = vdwg.mxu0
    %623 = vmatprep.subr.mxu0 %v550
    %624 = vmatpush1.msra.mxu0 %v547
    %625 = vmatprep.subr.mxu0 0.0
    %626 = vmatpush1.msra.mxu0 0.0
    %627 = vmatprep.subr.mxu0 0.0
    %628 = vmatpush1.msra.mxu0 0.0
    %629 = vmatprep.subr.mxu0 0.0
    %630 = vmatpush1.msra.mxu0 0.0
    %631 = vmatprep.subr.mxu0 0.0
    %632 = vmatpush1.msra.mxu0 0.0
    %633 = vmatprep.subr.mxu0 0.0
    %634 = vmatpush1.msra.mxu0 0.0
    %635 = vmatprep.subr.mxu0 0.0
    %636 = vmatpush1.msra.mxu0 0.0
    %637 = vmatprep.subr.mxu0 0.0
    %638 = vmatpush1.msra.mxu0 0.0
    %639 = vmatprep.subr.mxu0 0.0
    %640 = vmatpush1.msra.mxu0 0.0
    %641 = vmatprep.subr.mxu0 0.0
    %642 = vmatpush1.msra.mxu0 0.0
    %643 = vmatprep.subr.mxu0 0.0
    %644 = vmatpush1.msra.mxu0 0.0
    %645 = vmatprep.subr.mxu0 0.0
    %646 = vmatpush1.msra.mxu0 0.0
    %647 = vmatprep.subr.mxu0 0.0
    %648 = vmatpush1.msra.mxu0 0.0
    %649 = vmatprep.subr.mxu0 0.0
    %650 = vmatpush1.msra.mxu0 0.0
    %651 = vmatprep.subr.mxu0 0.0
    %652 = vmatpush1.msra.mxu0 0.0
    %653 = vmatprep.subr.mxu0 0.0
    %654 = vmatpush1.msra.mxu0 0.0
    %655 = vmatprep.subr.mxu0 0.0
    %656 = vmatpush1.msra.mxu0 0.0
    %657 = vmatprep.subr.mxu0 0.0
    %658 = vmatpush1.msra.mxu0 0.0
    %659 = vmatprep.subr.mxu0 0.0
    %660 = vmatpush1.msra.mxu0 0.0
    %661 = vmatprep.subr.mxu0 0.0
    %662 = vmatpush1.msra.mxu0 0.0
    %663 = vmatprep.subr.mxu0 0.0
    %664 = vmatpush1.msra.mxu0 0.0
    %665 = vmatprep.subr.mxu0 0.0
    %666 = vmatpush1.msra.mxu0 0.0
    %667 = vmatprep.subr.mxu0 0.0
    %668 = vmatpush1.msra.mxu0 0.0
    %669 = vmatprep.subr.mxu0 0.0
    %670 = vmatpush1.msra.mxu0 0.0
    %671 = vmatprep.subr.mxu0 0.0
    %672 = vmatpush1.msra.mxu0 0.0
    %673 = vmatprep.subr.mxu0 0.0
    %674 = vmatpush1.msra.mxu0 0.0
    %675 = vmatprep.subr.mxu0 0.0
    %676 = vmatpush1.msra.mxu0 0.0
    %677 = vmatprep.subr.mxu0 0.0
    %678 = vmatpush1.msra.mxu0 0.0
    %679 = vmatprep.subr.mxu0 0.0
    %680 = vmatpush1.msra.mxu0 0.0
    %681 = vmatprep.subr.mxu0 0.0
    %682 = vmatpush1.msra.mxu0 0.0
    %683 = vmatprep.subr.mxu0 0.0
    %684 = vmatpush1.msra.mxu0 0.0
    %685 = vmatprep.subr.mxu0 0.0
    %686 = vmatpush1.msra.mxu0 0.0
    %687 = vmatprep.mubr.f32.mxu0 0.0
    %688 = vmatmul.mubr.f32.gmra.mrb[0].mxu0 %v538
    %v689 = vpop.f32.mrb[0].mxu0
    %v690 = vadd.f32 0.0, %v689
    %v691 = vpop.f32.mrb[0].mxu0
    %v692 = vadd.f32 0.0, %v691
    %693 = vdwg.mxu0
    %v694 = vadd.f32 %v422, %v619
    %v695 = vadd.f32 %v424, %v621
    %v696 = vadd.f32 %v493, %v690
    %v697 = vadd.f32 %v495, %v692
    %698 = vrot.lane.b32.xlu0 %v92, 1
    %v699 = vpop.permute.xlu0 %698
    %700 = vrot.lane.b32.xlu0 %v96, 1
    %v701 = vpop.permute.xlu0 %700
    %702 = vrot.lane.b32.xlu0 %v93, 1
    %v703 = vpop.permute.xlu0 %702
    %704 = vrot.lane.b32.xlu0 %v97, 1
    %v705 = vpop.permute.xlu0 %704
    %vm706 = vcmp.lt.s32.totalorder %v109, 1
    %v707 = vsel %vm706, %v703, %v705
    %v708 = vsel %vm706, %v701, %v703
    %v709 = vsel %vm706, %v699, %v701
    %v710 = vsel %vm706, %v705, %v699
    %v712 = vlaneseq
    %v713 = vshrl.u32 %v712, 7
    %v714 = vsub.s32 0, %v713
    %v715 = vrot.slane %v79, %v714
    %v716 = vlaneseq
    %v717 = vshrl.u32 %v716, 7
    %v718 = vsub.s32 1, %v717
    %v719 = vrot.slane %v79, %v718
    %v720 = vlaneseq
    %v721 = vshrl.u32 %v720, 7
    %v722 = vsub.s32 2, %v721
    %v723 = vrot.slane %v79, %v722
    %v724 = vlaneseq
    %v725 = vshrl.u32 %v724, 7
    %v726 = vsub.s32 3, %v725
    %v727 = vrot.slane %v79, %v726
    %v732 = vmul.f32 %v710, %v715
    %v733 = vmul.f32 %v709, %v719
    %v734 = vmul.f32 %v708, %v723
    %v735 = vmul.f32 %v707, %v727
    %s736 = scalar_lea.vmem %s4, 12
    %v737 = vld [vmem:[%s736] sm:$0xf]
    %v739 = vsel %vm181, %v737, 0
    %v742 = vsel %vm185, %v732, 0
    %v745 = vsel %vm185, %v733, 0
    %v748 = vsel %vm185, %v734, 0
    %v751 = vsel %vm185, %v735, 0
    %753 = vmatprep.subr.mxu0 %v745
    %754 = vmatpush1.msra.mxu0 %v742
    %755 = vmatprep.subr.mxu0 0.0
    %756 = vmatpush1.msra.mxu0 0.0
    %757 = vmatprep.subr.mxu0 0.0
    %758 = vmatpush1.msra.mxu0 0.0
    %759 = vmatprep.subr.mxu0 0.0
    %760 = vmatpush1.msra.mxu0 0.0
    %761 = vmatprep.subr.mxu0 0.0
    %762 = vmatpush1.msra.mxu0 0.0
    %763 = vmatprep.subr.mxu0 0.0
    %764 = vmatpush1.msra.mxu0 0.0
    %765 = vmatprep.subr.mxu0 0.0
    %766 = vmatpush1.msra.mxu0 0.0
    %767 = vmatprep.subr.mxu0 0.0
    %768 = vmatpush1.msra.mxu0 0.0
    %769 = vmatprep.subr.mxu0 0.0
    %770 = vmatpush1.msra.mxu0 0.0
    %771 = vmatprep.subr.mxu0 0.0
    %772 = vmatpush1.msra.mxu0 0.0
    %773 = vmatprep.subr.mxu0 0.0
    %774 = vmatpush1.msra.mxu0 0.0
    %775 = vmatprep.subr.mxu0 0.0
    %776 = vmatpush1.msra.mxu0 0.0
    %777 = vmatprep.subr.mxu0 0.0
    %778 = vmatpush1.msra.mxu0 0.0
    %779 = vmatprep.subr.mxu0 0.0
    %780 = vmatpush1.msra.mxu0 0.0
    %781 = vmatprep.subr.mxu0 0.0
    %782 = vmatpush1.msra.mxu0 0.0
    %783 = vmatprep.subr.mxu0 0.0
    %784 = vmatpush1.msra.mxu0 0.0
    %785 = vmatprep.subr.mxu0 0.0
    %786 = vmatpush1.msra.mxu0 0.0
    %787 = vmatprep.subr.mxu0 0.0
    %788 = vmatpush1.msra.mxu0 0.0
    %789 = vmatprep.subr.mxu0 0.0
    %790 = vmatpush1.msra.mxu0 0.0
    %791 = vmatprep.subr.mxu0 0.0
    %792 = vmatpush1.msra.mxu0 0.0
    %793 = vmatprep.subr.mxu0 0.0
    %794 = vmatpush1.msra.mxu0 0.0
    %795 = vmatprep.subr.mxu0 0.0
    %796 = vmatpush1.msra.mxu0 0.0
    %797 = vmatprep.subr.mxu0 0.0
    %798 = vmatpush1.msra.mxu0 0.0
    %799 = vmatprep.subr.mxu0 0.0
    %800 = vmatpush1.msra.mxu0 0.0
    %801 = vmatprep.subr.mxu0 0.0
    %802 = vmatpush1.msra.mxu0 0.0
    %803 = vmatprep.subr.mxu0 0.0
    %804 = vmatpush1.msra.mxu0 0.0
    %805 = vmatprep.subr.mxu0 0.0
    %806 = vmatpush1.msra.mxu0 0.0
    %807 = vmatprep.subr.mxu0 0.0
    %808 = vmatpush1.msra.mxu0 0.0
    %809 = vmatprep.subr.mxu0 0.0
    %810 = vmatpush1.msra.mxu0 0.0
    %811 = vmatprep.subr.mxu0 0.0
    %812 = vmatpush1.msra.mxu0 0.0
    %813 = vmatprep.subr.mxu0 0.0
    %814 = vmatpush1.msra.mxu0 0.0
    %815 = vmatprep.subr.mxu0 0.0
    %816 = vmatpush1.msra.mxu0 0.0
    %817 = vmatprep.mubr.f32.mxu0 0.0
    %818 = vmatmul.mubr.f32.gmra.mrb[0].mxu0 %v739
    %v819 = vpop.f32.mrb[0].mxu0
    %v820 = vadd.f32 0.0, %v819
    %v821 = vpop.f32.mrb[0].mxu0
    %v822 = vadd.f32 0.0, %v821
    %823 = vdwg.mxu0
    %824 = vmatprep.subr.mxu0 %v751
    %825 = vmatpush1.msra.mxu0 %v748
    %826 = vmatprep.subr.mxu0 0.0
    %827 = vmatpush1.msra.mxu0 0.0
    %828 = vmatprep.subr.mxu0 0.0
    %829 = vmatpush1.msra.mxu0 0.0
    %830 = vmatprep.subr.mxu0 0.0
    %831 = vmatpush1.msra.mxu0 0.0
    %832 = vmatprep.subr.mxu0 0.0
    %833 = vmatpush1.msra.mxu0 0.0
    %834 = vmatprep.subr.mxu0 0.0
    %835 = vmatpush1.msra.mxu0 0.0
    %836 = vmatprep.subr.mxu0 0.0
    %837 = vmatpush1.msra.mxu0 0.0
    %838 = vmatprep.subr.mxu0 0.0
    %839 = vmatpush1.msra.mxu0 0.0
    %840 = vmatprep.subr.mxu0 0.0
    %841 = vmatpush1.msra.mxu0 0.0
    %842 = vmatprep.subr.mxu0 0.0
    %843 = vmatpush1.msra.mxu0 0.0
    %844 = vmatprep.subr.mxu0 0.0
    %845 = vmatpush1.msra.mxu0 0.0
    %846 = vmatprep.subr.mxu0 0.0
    %847 = vmatpush1.msra.mxu0 0.0
    %848 = vmatprep.subr.mxu0 0.0
    %849 = vmatpush1.msra.mxu0 0.0
    %850 = vmatprep.subr.mxu0 0.0
    %851 = vmatpush1.msra.mxu0 0.0
    %852 = vmatprep.subr.mxu0 0.0
    %853 = vmatpush1.msra.mxu0 0.0
    %854 = vmatprep.subr.mxu0 0.0
    %855 = vmatpush1.msra.mxu0 0.0
    %856 = vmatprep.subr.mxu0 0.0
    %857 = vmatpush1.msra.mxu0 0.0
    %858 = vmatprep.subr.mxu0 0.0
    %859 = vmatpush1.msra.mxu0 0.0
    %860 = vmatprep.subr.mxu0 0.0
    %861 = vmatpush1.msra.mxu0 0.0
    %862 = vmatprep.subr.mxu0 0.0
    %863 = vmatpush1.msra.mxu0 0.0
    %864 = vmatprep.subr.mxu0 0.0
    %865 = vmatpush1.msra.mxu0 0.0
    %866 = vmatprep.subr.mxu0 0.0
    %867 = vmatpush1.msra.mxu0 0.0
    %868 = vmatprep.subr.mxu0 0.0
    %869 = vmatpush1.msra.mxu0 0.0
    %870 = vmatprep.subr.mxu0 0.0
    %871 = vmatpush1.msra.mxu0 0.0
    %872 = vmatprep.subr.mxu0 0.0
    %873 = vmatpush1.msra.mxu0 0.0
    %874 = vmatprep.subr.mxu0 0.0
    %875 = vmatpush1.msra.mxu0 0.0
    %876 = vmatprep.subr.mxu0 0.0
    %877 = vmatpush1.msra.mxu0 0.0
    %878 = vmatprep.subr.mxu0 0.0
    %879 = vmatpush1.msra.mxu0 0.0
    %880 = vmatprep.subr.mxu0 0.0
    %881 = vmatpush1.msra.mxu0 0.0
    %882 = vmatprep.subr.mxu0 0.0
    %883 = vmatpush1.msra.mxu0 0.0
    %884 = vmatprep.subr.mxu0 0.0
    %885 = vmatpush1.msra.mxu0 0.0
    %886 = vmatprep.subr.mxu0 0.0
    %887 = vmatpush1.msra.mxu0 0.0
    %888 = vmatprep.mubr.f32.mxu0 0.0
    %889 = vmatmul.mubr.f32.gmra.mrb[0].mxu0 %v739
    %v890 = vpop.f32.mrb[0].mxu0
    %v891 = vadd.f32 0.0, %v890
    %v892 = vpop.f32.mrb[0].mxu0
    %v893 = vadd.f32 0.0, %v892
    %894 = vdwg.mxu0
    %v895 = vadd.f32 %v694, %v820
    %v896 = vadd.f32 %v695, %v822
    %v897 = vadd.f32 %v696, %v891
    %v898 = vadd.f32 %v697, %v893
    %s899 = scalar_lea.vmem %s4, 16
    %v900 = vld [vmem:[%s899] sm:$0xf]
    %v902 = vsel %vm181, %v900, 0
    %v904 = vsel %vm185, %v92, 0
    %v906 = vsel %vm185, %v96, 0
    %v908 = vsel %vm185, %v93, 0
    %v910 = vsel %vm185, %v97, 0
    %912 = vmatprep.subr.mxu0 %v906
    %913 = vmatpush1.msra.mxu0 %v904
    %914 = vmatprep.subr.mxu0 0.0
    %915 = vmatpush1.msra.mxu0 0.0
    %916 = vmatprep.subr.mxu0 0.0
    %917 = vmatpush1.msra.mxu0 0.0
    %918 = vmatprep.subr.mxu0 0.0
    %919 = vmatpush1.msra.mxu0 0.0
    %920 = vmatprep.subr.mxu0 0.0
    %921 = vmatpush1.msra.mxu0 0.0
    %922 = vmatprep.subr.mxu0 0.0
    %923 = vmatpush1.msra.mxu0 0.0
    %924 = vmatprep.subr.mxu0 0.0
    %925 = vmatpush1.msra.mxu0 0.0
    %926 = vmatprep.subr.mxu0 0.0
    %927 = vmatpush1.msra.mxu0 0.0
    %928 = vmatprep.subr.mxu0 0.0
    %929 = vmatpush1.msra.mxu0 0.0
    %930 = vmatprep.subr.mxu0 0.0
    %931 = vmatpush1.msra.mxu0 0.0
    %932 = vmatprep.subr.mxu0 0.0
    %933 = vmatpush1.msra.mxu0 0.0
    %934 = vmatprep.subr.mxu0 0.0
    %935 = vmatpush1.msra.mxu0 0.0
    %936 = vmatprep.subr.mxu0 0.0
    %937 = vmatpush1.msra.mxu0 0.0
    %938 = vmatprep.subr.mxu0 0.0
    %939 = vmatpush1.msra.mxu0 0.0
    %940 = vmatprep.subr.mxu0 0.0
    %941 = vmatpush1.msra.mxu0 0.0
    %942 = vmatprep.subr.mxu0 0.0
    %943 = vmatpush1.msra.mxu0 0.0
    %944 = vmatprep.subr.mxu0 0.0
    %945 = vmatpush1.msra.mxu0 0.0
    %946 = vmatprep.subr.mxu0 0.0
    %947 = vmatpush1.msra.mxu0 0.0
    %948 = vmatprep.subr.mxu0 0.0
    %949 = vmatpush1.msra.mxu0 0.0
    %950 = vmatprep.subr.mxu0 0.0
    %951 = vmatpush1.msra.mxu0 0.0
    %952 = vmatprep.subr.mxu0 0.0
    %953 = vmatpush1.msra.mxu0 0.0
    %954 = vmatprep.subr.mxu0 0.0
    %955 = vmatpush1.msra.mxu0 0.0
    %956 = vmatprep.subr.mxu0 0.0
    %957 = vmatpush1.msra.mxu0 0.0
    %958 = vmatprep.subr.mxu0 0.0
    %959 = vmatpush1.msra.mxu0 0.0
    %960 = vmatprep.subr.mxu0 0.0
    %961 = vmatpush1.msra.mxu0 0.0
    %962 = vmatprep.subr.mxu0 0.0
    %963 = vmatpush1.msra.mxu0 0.0
    %964 = vmatprep.subr.mxu0 0.0
    %965 = vmatpush1.msra.mxu0 0.0
    %966 = vmatprep.subr.mxu0 0.0
    %967 = vmatpush1.msra.mxu0 0.0
    %968 = vmatprep.subr.mxu0 0.0
    %969 = vmatpush1.msra.mxu0 0.0
    %970 = vmatprep.subr.mxu0 0.0
    %971 = vmatpush1.msra.mxu0 0.0
    %972 = vmatprep.subr.mxu0 0.0
    %973 = vmatpush1.msra.mxu0 0.0
    %974 = vmatprep.subr.mxu0 0.0
    %975 = vmatpush1.msra.mxu0 0.0
    %976 = vmatprep.mubr.f32.mxu0 0.0
    %977 = vmatmul.mubr.f32.gmra.mrb[0].mxu0 %v902
    %v978 = vpop.f32.mrb[0].mxu0
    %v979 = vadd.f32 0.0, %v978
    %v980 = vpop.f32.mrb[0].mxu0
    %v981 = vadd.f32 0.0, %v980
    %982 = vdwg.mxu0
    %983 = vmatprep.subr.mxu0 %v910
    %984 = vmatpush1.msra.mxu0 %v908
    %985 = vmatprep.subr.mxu0 0.0
    %986 = vmatpush1.msra.mxu0 0.0
    %987 = vmatprep.subr.mxu0 0.0
    %988 = vmatpush1.msra.mxu0 0.0
    %989 = vmatprep.subr.mxu0 0.0
    %990 = vmatpush1.msra.mxu0 0.0
    %991 = vmatprep.subr.mxu0 0.0
    %992 = vmatpush1.msra.mxu0 0.0
    %993 = vmatprep.subr.mxu0 0.0
    %994 = vmatpush1.msra.mxu0 0.0
    %995 = vmatprep.subr.mxu0 0.0
    %996 = vmatpush1.msra.mxu0 0.0
    %997 = vmatprep.subr.mxu0 0.0
    %998 = vmatpush1.msra.mxu0 0.0
    %999 = vmatprep.subr.mxu0 0.0
    %1000 = vmatpush1.msra.mxu0 0.0
    %1001 = vmatprep.subr.mxu0 0.0
    %1002 = vmatpush1.msra.mxu0 0.0
    %1003 = vmatprep.subr.mxu0 0.0
    %1004 = vmatpush1.msra.mxu0 0.0
    %1005 = vmatprep.subr.mxu0 0.0
    %1006 = vmatpush1.msra.mxu0 0.0
    %1007 = vmatprep.subr.mxu0 0.0
    %1008 = vmatpush1.msra.mxu0 0.0
    %1009 = vmatprep.subr.mxu0 0.0
    %1010 = vmatpush1.msra.mxu0 0.0
    %1011 = vmatprep.subr.mxu0 0.0
    %1012 = vmatpush1.msra.mxu0 0.0
    %1013 = vmatprep.subr.mxu0 0.0
    %1014 = vmatpush1.msra.mxu0 0.0
    %1015 = vmatprep.subr.mxu0 0.0
    %1016 = vmatpush1.msra.mxu0 0.0
    %1017 = vmatprep.subr.mxu0 0.0
    %1018 = vmatpush1.msra.mxu0 0.0
    %1019 = vmatprep.subr.mxu0 0.0
    %1020 = vmatpush1.msra.mxu0 0.0
    %1021 = vmatprep.subr.mxu0 0.0
    %1022 = vmatpush1.msra.mxu0 0.0
    %1023 = vmatprep.subr.mxu0 0.0
    %1024 = vmatpush1.msra.mxu0 0.0
    %1025 = vmatprep.subr.mxu0 0.0
    %1026 = vmatpush1.msra.mxu0 0.0
    %1027 = vmatprep.subr.mxu0 0.0
    %1028 = vmatpush1.msra.mxu0 0.0
    %1029 = vmatprep.subr.mxu0 0.0
    %1030 = vmatpush1.msra.mxu0 0.0
    %1031 = vmatprep.subr.mxu0 0.0
    %1032 = vmatpush1.msra.mxu0 0.0
    %1033 = vmatprep.subr.mxu0 0.0
    %1034 = vmatpush1.msra.mxu0 0.0
    %1035 = vmatprep.subr.mxu0 0.0
    %1036 = vmatpush1.msra.mxu0 0.0
    %1037 = vmatprep.subr.mxu0 0.0
    %1038 = vmatpush1.msra.mxu0 0.0
    %1039 = vmatprep.subr.mxu0 0.0
    %1040 = vmatpush1.msra.mxu0 0.0
    %1041 = vmatprep.subr.mxu0 0.0
    %1042 = vmatpush1.msra.mxu0 0.0
    %1043 = vmatprep.subr.mxu0 0.0
    %1044 = vmatpush1.msra.mxu0 0.0
    %1045 = vmatprep.subr.mxu0 0.0
    %1046 = vmatpush1.msra.mxu0 0.0
    %1047 = vmatprep.mubr.f32.mxu0 0.0
    %1048 = vmatmul.mubr.f32.gmra.mrb[0].mxu0 %v902
    %v1049 = vpop.f32.mrb[0].mxu0
    %v1050 = vadd.f32 0.0, %v1049
    %v1051 = vpop.f32.mrb[0].mxu0
    %v1052 = vadd.f32 0.0, %v1051
    %1053 = vdwg.mxu0
    %v1054 = vadd.f32 %v895, %v979
    %v1055 = vadd.f32 %v896, %v981
    %v1056 = vadd.f32 %v897, %v1050
    %v1057 = vadd.f32 %v898, %v1052
    %1058 = vrot.lane.b32.xlu0 %v92, 127
    %v1059 = vpop.permute.xlu0 %1058
    %1060 = vrot.lane.b32.xlu0 %v96, 127
    %v1061 = vpop.permute.xlu0 %1060
    %1062 = vrot.lane.b32.xlu0 %v93, 127
    %v1063 = vpop.permute.xlu0 %1062
    %1064 = vrot.lane.b32.xlu0 %v97, 127
    %v1065 = vpop.permute.xlu0 %1064
    %vm1066 = vcmp.lt.s32.totalorder %v109, 127
    %v1067 = vsel %vm1066, %v1063, %v1065
    %v1068 = vsel %vm1066, %v1061, %v1063
    %v1069 = vsel %vm1066, %v1059, %v1061
    %v1070 = vsel %vm1066, %v1065, %v1059
    %v1072 = vlaneseq
    %v1073 = vshrl.u32 %v1072, 7
    %v1074 = vsub.s32 0, %v1073
    %v1075 = vrot.slane %v81, %v1074
    %v1076 = vlaneseq
    %v1077 = vshrl.u32 %v1076, 7
    %v1078 = vsub.s32 1, %v1077
    %v1079 = vrot.slane %v81, %v1078
    %v1080 = vlaneseq
    %v1081 = vshrl.u32 %v1080, 7
    %v1082 = vsub.s32 2, %v1081
    %v1083 = vrot.slane %v81, %v1082
    %v1084 = vlaneseq
    %v1085 = vshrl.u32 %v1084, 7
    %v1086 = vsub.s32 3, %v1085
    %v1087 = vrot.slane %v81, %v1086
    %v1092 = vmul.f32 %v1069, %v1075
    %v1093 = vmul.f32 %v1068, %v1079
    %v1094 = vmul.f32 %v1067, %v1083
    %v1095 = vmul.f32 %v1070, %v1087
    %s1096 = scalar_lea.vmem %s4, 20
    %v1097 = vld [vmem:[%s1096] sm:$0xf]
    %v1099 = vsel %vm181, %v1097, 0
    %v1102 = vsel %vm185, %v1092, 0
    %v1105 = vsel %vm185, %v1093, 0
    %v1108 = vsel %vm185, %v1094, 0
    %v1111 = vsel %vm185, %v1095, 0
    %1113 = vmatprep.subr.mxu0 %v1105
    %1114 = vmatpush1.msra.mxu0 %v1102
    %1115 = vmatprep.subr.mxu0 0.0
    %1116 = vmatpush1.msra.mxu0 0.0
    %1117 = vmatprep.subr.mxu0 0.0
    %1118 = vmatpush1.msra.mxu0 0.0
    %1119 = vmatprep.subr.mxu0 0.0
    %1120 = vmatpush1.msra.mxu0 0.0
    %1121 = vmatprep.subr.mxu0 0.0
    %1122 = vmatpush1.msra.mxu0 0.0
    %1123 = vmatprep.subr.mxu0 0.0
    %1124 = vmatpush1.msra.mxu0 0.0
    %1125 = vmatprep.subr.mxu0 0.0
    %1126 = vmatpush1.msra.mxu0 0.0
    %1127 = vmatprep.subr.mxu0 0.0
    %1128 = vmatpush1.msra.mxu0 0.0
    %1129 = vmatprep.subr.mxu0 0.0
    %1130 = vmatpush1.msra.mxu0 0.0
    %1131 = vmatprep.subr.mxu0 0.0
    %1132 = vmatpush1.msra.mxu0 0.0
    %1133 = vmatprep.subr.mxu0 0.0
    %1134 = vmatpush1.msra.mxu0 0.0
    %1135 = vmatprep.subr.mxu0 0.0
    %1136 = vmatpush1.msra.mxu0 0.0
    %1137 = vmatprep.subr.mxu0 0.0
    %1138 = vmatpush1.msra.mxu0 0.0
    %1139 = vmatprep.subr.mxu0 0.0
    %1140 = vmatpush1.msra.mxu0 0.0
    %1141 = vmatprep.subr.mxu0 0.0
    %1142 = vmatpush1.msra.mxu0 0.0
    %1143 = vmatprep.subr.mxu0 0.0
    %1144 = vmatpush1.msra.mxu0 0.0
    %1145 = vmatprep.subr.mxu0 0.0
    %1146 = vmatpush1.msra.mxu0 0.0
    %1147 = vmatprep.subr.mxu0 0.0
    %1148 = vmatpush1.msra.mxu0 0.0
    %1149 = vmatprep.subr.mxu0 0.0
    %1150 = vmatpush1.msra.mxu0 0.0
    %1151 = vmatprep.subr.mxu0 0.0
    %1152 = vmatpush1.msra.mxu0 0.0
    %1153 = vmatprep.subr.mxu0 0.0
    %1154 = vmatpush1.msra.mxu0 0.0
    %1155 = vmatprep.subr.mxu0 0.0
    %1156 = vmatpush1.msra.mxu0 0.0
    %1157 = vmatprep.subr.mxu0 0.0
    %1158 = vmatpush1.msra.mxu0 0.0
    %1159 = vmatprep.subr.mxu0 0.0
    %1160 = vmatpush1.msra.mxu0 0.0
    %1161 = vmatprep.subr.mxu0 0.0
    %1162 = vmatpush1.msra.mxu0 0.0
    %1163 = vmatprep.subr.mxu0 0.0
    %1164 = vmatpush1.msra.mxu0 0.0
    %1165 = vmatprep.subr.mxu0 0.0
    %1166 = vmatpush1.msra.mxu0 0.0
    %1167 = vmatprep.subr.mxu0 0.0
    %1168 = vmatpush1.msra.mxu0 0.0
    %1169 = vmatprep.subr.mxu0 0.0
    %1170 = vmatpush1.msra.mxu0 0.0
    %1171 = vmatprep.subr.mxu0 0.0
    %1172 = vmatpush1.msra.mxu0 0.0
    %1173 = vmatprep.subr.mxu0 0.0
    %1174 = vmatpush1.msra.mxu0 0.0
    %1175 = vmatprep.subr.mxu0 0.0
    %1176 = vmatpush1.msra.mxu0 0.0
    %1177 = vmatprep.mubr.f32.mxu0 0.0
    %1178 = vmatmul.mubr.f32.gmra.mrb[0].mxu0 %v1099
    %v1179 = vpop.f32.mrb[0].mxu0
    %v1180 = vadd.f32 0.0, %v1179
    %v1181 = vpop.f32.mrb[0].mxu0
    %v1182 = vadd.f32 0.0, %v1181
    %1183 = vdwg.mxu0
    %1184 = vmatprep.subr.mxu0 %v1111
    %1185 = vmatpush1.msra.mxu0 %v1108
    %1186 = vmatprep.subr.mxu0 0.0
    %1187 = vmatpush1.msra.mxu0 0.0
    %1188 = vmatprep.subr.mxu0 0.0
    %1189 = vmatpush1.msra.mxu0 0.0
    %1190 = vmatprep.subr.mxu0 0.0
    %1191 = vmatpush1.msra.mxu0 0.0
    %1192 = vmatprep.subr.mxu0 0.0
    %1193 = vmatpush1.msra.mxu0 0.0
    %1194 = vmatprep.subr.mxu0 0.0
    %1195 = vmatpush1.msra.mxu0 0.0
    %1196 = vmatprep.subr.mxu0 0.0
    %1197 = vmatpush1.msra.mxu0 0.0
    %1198 = vmatprep.subr.mxu0 0.0
    %1199 = vmatpush1.msra.mxu0 0.0
    %1200 = vmatprep.subr.mxu0 0.0
    %1201 = vmatpush1.msra.mxu0 0.0
    %1202 = vmatprep.subr.mxu0 0.0
    %1203 = vmatpush1.msra.mxu0 0.0
    %1204 = vmatprep.subr.mxu0 0.0
    %1205 = vmatpush1.msra.mxu0 0.0
    %1206 = vmatprep.subr.mxu0 0.0
    %1207 = vmatpush1.msra.mxu0 0.0
    %1208 = vmatprep.subr.mxu0 0.0
    %1209 = vmatpush1.msra.mxu0 0.0
    %1210 = vmatprep.subr.mxu0 0.0
    %1211 = vmatpush1.msra.mxu0 0.0
    %1212 = vmatprep.subr.mxu0 0.0
    %1213 = vmatpush1.msra.mxu0 0.0
    %1214 = vmatprep.subr.mxu0 0.0
    %1215 = vmatpush1.msra.mxu0 0.0
    %1216 = vmatprep.subr.mxu0 0.0
    %1217 = vmatpush1.msra.mxu0 0.0
    %1218 = vmatprep.subr.mxu0 0.0
    %1219 = vmatpush1.msra.mxu0 0.0
    %1220 = vmatprep.subr.mxu0 0.0
    %1221 = vmatpush1.msra.mxu0 0.0
    %1222 = vmatprep.subr.mxu0 0.0
    %1223 = vmatpush1.msra.mxu0 0.0
    %1224 = vmatprep.subr.mxu0 0.0
    %1225 = vmatpush1.msra.mxu0 0.0
    %1226 = vmatprep.subr.mxu0 0.0
    %1227 = vmatpush1.msra.mxu0 0.0
    %1228 = vmatprep.subr.mxu0 0.0
    %1229 = vmatpush1.msra.mxu0 0.0
    %1230 = vmatprep.subr.mxu0 0.0
    %1231 = vmatpush1.msra.mxu0 0.0
    %1232 = vmatprep.subr.mxu0 0.0
    %1233 = vmatpush1.msra.mxu0 0.0
    %1234 = vmatprep.subr.mxu0 0.0
    %1235 = vmatpush1.msra.mxu0 0.0
    %1236 = vmatprep.subr.mxu0 0.0
    %1237 = vmatpush1.msra.mxu0 0.0
    %1238 = vmatprep.subr.mxu0 0.0
    %1239 = vmatpush1.msra.mxu0 0.0
    %1240 = vmatprep.subr.mxu0 0.0
    %1241 = vmatpush1.msra.mxu0 0.0
    %1242 = vmatprep.subr.mxu0 0.0
    %1243 = vmatpush1.msra.mxu0 0.0
    %1244 = vmatprep.subr.mxu0 0.0
    %1245 = vmatpush1.msra.mxu0 0.0
    %1246 = vmatprep.subr.mxu0 0.0
    %1247 = vmatpush1.msra.mxu0 0.0
    %1248 = vmatprep.mubr.f32.mxu0 0.0
    %1249 = vmatmul.mubr.f32.gmra.mrb[0].mxu0 %v1099
    %v1250 = vpop.f32.mrb[0].mxu0
    %v1251 = vadd.f32 0.0, %v1250
    %v1252 = vpop.f32.mrb[0].mxu0
    %v1253 = vadd.f32 0.0, %v1252
    %1254 = vdwg.mxu0
    %v1255 = vadd.f32 %v1054, %v1180
    %v1256 = vadd.f32 %v1055, %v1182
    %v1257 = vadd.f32 %v1056, %v1251
    %v1258 = vadd.f32 %v1057, %v1253
    %1259 = vrot.lane.b32.xlu0 %v92, 113
    %v1260 = vpop.permute.xlu0 %1259
    %1261 = vrot.lane.b32.xlu0 %v96, 113
    %v1262 = vpop.permute.xlu0 %1261
    %1263 = vrot.lane.b32.xlu0 %v93, 113
    %v1264 = vpop.permute.xlu0 %1263
    %1265 = vrot.lane.b32.xlu0 %v97, 113
    %v1266 = vpop.permute.xlu0 %1265
    %vm1267 = vcmp.lt.s32.totalorder %v109, 113
    %v1268 = vsel %vm1267, %v1264, %v1266
    %v1269 = vsel %vm1267, %v1262, %v1264
    %v1270 = vsel %vm1267, %v1260, %v1262
    %v1271 = vsel %vm1267, %v1266, %v1260
    %v1273 = vlaneseq
    %v1274 = vshrl.u32 %v1273, 7
    %v1275 = vsub.s32 0, %v1274
    %v1276 = vrot.slane %v83, %v1275
    %v1277 = vlaneseq
    %v1278 = vshrl.u32 %v1277, 7
    %v1279 = vsub.s32 1, %v1278
    %v1280 = vrot.slane %v83, %v1279
    %v1281 = vlaneseq
    %v1282 = vshrl.u32 %v1281, 7
    %v1283 = vsub.s32 2, %v1282
    %v1284 = vrot.slane %v83, %v1283
    %v1285 = vlaneseq
    %v1286 = vshrl.u32 %v1285, 7
    %v1287 = vsub.s32 3, %v1286
    %v1288 = vrot.slane %v83, %v1287
    %v1293 = vmul.f32 %v1270, %v1276
    %v1294 = vmul.f32 %v1269, %v1280
    %v1295 = vmul.f32 %v1268, %v1284
    %v1296 = vmul.f32 %v1271, %v1288
    %s1297 = scalar_lea.vmem %s4, 24
    %v1298 = vld [vmem:[%s1297] sm:$0xf]
    %v1300 = vsel %vm181, %v1298, 0
    %v1303 = vsel %vm185, %v1293, 0
    %v1306 = vsel %vm185, %v1294, 0
    %v1309 = vsel %vm185, %v1295, 0
    %v1312 = vsel %vm185, %v1296, 0
    %1314 = vmatprep.subr.mxu0 %v1306
    %1315 = vmatpush1.msra.mxu0 %v1303
    %1316 = vmatprep.subr.mxu0 0.0
    %1317 = vmatpush1.msra.mxu0 0.0
    %1318 = vmatprep.subr.mxu0 0.0
    %1319 = vmatpush1.msra.mxu0 0.0
    %1320 = vmatprep.subr.mxu0 0.0
    %1321 = vmatpush1.msra.mxu0 0.0
    %1322 = vmatprep.subr.mxu0 0.0
    %1323 = vmatpush1.msra.mxu0 0.0
    %1324 = vmatprep.subr.mxu0 0.0
    %1325 = vmatpush1.msra.mxu0 0.0
    %1326 = vmatprep.subr.mxu0 0.0
    %1327 = vmatpush1.msra.mxu0 0.0
    %1328 = vmatprep.subr.mxu0 0.0
    %1329 = vmatpush1.msra.mxu0 0.0
    %1330 = vmatprep.subr.mxu0 0.0
    %1331 = vmatpush1.msra.mxu0 0.0
    %1332 = vmatprep.subr.mxu0 0.0
    %1333 = vmatpush1.msra.mxu0 0.0
    %1334 = vmatprep.subr.mxu0 0.0
    %1335 = vmatpush1.msra.mxu0 0.0
    %1336 = vmatprep.subr.mxu0 0.0
    %1337 = vmatpush1.msra.mxu0 0.0
    %1338 = vmatprep.subr.mxu0 0.0
    %1339 = vmatpush1.msra.mxu0 0.0
    %1340 = vmatprep.subr.mxu0 0.0
    %1341 = vmatpush1.msra.mxu0 0.0
    %1342 = vmatprep.subr.mxu0 0.0
    %1343 = vmatpush1.msra.mxu0 0.0
    %1344 = vmatprep.subr.mxu0 0.0
    %1345 = vmatpush1.msra.mxu0 0.0
    %1346 = vmatprep.subr.mxu0 0.0
    %1347 = vmatpush1.msra.mxu0 0.0
    %1348 = vmatprep.subr.mxu0 0.0
    %1349 = vmatpush1.msra.mxu0 0.0
    %1350 = vmatprep.subr.mxu0 0.0
    %1351 = vmatpush1.msra.mxu0 0.0
    %1352 = vmatprep.subr.mxu0 0.0
    %1353 = vmatpush1.msra.mxu0 0.0
    %1354 = vmatprep.subr.mxu0 0.0
    %1355 = vmatpush1.msra.mxu0 0.0
    %1356 = vmatprep.subr.mxu0 0.0
    %1357 = vmatpush1.msra.mxu0 0.0
    %1358 = vmatprep.subr.mxu0 0.0
    %1359 = vmatpush1.msra.mxu0 0.0
    %1360 = vmatprep.subr.mxu0 0.0
    %1361 = vmatpush1.msra.mxu0 0.0
    %1362 = vmatprep.subr.mxu0 0.0
    %1363 = vmatpush1.msra.mxu0 0.0
    %1364 = vmatprep.subr.mxu0 0.0
    %1365 = vmatpush1.msra.mxu0 0.0
    %1366 = vmatprep.subr.mxu0 0.0
    %1367 = vmatpush1.msra.mxu0 0.0
    %1368 = vmatprep.subr.mxu0 0.0
    %1369 = vmatpush1.msra.mxu0 0.0
    %1370 = vmatprep.subr.mxu0 0.0
    %1371 = vmatpush1.msra.mxu0 0.0
    %1372 = vmatprep.subr.mxu0 0.0
    %1373 = vmatpush1.msra.mxu0 0.0
    %1374 = vmatprep.subr.mxu0 0.0
    %1375 = vmatpush1.msra.mxu0 0.0
    %1376 = vmatprep.subr.mxu0 0.0
    %1377 = vmatpush1.msra.mxu0 0.0
    %1378 = vmatprep.mubr.f32.mxu0 0.0
    %1379 = vmatmul.mubr.f32.gmra.mrb[0].mxu0 %v1300
    %v1380 = vpop.f32.mrb[0].mxu0
    %v1381 = vadd.f32 0.0, %v1380
    %v1382 = vpop.f32.mrb[0].mxu0
    %v1383 = vadd.f32 0.0, %v1382
    %1384 = vdwg.mxu0
    %1385 = vmatprep.subr.mxu0 %v1312
    %1386 = vmatpush1.msra.mxu0 %v1309
    %1387 = vmatprep.subr.mxu0 0.0
    %1388 = vmatpush1.msra.mxu0 0.0
    %1389 = vmatprep.subr.mxu0 0.0
    %1390 = vmatpush1.msra.mxu0 0.0
    %1391 = vmatprep.subr.mxu0 0.0
    %1392 = vmatpush1.msra.mxu0 0.0
    %1393 = vmatprep.subr.mxu0 0.0
    %1394 = vmatpush1.msra.mxu0 0.0
    %1395 = vmatprep.subr.mxu0 0.0
    %1396 = vmatpush1.msra.mxu0 0.0
    %1397 = vmatprep.subr.mxu0 0.0
    %1398 = vmatpush1.msra.mxu0 0.0
    %1399 = vmatprep.subr.mxu0 0.0
    %1400 = vmatpush1.msra.mxu0 0.0
    %1401 = vmatprep.subr.mxu0 0.0
    %1402 = vmatpush1.msra.mxu0 0.0
    %1403 = vmatprep.subr.mxu0 0.0
    %1404 = vmatpush1.msra.mxu0 0.0
    %1405 = vmatprep.subr.mxu0 0.0
    %1406 = vmatpush1.msra.mxu0 0.0
    %1407 = vmatprep.subr.mxu0 0.0
    %1408 = vmatpush1.msra.mxu0 0.0
    %1409 = vmatprep.subr.mxu0 0.0
    %1410 = vmatpush1.msra.mxu0 0.0
    %1411 = vmatprep.subr.mxu0 0.0
    %1412 = vmatpush1.msra.mxu0 0.0
    %1413 = vmatprep.subr.mxu0 0.0
    %1414 = vmatpush1.msra.mxu0 0.0
    %1415 = vmatprep.subr.mxu0 0.0
    %1416 = vmatpush1.msra.mxu0 0.0
    %1417 = vmatprep.subr.mxu0 0.0
    %1418 = vmatpush1.msra.mxu0 0.0
    %1419 = vmatprep.subr.mxu0 0.0
    %1420 = vmatpush1.msra.mxu0 0.0
    %1421 = vmatprep.subr.mxu0 0.0
    %1422 = vmatpush1.msra.mxu0 0.0
    %1423 = vmatprep.subr.mxu0 0.0
    %1424 = vmatpush1.msra.mxu0 0.0
    %1425 = vmatprep.subr.mxu0 0.0
    %1426 = vmatpush1.msra.mxu0 0.0
    %1427 = vmatprep.subr.mxu0 0.0
    %1428 = vmatpush1.msra.mxu0 0.0
    %1429 = vmatprep.subr.mxu0 0.0
    %1430 = vmatpush1.msra.mxu0 0.0
    %1431 = vmatprep.subr.mxu0 0.0
    %1432 = vmatpush1.msra.mxu0 0.0
    %1433 = vmatprep.subr.mxu0 0.0
    %1434 = vmatpush1.msra.mxu0 0.0
    %1435 = vmatprep.subr.mxu0 0.0
    %1436 = vmatpush1.msra.mxu0 0.0
    %1437 = vmatprep.subr.mxu0 0.0
    %1438 = vmatpush1.msra.mxu0 0.0
    %1439 = vmatprep.subr.mxu0 0.0
    %1440 = vmatpush1.msra.mxu0 0.0
    %1441 = vmatprep.subr.mxu0 0.0
    %1442 = vmatpush1.msra.mxu0 0.0
    %1443 = vmatprep.subr.mxu0 0.0
    %1444 = vmatpush1.msra.mxu0 0.0
    %1445 = vmatprep.subr.mxu0 0.0
    %1446 = vmatpush1.msra.mxu0 0.0
    %1447 = vmatprep.subr.mxu0 0.0
    %1448 = vmatpush1.msra.mxu0 0.0
    %1449 = vmatprep.mubr.f32.mxu0 0.0
    %1450 = vmatmul.mubr.f32.gmra.mrb[0].mxu0 %v1300
    %v1451 = vpop.f32.mrb[0].mxu0
    %v1452 = vadd.f32 0.0, %v1451
    %v1453 = vpop.f32.mrb[0].mxu0
    %v1454 = vadd.f32 0.0, %v1453
    %1455 = vdwg.mxu0
    %v1456 = vadd.f32 %v1255, %v1381
    %v1457 = vadd.f32 %v1256, %v1383
    %v1458 = vadd.f32 %v1257, %v1452
    %v1459 = vadd.f32 %v1258, %v1454
    %1460 = vrot.lane.b32.xlu0 %v92, 112
    %v1461 = vpop.permute.xlu0 %1460
    %1462 = vrot.lane.b32.xlu0 %v96, 112
    %v1463 = vpop.permute.xlu0 %1462
    %1464 = vrot.lane.b32.xlu0 %v93, 112
    %v1465 = vpop.permute.xlu0 %1464
    %1466 = vrot.lane.b32.xlu0 %v97, 112
    %v1467 = vpop.permute.xlu0 %1466
    %vm1468 = vcmp.lt.s32.totalorder %v109, 112
    %v1469 = vsel %vm1468, %v1465, %v1467
    %v1470 = vsel %vm1468, %v1463, %v1465
    %v1471 = vsel %vm1468, %v1461, %v1463
    %v1472 = vsel %vm1468, %v1467, %v1461
    %v1474 = vlaneseq
    %v1475 = vshrl.u32 %v1474, 7
    %v1476 = vsub.s32 0, %v1475
    %v1477 = vrot.slane %v85, %v1476
    %v1478 = vlaneseq
    %v1479 = vshrl.u32 %v1478, 7
    %v1480 = vsub.s32 1, %v1479
    %v1481 = vrot.slane %v85, %v1480
    %v1482 = vlaneseq
    %v1483 = vshrl.u32 %v1482, 7
    %v1484 = vsub.s32 2, %v1483
    %v1485 = vrot.slane %v85, %v1484
    %v1486 = vlaneseq
    %v1487 = vshrl.u32 %v1486, 7
    %v1488 = vsub.s32 3, %v1487
    %v1489 = vrot.slane %v85, %v1488
    %v1494 = vmul.f32 %v1471, %v1477
    %v1495 = vmul.f32 %v1470, %v1481
    %v1496 = vmul.f32 %v1469, %v1485
    %v1497 = vmul.f32 %v1472, %v1489
    %s1498 = scalar_lea.vmem %s4, 28
    %v1499 = vld [vmem:[%s1498] sm:$0xf]
    %v1501 = vsel %vm181, %v1499, 0
    %v1504 = vsel %vm185, %v1494, 0
    %v1507 = vsel %vm185, %v1495, 0
    %v1510 = vsel %vm185, %v1496, 0
    %v1513 = vsel %vm185, %v1497, 0
    %1515 = vmatprep.subr.mxu0 %v1507
    %1516 = vmatpush1.msra.mxu0 %v1504
    %1517 = vmatprep.subr.mxu0 0.0
    %1518 = vmatpush1.msra.mxu0 0.0
    %1519 = vmatprep.subr.mxu0 0.0
    %1520 = vmatpush1.msra.mxu0 0.0
    %1521 = vmatprep.subr.mxu0 0.0
    %1522 = vmatpush1.msra.mxu0 0.0
    %1523 = vmatprep.subr.mxu0 0.0
    %1524 = vmatpush1.msra.mxu0 0.0
    %1525 = vmatprep.subr.mxu0 0.0
    %1526 = vmatpush1.msra.mxu0 0.0
    %1527 = vmatprep.subr.mxu0 0.0
    %1528 = vmatpush1.msra.mxu0 0.0
    %1529 = vmatprep.subr.mxu0 0.0
    %1530 = vmatpush1.msra.mxu0 0.0
    %1531 = vmatprep.subr.mxu0 0.0
    %1532 = vmatpush1.msra.mxu0 0.0
    %1533 = vmatprep.subr.mxu0 0.0
    %1534 = vmatpush1.msra.mxu0 0.0
    %1535 = vmatprep.subr.mxu0 0.0
    %1536 = vmatpush1.msra.mxu0 0.0
    %1537 = vmatprep.subr.mxu0 0.0
    %1538 = vmatpush1.msra.mxu0 0.0
    %1539 = vmatprep.subr.mxu0 0.0
    %1540 = vmatpush1.msra.mxu0 0.0
    %1541 = vmatprep.subr.mxu0 0.0
    %1542 = vmatpush1.msra.mxu0 0.0
    %1543 = vmatprep.subr.mxu0 0.0
    %1544 = vmatpush1.msra.mxu0 0.0
    %1545 = vmatprep.subr.mxu0 0.0
    %1546 = vmatpush1.msra.mxu0 0.0
    %1547 = vmatprep.subr.mxu0 0.0
    %1548 = vmatpush1.msra.mxu0 0.0
    %1549 = vmatprep.subr.mxu0 0.0
    %1550 = vmatpush1.msra.mxu0 0.0
    %1551 = vmatprep.subr.mxu0 0.0
    %1552 = vmatpush1.msra.mxu0 0.0
    %1553 = vmatprep.subr.mxu0 0.0
    %1554 = vmatpush1.msra.mxu0 0.0
    %1555 = vmatprep.subr.mxu0 0.0
    %1556 = vmatpush1.msra.mxu0 0.0
    %1557 = vmatprep.subr.mxu0 0.0
    %1558 = vmatpush1.msra.mxu0 0.0
    %1559 = vmatprep.subr.mxu0 0.0
    %1560 = vmatpush1.msra.mxu0 0.0
    %1561 = vmatprep.subr.mxu0 0.0
    %1562 = vmatpush1.msra.mxu0 0.0
    %1563 = vmatprep.subr.mxu0 0.0
    %1564 = vmatpush1.msra.mxu0 0.0
    %1565 = vmatprep.subr.mxu0 0.0
    %1566 = vmatpush1.msra.mxu0 0.0
    %1567 = vmatprep.subr.mxu0 0.0
    %1568 = vmatpush1.msra.mxu0 0.0
    %1569 = vmatprep.subr.mxu0 0.0
    %1570 = vmatpush1.msra.mxu0 0.0
    %1571 = vmatprep.subr.mxu0 0.0
    %1572 = vmatpush1.msra.mxu0 0.0
    %1573 = vmatprep.subr.mxu0 0.0
    %1574 = vmatpush1.msra.mxu0 0.0
    %1575 = vmatprep.subr.mxu0 0.0
    %1576 = vmatpush1.msra.mxu0 0.0
    %1577 = vmatprep.subr.mxu0 0.0
    %1578 = vmatpush1.msra.mxu0 0.0
    %1579 = vmatprep.mubr.f32.mxu0 0.0
    %1580 = vmatmul.mubr.f32.gmra.mrb[0].mxu0 %v1501
    %v1581 = vpop.f32.mrb[0].mxu0
    %v1582 = vadd.f32 0.0, %v1581
    %v1583 = vpop.f32.mrb[0].mxu0
    %v1584 = vadd.f32 0.0, %v1583
    %1585 = vdwg.mxu0
    %1586 = vmatprep.subr.mxu0 %v1513
    %1587 = vmatpush1.msra.mxu0 %v1510
    %1588 = vmatprep.subr.mxu0 0.0
    %1589 = vmatpush1.msra.mxu0 0.0
    %1590 = vmatprep.subr.mxu0 0.0
    %1591 = vmatpush1.msra.mxu0 0.0
    %1592 = vmatprep.subr.mxu0 0.0
    %1593 = vmatpush1.msra.mxu0 0.0
    %1594 = vmatprep.subr.mxu0 0.0
    %1595 = vmatpush1.msra.mxu0 0.0
    %1596 = vmatprep.subr.mxu0 0.0
    %1597 = vmatpush1.msra.mxu0 0.0
    %1598 = vmatprep.subr.mxu0 0.0
    %1599 = vmatpush1.msra.mxu0 0.0
    %1600 = vmatprep.subr.mxu0 0.0
    %1601 = vmatpush1.msra.mxu0 0.0
    %1602 = vmatprep.subr.mxu0 0.0
    %1603 = vmatpush1.msra.mxu0 0.0
    %1604 = vmatprep.subr.mxu0 0.0
    %1605 = vmatpush1.msra.mxu0 0.0
    %1606 = vmatprep.subr.mxu0 0.0
    %1607 = vmatpush1.msra.mxu0 0.0
    %1608 = vmatprep.subr.mxu0 0.0
    %1609 = vmatpush1.msra.mxu0 0.0
    %1610 = vmatprep.subr.mxu0 0.0
    %1611 = vmatpush1.msra.mxu0 0.0
    %1612 = vmatprep.subr.mxu0 0.0
    %1613 = vmatpush1.msra.mxu0 0.0
    %1614 = vmatprep.subr.mxu0 0.0
    %1615 = vmatpush1.msra.mxu0 0.0
    %1616 = vmatprep.subr.mxu0 0.0
    %1617 = vmatpush1.msra.mxu0 0.0
    %1618 = vmatprep.subr.mxu0 0.0
    %1619 = vmatpush1.msra.mxu0 0.0
    %1620 = vmatprep.subr.mxu0 0.0
    %1621 = vmatpush1.msra.mxu0 0.0
    %1622 = vmatprep.subr.mxu0 0.0
    %1623 = vmatpush1.msra.mxu0 0.0
    %1624 = vmatprep.subr.mxu0 0.0
    %1625 = vmatpush1.msra.mxu0 0.0
    %1626 = vmatprep.subr.mxu0 0.0
    %1627 = vmatpush1.msra.mxu0 0.0
    %1628 = vmatprep.subr.mxu0 0.0
    %1629 = vmatpush1.msra.mxu0 0.0
    %1630 = vmatprep.subr.mxu0 0.0
    %1631 = vmatpush1.msra.mxu0 0.0
    %1632 = vmatprep.subr.mxu0 0.0
    %1633 = vmatpush1.msra.mxu0 0.0
    %1634 = vmatprep.subr.mxu0 0.0
    %1635 = vmatpush1.msra.mxu0 0.0
    %1636 = vmatprep.subr.mxu0 0.0
    %1637 = vmatpush1.msra.mxu0 0.0
    %1638 = vmatprep.subr.mxu0 0.0
    %1639 = vmatpush1.msra.mxu0 0.0
    %1640 = vmatprep.subr.mxu0 0.0
    %1641 = vmatpush1.msra.mxu0 0.0
    %1642 = vmatprep.subr.mxu0 0.0
    %1643 = vmatpush1.msra.mxu0 0.0
    %1644 = vmatprep.subr.mxu0 0.0
    %1645 = vmatpush1.msra.mxu0 0.0
    %1646 = vmatprep.subr.mxu0 0.0
    %1647 = vmatpush1.msra.mxu0 0.0
    %1648 = vmatprep.subr.mxu0 0.0
    %1649 = vmatpush1.msra.mxu0 0.0
    %1650 = vmatprep.mubr.f32.mxu0 0.0
    %1651 = vmatmul.mubr.f32.gmra.mrb[0].mxu0 %v1501
    %v1652 = vpop.f32.mrb[0].mxu0
    %v1653 = vadd.f32 0.0, %v1652
    %v1654 = vpop.f32.mrb[0].mxu0
    %v1655 = vadd.f32 0.0, %v1654
    %1656 = vdwg.mxu0
    %v1657 = vadd.f32 %v1456, %v1582
    %v1658 = vadd.f32 %v1457, %v1584
    %v1659 = vadd.f32 %v1458, %v1653
    %v1660 = vadd.f32 %v1459, %v1655
    %1661 = vrot.lane.b32.xlu0 %v92, 111
    %v1662 = vpop.permute.xlu0 %1661
    %1663 = vrot.lane.b32.xlu0 %v96, 111
    %v1664 = vpop.permute.xlu0 %1663
    %1665 = vrot.lane.b32.xlu0 %v93, 111
    %v1666 = vpop.permute.xlu0 %1665
    %1667 = vrot.lane.b32.xlu0 %v97, 111
    %v1668 = vpop.permute.xlu0 %1667
    %vm1669 = vcmp.lt.s32.totalorder %v109, 111
    %v1670 = vsel %vm1669, %v1666, %v1668
    %v1671 = vsel %vm1669, %v1664, %v1666
    %v1672 = vsel %vm1669, %v1662, %v1664
    %v1673 = vsel %vm1669, %v1668, %v1662
    %v1675 = vlaneseq
    %v1676 = vshrl.u32 %v1675, 7
    %v1677 = vsub.s32 0, %v1676
    %v1678 = vrot.slane %v87, %v1677
    %v1679 = vlaneseq
    %v1680 = vshrl.u32 %v1679, 7
    %v1681 = vsub.s32 1, %v1680
    %v1682 = vrot.slane %v87, %v1681
    %v1683 = vlaneseq
    %v1684 = vshrl.u32 %v1683, 7
    %v1685 = vsub.s32 2, %v1684
    %v1686 = vrot.slane %v87, %v1685
    %v1687 = vlaneseq
    %v1688 = vshrl.u32 %v1687, 7
    %v1689 = vsub.s32 3, %v1688
    %v1690 = vrot.slane %v87, %v1689
    %v1695 = vmul.f32 %v1672, %v1678
    %v1696 = vmul.f32 %v1671, %v1682
    %v1697 = vmul.f32 %v1670, %v1686
    %v1698 = vmul.f32 %v1673, %v1690
    %s1699 = scalar_lea.vmem %s4, 32
    %v1700 = vld [vmem:[%s1699] sm:$0xf]
    %v1702 = vsel %vm181, %v1700, 0
    %v1705 = vsel %vm185, %v1695, 0
    %v1708 = vsel %vm185, %v1696, 0
    %v1711 = vsel %vm185, %v1697, 0
    %v1714 = vsel %vm185, %v1698, 0
    %1716 = vmatprep.subr.mxu0 %v1708
    %1717 = vmatpush1.msra.mxu0 %v1705
    %1718 = vmatprep.subr.mxu0 0.0
    %1719 = vmatpush1.msra.mxu0 0.0
    %1720 = vmatprep.subr.mxu0 0.0
    %1721 = vmatpush1.msra.mxu0 0.0
    %1722 = vmatprep.subr.mxu0 0.0
    %1723 = vmatpush1.msra.mxu0 0.0
    %1724 = vmatprep.subr.mxu0 0.0
    %1725 = vmatpush1.msra.mxu0 0.0
    %1726 = vmatprep.subr.mxu0 0.0
    %1727 = vmatpush1.msra.mxu0 0.0
    %1728 = vmatprep.subr.mxu0 0.0
    %1729 = vmatpush1.msra.mxu0 0.0
    %1730 = vmatprep.subr.mxu0 0.0
    %1731 = vmatpush1.msra.mxu0 0.0
    %1732 = vmatprep.subr.mxu0 0.0
    %1733 = vmatpush1.msra.mxu0 0.0
    %1734 = vmatprep.subr.mxu0 0.0
    %1735 = vmatpush1.msra.mxu0 0.0
    %1736 = vmatprep.subr.mxu0 0.0
    %1737 = vmatpush1.msra.mxu0 0.0
    %1738 = vmatprep.subr.mxu0 0.0
    %1739 = vmatpush1.msra.mxu0 0.0
    %1740 = vmatprep.subr.mxu0 0.0
    %1741 = vmatpush1.msra.mxu0 0.0
    %1742 = vmatprep.subr.mxu0 0.0
    %1743 = vmatpush1.msra.mxu0 0.0
    %1744 = vmatprep.subr.mxu0 0.0
    %1745 = vmatpush1.msra.mxu0 0.0
    %1746 = vmatprep.subr.mxu0 0.0
    %1747 = vmatpush1.msra.mxu0 0.0
    %1748 = vmatprep.subr.mxu0 0.0
    %1749 = vmatpush1.msra.mxu0 0.0
    %1750 = vmatprep.subr.mxu0 0.0
    %1751 = vmatpush1.msra.mxu0 0.0
    %1752 = vmatprep.subr.mxu0 0.0
    %1753 = vmatpush1.msra.mxu0 0.0
    %1754 = vmatprep.subr.mxu0 0.0
    %1755 = vmatpush1.msra.mxu0 0.0
    %1756 = vmatprep.subr.mxu0 0.0
    %1757 = vmatpush1.msra.mxu0 0.0
    %1758 = vmatprep.subr.mxu0 0.0
    %1759 = vmatpush1.msra.mxu0 0.0
    %1760 = vmatprep.subr.mxu0 0.0
    %1761 = vmatpush1.msra.mxu0 0.0
    %1762 = vmatprep.subr.mxu0 0.0
    %1763 = vmatpush1.msra.mxu0 0.0
    %1764 = vmatprep.subr.mxu0 0.0
    %1765 = vmatpush1.msra.mxu0 0.0
    %1766 = vmatprep.subr.mxu0 0.0
    %1767 = vmatpush1.msra.mxu0 0.0
    %1768 = vmatprep.subr.mxu0 0.0
    %1769 = vmatpush1.msra.mxu0 0.0
    %1770 = vmatprep.subr.mxu0 0.0
    %1771 = vmatpush1.msra.mxu0 0.0
    %1772 = vmatprep.subr.mxu0 0.0
    %1773 = vmatpush1.msra.mxu0 0.0
    %1774 = vmatprep.subr.mxu0 0.0
    %1775 = vmatpush1.msra.mxu0 0.0
    %1776 = vmatprep.subr.mxu0 0.0
    %1777 = vmatpush1.msra.mxu0 0.0
    %1778 = vmatprep.subr.mxu0 0.0
    %1779 = vmatpush1.msra.mxu0 0.0
    %1780 = vmatprep.mubr.f32.mxu0 0.0
    %1781 = vmatmul.mubr.f32.gmra.mrb[0].mxu0 %v1702
    %v1782 = vpop.f32.mrb[0].mxu0
    %v1783 = vadd.f32 0.0, %v1782
    %v1784 = vpop.f32.mrb[0].mxu0
    %v1785 = vadd.f32 0.0, %v1784
    %1786 = vdwg.mxu0
    %1787 = vmatprep.subr.mxu0 %v1714
    %1788 = vmatpush1.msra.mxu0 %v1711
    %1789 = vmatprep.subr.mxu0 0.0
    %1790 = vmatpush1.msra.mxu0 0.0
    %1791 = vmatprep.subr.mxu0 0.0
    %1792 = vmatpush1.msra.mxu0 0.0
    %1793 = vmatprep.subr.mxu0 0.0
    %1794 = vmatpush1.msra.mxu0 0.0
    %1795 = vmatprep.subr.mxu0 0.0
    %1796 = vmatpush1.msra.mxu0 0.0
    %1797 = vmatprep.subr.mxu0 0.0
    %1798 = vmatpush1.msra.mxu0 0.0
    %1799 = vmatprep.subr.mxu0 0.0
    %1800 = vmatpush1.msra.mxu0 0.0
    %1801 = vmatprep.subr.mxu0 0.0
    %1802 = vmatpush1.msra.mxu0 0.0
    %1803 = vmatprep.subr.mxu0 0.0
    %1804 = vmatpush1.msra.mxu0 0.0
    %1805 = vmatprep.subr.mxu0 0.0
    %1806 = vmatpush1.msra.mxu0 0.0
    %1807 = vmatprep.subr.mxu0 0.0
    %1808 = vmatpush1.msra.mxu0 0.0
    %1809 = vmatprep.subr.mxu0 0.0
    %1810 = vmatpush1.msra.mxu0 0.0
    %1811 = vmatprep.subr.mxu0 0.0
    %1812 = vmatpush1.msra.mxu0 0.0
    %1813 = vmatprep.subr.mxu0 0.0
    %1814 = vmatpush1.msra.mxu0 0.0
    %1815 = vmatprep.subr.mxu0 0.0
    %1816 = vmatpush1.msra.mxu0 0.0
    %1817 = vmatprep.subr.mxu0 0.0
    %1818 = vmatpush1.msra.mxu0 0.0
    %1819 = vmatprep.subr.mxu0 0.0
    %1820 = vmatpush1.msra.mxu0 0.0
    %1821 = vmatprep.subr.mxu0 0.0
    %1822 = vmatpush1.msra.mxu0 0.0
    %1823 = vmatprep.subr.mxu0 0.0
    %1824 = vmatpush1.msra.mxu0 0.0
    %1825 = vmatprep.subr.mxu0 0.0
    %1826 = vmatpush1.msra.mxu0 0.0
    %1827 = vmatprep.subr.mxu0 0.0
    %1828 = vmatpush1.msra.mxu0 0.0
    %1829 = vmatprep.subr.mxu0 0.0
    %1830 = vmatpush1.msra.mxu0 0.0
    %1831 = vmatprep.subr.mxu0 0.0
    %1832 = vmatpush1.msra.mxu0 0.0
    %1833 = vmatprep.subr.mxu0 0.0
    %1834 = vmatpush1.msra.mxu0 0.0
    %1835 = vmatprep.subr.mxu0 0.0
    %1836 = vmatpush1.msra.mxu0 0.0
    %1837 = vmatprep.subr.mxu0 0.0
    %1838 = vmatpush1.msra.mxu0 0.0
    %1839 = vmatprep.subr.mxu0 0.0
    %1840 = vmatpush1.msra.mxu0 0.0
    %1841 = vmatprep.subr.mxu0 0.0
    %1842 = vmatpush1.msra.mxu0 0.0
    %1843 = vmatprep.subr.mxu0 0.0
    %1844 = vmatpush1.msra.mxu0 0.0
    %1845 = vmatprep.subr.mxu0 0.0
    %1846 = vmatpush1.msra.mxu0 0.0
    %1847 = vmatprep.subr.mxu0 0.0
    %1848 = vmatpush1.msra.mxu0 0.0
    %1849 = vmatprep.subr.mxu0 0.0
    %1850 = vmatpush1.msra.mxu0 0.0
    %1851 = vmatprep.mubr.f32.mxu0 0.0
    %1852 = vmatmul.mubr.f32.gmra.mrb[0].mxu0 %v1702
    %v1853 = vpop.f32.mrb[0].mxu0
    %v1854 = vadd.f32 0.0, %v1853
    %v1855 = vpop.f32.mrb[0].mxu0
    %v1856 = vadd.f32 0.0, %v1855
    %1857 = vdwg.mxu0
    %v1858 = vadd.f32 %v1657, %v1783
    %v1859 = vadd.f32 %v1658, %v1785
    %v1860 = vadd.f32 %v1659, %v1854
    %v1861 = vadd.f32 %v1660, %v1856
    %v1862 = vld [vmem:[%s5] sm:$0xf]
    %1864 = vset.pattern.permute.xlu0 0
    %1865 = vperm.xlu0 %1864, %v1862
    %v1866 = vpop.permute.xlu0 %1865
    %v1868 = vadd.f32 %v1858, %v1866
    %v1869 = vadd.f32 %v1859, %v1866
    %v1870 = vadd.f32 %v1860, %v1866
    %v1871 = vadd.f32 %v1861, %v1866
    %v1872 = vmax.f32 %v1868, 0.0
    %v1873 = vmax.f32 %v1869, 0.0
    %v1874 = vmax.f32 %v1870, 0.0
    %v1875 = vmax.f32 %v1871, 0.0
    %v1880 = vcombine.low %v1872, %v1873
    %v1881 = vcombine.low %v1874, %v1875
    %1884 = vst [vmem:[#allocation2] sm:$0xff] %v1880
    %1885 = vst [vmem:[#allocation2 + $0x8] sm:$0xff] %v1881
  $region33: #{_fused_forward.1} parent=0 // pred_fallthru
    _
  %p1886 = scmp.ge.s32.totalorder %s68, 1
  // Predicated region
  $region34: #{_fused_forward.1} parent=0 // pred_check
    %p1887 = pneg %p1886
  $region35: #{_fused_forward.1} parent=0 // pred_check_branch
    %1889 = sbr.rel (%p1887) target = $region37
  $region36: #{_fused_forward.1} parent=0 // pred_region
    %v1890 = vld [vmem:[#allocation2] sm:$0xff]
    %v1891 = vld [vmem:[#allocation2 + $0x8] sm:$0xff]
    %v1894 = vcombine.high %v1890, %v1890
    %v1895 = vcombine.high %v1891, %v1891
    %1898 = vrot.lane.b32.xlu0 %v1890, 17
    %v1899 = vpop.permute.xlu0 %1898
    %1900 = vrot.lane.b32.xlu0 %v1894, 17
    %v1901 = vpop.permute.xlu0 %1900
    %1902 = vrot.lane.b32.xlu0 %v1891, 17
    %v1903 = vpop.permute.xlu0 %1902
    %1904 = vrot.lane.b32.xlu0 %v1895, 17
    %v1905 = vpop.permute.xlu0 %1904
    %v1906 = vlaneseq
    %v1907 = vand.u32 %v1906, 127
    %vm1908 = vcmp.lt.s32.totalorder %v1907, 17
    %v1909 = vsel %vm1908, %v1903, %v1905
    %v1910 = vsel %vm1908, %v1901, %v1903
    %v1911 = vsel %vm1908, %v1899, %v1901
    %v1912 = vsel %vm1908, %v1905, %v1899
    %v1914 = vlaneseq
    %v1915 = vshrl.u32 %v1914, 7
    %v1916 = vsub.s32 0, %v1915
    %v1917 = vrot.slane %v73, %v1916
    %v1918 = vlaneseq
    %v1919 = vshrl.u32 %v1918, 7
    %v1920 = vsub.s32 1, %v1919
    %v1921 = vrot.slane %v73, %v1920
    %v1922 = vlaneseq
    %v1923 = vshrl.u32 %v1922, 7
    %v1924 = vsub.s32 2, %v1923
    %v1925 = vrot.slane %v73, %v1924
    %v1926 = vlaneseq
    %v1927 = vshrl.u32 %v1926, 7
    %v1928 = vsub.s32 3, %v1927
    %v1929 = vrot.slane %v73, %v1928
    %v1934 = vmul.f32 %v1912, %v1917
    %v1935 = vmul.f32 %v1911, %v1921
    %v1936 = vmul.f32 %v1910, %v1925
    %v1937 = vmul.f32 %v1909, %v1929
    %s1938 = scalar_lea.vmem %s4, 36
    %v1939 = vld [vmem:[%s1938] sm:$0xf]
    %1940 = vrot.lane.b32.xlu0 %v1890, 16
    %v1941 = vpop.permute.xlu0 %1940
    %1942 = vrot.lane.b32.xlu0 %v1894, 16
    %v1943 = vpop.permute.xlu0 %1942
    %1944 = vrot.lane.b32.xlu0 %v1891, 16
    %v1945 = vpop.permute.xlu0 %1944
    %1946 = vrot.lane.b32.xlu0 %v1895, 16
    %v1947 = vpop.permute.xlu0 %1946
    %vm1948 = vcmp.lt.s32.totalorder %v1907, 16
    %v1949 = vsel %vm1948, %v1945, %v1947
    %v1950 = vsel %vm1948, %v1943, %v1945
    %v1951 = vsel %vm1948, %v1941, %v1943
    %v1952 = vsel %vm1948, %v1947, %v1941
    %v1954 = vlaneseq
    %v1955 = vshrl.u32 %v1954, 7
    %v1956 = vsub.s32 0, %v1955
    %v1957 = vrot.slane %v75, %v1956
    %v1958 = vlaneseq
    %v1959 = vshrl.u32 %v1958, 7
    %v1960 = vsub.s32 1, %v1959
    %v1961 = vrot.slane %v75, %v1960
    %v1962 = vlaneseq
    %v1963 = vshrl.u32 %v1962, 7
    %v1964 = vsub.s32 2, %v1963
    %v1965 = vrot.slane %v75, %v1964
    %v1966 = vlaneseq
    %v1967 = vshrl.u32 %v1966, 7
    %v1968 = vsub.s32 3, %v1967
    %v1969 = vrot.slane %v75, %v1968
    %v1974 = vmul.f32 %v1952, %v1957
    %v1975 = vmul.f32 %v1951, %v1961
    %v1976 = vmul.f32 %v1950, %v1965
    %v1977 = vmul.f32 %v1949, %v1969
    %s1978 = scalar_lea.vmem %s4, 40
    %v1979 = vld [vmem:[%s1978] sm:$0xf]
    %vm1980 = vcmask 31744
    %v1982 = vsel %vm1980, %v1979, 0
    %vm1984 = vcmask 1043456
    %v1986 = vsel %vm1984, %v1974, 0
    %v1989 = vsel %vm1984, %v1975, 0
    %v1992 = vsel %vm1984, %v1976, 0
    %v1995 = vsel %vm1984, %v1977, 0
    %1997 = vmatprep.subr.mxu0 %v1989
    %1998 = vmatpush1.msra.mxu0 %v1986
    %1999 = vmatprep.subr.mxu0 0.0
    %2000 = vmatpush1.msra.mxu0 0.0
    %2001 = vmatprep.subr.mxu0 0.0
    %2002 = vmatpush1.msra.mxu0 0.0
    %2003 = vmatprep.subr.mxu0 0.0
    %2004 = vmatpush1.msra.mxu0 0.0
    %2005 = vmatprep.subr.mxu0 0.0
    %2006 = vmatpush1.msra.mxu0 0.0
    %2007 = vmatprep.subr.mxu0 0.0
    %2008 = vmatpush1.msra.mxu0 0.0
    %2009 = vmatprep.subr.mxu0 0.0
    %2010 = vmatpush1.msra.mxu0 0.0
    %2011 = vmatprep.subr.mxu0 0.0
    %2012 = vmatpush1.msra.mxu0 0.0
    %2013 = vmatprep.subr.mxu0 0.0
    %2014 = vmatpush1.msra.mxu0 0.0
    %2015 = vmatprep.subr.mxu0 0.0
    %2016 = vmatpush1.msra.mxu0 0.0
    %2017 = vmatprep.subr.mxu0 0.0
    %2018 = vmatpush1.msra.mxu0 0.0
    %2019 = vmatprep.subr.mxu0 0.0
    %2020 = vmatpush1.msra.mxu0 0.0
    %2021 = vmatprep.subr.mxu0 0.0
    %2022 = vmatpush1.msra.mxu0 0.0
    %2023 = vmatprep.subr.mxu0 0.0
    %2024 = vmatpush1.msra.mxu0 0.0
    %2025 = vmatprep.subr.mxu0 0.0
    %2026 = vmatpush1.msra.mxu0 0.0
    %2027 = vmatprep.subr.mxu0 0.0
    %2028 = vmatpush1.msra.mxu0 0.0
    %2029 = vmatprep.subr.mxu0 0.0
    %2030 = vmatpush1.msra.mxu0 0.0
    %2031 = vmatprep.subr.mxu0 0.0
    %2032 = vmatpush1.msra.mxu0 0.0
    %2033 = vmatprep.subr.mxu0 0.0
    %2034 = vmatpush1.msra.mxu0 0.0
    %2035 = vmatprep.subr.mxu0 0.0
    %2036 = vmatpush1.msra.mxu0 0.0
    %2037 = vmatprep.subr.mxu0 0.0
    %2038 = vmatpush1.msra.mxu0 0.0
    %2039 = vmatprep.subr.mxu0 0.0
    %2040 = vmatpush1.msra.mxu0 0.0
    %2041 = vmatprep.subr.mxu0 0.0
    %2042 = vmatpush1.msra.mxu0 0.0
    %2043 = vmatprep.subr.mxu0 0.0
    %2044 = vmatpush1.msra.mxu0 0.0
    %2045 = vmatprep.subr.mxu0 0.0
    %2046 = vmatpush1.msra.mxu0 0.0
    %2047 = vmatprep.subr.mxu0 0.0
    %2048 = vmatpush1.msra.mxu0 0.0
    %2049 = vmatprep.subr.mxu0 0.0
    %2050 = vmatpush1.msra.mxu0 0.0
    %2051 = vmatprep.subr.mxu0 0.0
    %2052 = vmatpush1.msra.mxu0 0.0
    %2053 = vmatprep.subr.mxu0 0.0
    %2054 = vmatpush1.msra.mxu0 0.0
    %2055 = vmatprep.subr.mxu0 0.0
    %2056 = vmatpush1.msra.mxu0 0.0
    %2057 = vmatprep.subr.mxu0 0.0
    %2058 = vmatpush1.msra.mxu0 0.0
    %2059 = vmatprep.subr.mxu0 0.0
    %2060 = vmatpush1.msra.mxu0 0.0
    %2061 = vmatprep.mubr.f32.mxu0 0.0
    %2062 = vmatmul.mubr.f32.gmra.mrb[0].mxu0 %v1982
    %v2063 = vpop.f32.mrb[0].mxu0
    %v2064 = vadd.f32 0.0, %v2063
    %v2065 = vpop.f32.mrb[0].mxu0
    %v2066 = vadd.f32 0.0, %v2065
    %2067 = vdwg.mxu0
    %2068 = vmatprep.subr.mxu0 %v1995
    %2069 = vmatpush1.msra.mxu0 %v1992
    %2070 = vmatprep.subr.mxu0 0.0
    %2071 = vmatpush1.msra.mxu0 0.0
    %2072 = vmatprep.subr.mxu0 0.0
    %2073 = vmatpush1.msra.mxu0 0.0
    %2074 = vmatprep.subr.mxu0 0.0
    %2075 = vmatpush1.msra.mxu0 0.0
    %2076 = vmatprep.subr.mxu0 0.0
    %2077 = vmatpush1.msra.mxu0 0.0
    %2078 = vmatprep.subr.mxu0 0.0
    %2079 = vmatpush1.msra.mxu0 0.0
    %2080 = vmatprep.subr.mxu0 0.0
    %2081 = vmatpush1.msra.mxu0 0.0
    %2082 = vmatprep.subr.mxu0 0.0
    %2083 = vmatpush1.msra.mxu0 0.0
    %2084 = vmatprep.subr.mxu0 0.0
    %2085 = vmatpush1.msra.mxu0 0.0
    %2086 = vmatprep.subr.mxu0 0.0
    %2087 = vmatpush1.msra.mxu0 0.0
    %2088 = vmatprep.subr.mxu0 0.0
    %2089 = vmatpush1.msra.mxu0 0.0
    %2090 = vmatprep.subr.mxu0 0.0
    %2091 = vmatpush1.msra.mxu0 0.0
    %2092 = vmatprep.subr.mxu0 0.0
    %2093 = vmatpush1.msra.mxu0 0.0
    %2094 = vmatprep.subr.mxu0 0.0
    %2095 = vmatpush1.msra.mxu0 0.0
    %2096 = vmatprep.subr.mxu0 0.0
    %2097 = vmatpush1.msra.mxu0 0.0
    %2098 = vmatprep.subr.mxu0 0.0
    %2099 = vmatpush1.msra.mxu0 0.0
    %2100 = vmatprep.subr.mxu0 0.0
    %2101 = vmatpush1.msra.mxu0 0.0
    %2102 = vmatprep.subr.mxu0 0.0
    %2103 = vmatpush1.msra.mxu0 0.0
    %2104 = vmatprep.subr.mxu0 0.0
    %2105 = vmatpush1.msra.mxu0 0.0
    %2106 = vmatprep.subr.mxu0 0.0
    %2107 = vmatpush1.msra.mxu0 0.0
    %2108 = vmatprep.subr.mxu0 0.0
    %2109 = vmatpush1.msra.mxu0 0.0
    %2110 = vmatprep.subr.mxu0 0.0
    %2111 = vmatpush1.msra.mxu0 0.0
    %2112 = vmatprep.subr.mxu0 0.0
    %2113 = vmatpush1.msra.mxu0 0.0
    %2114 = vmatprep.subr.mxu0 0.0
    %2115 = vmatpush1.msra.mxu0 0.0
    %2116 = vmatprep.subr.mxu0 0.0
    %2117 = vmatpush1.msra.mxu0 0.0
    %2118 = vmatprep.subr.mxu0 0.0
    %2119 = vmatpush1.msra.mxu0 0.0
    %2120 = vmatprep.subr.mxu0 0.0
    %2121 = vmatpush1.msra.mxu0 0.0
    %2122 = vmatprep.subr.mxu0 0.0
    %2123 = vmatpush1.msra.mxu0 0.0
    %2124 = vmatprep.subr.mxu0 0.0
    %2125 = vmatpush1.msra.mxu0 0.0
    %2126 = vmatprep.subr.mxu0 0.0
    %2127 = vmatpush1.msra.mxu0 0.0
    %2128 = vmatprep.subr.mxu0 0.0
    %2129 = vmatpush1.msra.mxu0 0.0
    %2130 = vmatprep.subr.mxu0 0.0
    %2131 = vmatpush1.msra.mxu0 0.0
    %2132 = vmatprep.mubr.f32.mxu0 0.0
    %2133 = vmatmul.mubr.f32.gmra.mrb[0].mxu0 %v1982
    %v2134 = vpop.f32.mrb[0].mxu0
    %v2135 = vadd.f32 0.0, %v2134
    %v2136 = vpop.f32.mrb[0].mxu0
    %v2137 = vadd.f32 0.0, %v2136
    %2138 = vdwg.mxu0
    %v2140 = vsel %vm1980, %v1939, 0
    %v2143 = vsel %vm1984, %v1934, 0
    %v2146 = vsel %vm1984, %v1935, 0
    %v2149 = vsel %vm1984, %v1936, 0
    %v2152 = vsel %vm1984, %v1937, 0
    %2154 = vmatprep.subr.mxu0 %v2146
    %2155 = vmatpush1.msra.mxu0 %v2143
    %2156 = vmatprep.subr.mxu0 0.0
    %2157 = vmatpush1.msra.mxu0 0.0
    %2158 = vmatprep.subr.mxu0 0.0
    %2159 = vmatpush1.msra.mxu0 0.0
    %2160 = vmatprep.subr.mxu0 0.0
    %2161 = vmatpush1.msra.mxu0 0.0
    %2162 = vmatprep.subr.mxu0 0.0
    %2163 = vmatpush1.msra.mxu0 0.0
    %2164 = vmatprep.subr.mxu0 0.0
    %2165 = vmatpush1.msra.mxu0 0.0
    %2166 = vmatprep.subr.mxu0 0.0
    %2167 = vmatpush1.msra.mxu0 0.0
    %2168 = vmatprep.subr.mxu0 0.0
    %2169 = vmatpush1.msra.mxu0 0.0
    %2170 = vmatprep.subr.mxu0 0.0
    %2171 = vmatpush1.msra.mxu0 0.0
    %2172 = vmatprep.subr.mxu0 0.0
    %2173 = vmatpush1.msra.mxu0 0.0
    %2174 = vmatprep.subr.mxu0 0.0
    %2175 = vmatpush1.msra.mxu0 0.0
    %2176 = vmatprep.subr.mxu0 0.0
    %2177 = vmatpush1.msra.mxu0 0.0
    %2178 = vmatprep.subr.mxu0 0.0
    %2179 = vmatpush1.msra.mxu0 0.0
    %2180 = vmatprep.subr.mxu0 0.0
    %2181 = vmatpush1.msra.mxu0 0.0
    %2182 = vmatprep.subr.mxu0 0.0
    %2183 = vmatpush1.msra.mxu0 0.0
    %2184 = vmatprep.subr.mxu0 0.0
    %2185 = vmatpush1.msra.mxu0 0.0
    %2186 = vmatprep.subr.mxu0 0.0
    %2187 = vmatpush1.msra.mxu0 0.0
    %2188 = vmatprep.subr.mxu0 0.0
    %2189 = vmatpush1.msra.mxu0 0.0
    %2190 = vmatprep.subr.mxu0 0.0
    %2191 = vmatpush1.msra.mxu0 0.0
    %2192 = vmatprep.subr.mxu0 0.0
    %2193 = vmatpush1.msra.mxu0 0.0
    %2194 = vmatprep.subr.mxu0 0.0
    %2195 = vmatpush1.msra.mxu0 0.0
    %2196 = vmatprep.subr.mxu0 0.0
    %2197 = vmatpush1.msra.mxu0 0.0
    %2198 = vmatprep.subr.mxu0 0.0
    %2199 = vmatpush1.msra.mxu0 0.0
    %2200 = vmatprep.subr.mxu0 0.0
    %2201 = vmatpush1.msra.mxu0 0.0
    %2202 = vmatprep.subr.mxu0 0.0
    %2203 = vmatpush1.msra.mxu0 0.0
    %2204 = vmatprep.subr.mxu0 0.0
    %2205 = vmatpush1.msra.mxu0 0.0
    %2206 = vmatprep.subr.mxu0 0.0
    %2207 = vmatpush1.msra.mxu0 0.0
    %2208 = vmatprep.subr.mxu0 0.0
    %2209 = vmatpush1.msra.mxu0 0.0
    %2210 = vmatprep.subr.mxu0 0.0
    %2211 = vmatpush1.msra.mxu0 0.0
    %2212 = vmatprep.subr.mxu0 0.0
    %2213 = vmatpush1.msra.mxu0 0.0
    %2214 = vmatprep.subr.mxu0 0.0
    %2215 = vmatpush1.msra.mxu0 0.0
    %2216 = vmatprep.subr.mxu0 0.0
    %2217 = vmatpush1.msra.mxu0 0.0
    %2218 = vmatprep.mubr.f32.mxu0 0.0
    %2219 = vmatmul.mubr.f32.gmra.mrb[0].mxu0 %v2140
    %v2220 = vpop.f32.mrb[0].mxu0
    %v2221 = vadd.f32 %v2064, %v2220
    %v2222 = vpop.f32.mrb[0].mxu0
    %v2223 = vadd.f32 %v2066, %v2222
    %2224 = vdwg.mxu0
    %2225 = vmatprep.subr.mxu0 %v2152
    %2226 = vmatpush1.msra.mxu0 %v2149
    %2227 = vmatprep.subr.mxu0 0.0
    %2228 = vmatpush1.msra.mxu0 0.0
    %2229 = vmatprep.subr.mxu0 0.0
    %2230 = vmatpush1.msra.mxu0 0.0
    %2231 = vmatprep.subr.mxu0 0.0
    %2232 = vmatpush1.msra.mxu0 0.0
    %2233 = vmatprep.subr.mxu0 0.0
    %2234 = vmatpush1.msra.mxu0 0.0
    %2235 = vmatprep.subr.mxu0 0.0
    %2236 = vmatpush1.msra.mxu0 0.0
    %2237 = vmatprep.subr.mxu0 0.0
    %2238 = vmatpush1.msra.mxu0 0.0
    %2239 = vmatprep.subr.mxu0 0.0
    %2240 = vmatpush1.msra.mxu0 0.0
    %2241 = vmatprep.subr.mxu0 0.0
    %2242 = vmatpush1.msra.mxu0 0.0
    %2243 = vmatprep.subr.mxu0 0.0
    %2244 = vmatpush1.msra.mxu0 0.0
    %2245 = vmatprep.subr.mxu0 0.0
    %2246 = vmatpush1.msra.mxu0 0.0
    %2247 = vmatprep.subr.mxu0 0.0
    %2248 = vmatpush1.msra.mxu0 0.0
    %2249 = vmatprep.subr.mxu0 0.0
    %2250 = vmatpush1.msra.mxu0 0.0
    %2251 = vmatprep.subr.mxu0 0.0
    %2252 = vmatpush1.msra.mxu0 0.0
    %2253 = vmatprep.subr.mxu0 0.0
    %2254 = vmatpush1.msra.mxu0 0.0
    %2255 = vmatprep.subr.mxu0 0.0
    %2256 = vmatpush1.msra.mxu0 0.0
    %2257 = vmatprep.subr.mxu0 0.0
    %2258 = vmatpush1.msra.mxu0 0.0
    %2259 = vmatprep.subr.mxu0 0.0
    %2260 = vmatpush1.msra.mxu0 0.0
    %2261 = vmatprep.subr.mxu0 0.0
    %2262 = vmatpush1.msra.mxu0 0.0
    %2263 = vmatprep.subr.mxu0 0.0
    %2264 = vmatpush1.msra.mxu0 0.0
    %2265 = vmatprep.subr.mxu0 0.0
    %2266 = vmatpush1.msra.mxu0 0.0
    %2267 = vmatprep.subr.mxu0 0.0
    %2268 = vmatpush1.msra.mxu0 0.0
    %2269 = vmatprep.subr.mxu0 0.0
    %2270 = vmatpush1.msra.mxu0 0.0
    %2271 = vmatprep.subr.mxu0 0.0
    %2272 = vmatpush1.msra.mxu0 0.0
    %2273 = vmatprep.subr.mxu0 0.0
    %2274 = vmatpush1.msra.mxu0 0.0
    %2275 = vmatprep.subr.mxu0 0.0
    %2276 = vmatpush1.msra.mxu0 0.0
    %2277 = vmatprep.subr.mxu0 0.0
    %2278 = vmatpush1.msra.mxu0 0.0
    %2279 = vmatprep.subr.mxu0 0.0
    %2280 = vmatpush1.msra.mxu0 0.0
    %2281 = vmatprep.subr.mxu0 0.0
    %2282 = vmatpush1.msra.mxu0 0.0
    %2283 = vmatprep.subr.mxu0 0.0
    %2284 = vmatpush1.msra.mxu0 0.0
    %2285 = vmatprep.subr.mxu0 0.0
    %2286 = vmatpush1.msra.mxu0 0.0
    %2287 = vmatprep.subr.mxu0 0.0
    %2288 = vmatpush1.msra.mxu0 0.0
    %2289 = vmatprep.mubr.f32.mxu0 0.0
    %2290 = vmatmul.mubr.f32.gmra.mrb[0].mxu0 %v2140
    %v2291 = vpop.f32.mrb[0].mxu0
    %v2292 = vadd.f32 %v2135, %v2291
    %v2293 = vpop.f32.mrb[0].mxu0
    %v2294 = vadd.f32 %v2137, %v2293
    %2295 = vdwg.mxu0
    %2296 = vrot.lane.b32.xlu0 %v1890, 15
    %v2297 = vpop.permute.xlu0 %2296
    %2298 = vrot.lane.b32.xlu0 %v1894, 15
    %v2299 = vpop.permute.xlu0 %2298
    %2300 = vrot.lane.b32.xlu0 %v1891, 15
    %v2301 = vpop.permute.xlu0 %2300
    %2302 = vrot.lane.b32.xlu0 %v1895, 15
    %v2303 = vpop.permute.xlu0 %2302
    %vm2304 = vcmp.lt.s32.totalorder %v1907, 15
    %v2305 = vsel %vm2304, %v2301, %v2303
    %v2306 = vsel %vm2304, %v2299, %v2301
    %v2307 = vsel %vm2304, %v2297, %v2299
    %v2308 = vsel %vm2304, %v2303, %v2297
    %v2310 = vlaneseq
    %v2311 = vshrl.u32 %v2310, 7
    %v2312 = vsub.s32 0, %v2311
    %v2313 = vrot.slane %v77, %v2312
    %v2314 = vlaneseq
    %v2315 = vshrl.u32 %v2314, 7
    %v2316 = vsub.s32 1, %v2315
    %v2317 = vrot.slane %v77, %v2316
    %v2318 = vlaneseq
    %v2319 = vshrl.u32 %v2318, 7
    %v2320 = vsub.s32 2, %v2319
    %v2321 = vrot.slane %v77, %v2320
    %v2322 = vlaneseq
    %v2323 = vshrl.u32 %v2322, 7
    %v2324 = vsub.s32 3, %v2323
    %v2325 = vrot.slane %v77, %v2324
    %v2330 = vmul.f32 %v2308, %v2313
    %v2331 = vmul.f32 %v2307, %v2317
    %v2332 = vmul.f32 %v2306, %v2321
    %v2333 = vmul.f32 %v2305, %v2325
    %s2334 = scalar_lea.vmem %s4, 44
    %v2335 = vld [vmem:[%s2334] sm:$0xf]
    %v2337 = vsel %vm1980, %v2335, 0
    %v2340 = vsel %vm1984, %v2330, 0
    %v2343 = vsel %vm1984, %v2331, 0
    %v2346 = vsel %vm1984, %v2332, 0
    %v2349 = vsel %vm1984, %v2333, 0
    %2351 = vmatprep.subr.mxu0 %v2343
    %2352 = vmatpush1.msra.mxu0 %v2340
    %2353 = vmatprep.subr.mxu0 0.0
    %2354 = vmatpush1.msra.mxu0 0.0
    %2355 = vmatprep.subr.mxu0 0.0
    %2356 = vmatpush1.msra.mxu0 0.0
    %2357 = vmatprep.subr.mxu0 0.0
    %2358 = vmatpush1.msra.mxu0 0.0
    %2359 = vmatprep.subr.mxu0 0.0
    %2360 = vmatpush1.msra.mxu0 0.0
    %2361 = vmatprep.subr.mxu0 0.0
    %2362 = vmatpush1.msra.mxu0 0.0
    %2363 = vmatprep.subr.mxu0 0.0
    %2364 = vmatpush1.msra.mxu0 0.0
    %2365 = vmatprep.subr.mxu0 0.0
    %2366 = vmatpush1.msra.mxu0 0.0
    %2367 = vmatprep.subr.mxu0 0.0
    %2368 = vmatpush1.msra.mxu0 0.0
    %2369 = vmatprep.subr.mxu0 0.0
    %2370 = vmatpush1.msra.mxu0 0.0
    %2371 = vmatprep.subr.mxu0 0.0
    %2372 = vmatpush1.msra.mxu0 0.0
    %2373 = vmatprep.subr.mxu0 0.0
    %2374 = vmatpush1.msra.mxu0 0.0
    %2375 = vmatprep.subr.mxu0 0.0
    %2376 = vmatpush1.msra.mxu0 0.0
    %2377 = vmatprep.subr.mxu0 0.0
    %2378 = vmatpush1.msra.mxu0 0.0
    %2379 = vmatprep.subr.mxu0 0.0
    %2380 = vmatpush1.msra.mxu0 0.0
    %2381 = vmatprep.subr.mxu0 0.0
    %2382 = vmatpush1.msra.mxu0 0.0
    %2383 = vmatprep.subr.mxu0 0.0
    %2384 = vmatpush1.msra.mxu0 0.0
    %2385 = vmatprep.subr.mxu0 0.0
    %2386 = vmatpush1.msra.mxu0 0.0
    %2387 = vmatprep.subr.mxu0 0.0
    %2388 = vmatpush1.msra.mxu0 0.0
    %2389 = vmatprep.subr.mxu0 0.0
    %2390 = vmatpush1.msra.mxu0 0.0
    %2391 = vmatprep.subr.mxu0 0.0
    %2392 = vmatpush1.msra.mxu0 0.0
    %2393 = vmatprep.subr.mxu0 0.0
    %2394 = vmatpush1.msra.mxu0 0.0
    %2395 = vmatprep.subr.mxu0 0.0
    %2396 = vmatpush1.msra.mxu0 0.0
    %2397 = vmatprep.subr.mxu0 0.0
    %2398 = vmatpush1.msra.mxu0 0.0
    %2399 = vmatprep.subr.mxu0 0.0
    %2400 = vmatpush1.msra.mxu0 0.0
    %2401 = vmatprep.subr.mxu0 0.0
    %2402 = vmatpush1.msra.mxu0 0.0
    %2403 = vmatprep.subr.mxu0 0.0
    %2404 = vmatpush1.msra.mxu0 0.0
    %2405 = vmatprep.subr.mxu0 0.0
    %2406 = vmatpush1.msra.mxu0 0.0
    %2407 = vmatprep.subr.mxu0 0.0
    %2408 = vmatpush1.msra.mxu0 0.0
    %2409 = vmatprep.subr.mxu0 0.0
    %2410 = vmatpush1.msra.mxu0 0.0
    %2411 = vmatprep.subr.mxu0 0.0
    %2412 = vmatpush1.msra.mxu0 0.0
    %2413 = vmatprep.subr.mxu0 0.0
    %2414 = vmatpush1.msra.mxu0 0.0
    %2415 = vmatprep.mubr.f32.mxu0 0.0
    %2416 = vmatmul.mubr.f32.gmra.mrb[0].mxu0 %v2337
    %v2417 = vpop.f32.mrb[0].mxu0
    %v2418 = vadd.f32 0.0, %v2417
    %v2419 = vpop.f32.mrb[0].mxu0
    %v2420 = vadd.f32 0.0, %v2419
    %2421 = vdwg.mxu0
    %2422 = vmatprep.subr.mxu0 %v2349
    %2423 = vmatpush1.msra.mxu0 %v2346
    %2424 = vmatprep.subr.mxu0 0.0
    %2425 = vmatpush1.msra.mxu0 0.0
    %2426 = vmatprep.subr.mxu0 0.0
    %2427 = vmatpush1.msra.mxu0 0.0
    %2428 = vmatprep.subr.mxu0 0.0
    %2429 = vmatpush1.msra.mxu0 0.0
    %2430 = vmatprep.subr.mxu0 0.0
    %2431 = vmatpush1.msra.mxu0 0.0
    %2432 = vmatprep.subr.mxu0 0.0
    %2433 = vmatpush1.msra.mxu0 0.0
    %2434 = vmatprep.subr.mxu0 0.0
    %2435 = vmatpush1.msra.mxu0 0.0
    %2436 = vmatprep.subr.mxu0 0.0
    %2437 = vmatpush1.msra.mxu0 0.0
    %2438 = vmatprep.subr.mxu0 0.0
    %2439 = vmatpush1.msra.mxu0 0.0
    %2440 = vmatprep.subr.mxu0 0.0
    %2441 = vmatpush1.msra.mxu0 0.0
    %2442 = vmatprep.subr.mxu0 0.0
    %2443 = vmatpush1.msra.mxu0 0.0
    %2444 = vmatprep.subr.mxu0 0.0
    %2445 = vmatpush1.msra.mxu0 0.0
    %2446 = vmatprep.subr.mxu0 0.0
    %2447 = vmatpush1.msra.mxu0 0.0
    %2448 = vmatprep.subr.mxu0 0.0
    %2449 = vmatpush1.msra.mxu0 0.0
    %2450 = vmatprep.subr.mxu0 0.0
    %2451 = vmatpush1.msra.mxu0 0.0
    %2452 = vmatprep.subr.mxu0 0.0
    %2453 = vmatpush1.msra.mxu0 0.0
    %2454 = vmatprep.subr.mxu0 0.0
    %2455 = vmatpush1.msra.mxu0 0.0
    %2456 = vmatprep.subr.mxu0 0.0
    %2457 = vmatpush1.msra.mxu0 0.0
    %2458 = vmatprep.subr.mxu0 0.0
    %2459 = vmatpush1.msra.mxu0 0.0
    %2460 = vmatprep.subr.mxu0 0.0
    %2461 = vmatpush1.msra.mxu0 0.0
    %2462 = vmatprep.subr.mxu0 0.0
    %2463 = vmatpush1.msra.mxu0 0.0
    %2464 = vmatprep.subr.mxu0 0.0
    %2465 = vmatpush1.msra.mxu0 0.0
    %2466 = vmatprep.subr.mxu0 0.0
    %2467 = vmatpush1.msra.mxu0 0.0
    %2468 = vmatprep.subr.mxu0 0.0
    %2469 = vmatpush1.msra.mxu0 0.0
    %2470 = vmatprep.subr.mxu0 0.0
    %2471 = vmatpush1.msra.mxu0 0.0
    %2472 = vmatprep.subr.mxu0 0.0
    %2473 = vmatpush1.msra.mxu0 0.0
    %2474 = vmatprep.subr.mxu0 0.0
    %2475 = vmatpush1.msra.mxu0 0.0
    %2476 = vmatprep.subr.mxu0 0.0
    %2477 = vmatpush1.msra.mxu0 0.0
    %2478 = vmatprep.subr.mxu0 0.0
    %2479 = vmatpush1.msra.mxu0 0.0
    %2480 = vmatprep.subr.mxu0 0.0
    %2481 = vmatpush1.msra.mxu0 0.0
    %2482 = vmatprep.subr.mxu0 0.0
    %2483 = vmatpush1.msra.mxu0 0.0
    %2484 = vmatprep.subr.mxu0 0.0
    %2485 = vmatpush1.msra.mxu0 0.0
    %2486 = vmatprep.mubr.f32.mxu0 0.0
    %2487 = vmatmul.mubr.f32.gmra.mrb[0].mxu0 %v2337
    %v2488 = vpop.f32.mrb[0].mxu0
    %v2489 = vadd.f32 0.0, %v2488
    %v2490 = vpop.f32.mrb[0].mxu0
    %v2491 = vadd.f32 0.0, %v2490
    %2492 = vdwg.mxu0
    %v2493 = vadd.f32 %v2221, %v2418
    %v2494 = vadd.f32 %v2223, %v2420
    %v2495 = vadd.f32 %v2292, %v2489
    %v2496 = vadd.f32 %v2294, %v2491
    %2497 = vrot.lane.b32.xlu0 %v1890, 1
    %v2498 = vpop.permute.xlu0 %2497
    %2499 = vrot.lane.b32.xlu0 %v1894, 1
    %v2500 = vpop.permute.xlu0 %2499
    %2501 = vrot.lane.b32.xlu0 %v1891, 1
    %v2502 = vpop.permute.xlu0 %2501
    %2503 = vrot.lane.b32.xlu0 %v1895, 1
    %v2504 = vpop.permute.xlu0 %2503
    %vm2505 = vcmp.lt.s32.totalorder %v1907, 1
    %v2506 = vsel %vm2505, %v2502, %v2504
    %v2507 = vsel %vm2505, %v2500, %v2502
    %v2508 = vsel %vm2505, %v2498, %v2500
    %v2509 = vsel %vm2505, %v2504, %v2498
    %v2511 = vlaneseq
    %v2512 = vshrl.u32 %v2511, 7
    %v2513 = vsub.s32 0, %v2512
    %v2514 = vrot.slane %v79, %v2513
    %v2515 = vlaneseq
    %v2516 = vshrl.u32 %v2515, 7
    %v2517 = vsub.s32 1, %v2516
    %v2518 = vrot.slane %v79, %v2517
    %v2519 = vlaneseq
    %v2520 = vshrl.u32 %v2519, 7
    %v2521 = vsub.s32 2, %v2520
    %v2522 = vrot.slane %v79, %v2521
    %v2523 = vlaneseq
    %v2524 = vshrl.u32 %v2523, 7
    %v2525 = vsub.s32 3, %v2524
    %v2526 = vrot.slane %v79, %v2525
    %v2531 = vmul.f32 %v2509, %v2514
    %v2532 = vmul.f32 %v2508, %v2518
    %v2533 = vmul.f32 %v2507, %v2522
    %v2534 = vmul.f32 %v2506, %v2526
    %s2535 = scalar_lea.vmem %s4, 48
    %v2536 = vld [vmem:[%s2535] sm:$0xf]
    %v2538 = vsel %vm1980, %v2536, 0
    %v2541 = vsel %vm1984, %v2531, 0
    %v2544 = vsel %vm1984, %v2532, 0
    %v2547 = vsel %vm1984, %v2533, 0
    %v2550 = vsel %vm1984, %v2534, 0
    %2552 = vmatprep.subr.mxu0 %v2544
    %2553 = vmatpush1.msra.mxu0 %v2541
    %2554 = vmatprep.subr.mxu0 0.0
    %2555 = vmatpush1.msra.mxu0 0.0
    %2556 = vmatprep.subr.mxu0 0.0
    %2557 = vmatpush1.msra.mxu0 0.0
    %2558 = vmatprep.subr.mxu0 0.0
    %2559 = vmatpush1.msra.mxu0 0.0
    %2560 = vmatprep.subr.mxu0 0.0
    %2561 = vmatpush1.msra.mxu0 0.0
    %2562 = vmatprep.subr.mxu0 0.0
    %2563 = vmatpush1.msra.mxu0 0.0
    %2564 = vmatprep.subr.mxu0 0.0
    %2565 = vmatpush1.msra.mxu0 0.0
    %2566 = vmatprep.subr.mxu0 0.0
    %2567 = vmatpush1.msra.mxu0 0.0
    %2568 = vmatprep.subr.mxu0 0.0
    %2569 = vmatpush1.msra.mxu0 0.0
    %2570 = vmatprep.subr.mxu0 0.0
    %2571 = vmatpush1.msra.mxu0 0.0
    %2572 = vmatprep.subr.mxu0 0.0
    %2573 = vmatpush1.msra.mxu0 0.0
    %2574 = vmatprep.subr.mxu0 0.0
    %2575 = vmatpush1.msra.mxu0 0.0
    %2576 = vmatprep.subr.mxu0 0.0
    %2577 = vmatpush1.msra.mxu0 0.0
    %2578 = vmatprep.subr.mxu0 0.0
    %2579 = vmatpush1.msra.mxu0 0.0
    %2580 = vmatprep.subr.mxu0 0.0
    %2581 = vmatpush1.msra.mxu0 0.0
    %2582 = vmatprep.subr.mxu0 0.0
    %2583 = vmatpush1.msra.mxu0 0.0
    %2584 = vmatprep.subr.mxu0 0.0
    %2585 = vmatpush1.msra.mxu0 0.0
    %2586 = vmatprep.subr.mxu0 0.0
    %2587 = vmatpush1.msra.mxu0 0.0
    %2588 = vmatprep.subr.mxu0 0.0
    %2589 = vmatpush1.msra.mxu0 0.0
    %2590 = vmatprep.subr.mxu0 0.0
    %2591 = vmatpush1.msra.mxu0 0.0
    %2592 = vmatprep.subr.mxu0 0.0
    %2593 = vmatpush1.msra.mxu0 0.0
    %2594 = vmatprep.subr.mxu0 0.0
    %2595 = vmatpush1.msra.mxu0 0.0
    %2596 = vmatprep.subr.mxu0 0.0
    %2597 = vmatpush1.msra.mxu0 0.0
    %2598 = vmatprep.subr.mxu0 0.0
    %2599 = vmatpush1.msra.mxu0 0.0
    %2600 = vmatprep.subr.mxu0 0.0
    %2601 = vmatpush1.msra.mxu0 0.0
    %2602 = vmatprep.subr.mxu0 0.0
    %2603 = vmatpush1.msra.mxu0 0.0
    %2604 = vmatprep.subr.mxu0 0.0
    %2605 = vmatpush1.msra.mxu0 0.0
    %2606 = vmatprep.subr.mxu0 0.0
    %2607 = vmatpush1.msra.mxu0 0.0
    %2608 = vmatprep.subr.mxu0 0.0
    %2609 = vmatpush1.msra.mxu0 0.0
    %2610 = vmatprep.subr.mxu0 0.0
    %2611 = vmatpush1.msra.mxu0 0.0
    %2612 = vmatprep.subr.mxu0 0.0
    %2613 = vmatpush1.msra.mxu0 0.0
    %2614 = vmatprep.subr.mxu0 0.0
    %2615 = vmatpush1.msra.mxu0 0.0
    %2616 = vmatprep.mubr.f32.mxu0 0.0
    %2617 = vmatmul.mubr.f32.gmra.mrb[0].mxu0 %v2538
    %v2618 = vpop.f32.mrb[0].mxu0
    %v2619 = vadd.f32 0.0, %v2618
    %v2620 = vpop.f32.mrb[0].mxu0
    %v2621 = vadd.f32 0.0, %v2620
    %2622 = vdwg.mxu0
    %2623 = vmatprep.subr.mxu0 %v2550
    %2624 = vmatpush1.msra.mxu0 %v2547
    %2625 = vmatprep.subr.mxu0 0.0
    %2626 = vmatpush1.msra.mxu0 0.0
    %2627 = vmatprep.subr.mxu0 0.0
    %2628 = vmatpush1.msra.mxu0 0.0
    %2629 = vmatprep.subr.mxu0 0.0
    %2630 = vmatpush1.msra.mxu0 0.0
    %2631 = vmatprep.subr.mxu0 0.0
    %2632 = vmatpush1.msra.mxu0 0.0
    %2633 = vmatprep.subr.mxu0 0.0
    %2634 = vmatpush1.msra.mxu0 0.0
    %2635 = vmatprep.subr.mxu0 0.0
    %2636 = vmatpush1.msra.mxu0 0.0
    %2637 = vmatprep.subr.mxu0 0.0
    %2638 = vmatpush1.msra.mxu0 0.0
    %2639 = vmatprep.subr.mxu0 0.0
    %2640 = vmatpush1.msra.mxu0 0.0
    %2641 = vmatprep.subr.mxu0 0.0
    %2642 = vmatpush1.msra.mxu0 0.0
    %2643 = vmatprep.subr.mxu0 0.0
    %2644 = vmatpush1.msra.mxu0 0.0
    %2645 = vmatprep.subr.mxu0 0.0
    %2646 = vmatpush1.msra.mxu0 0.0
    %2647 = vmatprep.subr.mxu0 0.0
    %2648 = vmatpush1.msra.mxu0 0.0
    %2649 = vmatprep.subr.mxu0 0.0
    %2650 = vmatpush1.msra.mxu0 0.0
    %2651 = vmatprep.subr.mxu0 0.0
    %2652 = vmatpush1.msra.mxu0 0.0
    %2653 = vmatprep.subr.mxu0 0.0
    %2654 = vmatpush1.msra.mxu0 0.0
    %2655 = vmatprep.subr.mxu0 0.0
    %2656 = vmatpush1.msra.mxu0 0.0
    %2657 = vmatprep.subr.mxu0 0.0
    %2658 = vmatpush1.msra.mxu0 0.0
    %2659 = vmatprep.subr.mxu0 0.0
    %2660 = vmatpush1.msra.mxu0 0.0
    %2661 = vmatprep.subr.mxu0 0.0
    %2662 = vmatpush1.msra.mxu0 0.0
    %2663 = vmatprep.subr.mxu0 0.0
    %2664 = vmatpush1.msra.mxu0 0.0
    %2665 = vmatprep.subr.mxu0 0.0
    %2666 = vmatpush1.msra.mxu0 0.0
    %2667 = vmatprep.subr.mxu0 0.0
    %2668 = vmatpush1.msra.mxu0 0.0
    %2669 = vmatprep.subr.mxu0 0.0
    %2670 = vmatpush1.msra.mxu0 0.0
    %2671 = vmatprep.subr.mxu0 0.0
    %2672 = vmatpush1.msra.mxu0 0.0
    %2673 = vmatprep.subr.mxu0 0.0
    %2674 = vmatpush1.msra.mxu0 0.0
    %2675 = vmatprep.subr.mxu0 0.0
    %2676 = vmatpush1.msra.mxu0 0.0
    %2677 = vmatprep.subr.mxu0 0.0
    %2678 = vmatpush1.msra.mxu0 0.0
    %2679 = vmatprep.subr.mxu0 0.0
    %2680 = vmatpush1.msra.mxu0 0.0
    %2681 = vmatprep.subr.mxu0 0.0
    %2682 = vmatpush1.msra.mxu0 0.0
    %2683 = vmatprep.subr.mxu0 0.0
    %2684 = vmatpush1.msra.mxu0 0.0
    %2685 = vmatprep.subr.mxu0 0.0
    %2686 = vmatpush1.msra.mxu0 0.0
    %2687 = vmatprep.mubr.f32.mxu0 0.0
    %2688 = vmatmul.mubr.f32.gmra.mrb[0].mxu0 %v2538
    %v2689 = vpop.f32.mrb[0].mxu0
    %v2690 = vadd.f32 0.0, %v2689
    %v2691 = vpop.f32.mrb[0].mxu0
    %v2692 = vadd.f32 0.0, %v2691
    %2693 = vdwg.mxu0
    %v2694 = vadd.f32 %v2493, %v2619
    %v2695 = vadd.f32 %v2494, %v2621
    %v2696 = vadd.f32 %v2495, %v2690
    %v2697 = vadd.f32 %v2496, %v2692
    %s2698 = scalar_lea.vmem %s4, 52
    %v2699 = vld [vmem:[%s2698] sm:$0xf]
    %v2701 = vsel %vm1980, %v2699, 0
    %v2703 = vsel %vm1984, %v1890, 0
    %v2705 = vsel %vm1984, %v1894, 0
    %v2707 = vsel %vm1984, %v1891, 0
    %v2709 = vsel %vm1984, %v1895, 0
    %2711 = vmatprep.subr.mxu0 %v2705
    %2712 = vmatpush1.msra.mxu0 %v2703
    %2713 = vmatprep.subr.mxu0 0.0
    %2714 = vmatpush1.msra.mxu0 0.0
    %2715 = vmatprep.subr.mxu0 0.0
    %2716 = vmatpush1.msra.mxu0 0.0
    %2717 = vmatprep.subr.mxu0 0.0
    %2718 = vmatpush1.msra.mxu0 0.0
    %2719 = vmatprep.subr.mxu0 0.0
    %2720 = vmatpush1.msra.mxu0 0.0
    %2721 = vmatprep.subr.mxu0 0.0
    %2722 = vmatpush1.msra.mxu0 0.0
    %2723 = vmatprep.subr.mxu0 0.0
    %2724 = vmatpush1.msra.mxu0 0.0
    %2725 = vmatprep.subr.mxu0 0.0
    %2726 = vmatpush1.msra.mxu0 0.0
    %2727 = vmatprep.subr.mxu0 0.0
    %2728 = vmatpush1.msra.mxu0 0.0
    %2729 = vmatprep.subr.mxu0 0.0
    %2730 = vmatpush1.msra.mxu0 0.0
    %2731 = vmatprep.subr.mxu0 0.0
    %2732 = vmatpush1.msra.mxu0 0.0
    %2733 = vmatprep.subr.mxu0 0.0
    %2734 = vmatpush1.msra.mxu0 0.0
    %2735 = vmatprep.subr.mxu0 0.0
    %2736 = vmatpush1.msra.mxu0 0.0
    %2737 = vmatprep.subr.mxu0 0.0
    %2738 = vmatpush1.msra.mxu0 0.0
    %2739 = vmatprep.subr.mxu0 0.0
    %2740 = vmatpush1.msra.mxu0 0.0
    %2741 = vmatprep.subr.mxu0 0.0
    %2742 = vmatpush1.msra.mxu0 0.0
    %2743 = vmatprep.subr.mxu0 0.0
    %2744 = vmatpush1.msra.mxu0 0.0
    %2745 = vmatprep.subr.mxu0 0.0
    %2746 = vmatpush1.msra.mxu0 0.0
    %2747 = vmatprep.subr.mxu0 0.0
    %2748 = vmatpush1.msra.mxu0 0.0
    %2749 = vmatprep.subr.mxu0 0.0
    %2750 = vmatpush1.msra.mxu0 0.0
    %2751 = vmatprep.subr.mxu0 0.0
    %2752 = vmatpush1.msra.mxu0 0.0
    %2753 = vmatprep.subr.mxu0 0.0
    %2754 = vmatpush1.msra.mxu0 0.0
    %2755 = vmatprep.subr.mxu0 0.0
    %2756 = vmatpush1.msra.mxu0 0.0
    %2757 = vmatprep.subr.mxu0 0.0
    %2758 = vmatpush1.msra.mxu0 0.0
    %2759 = vmatprep.subr.mxu0 0.0
    %2760 = vmatpush1.msra.mxu0 0.0
    %2761 = vmatprep.subr.mxu0 0.0
    %2762 = vmatpush1.msra.mxu0 0.0
    %2763 = vmatprep.subr.mxu0 0.0
    %2764 = vmatpush1.msra.mxu0 0.0
    %2765 = vmatprep.subr.mxu0 0.0
    %2766 = vmatpush1.msra.mxu0 0.0
    %2767 = vmatprep.subr.mxu0 0.0
    %2768 = vmatpush1.msra.mxu0 0.0
    %2769 = vmatprep.subr.mxu0 0.0
    %2770 = vmatpush1.msra.mxu0 0.0
    %2771 = vmatprep.subr.mxu0 0.0
    %2772 = vmatpush1.msra.mxu0 0.0
    %2773 = vmatprep.subr.mxu0 0.0
    %2774 = vmatpush1.msra.mxu0 0.0
    %2775 = vmatprep.mubr.f32.mxu0 0.0
    %2776 = vmatmul.mubr.f32.gmra.mrb[0].mxu0 %v2701
    %v2777 = vpop.f32.mrb[0].mxu0
    %v2778 = vadd.f32 0.0, %v2777
    %v2779 = vpop.f32.mrb[0].mxu0
    %v2780 = vadd.f32 0.0, %v2779
    %2781 = vdwg.mxu0
    %2782 = vmatprep.subr.mxu0 %v2709
    %2783 = vmatpush1.msra.mxu0 %v2707
    %2784 = vmatprep.subr.mxu0 0.0
    %2785 = vmatpush1.msra.mxu0 0.0
    %2786 = vmatprep.subr.mxu0 0.0
    %2787 = vmatpush1.msra.mxu0 0.0
    %2788 = vmatprep.subr.mxu0 0.0
    %2789 = vmatpush1.msra.mxu0 0.0
    %2790 = vmatprep.subr.mxu0 0.0
    %2791 = vmatpush1.msra.mxu0 0.0
    %2792 = vmatprep.subr.mxu0 0.0
    %2793 = vmatpush1.msra.mxu0 0.0
    %2794 = vmatprep.subr.mxu0 0.0
    %2795 = vmatpush1.msra.mxu0 0.0
    %2796 = vmatprep.subr.mxu0 0.0
    %2797 = vmatpush1.msra.mxu0 0.0
    %2798 = vmatprep.subr.mxu0 0.0
    %2799 = vmatpush1.msra.mxu0 0.0
    %2800 = vmatprep.subr.mxu0 0.0
    %2801 = vmatpush1.msra.mxu0 0.0
    %2802 = vmatprep.subr.mxu0 0.0
    %2803 = vmatpush1.msra.mxu0 0.0
    %2804 = vmatprep.subr.mxu0 0.0
    %2805 = vmatpush1.msra.mxu0 0.0
    %2806 = vmatprep.subr.mxu0 0.0
    %2807 = vmatpush1.msra.mxu0 0.0
    %2808 = vmatprep.subr.mxu0 0.0
    %2809 = vmatpush1.msra.mxu0 0.0
    %2810 = vmatprep.subr.mxu0 0.0
    %2811 = vmatpush1.msra.mxu0 0.0
    %2812 = vmatprep.subr.mxu0 0.0
    %2813 = vmatpush1.msra.mxu0 0.0
    %2814 = vmatprep.subr.mxu0 0.0
    %2815 = vmatpush1.msra.mxu0 0.0
    %2816 = vmatprep.subr.mxu0 0.0
    %2817 = vmatpush1.msra.mxu0 0.0
    %2818 = vmatprep.subr.mxu0 0.0
    %2819 = vmatpush1.msra.mxu0 0.0
    %2820 = vmatprep.subr.mxu0 0.0
    %2821 = vmatpush1.msra.mxu0 0.0
    %2822 = vmatprep.subr.mxu0 0.0
    %2823 = vmatpush1.msra.mxu0 0.0
    %2824 = vmatprep.subr.mxu0 0.0
    %2825 = vmatpush1.msra.mxu0 0.0
    %2826 = vmatprep.subr.mxu0 0.0
    %2827 = vmatpush1.msra.mxu0 0.0
    %2828 = vmatprep.subr.mxu0 0.0
    %2829 = vmatpush1.msra.mxu0 0.0
    %2830 = vmatprep.subr.mxu0 0.0
    %2831 = vmatpush1.msra.mxu0 0.0
    %2832 = vmatprep.subr.mxu0 0.0
    %2833 = vmatpush1.msra.mxu0 0.0
    %2834 = vmatprep.subr.mxu0 0.0
    %2835 = vmatpush1.msra.mxu0 0.0
    %2836 = vmatprep.subr.mxu0 0.0
    %2837 = vmatpush1.msra.mxu0 0.0
    %2838 = vmatprep.subr.mxu0 0.0
    %2839 = vmatpush1.msra.mxu0 0.0
    %2840 = vmatprep.subr.mxu0 0.0
    %2841 = vmatpush1.msra.mxu0 0.0
    %2842 = vmatprep.subr.mxu0 0.0
    %2843 = vmatpush1.msra.mxu0 0.0
    %2844 = vmatprep.subr.mxu0 0.0
    %2845 = vmatpush1.msra.mxu0 0.0
    %2846 = vmatprep.mubr.f32.mxu0 0.0
    %2847 = vmatmul.mubr.f32.gmra.mrb[0].mxu0 %v2701
    %v2848 = vpop.f32.mrb[0].mxu0
    %v2849 = vadd.f32 0.0, %v2848
    %v2850 = vpop.f32.mrb[0].mxu0
    %v2851 = vadd.f32 0.0, %v2850
    %2852 = vdwg.mxu0
    %v2853 = vadd.f32 %v2694, %v2778
    %v2854 = vadd.f32 %v2695, %v2780
    %v2855 = vadd.f32 %v2696, %v2849
    %v2856 = vadd.f32 %v2697, %v2851
    %2857 = vrot.lane.b32.xlu0 %v1890, 127
    %v2858 = vpop.permute.xlu0 %2857
    %2859 = vrot.lane.b32.xlu0 %v1894, 127
    %v2860 = vpop.permute.xlu0 %2859
    %2861 = vrot.lane.b32.xlu0 %v1891, 127
    %v2862 = vpop.permute.xlu0 %2861
    %2863 = vrot.lane.b32.xlu0 %v1895, 127
    %v2864 = vpop.permute.xlu0 %2863
    %vm2865 = vcmp.lt.s32.totalorder %v1907, 127
    %v2866 = vsel %vm2865, %v2862, %v2864
    %v2867 = vsel %vm2865, %v2860, %v2862
    %v2868 = vsel %vm2865, %v2858, %v2860
    %v2869 = vsel %vm2865, %v2864, %v2858
    %v2871 = vlaneseq
    %v2872 = vshrl.u32 %v2871, 7
    %v2873 = vsub.s32 0, %v2872
    %v2874 = vrot.slane %v81, %v2873
    %v2875 = vlaneseq
    %v2876 = vshrl.u32 %v2875, 7
    %v2877 = vsub.s32 1, %v2876
    %v2878 = vrot.slane %v81, %v2877
    %v2879 = vlaneseq
    %v2880 = vshrl.u32 %v2879, 7
    %v2881 = vsub.s32 2, %v2880
    %v2882 = vrot.slane %v81, %v2881
    %v2883 = vlaneseq
    %v2884 = vshrl.u32 %v2883, 7
    %v2885 = vsub.s32 3, %v2884
    %v2886 = vrot.slane %v81, %v2885
    %v2891 = vmul.f32 %v2868, %v2874
    %v2892 = vmul.f32 %v2867, %v2878
    %v2893 = vmul.f32 %v2866, %v2882
    %v2894 = vmul.f32 %v2869, %v2886
    %s2895 = scalar_lea.vmem %s4, 56
    %v2896 = vld [vmem:[%s2895] sm:$0xf]
    %v2898 = vsel %vm1980, %v2896, 0
    %v2901 = vsel %vm1984, %v2891, 0
    %v2904 = vsel %vm1984, %v2892, 0
    %v2907 = vsel %vm1984, %v2893, 0
    %v2910 = vsel %vm1984, %v2894, 0
    %2912 = vmatprep.subr.mxu0 %v2904
    %2913 = vmatpush1.msra.mxu0 %v2901
    %2914 = vmatprep.subr.mxu0 0.0
    %2915 = vmatpush1.msra.mxu0 0.0
    %2916 = vmatprep.subr.mxu0 0.0
    %2917 = vmatpush1.msra.mxu0 0.0
    %2918 = vmatprep.subr.mxu0 0.0
    %2919 = vmatpush1.msra.mxu0 0.0
    %2920 = vmatprep.subr.mxu0 0.0
    %2921 = vmatpush1.msra.mxu0 0.0
    %2922 = vmatprep.subr.mxu0 0.0
    %2923 = vmatpush1.msra.mxu0 0.0
    %2924 = vmatprep.subr.mxu0 0.0
    %2925 = vmatpush1.msra.mxu0 0.0
    %2926 = vmatprep.subr.mxu0 0.0
    %2927 = vmatpush1.msra.mxu0 0.0
    %2928 = vmatprep.subr.mxu0 0.0
    %2929 = vmatpush1.msra.mxu0 0.0
    %2930 = vmatprep.subr.mxu0 0.0
    %2931 = vmatpush1.msra.mxu0 0.0
    %2932 = vmatprep.subr.mxu0 0.0
    %2933 = vmatpush1.msra.mxu0 0.0
    %2934 = vmatprep.subr.mxu0 0.0
    %2935 = vmatpush1.msra.mxu0 0.0
    %2936 = vmatprep.subr.mxu0 0.0
    %2937 = vmatpush1.msra.mxu0 0.0
    %2938 = vmatprep.subr.mxu0 0.0
    %2939 = vmatpush1.msra.mxu0 0.0
    %2940 = vmatprep.subr.mxu0 0.0
    %2941 = vmatpush1.msra.mxu0 0.0
    %2942 = vmatprep.subr.mxu0 0.0
    %2943 = vmatpush1.msra.mxu0 0.0
    %2944 = vmatprep.subr.mxu0 0.0
    %2945 = vmatpush1.msra.mxu0 0.0
    %2946 = vmatprep.subr.mxu0 0.0
    %2947 = vmatpush1.msra.mxu0 0.0
    %2948 = vmatprep.subr.mxu0 0.0
    %2949 = vmatpush1.msra.mxu0 0.0
    %2950 = vmatprep.subr.mxu0 0.0
    %2951 = vmatpush1.msra.mxu0 0.0
    %2952 = vmatprep.subr.mxu0 0.0
    %2953 = vmatpush1.msra.mxu0 0.0
    %2954 = vmatprep.subr.mxu0 0.0
    %2955 = vmatpush1.msra.mxu0 0.0
    %2956 = vmatprep.subr.mxu0 0.0
    %2957 = vmatpush1.msra.mxu0 0.0
    %2958 = vmatprep.subr.mxu0 0.0
    %2959 = vmatpush1.msra.mxu0 0.0
    %2960 = vmatprep.subr.mxu0 0.0
    %2961 = vmatpush1.msra.mxu0 0.0
    %2962 = vmatprep.subr.mxu0 0.0
    %2963 = vmatpush1.msra.mxu0 0.0
    %2964 = vmatprep.subr.mxu0 0.0
    %2965 = vmatpush1.msra.mxu0 0.0
    %2966 = vmatprep.subr.mxu0 0.0
    %2967 = vmatpush1.msra.mxu0 0.0
    %2968 = vmatprep.subr.mxu0 0.0
    %2969 = vmatpush1.msra.mxu0 0.0
    %2970 = vmatprep.subr.mxu0 0.0
    %2971 = vmatpush1.msra.mxu0 0.0
    %2972 = vmatprep.subr.mxu0 0.0
    %2973 = vmatpush1.msra.mxu0 0.0
    %2974 = vmatprep.subr.mxu0 0.0
    %2975 = vmatpush1.msra.mxu0 0.0
    %2976 = vmatprep.mubr.f32.mxu0 0.0
    %2977 = vmatmul.mubr.f32.gmra.mrb[0].mxu0 %v2898
    %v2978 = vpop.f32.mrb[0].mxu0
    %v2979 = vadd.f32 0.0, %v2978
    %v2980 = vpop.f32.mrb[0].mxu0
    %v2981 = vadd.f32 0.0, %v2980
    %2982 = vdwg.mxu0
    %2983 = vmatprep.subr.mxu0 %v2910
    %2984 = vmatpush1.msra.mxu0 %v2907
    %2985 = vmatprep.subr.mxu0 0.0
    %2986 = vmatpush1.msra.mxu0 0.0
    %2987 = vmatprep.subr.mxu0 0.0
    %2988 = vmatpush1.msra.mxu0 0.0
    %2989 = vmatprep.subr.mxu0 0.0
    %2990 = vmatpush1.msra.mxu0 0.0
    %2991 = vmatprep.subr.mxu0 0.0
    %2992 = vmatpush1.msra.mxu0 0.0
    %2993 = vmatprep.subr.mxu0 0.0
    %2994 = vmatpush1.msra.mxu0 0.0
    %2995 = vmatprep.subr.mxu0 0.0
    %2996 = vmatpush1.msra.mxu0 0.0
    %2997 = vmatprep.subr.mxu0 0.0
    %2998 = vmatpush1.msra.mxu0 0.0
    %2999 = vmatprep.subr.mxu0 0.0
    %3000 = vmatpush1.msra.mxu0 0.0
    %3001 = vmatprep.subr.mxu0 0.0
    %3002 = vmatpush1.msra.mxu0 0.0
    %3003 = vmatprep.subr.mxu0 0.0
    %3004 = vmatpush1.msra.mxu0 0.0
    %3005 = vmatprep.subr.mxu0 0.0
    %3006 = vmatpush1.msra.mxu0 0.0
    %3007 = vmatprep.subr.mxu0 0.0
    %3008 = vmatpush1.msra.mxu0 0.0
    %3009 = vmatprep.subr.mxu0 0.0
    %3010 = vmatpush1.msra.mxu0 0.0
    %3011 = vmatprep.subr.mxu0 0.0
    %3012 = vmatpush1.msra.mxu0 0.0
    %3013 = vmatprep.subr.mxu0 0.0
    %3014 = vmatpush1.msra.mxu0 0.0
    %3015 = vmatprep.subr.mxu0 0.0
    %3016 = vmatpush1.msra.mxu0 0.0
    %3017 = vmatprep.subr.mxu0 0.0
    %3018 = vmatpush1.msra.mxu0 0.0
    %3019 = vmatprep.subr.mxu0 0.0
    %3020 = vmatpush1.msra.mxu0 0.0
    %3021 = vmatprep.subr.mxu0 0.0
    %3022 = vmatpush1.msra.mxu0 0.0
    %3023 = vmatprep.subr.mxu0 0.0
    %3024 = vmatpush1.msra.mxu0 0.0
    %3025 = vmatprep.subr.mxu0 0.0
    %3026 = vmatpush1.msra.mxu0 0.0
    %3027 = vmatprep.subr.mxu0 0.0
    %3028 = vmatpush1.msra.mxu0 0.0
    %3029 = vmatprep.subr.mxu0 0.0
    %3030 = vmatpush1.msra.mxu0 0.0
    %3031 = vmatprep.subr.mxu0 0.0
    %3032 = vmatpush1.msra.mxu0 0.0
    %3033 = vmatprep.subr.mxu0 0.0
    %3034 = vmatpush1.msra.mxu0 0.0
    %3035 = vmatprep.subr.mxu0 0.0
    %3036 = vmatpush1.msra.mxu0 0.0
    %3037 = vmatprep.subr.mxu0 0.0
    %3038 = vmatpush1.msra.mxu0 0.0
    %3039 = vmatprep.subr.mxu0 0.0
    %3040 = vmatpush1.msra.mxu0 0.0
    %3041 = vmatprep.subr.mxu0 0.0
    %3042 = vmatpush1.msra.mxu0 0.0
    %3043 = vmatprep.subr.mxu0 0.0
    %3044 = vmatpush1.msra.mxu0 0.0
    %3045 = vmatprep.subr.mxu0 0.0
    %3046 = vmatpush1.msra.mxu0 0.0
    %3047 = vmatprep.mubr.f32.mxu0 0.0
    %3048 = vmatmul.mubr.f32.gmra.mrb[0].mxu0 %v2898
    %v3049 = vpop.f32.mrb[0].mxu0
    %v3050 = vadd.f32 0.0, %v3049
    %v3051 = vpop.f32.mrb[0].mxu0
    %v3052 = vadd.f32 0.0, %v3051
    %3053 = vdwg.mxu0
    %v3054 = vadd.f32 %v2853, %v2979
    %v3055 = vadd.f32 %v2854, %v2981
    %v3056 = vadd.f32 %v2855, %v3050
    %v3057 = vadd.f32 %v2856, %v3052
    %3058 = vrot.lane.b32.xlu0 %v1890, 113
    %v3059 = vpop.permute.xlu0 %3058
    %3060 = vrot.lane.b32.xlu0 %v1894, 113
    %v3061 = vpop.permute.xlu0 %3060
    %3062 = vrot.lane.b32.xlu0 %v1891, 113
    %v3063 = vpop.permute.xlu0 %3062
    %3064 = vrot.lane.b32.xlu0 %v1895, 113
    %v3065 = vpop.permute.xlu0 %3064
    %vm3066 = vcmp.lt.s32.totalorder %v1907, 113
    %v3067 = vsel %vm3066, %v3063, %v3065
    %v3068 = vsel %vm3066, %v3061, %v3063
    %v3069 = vsel %vm3066, %v3059, %v3061
    %v3070 = vsel %vm3066, %v3065, %v3059
    %v3072 = vlaneseq
    %v3073 = vshrl.u32 %v3072, 7
    %v3074 = vsub.s32 0, %v3073
    %v3075 = vrot.slane %v83, %v3074
    %v3076 = vlaneseq
    %v3077 = vshrl.u32 %v3076, 7
    %v3078 = vsub.s32 1, %v3077
    %v3079 = vrot.slane %v83, %v3078
    %v3080 = vlaneseq
    %v3081 = vshrl.u32 %v3080, 7
    %v3082 = vsub.s32 2, %v3081
    %v3083 = vrot.slane %v83, %v3082
    %v3084 = vlaneseq
    %v3085 = vshrl.u32 %v3084, 7
    %v3086 = vsub.s32 3, %v3085
    %v3087 = vrot.slane %v83, %v3086
    %v3092 = vmul.f32 %v3069, %v3075
    %v3093 = vmul.f32 %v3068, %v3079
    %v3094 = vmul.f32 %v3067, %v3083
    %v3095 = vmul.f32 %v3070, %v3087
    %s3096 = scalar_lea.vmem %s4, 60
    %v3097 = vld [vmem:[%s3096] sm:$0xf]
    %v3099 = vsel %vm1980, %v3097, 0
    %v3102 = vsel %vm1984, %v3092, 0
    %v3105 = vsel %vm1984, %v3093, 0
    %v3108 = vsel %vm1984, %v3094, 0
    %v3111 = vsel %vm1984, %v3095, 0
    %3113 = vmatprep.subr.mxu0 %v3105
    %3114 = vmatpush1.msra.mxu0 %v3102
    %3115 = vmatprep.subr.mxu0 0.0
    %3116 = vmatpush1.msra.mxu0 0.0
    %3117 = vmatprep.subr.mxu0 0.0
    %3118 = vmatpush1.msra.mxu0 0.0
    %3119 = vmatprep.subr.mxu0 0.0
    %3120 = vmatpush1.msra.mxu0 0.0
    %3121 = vmatprep.subr.mxu0 0.0
    %3122 = vmatpush1.msra.mxu0 0.0
    %3123 = vmatprep.subr.mxu0 0.0
    %3124 = vmatpush1.msra.mxu0 0.0
    %3125 = vmatprep.subr.mxu0 0.0
    %3126 = vmatpush1.msra.mxu0 0.0
    %3127 = vmatprep.subr.mxu0 0.0
    %3128 = vmatpush1.msra.mxu0 0.0
    %3129 = vmatprep.subr.mxu0 0.0
    %3130 = vmatpush1.msra.mxu0 0.0
    %3131 = vmatprep.subr.mxu0 0.0
    %3132 = vmatpush1.msra.mxu0 0.0
    %3133 = vmatprep.subr.mxu0 0.0
    %3134 = vmatpush1.msra.mxu0 0.0
    %3135 = vmatprep.subr.mxu0 0.0
    %3136 = vmatpush1.msra.mxu0 0.0
    %3137 = vmatprep.subr.mxu0 0.0
    %3138 = vmatpush1.msra.mxu0 0.0
    %3139 = vmatprep.subr.mxu0 0.0
    %3140 = vmatpush1.msra.mxu0 0.0
    %3141 = vmatprep.subr.mxu0 0.0
    %3142 = vmatpush1.msra.mxu0 0.0
    %3143 = vmatprep.subr.mxu0 0.0
    %3144 = vmatpush1.msra.mxu0 0.0
    %3145 = vmatprep.subr.mxu0 0.0
    %3146 = vmatpush1.msra.mxu0 0.0
    %3147 = vmatprep.subr.mxu0 0.0
    %3148 = vmatpush1.msra.mxu0 0.0
    %3149 = vmatprep.subr.mxu0 0.0
    %3150 = vmatpush1.msra.mxu0 0.0
    %3151 = vmatprep.subr.mxu0 0.0
    %3152 = vmatpush1.msra.mxu0 0.0
    %3153 = vmatprep.subr.mxu0 0.0
    %3154 = vmatpush1.msra.mxu0 0.0
    %3155 = vmatprep.subr.mxu0 0.0
    %3156 = vmatpush1.msra.mxu0 0.0
    %3157 = vmatprep.subr.mxu0 0.0
    %3158 = vmatpush1.msra.mxu0 0.0
    %3159 = vmatprep.subr.mxu0 0.0
    %3160 = vmatpush1.msra.mxu0 0.0
    %3161 = vmatprep.subr.mxu0 0.0
    %3162 = vmatpush1.msra.mxu0 0.0
    %3163 = vmatprep.subr.mxu0 0.0
    %3164 = vmatpush1.msra.mxu0 0.0
    %3165 = vmatprep.subr.mxu0 0.0
    %3166 = vmatpush1.msra.mxu0 0.0
    %3167 = vmatprep.subr.mxu0 0.0
    %3168 = vmatpush1.msra.mxu0 0.0
    %3169 = vmatprep.subr.mxu0 0.0
    %3170 = vmatpush1.msra.mxu0 0.0
    %3171 = vmatprep.subr.mxu0 0.0
    %3172 = vmatpush1.msra.mxu0 0.0
    %3173 = vmatprep.subr.mxu0 0.0
    %3174 = vmatpush1.msra.mxu0 0.0
    %3175 = vmatprep.subr.mxu0 0.0
    %3176 = vmatpush1.msra.mxu0 0.0
    %3177 = vmatprep.mubr.f32.mxu0 0.0
    %3178 = vmatmul.mubr.f32.gmra.mrb[0].mxu0 %v3099
    %v3179 = vpop.f32.mrb[0].mxu0
    %v3180 = vadd.f32 0.0, %v3179
    %v3181 = vpop.f32.mrb[0].mxu0
    %v3182 = vadd.f32 0.0, %v3181
    %3183 = vdwg.mxu0
    %3184 = vmatprep.subr.mxu0 %v3111
    %3185 = vmatpush1.msra.mxu0 %v3108
    %3186 = vmatprep.subr.mxu0 0.0
    %3187 = vmatpush1.msra.mxu0 0.0
    %3188 = vmatprep.subr.mxu0 0.0
    %3189 = vmatpush1.msra.mxu0 0.0
    %3190 = vmatprep.subr.mxu0 0.0
    %3191 = vmatpush1.msra.mxu0 0.0
    %3192 = vmatprep.subr.mxu0 0.0
    %3193 = vmatpush1.msra.mxu0 0.0
    %3194 = vmatprep.subr.mxu0 0.0
    %3195 = vmatpush1.msra.mxu0 0.0
    %3196 = vmatprep.subr.mxu0 0.0
    %3197 = vmatpush1.msra.mxu0 0.0
    %3198 = vmatprep.subr.mxu0 0.0
    %3199 = vmatpush1.msra.mxu0 0.0
    %3200 = vmatprep.subr.mxu0 0.0
    %3201 = vmatpush1.msra.mxu0 0.0
    %3202 = vmatprep.subr.mxu0 0.0
    %3203 = vmatpush1.msra.mxu0 0.0
    %3204 = vmatprep.subr.mxu0 0.0
    %3205 = vmatpush1.msra.mxu0 0.0
    %3206 = vmatprep.subr.mxu0 0.0
    %3207 = vmatpush1.msra.mxu0 0.0
    %3208 = vmatprep.subr.mxu0 0.0
    %3209 = vmatpush1.msra.mxu0 0.0
    %3210 = vmatprep.subr.mxu0 0.0
    %3211 = vmatpush1.msra.mxu0 0.0
    %3212 = vmatprep.subr.mxu0 0.0
    %3213 = vmatpush1.msra.mxu0 0.0
    %3214 = vmatprep.subr.mxu0 0.0
    %3215 = vmatpush1.msra.mxu0 0.0
    %3216 = vmatprep.subr.mxu0 0.0
    %3217 = vmatpush1.msra.mxu0 0.0
    %3218 = vmatprep.subr.mxu0 0.0
    %3219 = vmatpush1.msra.mxu0 0.0
    %3220 = vmatprep.subr.mxu0 0.0
    %3221 = vmatpush1.msra.mxu0 0.0
    %3222 = vmatprep.subr.mxu0 0.0
    %3223 = vmatpush1.msra.mxu0 0.0
    %3224 = vmatprep.subr.mxu0 0.0
    %3225 = vmatpush1.msra.mxu0 0.0
    %3226 = vmatprep.subr.mxu0 0.0
    %3227 = vmatpush1.msra.mxu0 0.0
    %3228 = vmatprep.subr.mxu0 0.0
    %3229 = vmatpush1.msra.mxu0 0.0
    %3230 = vmatprep.subr.mxu0 0.0
    %3231 = vmatpush1.msra.mxu0 0.0
    %3232 = vmatprep.subr.mxu0 0.0
    %3233 = vmatpush1.msra.mxu0 0.0
    %3234 = vmatprep.subr.mxu0 0.0
    %3235 = vmatpush1.msra.mxu0 0.0
    %3236 = vmatprep.subr.mxu0 0.0
    %3237 = vmatpush1.msra.mxu0 0.0
    %3238 = vmatprep.subr.mxu0 0.0
    %3239 = vmatpush1.msra.mxu0 0.0
    %3240 = vmatprep.subr.mxu0 0.0
    %3241 = vmatpush1.msra.mxu0 0.0
    %3242 = vmatprep.subr.mxu0 0.0
    %3243 = vmatpush1.msra.mxu0 0.0
    %3244 = vmatprep.subr.mxu0 0.0
    %3245 = vmatpush1.msra.mxu0 0.0
    %3246 = vmatprep.subr.mxu0 0.0
    %3247 = vmatpush1.msra.mxu0 0.0
    %3248 = vmatprep.mubr.f32.mxu0 0.0
    %3249 = vmatmul.mubr.f32.gmra.mrb[0].mxu0 %v3099
    %v3250 = vpop.f32.mrb[0].mxu0
    %v3251 = vadd.f32 0.0, %v3250
    %v3252 = vpop.f32.mrb[0].mxu0
    %v3253 = vadd.f32 0.0, %v3252
    %3254 = vdwg.mxu0
    %v3255 = vadd.f32 %v3054, %v3180
    %v3256 = vadd.f32 %v3055, %v3182
    %v3257 = vadd.f32 %v3056, %v3251
    %v3258 = vadd.f32 %v3057, %v3253
    %3259 = vrot.lane.b32.xlu0 %v1890, 112
    %v3260 = vpop.permute.xlu0 %3259
    %3261 = vrot.lane.b32.xlu0 %v1894, 112
    %v3262 = vpop.permute.xlu0 %3261
    %3263 = vrot.lane.b32.xlu0 %v1891, 112
    %v3264 = vpop.permute.xlu0 %3263
    %3265 = vrot.lane.b32.xlu0 %v1895, 112
    %v3266 = vpop.permute.xlu0 %3265
    %vm3267 = vcmp.lt.s32.totalorder %v1907, 112
    %v3268 = vsel %vm3267, %v3264, %v3266
    %v3269 = vsel %vm3267, %v3262, %v3264
    %v3270 = vsel %vm3267, %v3260, %v3262
    %v3271 = vsel %vm3267, %v3266, %v3260
    %v3273 = vlaneseq
    %v3274 = vshrl.u32 %v3273, 7
    %v3275 = vsub.s32 0, %v3274
    %v3276 = vrot.slane %v85, %v3275
    %v3277 = vlaneseq
    %v3278 = vshrl.u32 %v3277, 7
    %v3279 = vsub.s32 1, %v3278
    %v3280 = vrot.slane %v85, %v3279
    %v3281 = vlaneseq
    %v3282 = vshrl.u32 %v3281, 7
    %v3283 = vsub.s32 2, %v3282
    %v3284 = vrot.slane %v85, %v3283
    %v3285 = vlaneseq
    %v3286 = vshrl.u32 %v3285, 7
    %v3287 = vsub.s32 3, %v3286
    %v3288 = vrot.slane %v85, %v3287
    %v3293 = vmul.f32 %v3270, %v3276
    %v3294 = vmul.f32 %v3269, %v3280
    %v3295 = vmul.f32 %v3268, %v3284
    %v3296 = vmul.f32 %v3271, %v3288
    %s3297 = scalar_lea.vmem %s4, 64
    %v3298 = vld [vmem:[%s3297] sm:$0xf]
    %v3300 = vsel %vm1980, %v3298, 0
    %v3303 = vsel %vm1984, %v3293, 0
    %v3306 = vsel %vm1984, %v3294, 0
    %v3309 = vsel %vm1984, %v3295, 0
    %v3312 = vsel %vm1984, %v3296, 0
    %3314 = vmatprep.subr.mxu0 %v3306
    %3315 = vmatpush1.msra.mxu0 %v3303
    %3316 = vmatprep.subr.mxu0 0.0
    %3317 = vmatpush1.msra.mxu0 0.0
    %3318 = vmatprep.subr.mxu0 0.0
    %3319 = vmatpush1.msra.mxu0 0.0
    %3320 = vmatprep.subr.mxu0 0.0
    %3321 = vmatpush1.msra.mxu0 0.0
    %3322 = vmatprep.subr.mxu0 0.0
    %3323 = vmatpush1.msra.mxu0 0.0
    %3324 = vmatprep.subr.mxu0 0.0
    %3325 = vmatpush1.msra.mxu0 0.0
    %3326 = vmatprep.subr.mxu0 0.0
    %3327 = vmatpush1.msra.mxu0 0.0
    %3328 = vmatprep.subr.mxu0 0.0
    %3329 = vmatpush1.msra.mxu0 0.0
    %3330 = vmatprep.subr.mxu0 0.0
    %3331 = vmatpush1.msra.mxu0 0.0
    %3332 = vmatprep.subr.mxu0 0.0
    %3333 = vmatpush1.msra.mxu0 0.0
    %3334 = vmatprep.subr.mxu0 0.0
    %3335 = vmatpush1.msra.mxu0 0.0
    %3336 = vmatprep.subr.mxu0 0.0
    %3337 = vmatpush1.msra.mxu0 0.0
    %3338 = vmatprep.subr.mxu0 0.0
    %3339 = vmatpush1.msra.mxu0 0.0
    %3340 = vmatprep.subr.mxu0 0.0
    %3341 = vmatpush1.msra.mxu0 0.0
    %3342 = vmatprep.subr.mxu0 0.0
    %3343 = vmatpush1.msra.mxu0 0.0
    %3344 = vmatprep.subr.mxu0 0.0
    %3345 = vmatpush1.msra.mxu0 0.0
    %3346 = vmatprep.subr.mxu0 0.0
    %3347 = vmatpush1.msra.mxu0 0.0
    %3348 = vmatprep.subr.mxu0 0.0
    %3349 = vmatpush1.msra.mxu0 0.0
    %3350 = vmatprep.subr.mxu0 0.0
    %3351 = vmatpush1.msra.mxu0 0.0
    %3352 = vmatprep.subr.mxu0 0.0
    %3353 = vmatpush1.msra.mxu0 0.0
    %3354 = vmatprep.subr.mxu0 0.0
    %3355 = vmatpush1.msra.mxu0 0.0
    %3356 = vmatprep.subr.mxu0 0.0
    %3357 = vmatpush1.msra.mxu0 0.0
    %3358 = vmatprep.subr.mxu0 0.0
    %3359 = vmatpush1.msra.mxu0 0.0
    %3360 = vmatprep.subr.mxu0 0.0
    %3361 = vmatpush1.msra.mxu0 0.0
    %3362 = vmatprep.subr.mxu0 0.0
    %3363 = vmatpush1.msra.mxu0 0.0
    %3364 = vmatprep.subr.mxu0 0.0
    %3365 = vmatpush1.msra.mxu0 0.0
    %3366 = vmatprep.subr.mxu0 0.0
    %3367 = vmatpush1.msra.mxu0 0.0
    %3368 = vmatprep.subr.mxu0 0.0
    %3369 = vmatpush1.msra.mxu0 0.0
    %3370 = vmatprep.subr.mxu0 0.0
    %3371 = vmatpush1.msra.mxu0 0.0
    %3372 = vmatprep.subr.mxu0 0.0
    %3373 = vmatpush1.msra.mxu0 0.0
    %3374 = vmatprep.subr.mxu0 0.0
    %3375 = vmatpush1.msra.mxu0 0.0
    %3376 = vmatprep.subr.mxu0 0.0
    %3377 = vmatpush1.msra.mxu0 0.0
    %3378 = vmatprep.mubr.f32.mxu0 0.0
    %3379 = vmatmul.mubr.f32.gmra.mrb[0].mxu0 %v3300
    %v3380 = vpop.f32.mrb[0].mxu0
    %v3381 = vadd.f32 0.0, %v3380
    %v3382 = vpop.f32.mrb[0].mxu0
    %v3383 = vadd.f32 0.0, %v3382
    %3384 = vdwg.mxu0
    %3385 = vmatprep.subr.mxu0 %v3312
    %3386 = vmatpush1.msra.mxu0 %v3309
    %3387 = vmatprep.subr.mxu0 0.0
    %3388 = vmatpush1.msra.mxu0 0.0
    %3389 = vmatprep.subr.mxu0 0.0
    %3390 = vmatpush1.msra.mxu0 0.0
    %3391 = vmatprep.subr.mxu0 0.0
    %3392 = vmatpush1.msra.mxu0 0.0
    %3393 = vmatprep.subr.mxu0 0.0
    %3394 = vmatpush1.msra.mxu0 0.0
    %3395 = vmatprep.subr.mxu0 0.0
    %3396 = vmatpush1.msra.mxu0 0.0
    %3397 = vmatprep.subr.mxu0 0.0
    %3398 = vmatpush1.msra.mxu0 0.0
    %3399 = vmatprep.subr.mxu0 0.0
    %3400 = vmatpush1.msra.mxu0 0.0
    %3401 = vmatprep.subr.mxu0 0.0
    %3402 = vmatpush1.msra.mxu0 0.0
    %3403 = vmatprep.subr.mxu0 0.0
    %3404 = vmatpush1.msra.mxu0 0.0
    %3405 = vmatprep.subr.mxu0 0.0
    %3406 = vmatpush1.msra.mxu0 0.0
    %3407 = vmatprep.subr.mxu0 0.0
    %3408 = vmatpush1.msra.mxu0 0.0
    %3409 = vmatprep.subr.mxu0 0.0
    %3410 = vmatpush1.msra.mxu0 0.0
    %3411 = vmatprep.subr.mxu0 0.0
    %3412 = vmatpush1.msra.mxu0 0.0
    %3413 = vmatprep.subr.mxu0 0.0
    %3414 = vmatpush1.msra.mxu0 0.0
    %3415 = vmatprep.subr.mxu0 0.0
    %3416 = vmatpush1.msra.mxu0 0.0
    %3417 = vmatprep.subr.mxu0 0.0
    %3418 = vmatpush1.msra.mxu0 0.0
    %3419 = vmatprep.subr.mxu0 0.0
    %3420 = vmatpush1.msra.mxu0 0.0
    %3421 = vmatprep.subr.mxu0 0.0
    %3422 = vmatpush1.msra.mxu0 0.0
    %3423 = vmatprep.subr.mxu0 0.0
    %3424 = vmatpush1.msra.mxu0 0.0
    %3425 = vmatprep.subr.mxu0 0.0
    %3426 = vmatpush1.msra.mxu0 0.0
    %3427 = vmatprep.subr.mxu0 0.0
    %3428 = vmatpush1.msra.mxu0 0.0
    %3429 = vmatprep.subr.mxu0 0.0
    %3430 = vmatpush1.msra.mxu0 0.0
    %3431 = vmatprep.subr.mxu0 0.0
    %3432 = vmatpush1.msra.mxu0 0.0
    %3433 = vmatprep.subr.mxu0 0.0
    %3434 = vmatpush1.msra.mxu0 0.0
    %3435 = vmatprep.subr.mxu0 0.0
    %3436 = vmatpush1.msra.mxu0 0.0
    %3437 = vmatprep.subr.mxu0 0.0
    %3438 = vmatpush1.msra.mxu0 0.0
    %3439 = vmatprep.subr.mxu0 0.0
    %3440 = vmatpush1.msra.mxu0 0.0
    %3441 = vmatprep.subr.mxu0 0.0
    %3442 = vmatpush1.msra.mxu0 0.0
    %3443 = vmatprep.subr.mxu0 0.0
    %3444 = vmatpush1.msra.mxu0 0.0
    %3445 = vmatprep.subr.mxu0 0.0
    %3446 = vmatpush1.msra.mxu0 0.0
    %3447 = vmatprep.subr.mxu0 0.0
    %3448 = vmatpush1.msra.mxu0 0.0
    %3449 = vmatprep.mubr.f32.mxu0 0.0
    %3450 = vmatmul.mubr.f32.gmra.mrb[0].mxu0 %v3300
    %v3451 = vpop.f32.mrb[0].mxu0
    %v3452 = vadd.f32 0.0, %v3451
    %v3453 = vpop.f32.mrb[0].mxu0
    %v3454 = vadd.f32 0.0, %v3453
    %3455 = vdwg.mxu0
    %v3456 = vadd.f32 %v3255, %v3381
    %v3457 = vadd.f32 %v3256, %v3383
    %v3458 = vadd.f32 %v3257, %v3452
    %v3459 = vadd.f32 %v3258, %v3454
    %3460 = vrot.lane.b32.xlu0 %v1890, 111
    %v3461 = vpop.permute.xlu0 %3460
    %3462 = vrot.lane.b32.xlu0 %v1894, 111
    %v3463 = vpop.permute.xlu0 %3462
    %3464 = vrot.lane.b32.xlu0 %v1891, 111
    %v3465 = vpop.permute.xlu0 %3464
    %3466 = vrot.lane.b32.xlu0 %v1895, 111
    %v3467 = vpop.permute.xlu0 %3466
    %vm3468 = vcmp.lt.s32.totalorder %v1907, 111
    %v3469 = vsel %vm3468, %v3465, %v3467
    %v3470 = vsel %vm3468, %v3463, %v3465
    %v3471 = vsel %vm3468, %v3461, %v3463
    %v3472 = vsel %vm3468, %v3467, %v3461
    %v3474 = vlaneseq
    %v3475 = vshrl.u32 %v3474, 7
    %v3476 = vsub.s32 0, %v3475
    %v3477 = vrot.slane %v87, %v3476
    %v3478 = vlaneseq
    %v3479 = vshrl.u32 %v3478, 7
    %v3480 = vsub.s32 1, %v3479
    %v3481 = vrot.slane %v87, %v3480
    %v3482 = vlaneseq
    %v3483 = vshrl.u32 %v3482, 7
    %v3484 = vsub.s32 2, %v3483
    %v3485 = vrot.slane %v87, %v3484
    %v3486 = vlaneseq
    %v3487 = vshrl.u32 %v3486, 7
    %v3488 = vsub.s32 3, %v3487
    %v3489 = vrot.slane %v87, %v3488
    %v3494 = vmul.f32 %v3471, %v3477
    %v3495 = vmul.f32 %v3470, %v3481
    %v3496 = vmul.f32 %v3469, %v3485
    %v3497 = vmul.f32 %v3472, %v3489
    %s3498 = scalar_lea.vmem %s4, 68
    %v3499 = vld [vmem:[%s3498] sm:$0xf]
    %v3501 = vsel %vm1980, %v3499, 0
    %v3504 = vsel %vm1984, %v3494, 0
    %v3507 = vsel %vm1984, %v3495, 0
    %v3510 = vsel %vm1984, %v3496, 0
    %v3513 = vsel %vm1984, %v3497, 0
    %3515 = vmatprep.subr.mxu0 %v3507
    %3516 = vmatpush1.msra.mxu0 %v3504
    %3517 = vmatprep.subr.mxu0 0.0
    %3518 = vmatpush1.msra.mxu0 0.0
    %3519 = vmatprep.subr.mxu0 0.0
    %3520 = vmatpush1.msra.mxu0 0.0
    %3521 = vmatprep.subr.mxu0 0.0
    %3522 = vmatpush1.msra.mxu0 0.0
    %3523 = vmatprep.subr.mxu0 0.0
    %3524 = vmatpush1.msra.mxu0 0.0
    %3525 = vmatprep.subr.mxu0 0.0
    %3526 = vmatpush1.msra.mxu0 0.0
    %3527 = vmatprep.subr.mxu0 0.0
    %3528 = vmatpush1.msra.mxu0 0.0
    %3529 = vmatprep.subr.mxu0 0.0
    %3530 = vmatpush1.msra.mxu0 0.0
    %3531 = vmatprep.subr.mxu0 0.0
    %3532 = vmatpush1.msra.mxu0 0.0
    %3533 = vmatprep.subr.mxu0 0.0
    %3534 = vmatpush1.msra.mxu0 0.0
    %3535 = vmatprep.subr.mxu0 0.0
    %3536 = vmatpush1.msra.mxu0 0.0
    %3537 = vmatprep.subr.mxu0 0.0
    %3538 = vmatpush1.msra.mxu0 0.0
    %3539 = vmatprep.subr.mxu0 0.0
    %3540 = vmatpush1.msra.mxu0 0.0
    %3541 = vmatprep.subr.mxu0 0.0
    %3542 = vmatpush1.msra.mxu0 0.0
    %3543 = vmatprep.subr.mxu0 0.0
    %3544 = vmatpush1.msra.mxu0 0.0
    %3545 = vmatprep.subr.mxu0 0.0
    %3546 = vmatpush1.msra.mxu0 0.0
    %3547 = vmatprep.subr.mxu0 0.0
    %3548 = vmatpush1.msra.mxu0 0.0
    %3549 = vmatprep.subr.mxu0 0.0
    %3550 = vmatpush1.msra.mxu0 0.0
    %3551 = vmatprep.subr.mxu0 0.0
    %3552 = vmatpush1.msra.mxu0 0.0
    %3553 = vmatprep.subr.mxu0 0.0
    %3554 = vmatpush1.msra.mxu0 0.0
    %3555 = vmatprep.subr.mxu0 0.0
    %3556 = vmatpush1.msra.mxu0 0.0
    %3557 = vmatprep.subr.mxu0 0.0
    %3558 = vmatpush1.msra.mxu0 0.0
    %3559 = vmatprep.subr.mxu0 0.0
    %3560 = vmatpush1.msra.mxu0 0.0
    %3561 = vmatprep.subr.mxu0 0.0
    %3562 = vmatpush1.msra.mxu0 0.0
    %3563 = vmatprep.subr.mxu0 0.0
    %3564 = vmatpush1.msra.mxu0 0.0
    %3565 = vmatprep.subr.mxu0 0.0
    %3566 = vmatpush1.msra.mxu0 0.0
    %3567 = vmatprep.subr.mxu0 0.0
    %3568 = vmatpush1.msra.mxu0 0.0
    %3569 = vmatprep.subr.mxu0 0.0
    %3570 = vmatpush1.msra.mxu0 0.0
    %3571 = vmatprep.subr.mxu0 0.0
    %3572 = vmatpush1.msra.mxu0 0.0
    %3573 = vmatprep.subr.mxu0 0.0
    %3574 = vmatpush1.msra.mxu0 0.0
    %3575 = vmatprep.subr.mxu0 0.0
    %3576 = vmatpush1.msra.mxu0 0.0
    %3577 = vmatprep.subr.mxu0 0.0
    %3578 = vmatpush1.msra.mxu0 0.0
    %3579 = vmatprep.mubr.f32.mxu0 0.0
    %3580 = vmatmul.mubr.f32.gmra.mrb[0].mxu0 %v3501
    %v3581 = vpop.f32.mrb[0].mxu0
    %v3582 = vadd.f32 0.0, %v3581
    %v3583 = vpop.f32.mrb[0].mxu0
    %v3584 = vadd.f32 0.0, %v3583
    %3585 = vdwg.mxu0
    %3586 = vmatprep.subr.mxu0 %v3513
    %3587 = vmatpush1.msra.mxu0 %v3510
    %3588 = vmatprep.subr.mxu0 0.0
    %3589 = vmatpush1.msra.mxu0 0.0
    %3590 = vmatprep.subr.mxu0 0.0
    %3591 = vmatpush1.msra.mxu0 0.0
    %3592 = vmatprep.subr.mxu0 0.0
    %3593 = vmatpush1.msra.mxu0 0.0
    %3594 = vmatprep.subr.mxu0 0.0
    %3595 = vmatpush1.msra.mxu0 0.0
    %3596 = vmatprep.subr.mxu0 0.0
    %3597 = vmatpush1.msra.mxu0 0.0
    %3598 = vmatprep.subr.mxu0 0.0
    %3599 = vmatpush1.msra.mxu0 0.0
    %3600 = vmatprep.subr.mxu0 0.0
    %3601 = vmatpush1.msra.mxu0 0.0
    %3602 = vmatprep.subr.mxu0 0.0
    %3603 = vmatpush1.msra.mxu0 0.0
    %3604 = vmatprep.subr.mxu0 0.0
    %3605 = vmatpush1.msra.mxu0 0.0
    %3606 = vmatprep.subr.mxu0 0.0
    %3607 = vmatpush1.msra.mxu0 0.0
    %3608 = vmatprep.subr.mxu0 0.0
    %3609 = vmatpush1.msra.mxu0 0.0
    %3610 = vmatprep.subr.mxu0 0.0
    %3611 = vmatpush1.msra.mxu0 0.0
    %3612 = vmatprep.subr.mxu0 0.0
    %3613 = vmatpush1.msra.mxu0 0.0
    %3614 = vmatprep.subr.mxu0 0.0
    %3615 = vmatpush1.msra.mxu0 0.0
    %3616 = vmatprep.subr.mxu0 0.0
    %3617 = vmatpush1.msra.mxu0 0.0
    %3618 = vmatprep.subr.mxu0 0.0
    %3619 = vmatpush1.msra.mxu0 0.0
    %3620 = vmatprep.subr.mxu0 0.0
    %3621 = vmatpush1.msra.mxu0 0.0
    %3622 = vmatprep.subr.mxu0 0.0
    %3623 = vmatpush1.msra.mxu0 0.0
    %3624 = vmatprep.subr.mxu0 0.0
    %3625 = vmatpush1.msra.mxu0 0.0
    %3626 = vmatprep.subr.mxu0 0.0
    %3627 = vmatpush1.msra.mxu0 0.0
    %3628 = vmatprep.subr.mxu0 0.0
    %3629 = vmatpush1.msra.mxu0 0.0
    %3630 = vmatprep.subr.mxu0 0.0
    %3631 = vmatpush1.msra.mxu0 0.0
    %3632 = vmatprep.subr.mxu0 0.0
    %3633 = vmatpush1.msra.mxu0 0.0
    %3634 = vmatprep.subr.mxu0 0.0
    %3635 = vmatpush1.msra.mxu0 0.0
    %3636 = vmatprep.subr.mxu0 0.0
    %3637 = vmatpush1.msra.mxu0 0.0
    %3638 = vmatprep.subr.mxu0 0.0
    %3639 = vmatpush1.msra.mxu0 0.0
    %3640 = vmatprep.subr.mxu0 0.0
    %3641 = vmatpush1.msra.mxu0 0.0
    %3642 = vmatprep.subr.mxu0 0.0
    %3643 = vmatpush1.msra.mxu0 0.0
    %3644 = vmatprep.subr.mxu0 0.0
    %3645 = vmatpush1.msra.mxu0 0.0
    %3646 = vmatprep.subr.mxu0 0.0
    %3647 = vmatpush1.msra.mxu0 0.0
    %3648 = vmatprep.subr.mxu0 0.0
    %3649 = vmatpush1.msra.mxu0 0.0
    %3650 = vmatprep.mubr.f32.mxu0 0.0
    %3651 = vmatmul.mubr.f32.gmra.mrb[0].mxu0 %v3501
    %v3652 = vpop.f32.mrb[0].mxu0
    %v3653 = vadd.f32 0.0, %v3652
    %v3654 = vpop.f32.mrb[0].mxu0
    %v3655 = vadd.f32 0.0, %v3654
    %3656 = vdwg.mxu0
    %v3657 = vadd.f32 %v3456, %v3582
    %v3658 = vadd.f32 %v3457, %v3584
    %v3659 = vadd.f32 %v3458, %v3653
    %v3660 = vadd.f32 %v3459, %v3655
    %s3661 = scalar_lea.vmem %s5, 4
    %v3662 = vld [vmem:[%s3661] sm:$0xf]
    %3664 = vset.pattern.permute.xlu0 0
    %3665 = vperm.xlu0 %3664, %v3662
    %v3666 = vpop.permute.xlu0 %3665
    %v3668 = vadd.f32 %v3657, %v3666
    %v3669 = vadd.f32 %v3658, %v3666
    %v3670 = vadd.f32 %v3659, %v3666
    %v3671 = vadd.f32 %v3660, %v3666
    %v3672 = vmax.f32 %v3668, 0.0
    %v3673 = vmax.f32 %v3669, 0.0
    %v3674 = vmax.f32 %v3670, 0.0
    %v3675 = vmax.f32 %v3671, 0.0
    %v3680 = vcombine.low %v3672, %v3673
    %v3681 = vcombine.low %v3674, %v3675
    %3684 = vst [vmem:[#allocation2] sm:$0xff] %v3680
    %3685 = vst [vmem:[#allocation2 + $0x8] sm:$0xff] %v3681
  $region37: #{_fused_forward.1} parent=0 // pred_fallthru
    _
  %p3686 = scmp.ge.s32.totalorder %s68, 2
  // Predicated region
  $region38: #{_fused_forward.1} parent=0 // pred_check
    %p3687 = pneg %p3686
  $region39: #{_fused_forward.1} parent=0 // pred_check_branch
    %3689 = sbr.rel (%p3687) target = $region41
  $region40: #{_fused_forward.1} parent=0 // pred_region
    %v3690 = vld [vmem:[#allocation2] sm:$0xff]
    %v3691 = vld [vmem:[#allocation2 + $0x8] sm:$0xff]
    %v3694 = vcombine.high %v3690, %v3690
    %v3695 = vcombine.high %v3691, %v3691
    %3698 = vrot.lane.b32.xlu0 %v3690, 17
    %v3699 = vpop.permute.xlu0 %3698
    %3700 = vrot.lane.b32.xlu0 %v3694, 17
    %v3701 = vpop.permute.xlu0 %3700
    %3702 = vrot.lane.b32.xlu0 %v3691, 17
    %v3703 = vpop.permute.xlu0 %3702
    %3704 = vrot.lane.b32.xlu0 %v3695, 17
    %v3705 = vpop.permute.xlu0 %3704
    %v3706 = vlaneseq
    %v3707 = vand.u32 %v3706, 127
    %vm3708 = vcmp.lt.s32.totalorder %v3707, 17
    %v3709 = vsel %vm3708, %v3703, %v3705
    %v3710 = vsel %vm3708, %v3701, %v3703
    %v3711 = vsel %vm3708, %v3699, %v3701
    %v3712 = vsel %vm3708, %v3705, %v3699
    %v3714 = vlaneseq
    %v3715 = vshrl.u32 %v3714, 7
    %v3716 = vsub.s32 0, %v3715
    %v3717 = vrot.slane %v73, %v3716
    %v3718 = vlaneseq
    %v3719 = vshrl.u32 %v3718, 7
    %v3720 = vsub.s32 1, %v3719
    %v3721 = vrot.slane %v73, %v3720
    %v3722 = vlaneseq
    %v3723 = vshrl.u32 %v3722, 7
    %v3724 = vsub.s32 2, %v3723
    %v3725 = vrot.slane %v73, %v3724
    %v3726 = vlaneseq
    %v3727 = vshrl.u32 %v3726, 7
    %v3728 = vsub.s32 3, %v3727
    %v3729 = vrot.slane %v73, %v3728
    %v3734 = vmul.f32 %v3712, %v3717
    %v3735 = vmul.f32 %v3711, %v3721
    %v3736 = vmul.f32 %v3710, %v3725
    %v3737 = vmul.f32 %v3709, %v3729
    %s3738 = scalar_lea.vmem %s4, 72
    %v3739 = vld [vmem:[%s3738] sm:$0xf]
    %3740 = vrot.lane.b32.xlu0 %v3690, 16
    %v3741 = vpop.permute.xlu0 %3740
    %3742 = vrot.lane.b32.xlu0 %v3694, 16
    %v3743 = vpop.permute.xlu0 %3742
    %3744 = vrot.lane.b32.xlu0 %v3691, 16
    %v3745 = vpop.permute.xlu0 %3744
    %3746 = vrot.lane.b32.xlu0 %v3695, 16
    %v3747 = vpop.permute.xlu0 %3746
    %vm3748 = vcmp.lt.s32.totalorder %v3707, 16
    %v3749 = vsel %vm3748, %v3745, %v3747
    %v3750 = vsel %vm3748, %v3743, %v3745
    %v3751 = vsel %vm3748, %v3741, %v3743
    %v3752 = vsel %vm3748, %v3747, %v3741
    %v3754 = vlaneseq
    %v3755 = vshrl.u32 %v3754, 7
    %v3756 = vsub.s32 0, %v3755
    %v3757 = vrot.slane %v75, %v3756
    %v3758 = vlaneseq
    %v3759 = vshrl.u32 %v3758, 7
    %v3760 = vsub.s32 1, %v3759
    %v3761 = vrot.slane %v75, %v3760
    %v3762 = vlaneseq
    %v3763 = vshrl.u32 %v3762, 7
    %v3764 = vsub.s32 2, %v3763
    %v3765 = vrot.slane %v75, %v3764
    %v3766 = vlaneseq
    %v3767 = vshrl.u32 %v3766, 7
    %v3768 = vsub.s32 3, %v3767
    %v3769 = vrot.slane %v75, %v3768
    %v3774 = vmul.f32 %v3752, %v3757
    %v3775 = vmul.f32 %v3751, %v3761
    %v3776 = vmul.f32 %v3750, %v3765
    %v3777 = vmul.f32 %v3749, %v3769
    %s3778 = scalar_lea.vmem %s4, 76
    %v3779 = vld [vmem:[%s3778] sm:$0xf]
    %vm3780 = vcmask 31744
    %v3782 = vsel %vm3780, %v3779, 0
    %vm3784 = vcmask 1043456
    %v3786 = vsel %vm3784, %v3774, 0
    %v3789 = vsel %vm3784, %v3775, 0
    %v3792 = vsel %vm3784, %v3776, 0
    %v3795 = vsel %vm3784, %v3777, 0
    %3797 = vmatprep.subr.mxu0 %v3789
    %3798 = vmatpush1.msra.mxu0 %v3786
    %3799 = vmatprep.subr.mxu0 0.0
    %3800 = vmatpush1.msra.mxu0 0.0
    %3801 = vmatprep.subr.mxu0 0.0
    %3802 = vmatpush1.msra.mxu0 0.0
    %3803 = vmatprep.subr.mxu0 0.0
    %3804 = vmatpush1.msra.mxu0 0.0
    %3805 = vmatprep.subr.mxu0 0.0
    %3806 = vmatpush1.msra.mxu0 0.0
    %3807 = vmatprep.subr.mxu0 0.0
    %3808 = vmatpush1.msra.mxu0 0.0
    %3809 = vmatprep.subr.mxu0 0.0
    %3810 = vmatpush1.msra.mxu0 0.0
    %3811 = vmatprep.subr.mxu0 0.0
    %3812 = vmatpush1.msra.mxu0 0.0
    %3813 = vmatprep.subr.mxu0 0.0
    %3814 = vmatpush1.msra.mxu0 0.0
    %3815 = vmatprep.subr.mxu0 0.0
    %3816 = vmatpush1.msra.mxu0 0.0
    %3817 = vmatprep.subr.mxu0 0.0
    %3818 = vmatpush1.msra.mxu0 0.0
    %3819 = vmatprep.subr.mxu0 0.0
    %3820 = vmatpush1.msra.mxu0 0.0
    %3821 = vmatprep.subr.mxu0 0.0
    %3822 = vmatpush1.msra.mxu0 0.0
    %3823 = vmatprep.subr.mxu0 0.0
    %3824 = vmatpush1.msra.mxu0 0.0
    %3825 = vmatprep.subr.mxu0 0.0
    %3826 = vmatpush1.msra.mxu0 0.0
    %3827 = vmatprep.subr.mxu0 0.0
    %3828 = vmatpush1.msra.mxu0 0.0
    %3829 = vmatprep.subr.mxu0 0.0
    %3830 = vmatpush1.msra.mxu0 0.0
    %3831 = vmatprep.subr.mxu0 0.0
    %3832 = vmatpush1.msra.mxu0 0.0
    %3833 = vmatprep.subr.mxu0 0.0
    %3834 = vmatpush1.msra.mxu0 0.0
    %3835 = vmatprep.subr.mxu0 0.0
    %3836 = vmatpush1.msra.mxu0 0.0
    %3837 = vmatprep.subr.mxu0 0.0
    %3838 = vmatpush1.msra.mxu0 0.0
    %3839 = vmatprep.subr.mxu0 0.0
    %3840 = vmatpush1.msra.mxu0 0.0
    %3841 = vmatprep.subr.mxu0 0.0
    %3842 = vmatpush1.msra.mxu0 0.0
    %3843 = vmatprep.subr.mxu0 0.0
    %3844 = vmatpush1.msra.mxu0 0.0
    %3845 = vmatprep.subr.mxu0 0.0
    %3846 = vmatpush1.msra.mxu0 0.0
    %3847 = vmatprep.subr.mxu0 0.0
    %3848 = vmatpush1.msra.mxu0 0.0
    %3849 = vmatprep.subr.mxu0 0.0
    %3850 = vmatpush1.msra.mxu0 0.0
    %3851 = vmatprep.subr.mxu0 0.0
    %3852 = vmatpush1.msra.mxu0 0.0
    %3853 = vmatprep.subr.mxu0 0.0
    %3854 = vmatpush1.msra.mxu0 0.0
    %3855 = vmatprep.subr.mxu0 0.0
    %3856 = vmatpush1.msra.mxu0 0.0
    %3857 = vmatprep.subr.mxu0 0.0
    %3858 = vmatpush1.msra.mxu0 0.0
    %3859 = vmatprep.subr.mxu0 0.0
    %3860 = vmatpush1.msra.mxu0 0.0
    %3861 = vmatprep.mubr.f32.mxu0 0.0
    %3862 = vmatmul.mubr.f32.gmra.mrb[0].mxu0 %v3782
    %v3863 = vpop.f32.mrb[0].mxu0
    %v3864 = vadd.f32 0.0, %v3863
    %v3865 = vpop.f32.mrb[0].mxu0
    %v3866 = vadd.f32 0.0, %v3865
    %3867 = vdwg.mxu0
    %3868 = vmatprep.subr.mxu0 %v3795
    %3869 = vmatpush1.msra.mxu0 %v3792
    %3870 = vmatprep.subr.mxu0 0.0
    %3871 = vmatpush1.msra.mxu0 0.0
    %3872 = vmatprep.subr.mxu0 0.0
    %3873 = vmatpush1.msra.mxu0 0.0
    %3874 = vmatprep.subr.mxu0 0.0
    %3875 = vmatpush1.msra.mxu0 0.0
    %3876 = vmatprep.subr.mxu0 0.0
    %3877 = vmatpush1.msra.mxu0 0.0
    %3878 = vmatprep.subr.mxu0 0.0
    %3879 = vmatpush1.msra.mxu0 0.0
    %3880 = vmatprep.subr.mxu0 0.0
    %3881 = vmatpush1.msra.mxu0 0.0
    %3882 = vmatprep.subr.mxu0 0.0
    %3883 = vmatpush1.msra.mxu0 0.0
    %3884 = vmatprep.subr.mxu0 0.0
    %3885 = vmatpush1.msra.mxu0 0.0
    %3886 = vmatprep.subr.mxu0 0.0
    %3887 = vmatpush1.msra.mxu0 0.0
    %3888 = vmatprep.subr.mxu0 0.0
    %3889 = vmatpush1.msra.mxu0 0.0
    %3890 = vmatprep.subr.mxu0 0.0
    %3891 = vmatpush1.msra.mxu0 0.0
    %3892 = vmatprep.subr.mxu0 0.0
    %3893 = vmatpush1.msra.mxu0 0.0
    %3894 = vmatprep.subr.mxu0 0.0
    %3895 = vmatpush1.msra.mxu0 0.0
    %3896 = vmatprep.subr.mxu0 0.0
    %3897 = vmatpush1.msra.mxu0 0.0
    %3898 = vmatprep.subr.mxu0 0.0
    %3899 = vmatpush1.msra.mxu0 0.0
    %3900 = vmatprep.subr.mxu0 0.0
    %3901 = vmatpush1.msra.mxu0 0.0
    %3902 = vmatprep.subr.mxu0 0.0
    %3903 = vmatpush1.msra.mxu0 0.0
    %3904 = vmatprep.subr.mxu0 0.0
    %3905 = vmatpush1.msra.mxu0 0.0
    %3906 = vmatprep.subr.mxu0 0.0
    %3907 = vmatpush1.msra.mxu0 0.0
    %3908 = vmatprep.subr.mxu0 0.0
    %3909 = vmatpush1.msra.mxu0 0.0
    %3910 = vmatprep.subr.mxu0 0.0
    %3911 = vmatpush1.msra.mxu0 0.0
    %3912 = vmatprep.subr.mxu0 0.0
    %3913 = vmatpush1.msra.mxu0 0.0
    %3914 = vmatprep.subr.mxu0 0.0
    %3915 = vmatpush1.msra.mxu0 0.0
    %3916 = vmatprep.subr.mxu0 0.0
    %3917 = vmatpush1.msra.mxu0 0.0
    %3918 = vmatprep.subr.mxu0 0.0
    %3919 = vmatpush1.msra.mxu0 0.0
    %3920 = vmatprep.subr.mxu0 0.0
    %3921 = vmatpush1.msra.mxu0 0.0
    %3922 = vmatprep.subr.mxu0 0.0
    %3923 = vmatpush1.msra.mxu0 0.0
    %3924 = vmatprep.subr.mxu0 0.0
    %3925 = vmatpush1.msra.mxu0 0.0
    %3926 = vmatprep.subr.mxu0 0.0
    %3927 = vmatpush1.msra.mxu0 0.0
    %3928 = vmatprep.subr.mxu0 0.0
    %3929 = vmatpush1.msra.mxu0 0.0
    %3930 = vmatprep.subr.mxu0 0.0
    %3931 = vmatpush1.msra.mxu0 0.0
    %3932 = vmatprep.mubr.f32.mxu0 0.0
    %3933 = vmatmul.mubr.f32.gmra.mrb[0].mxu0 %v3782
    %v3934 = vpop.f32.mrb[0].mxu0
    %v3935 = vadd.f32 0.0, %v3934
    %v3936 = vpop.f32.mrb[0].mxu0
    %v3937 = vadd.f32 0.0, %v3936
    %3938 = vdwg.mxu0
    %v3940 = vsel %vm3780, %v3739, 0
    %v3943 = vsel %vm3784, %v3734, 0
    %v3946 = vsel %vm3784, %v3735, 0
    %v3949 = vsel %vm3784, %v3736, 0
    %v3952 = vsel %vm3784, %v3737, 0
    %3954 = vmatprep.subr.mxu0 %v3946
    %3955 = vmatpush1.msra.mxu0 %v3943
    %3956 = vmatprep.subr.mxu0 0.0
    %3957 = vmatpush1.msra.mxu0 0.0
    %3958 = vmatprep.subr.mxu0 0.0
    %3959 = vmatpush1.msra.mxu0 0.0
    %3960 = vmatprep.subr.mxu0 0.0
    %3961 = vmatpush1.msra.mxu0 0.0
    %3962 = vmatprep.subr.mxu0 0.0
    %3963 = vmatpush1.msra.mxu0 0.0
    %3964 = vmatprep.subr.mxu0 0.0
    %3965 = vmatpush1.msra.mxu0 0.0
    %3966 = vmatprep.subr.mxu0 0.0
    %3967 = vmatpush1.msra.mxu0 0.0
    %3968 = vmatprep.subr.mxu0 0.0
    %3969 = vmatpush1.msra.mxu0 0.0
    %3970 = vmatprep.subr.mxu0 0.0
    %3971 = vmatpush1.msra.mxu0 0.0
    %3972 = vmatprep.subr.mxu0 0.0
    %3973 = vmatpush1.msra.mxu0 0.0
    %3974 = vmatprep.subr.mxu0 0.0
    %3975 = vmatpush1.msra.mxu0 0.0
    %3976 = vmatprep.subr.mxu0 0.0
    %3977 = vmatpush1.msra.mxu0 0.0
    %3978 = vmatprep.subr.mxu0 0.0
    %3979 = vmatpush1.msra.mxu0 0.0
    %3980 = vmatprep.subr.mxu0 0.0
    %3981 = vmatpush1.msra.mxu0 0.0
    %3982 = vmatprep.subr.mxu0 0.0
    %3983 = vmatpush1.msra.mxu0 0.0
    %3984 = vmatprep.subr.mxu0 0.0
    %3985 = vmatpush1.msra.mxu0 0.0
    %3986 = vmatprep.subr.mxu0 0.0
    %3987 = vmatpush1.msra.mxu0 0.0
    %3988 = vmatprep.subr.mxu0 0.0
    %3989 = vmatpush1.msra.mxu0 0.0
    %3990 = vmatprep.subr.mxu0 0.0
    %3991 = vmatpush1.msra.mxu0 0.0
    %3992 = vmatprep.subr.mxu0 0.0
    %3993 = vmatpush1.msra.mxu0 0.0
    %3994 = vmatprep.subr.mxu0 0.0
    %3995 = vmatpush1.msra.mxu0 0.0
    %3996 = vmatprep.subr.mxu0 0.0
    %3997 = vmatpush1.msra.mxu0 0.0
    %3998 = vmatprep.subr.mxu0 0.0
    %3999 = vmatpush1.msra.mxu0 0.0
    %4000 = vmatprep.subr.mxu0 0.0
    %4001 = vmatpush1.msra.mxu0 0.0
    %4002 = vmatprep.subr.mxu0 0.0
    %4003 = vmatpush1.msra.mxu0 0.0
    %4004 = vmatprep.subr.mxu0 0.0
    %4005 = vmatpush1.msra.mxu0 0.0
    %4006 = vmatprep.subr.mxu0 0.0
    %4007 = vmatpush1.msra.mxu0 0.0
    %4008 = vmatprep.subr.mxu0 0.0
    %4009 = vmatpush1.msra.mxu0 0.0
    %4010 = vmatprep.subr.mxu0 0.0
    %4011 = vmatpush1.msra.mxu0 0.0
    %4012 = vmatprep.subr.mxu0 0.0
    %4013 = vmatpush1.msra.mxu0 0.0
    %4014 = vmatprep.subr.mxu0 0.0
    %4015 = vmatpush1.msra.mxu0 0.0
    %4016 = vmatprep.subr.mxu0 0.0
    %4017 = vmatpush1.msra.mxu0 0.0
    %4018 = vmatprep.mubr.f32.mxu0 0.0
    %4019 = vmatmul.mubr.f32.gmra.mrb[0].mxu0 %v3940
    %v4020 = vpop.f32.mrb[0].mxu0
    %v4021 = vadd.f32 %v3864, %v4020
    %v4022 = vpop.f32.mrb[0].mxu0
    %v4023 = vadd.f32 %v3866, %v4022
    %4024 = vdwg.mxu0
    %4025 = vmatprep.subr.mxu0 %v3952
    %4026 = vmatpush1.msra.mxu0 %v3949
    %4027 = vmatprep.subr.mxu0 0.0
    %4028 = vmatpush1.msra.mxu0 0.0
    %4029 = vmatprep.subr.mxu0 0.0
    %4030 = vmatpush1.msra.mxu0 0.0
    %4031 = vmatprep.subr.mxu0 0.0
    %4032 = vmatpush1.msra.mxu0 0.0
    %4033 = vmatprep.subr.mxu0 0.0
    %4034 = vmatpush1.msra.mxu0 0.0
    %4035 = vmatprep.subr.mxu0 0.0
    %4036 = vmatpush1.msra.mxu0 0.0
    %4037 = vmatprep.subr.mxu0 0.0
    %4038 = vmatpush1.msra.mxu0 0.0
    %4039 = vmatprep.subr.mxu0 0.0
    %4040 = vmatpush1.msra.mxu0 0.0
    %4041 = vmatprep.subr.mxu0 0.0
    %4042 = vmatpush1.msra.mxu0 0.0
    %4043 = vmatprep.subr.mxu0 0.0
    %4044 = vmatpush1.msra.mxu0 0.0
    %4045 = vmatprep.subr.mxu0 0.0
    %4046 = vmatpush1.msra.mxu0 0.0
    %4047 = vmatprep.subr.mxu0 0.0
    %4048 = vmatpush1.msra.mxu0 0.0
    %4049 = vmatprep.subr.mxu0 0.0
    %4050 = vmatpush1.msra.mxu0 0.0
    %4051 = vmatprep.subr.mxu0 0.0
    %4052 = vmatpush1.msra.mxu0 0.0
    %4053 = vmatprep.subr.mxu0 0.0
    %4054 = vmatpush1.msra.mxu0 0.0
    %4055 = vmatprep.subr.mxu0 0.0
    %4056 = vmatpush1.msra.mxu0 0.0
    %4057 = vmatprep.subr.mxu0 0.0
    %4058 = vmatpush1.msra.mxu0 0.0
    %4059 = vmatprep.subr.mxu0 0.0
    %4060 = vmatpush1.msra.mxu0 0.0
    %4061 = vmatprep.subr.mxu0 0.0
    %4062 = vmatpush1.msra.mxu0 0.0
    %4063 = vmatprep.subr.mxu0 0.0
    %4064 = vmatpush1.msra.mxu0 0.0
    %4065 = vmatprep.subr.mxu0 0.0
    %4066 = vmatpush1.msra.mxu0 0.0
    %4067 = vmatprep.subr.mxu0 0.0
    %4068 = vmatpush1.msra.mxu0 0.0
    %4069 = vmatprep.subr.mxu0 0.0
    %4070 = vmatpush1.msra.mxu0 0.0
    %4071 = vmatprep.subr.mxu0 0.0
    %4072 = vmatpush1.msra.mxu0 0.0
    %4073 = vmatprep.subr.mxu0 0.0
    %4074 = vmatpush1.msra.mxu0 0.0
    %4075 = vmatprep.subr.mxu0 0.0
    %4076 = vmatpush1.msra.mxu0 0.0
    %4077 = vmatprep.subr.mxu0 0.0
    %4078 = vmatpush1.msra.mxu0 0.0
    %4079 = vmatprep.subr.mxu0 0.0
    %4080 = vmatpush1.msra.mxu0 0.0
    %4081 = vmatprep.subr.mxu0 0.0
    %4082 = vmatpush1.msra.mxu0 0.0
    %4083 = vmatprep.subr.mxu0 0.0
    %4084 = vmatpush1.msra.mxu0 0.0
    %4085 = vmatprep.subr.mxu0 0.0
    %4086 = vmatpush1.msra.mxu0 0.0
    %4087 = vmatprep.subr.mxu0 0.0
    %4088 = vmatpush1.msra.mxu0 0.0
    %4089 = vmatprep.mubr.f32.mxu0 0.0
    %4090 = vmatmul.mubr.f32.gmra.mrb[0].mxu0 %v3940
    %v4091 = vpop.f32.mrb[0].mxu0
    %v4092 = vadd.f32 %v3935, %v4091
    %v4093 = vpop.f32.mrb[0].mxu0
    %v4094 = vadd.f32 %v3937, %v4093
    %4095 = vdwg.mxu0
    %4096 = vrot.lane.b32.xlu0 %v3690, 15
    %v4097 = vpop.permute.xlu0 %4096
    %4098 = vrot.lane.b32.xlu0 %v3694, 15
    %v4099 = vpop.permute.xlu0 %4098
    %4100 = vrot.lane.b32.xlu0 %v3691, 15
    %v4101 = vpop.permute.xlu0 %4100
    %4102 = vrot.lane.b32.xlu0 %v3695, 15
    %v4103 = vpop.permute.xlu0 %4102
    %vm4104 = vcmp.lt.s32.totalorder %v3707, 15
    %v4105 = vsel %vm4104, %v4101, %v4103
    %v4106 = vsel %vm4104, %v4099, %v4101
    %v4107 = vsel %vm4104, %v4097, %v4099
    %v4108 = vsel %vm4104, %v4103, %v4097
    %v4110 = vlaneseq
    %v4111 = vshrl.u32 %v4110, 7
    %v4112 = vsub.s32 0, %v4111
    %v4113 = vrot.slane %v77, %v4112
    %v4114 = vlaneseq
    %v4115 = vshrl.u32 %v4114, 7
    %v4116 = vsub.s32 1, %v4115
    %v4117 = vrot.slane %v77, %v4116
    %v4118 = vlaneseq
    %v4119 = vshrl.u32 %v4118, 7
    %v4120 = vsub.s32 2, %v4119
    %v4121 = vrot.slane %v77, %v4120
    %v4122 = vlaneseq
    %v4123 = vshrl.u32 %v4122, 7
    %v4124 = vsub.s32 3, %v4123
    %v4125 = vrot.slane %v77, %v4124
    %v4130 = vmul.f32 %v4108, %v4113
    %v4131 = vmul.f32 %v4107, %v4117
    %v4132 = vmul.f32 %v4106, %v4121
    %v4133 = vmul.f32 %v4105, %v4125
    %s4134 = scalar_lea.vmem %s4, 80
    %v4135 = vld [vmem:[%s4134] sm:$0xf]
    %v4137 = vsel %vm3780, %v4135, 0
    %v4140 = vsel %vm3784, %v4130, 0
    %v4143 = vsel %vm3784, %v4131, 0
    %v4146 = vsel %vm3784, %v4132, 0
    %v4149 = vsel %vm3784, %v4133, 0
    %4151 = vmatprep.subr.mxu0 %v4143
    %4152 = vmatpush1.msra.mxu0 %v4140
    %4153 = vmatprep.subr.mxu0 0.0
    %4154 = vmatpush1.msra.mxu0 0.0
    %4155 = vmatprep.subr.mxu0 0.0
    %4156 = vmatpush1.msra.mxu0 0.0
    %4157 = vmatprep.subr.mxu0 0.0
    %4158 = vmatpush1.msra.mxu0 0.0
    %4159 = vmatprep.subr.mxu0 0.0
    %4160 = vmatpush1.msra.mxu0 0.0
    %4161 = vmatprep.subr.mxu0 0.0
    %4162 = vmatpush1.msra.mxu0 0.0
    %4163 = vmatprep.subr.mxu0 0.0
    %4164 = vmatpush1.msra.mxu0 0.0
    %4165 = vmatprep.subr.mxu0 0.0
    %4166 = vmatpush1.msra.mxu0 0.0
    %4167 = vmatprep.subr.mxu0 0.0
    %4168 = vmatpush1.msra.mxu0 0.0
    %4169 = vmatprep.subr.mxu0 0.0
    %4170 = vmatpush1.msra.mxu0 0.0
    %4171 = vmatprep.subr.mxu0 0.0
    %4172 = vmatpush1.msra.mxu0 0.0
    %4173 = vmatprep.subr.mxu0 0.0
    %4174 = vmatpush1.msra.mxu0 0.0
    %4175 = vmatprep.subr.mxu0 0.0
    %4176 = vmatpush1.msra.mxu0 0.0
    %4177 = vmatprep.subr.mxu0 0.0
    %4178 = vmatpush1.msra.mxu0 0.0
    %4179 = vmatprep.subr.mxu0 0.0
    %4180 = vmatpush1.msra.mxu0 0.0
    %4181 = vmatprep.subr.mxu0 0.0
    %4182 = vmatpush1.msra.mxu0 0.0
    %4183 = vmatprep.subr.mxu0 0.0
    %4184 = vmatpush1.msra.mxu0 0.0
    %4185 = vmatprep.subr.mxu0 0.0
    %4186 = vmatpush1.msra.mxu0 0.0
    %4187 = vmatprep.subr.mxu0 0.0
    %4188 = vmatpush1.msra.mxu0 0.0
    %4189 = vmatprep.subr.mxu0 0.0
    %4190 = vmatpush1.msra.mxu0 0.0
    %4191 = vmatprep.subr.mxu0 0.0
    %4192 = vmatpush1.msra.mxu0 0.0
    %4193 = vmatprep.subr.mxu0 0.0
    %4194 = vmatpush1.msra.mxu0 0.0
    %4195 = vmatprep.subr.mxu0 0.0
    %4196 = vmatpush1.msra.mxu0 0.0
    %4197 = vmatprep.subr.mxu0 0.0
    %4198 = vmatpush1.msra.mxu0 0.0
    %4199 = vmatprep.subr.mxu0 0.0
    %4200 = vmatpush1.msra.mxu0 0.0
    %4201 = vmatprep.subr.mxu0 0.0
    %4202 = vmatpush1.msra.mxu0 0.0
    %4203 = vmatprep.subr.mxu0 0.0
    %4204 = vmatpush1.msra.mxu0 0.0
    %4205 = vmatprep.subr.mxu0 0.0
    %4206 = vmatpush1.msra.mxu0 0.0
    %4207 = vmatprep.subr.mxu0 0.0
    %4208 = vmatpush1.msra.mxu0 0.0
    %4209 = vmatprep.subr.mxu0 0.0
    %4210 = vmatpush1.msra.mxu0 0.0
    %4211 = vmatprep.subr.mxu0 0.0
    %4212 = vmatpush1.msra.mxu0 0.0
    %4213 = vmatprep.subr.mxu0 0.0
    %4214 = vmatpush1.msra.mxu0 0.0
    %4215 = vmatprep.mubr.f32.mxu0 0.0
    %4216 = vmatmul.mubr.f32.gmra.mrb[0].mxu0 %v4137
    %v4217 = vpop.f32.mrb[0].mxu0
    %v4218 = vadd.f32 0.0, %v4217
    %v4219 = vpop.f32.mrb[0].mxu0
    %v4220 = vadd.f32 0.0, %v4219
    %4221 = vdwg.mxu0
    %4222 = vmatprep.subr.mxu0 %v4149
    %4223 = vmatpush1.msra.mxu0 %v4146
    %4224 = vmatprep.subr.mxu0 0.0
    %4225 = vmatpush1.msra.mxu0 0.0
    %4226 = vmatprep.subr.mxu0 0.0
    %4227 = vmatpush1.msra.mxu0 0.0
    %4228 = vmatprep.subr.mxu0 0.0
    %4229 = vmatpush1.msra.mxu0 0.0
    %4230 = vmatprep.subr.mxu0 0.0
    %4231 = vmatpush1.msra.mxu0 0.0
    %4232 = vmatprep.subr.mxu0 0.0
    %4233 = vmatpush1.msra.mxu0 0.0
    %4234 = vmatprep.subr.mxu0 0.0
    %4235 = vmatpush1.msra.mxu0 0.0
    %4236 = vmatprep.subr.mxu0 0.0
    %4237 = vmatpush1.msra.mxu0 0.0
    %4238 = vmatprep.subr.mxu0 0.0
    %4239 = vmatpush1.msra.mxu0 0.0
    %4240 = vmatprep.subr.mxu0 0.0
    %4241 = vmatpush1.msra.mxu0 0.0
    %4242 = vmatprep.subr.mxu0 0.0
    %4243 = vmatpush1.msra.mxu0 0.0
    %4244 = vmatprep.subr.mxu0 0.0
    %4245 = vmatpush1.msra.mxu0 0.0
    %4246 = vmatprep.subr.mxu0 0.0
    %4247 = vmatpush1.msra.mxu0 0.0
    %4248 = vmatprep.subr.mxu0 0.0
    %4249 = vmatpush1.msra.mxu0 0.0
    %4250 = vmatprep.subr.mxu0 0.0
    %4251 = vmatpush1.msra.mxu0 0.0
    %4252 = vmatprep.subr.mxu0 0.0
    %4253 = vmatpush1.msra.mxu0 0.0
    %4254 = vmatprep.subr.mxu0 0.0
    %4255 = vmatpush1.msra.mxu0 0.0
    %4256 = vmatprep.subr.mxu0 0.0
    %4257 = vmatpush1.msra.mxu0 0.0
    %4258 = vmatprep.subr.mxu0 0.0
    %4259 = vmatpush1.msra.mxu0 0.0
    %4260 = vmatprep.subr.mxu0 0.0
    %4261 = vmatpush1.msra.mxu0 0.0
    %4262 = vmatprep.subr.mxu0 0.0
    %4263 = vmatpush1.msra.mxu0 0.0
    %4264 = vmatprep.subr.mxu0 0.0
    %4265 = vmatpush1.msra.mxu0 0.0
    %4266 = vmatprep.subr.mxu0 0.0
    %4267 = vmatpush1.msra.mxu0 0.0
    %4268 = vmatprep.subr.mxu0 0.0
    %4269 = vmatpush1.msra.mxu0 0.0
    %4270 = vmatprep.subr.mxu0 0.0
    %4271 = vmatpush1.msra.mxu0 0.0
    %4272 = vmatprep.subr.mxu0 0.0
    %4273 = vmatpush1.msra.mxu0 0.0
    %4274 = vmatprep.subr.mxu0 0.0
    %4275 = vmatpush1.msra.mxu0 0.0
    %4276 = vmatprep.subr.mxu0 0.0
    %4277 = vmatpush1.msra.mxu0 0.0
    %4278 = vmatprep.subr.mxu0 0.0
    %4279 = vmatpush1.msra.mxu0 0.0
    %4280 = vmatprep.subr.mxu0 0.0
    %4281 = vmatpush1.msra.mxu0 0.0
    %4282 = vmatprep.subr.mxu0 0.0
    %4283 = vmatpush1.msra.mxu0 0.0
    %4284 = vmatprep.subr.mxu0 0.0
    %4285 = vmatpush1.msra.mxu0 0.0
    %4286 = vmatprep.mubr.f32.mxu0 0.0
    %4287 = vmatmul.mubr.f32.gmra.mrb[0].mxu0 %v4137
    %v4288 = vpop.f32.mrb[0].mxu0
    %v4289 = vadd.f32 0.0, %v4288
    %v4290 = vpop.f32.mrb[0].mxu0
    %v4291 = vadd.f32 0.0, %v4290
    %4292 = vdwg.mxu0
    %v4293 = vadd.f32 %v4021, %v4218
    %v4294 = vadd.f32 %v4023, %v4220
    %v4295 = vadd.f32 %v4092, %v4289
    %v4296 = vadd.f32 %v4094, %v4291
    %4297 = vrot.lane.b32.xlu0 %v3690, 1
    %v4298 = vpop.permute.xlu0 %4297
    %4299 = vrot.lane.b32.xlu0 %v3694, 1
    %v4300 = vpop.permute.xlu0 %4299
    %4301 = vrot.lane.b32.xlu0 %v3691, 1
    %v4302 = vpop.permute.xlu0 %4301
    %4303 = vrot.lane.b32.xlu0 %v3695, 1
    %v4304 = vpop.permute.xlu0 %4303
    %vm4305 = vcmp.lt.s32.totalorder %v3707, 1
    %v4306 = vsel %vm4305, %v4302, %v4304
    %v4307 = vsel %vm4305, %v4300, %v4302
    %v4308 = vsel %vm4305, %v4298, %v4300
    %v4309 = vsel %vm4305, %v4304, %v4298
    %v4311 = vlaneseq
    %v4312 = vshrl.u32 %v4311, 7
    %v4313 = vsub.s32 0, %v4312
    %v4314 = vrot.slane %v79, %v4313
    %v4315 = vlaneseq
    %v4316 = vshrl.u32 %v4315, 7
    %v4317 = vsub.s32 1, %v4316
    %v4318 = vrot.slane %v79, %v4317
    %v4319 = vlaneseq
    %v4320 = vshrl.u32 %v4319, 7
    %v4321 = vsub.s32 2, %v4320
    %v4322 = vrot.slane %v79, %v4321
    %v4323 = vlaneseq
    %v4324 = vshrl.u32 %v4323, 7
    %v4325 = vsub.s32 3, %v4324
    %v4326 = vrot.slane %v79, %v4325
    %v4331 = vmul.f32 %v4309, %v4314
    %v4332 = vmul.f32 %v4308, %v4318
    %v4333 = vmul.f32 %v4307, %v4322
    %v4334 = vmul.f32 %v4306, %v4326
    %s4335 = scalar_lea.vmem %s4, 84
    %v4336 = vld [vmem:[%s4335] sm:$0xf]
    %v4338 = vsel %vm3780, %v4336, 0
    %v4341 = vsel %vm3784, %v4331, 0
    %v4344 = vsel %vm3784, %v4332, 0
    %v4347 = vsel %vm3784, %v4333, 0
    %v4350 = vsel %vm3784, %v4334, 0
    %4352 = vmatprep.subr.mxu0 %v4344
    %4353 = vmatpush1.msra.mxu0 %v4341
    %4354 = vmatprep.subr.mxu0 0.0
    %4355 = vmatpush1.msra.mxu0 0.0
    %4356 = vmatprep.subr.mxu0 0.0
    %4357 = vmatpush1.msra.mxu0 0.0
    %4358 = vmatprep.subr.mxu0 0.0
    %4359 = vmatpush1.msra.mxu0 0.0
    %4360 = vmatprep.subr.mxu0 0.0
    %4361 = vmatpush1.msra.mxu0 0.0
    %4362 = vmatprep.subr.mxu0 0.0
    %4363 = vmatpush1.msra.mxu0 0.0
    %4364 = vmatprep.subr.mxu0 0.0
    %4365 = vmatpush1.msra.mxu0 0.0
    %4366 = vmatprep.subr.mxu0 0.0
    %4367 = vmatpush1.msra.mxu0 0.0
    %4368 = vmatprep.subr.mxu0 0.0
    %4369 = vmatpush1.msra.mxu0 0.0
    %4370 = vmatprep.subr.mxu0 0.0
    %4371 = vmatpush1.msra.mxu0 0.0
    %4372 = vmatprep.subr.mxu0 0.0
    %4373 = vmatpush1.msra.mxu0 0.0
    %4374 = vmatprep.subr.mxu0 0.0
    %4375 = vmatpush1.msra.mxu0 0.0
    %4376 = vmatprep.subr.mxu0 0.0
    %4377 = vmatpush1.msra.mxu0 0.0
    %4378 = vmatprep.subr.mxu0 0.0
    %4379 = vmatpush1.msra.mxu0 0.0
    %4380 = vmatprep.subr.mxu0 0.0
    %4381 = vmatpush1.msra.mxu0 0.0
    %4382 = vmatprep.subr.mxu0 0.0
    %4383 = vmatpush1.msra.mxu0 0.0
    %4384 = vmatprep.subr.mxu0 0.0
    %4385 = vmatpush1.msra.mxu0 0.0
    %4386 = vmatprep.subr.mxu0 0.0
    %4387 = vmatpush1.msra.mxu0 0.0
    %4388 = vmatprep.subr.mxu0 0.0
    %4389 = vmatpush1.msra.mxu0 0.0
    %4390 = vmatprep.subr.mxu0 0.0
    %4391 = vmatpush1.msra.mxu0 0.0
    %4392 = vmatprep.subr.mxu0 0.0
    %4393 = vmatpush1.msra.mxu0 0.0
    %4394 = vmatprep.subr.mxu0 0.0
    %4395 = vmatpush1.msra.mxu0 0.0
    %4396 = vmatprep.subr.mxu0 0.0
    %4397 = vmatpush1.msra.mxu0 0.0
    %4398 = vmatprep.subr.mxu0 0.0
    %4399 = vmatpush1.msra.mxu0 0.0
    %4400 = vmatprep.subr.mxu0 0.0
    %4401 = vmatpush1.msra.mxu0 0.0
    %4402 = vmatprep.subr.mxu0 0.0
    %4403 = vmatpush1.msra.mxu0 0.0
    %4404 = vmatprep.subr.mxu0 0.0
    %4405 = vmatpush1.msra.mxu0 0.0
    %4406 = vmatprep.subr.mxu0 0.0
    %4407 = vmatpush1.msra.mxu0 0.0
    %4408 = vmatprep.subr.mxu0 0.0
    %4409 = vmatpush1.msra.mxu0 0.0
    %4410 = vmatprep.subr.mxu0 0.0
    %4411 = vmatpush1.msra.mxu0 0.0
    %4412 = vmatprep.subr.mxu0 0.0
    %4413 = vmatpush1.msra.mxu0 0.0
    %4414 = vmatprep.subr.mxu0 0.0
    %4415 = vmatpush1.msra.mxu0 0.0
    %4416 = vmatprep.mubr.f32.mxu0 0.0
    %4417 = vmatmul.mubr.f32.gmra.mrb[0].mxu0 %v4338
    %v4418 = vpop.f32.mrb[0].mxu0
    %v4419 = vadd.f32 0.0, %v4418
    %v4420 = vpop.f32.mrb[0].mxu0
    %v4421 = vadd.f32 0.0, %v4420
    %4422 = vdwg.mxu0
    %4423 = vmatprep.subr.mxu0 %v4350
    %4424 = vmatpush1.msra.mxu0 %v4347
    %4425 = vmatprep.subr.mxu0 0.0
    %4426 = vmatpush1.msra.mxu0 0.0
    %4427 = vmatprep.subr.mxu0 0.0
    %4428 = vmatpush1.msra.mxu0 0.0
    %4429 = vmatprep.subr.mxu0 0.0
    %4430 = vmatpush1.msra.mxu0 0.0
    %4431 = vmatprep.subr.mxu0 0.0
    %4432 = vmatpush1.msra.mxu0 0.0
    %4433 = vmatprep.subr.mxu0 0.0
    %4434 = vmatpush1.msra.mxu0 0.0
    %4435 = vmatprep.subr.mxu0 0.0
    %4436 = vmatpush1.msra.mxu0 0.0
    %4437 = vmatprep.subr.mxu0 0.0
    %4438 = vmatpush1.msra.mxu0 0.0
    %4439 = vmatprep.subr.mxu0 0.0
    %4440 = vmatpush1.msra.mxu0 0.0
    %4441 = vmatprep.subr.mxu0 0.0
    %4442 = vmatpush1.msra.mxu0 0.0
    %4443 = vmatprep.subr.mxu0 0.0
    %4444 = vmatpush1.msra.mxu0 0.0
    %4445 = vmatprep.subr.mxu0 0.0
    %4446 = vmatpush1.msra.mxu0 0.0
    %4447 = vmatprep.subr.mxu0 0.0
    %4448 = vmatpush1.msra.mxu0 0.0
    %4449 = vmatprep.subr.mxu0 0.0
    %4450 = vmatpush1.msra.mxu0 0.0
    %4451 = vmatprep.subr.mxu0 0.0
    %4452 = vmatpush1.msra.mxu0 0.0
    %4453 = vmatprep.subr.mxu0 0.0
    %4454 = vmatpush1.msra.mxu0 0.0
    %4455 = vmatprep.subr.mxu0 0.0
    %4456 = vmatpush1.msra.mxu0 0.0
    %4457 = vmatprep.subr.mxu0 0.0
    %4458 = vmatpush1.msra.mxu0 0.0
    %4459 = vmatprep.subr.mxu0 0.0
    %4460 = vmatpush1.msra.mxu0 0.0
    %4461 = vmatprep.subr.mxu0 0.0
    %4462 = vmatpush1.msra.mxu0 0.0
    %4463 = vmatprep.subr.mxu0 0.0
    %4464 = vmatpush1.msra.mxu0 0.0
    %4465 = vmatprep.subr.mxu0 0.0
    %4466 = vmatpush1.msra.mxu0 0.0
    %4467 = vmatprep.subr.mxu0 0.0
    %4468 = vmatpush1.msra.mxu0 0.0
    %4469 = vmatprep.subr.mxu0 0.0
    %4470 = vmatpush1.msra.mxu0 0.0
    %4471 = vmatprep.subr.mxu0 0.0
    %4472 = vmatpush1.msra.mxu0 0.0
    %4473 = vmatprep.subr.mxu0 0.0
    %4474 = vmatpush1.msra.mxu0 0.0
    %4475 = vmatprep.subr.mxu0 0.0
    %4476 = vmatpush1.msra.mxu0 0.0
    %4477 = vmatprep.subr.mxu0 0.0
    %4478 = vmatpush1.msra.mxu0 0.0
    %4479 = vmatprep.subr.mxu0 0.0
    %4480 = vmatpush1.msra.mxu0 0.0
    %4481 = vmatprep.subr.mxu0 0.0
    %4482 = vmatpush1.msra.mxu0 0.0
    %4483 = vmatprep.subr.mxu0 0.0
    %4484 = vmatpush1.msra.mxu0 0.0
    %4485 = vmatprep.subr.mxu0 0.0
    %4486 = vmatpush1.msra.mxu0 0.0
    %4487 = vmatprep.mubr.f32.mxu0 0.0
    %4488 = vmatmul.mubr.f32.gmra.mrb[0].mxu0 %v4338
    %v4489 = vpop.f32.mrb[0].mxu0
    %v4490 = vadd.f32 0.0, %v4489
    %v4491 = vpop.f32.mrb[0].mxu0
    %v4492 = vadd.f32 0.0, %v4491
    %4493 = vdwg.mxu0
    %v4494 = vadd.f32 %v4293, %v4419
    %v4495 = vadd.f32 %v4294, %v4421
    %v4496 = vadd.f32 %v4295, %v4490
    %v4497 = vadd.f32 %v4296, %v4492
    %s4498 = scalar_lea.vmem %s4, 88
    %v4499 = vld [vmem:[%s4498] sm:$0xf]
    %v4501 = vsel %vm3780, %v4499, 0
    %v4503 = vsel %vm3784, %v3690, 0
    %v4505 = vsel %vm3784, %v3694, 0
    %v4507 = vsel %vm3784, %v3691, 0
    %v4509 = vsel %vm3784, %v3695, 0
    %4511 = vmatprep.subr.mxu0 %v4505
    %4512 = vmatpush1.msra.mxu0 %v4503
    %4513 = vmatprep.subr.mxu0 0.0
    %4514 = vmatpush1.msra.mxu0 0.0
    %4515 = vmatprep.subr.mxu0 0.0
    %4516 = vmatpush1.msra.mxu0 0.0
    %4517 = vmatprep.subr.mxu0 0.0
    %4518 = vmatpush1.msra.mxu0 0.0
    %4519 = vmatprep.subr.mxu0 0.0
    %4520 = vmatpush1.msra.mxu0 0.0
    %4521 = vmatprep.subr.mxu0 0.0
    %4522 = vmatpush1.msra.mxu0 0.0
    %4523 = vmatprep.subr.mxu0 0.0
    %4524 = vmatpush1.msra.mxu0 0.0
    %4525 = vmatprep.subr.mxu0 0.0
    %4526 = vmatpush1.msra.mxu0 0.0
    %4527 = vmatprep.subr.mxu0 0.0
    %4528 = vmatpush1.msra.mxu0 0.0
    %4529 = vmatprep.subr.mxu0 0.0
    %4530 = vmatpush1.msra.mxu0 0.0
    %4531 = vmatprep.subr.mxu0 0.0
    %4532 = vmatpush1.msra.mxu0 0.0
    %4533 = vmatprep.subr.mxu0 0.0
    %4534 = vmatpush1.msra.mxu0 0.0
    %4535 = vmatprep.subr.mxu0 0.0
    %4536 = vmatpush1.msra.mxu0 0.0
    %4537 = vmatprep.subr.mxu0 0.0
    %4538 = vmatpush1.msra.mxu0 0.0
    %4539 = vmatprep.subr.mxu0 0.0
    %4540 = vmatpush1.msra.mxu0 0.0
    %4541 = vmatprep.subr.mxu0 0.0
    %4542 = vmatpush1.msra.mxu0 0.0
    %4543 = vmatprep.subr.mxu0 0.0
    %4544 = vmatpush1.msra.mxu0 0.0
    %4545 = vmatprep.subr.mxu0 0.0
    %4546 = vmatpush1.msra.mxu0 0.0
    %4547 = vmatprep.subr.mxu0 0.0
    %4548 = vmatpush1.msra.mxu0 0.0
    %4549 = vmatprep.subr.mxu0 0.0
    %4550 = vmatpush1.msra.mxu0 0.0
    %4551 = vmatprep.subr.mxu0 0.0
    %4552 = vmatpush1.msra.mxu0 0.0
    %4553 = vmatprep.subr.mxu0 0.0
    %4554 = vmatpush1.msra.mxu0 0.0
    %4555 = vmatprep.subr.mxu0 0.0
    %4556 = vmatpush1.msra.mxu0 0.0
    %4557 = vmatprep.subr.mxu0 0.0
    %4558 = vmatpush1.msra.mxu0 0.0
    %4559 = vmatprep.subr.mxu0 0.0
    %4560 = vmatpush1.msra.mxu0 0.0
    %4561 = vmatprep.subr.mxu0 0.0
    %4562 = vmatpush1.msra.mxu0 0.0
    %4563 = vmatprep.subr.mxu0 0.0
    %4564 = vmatpush1.msra.mxu0 0.0
    %4565 = vmatprep.subr.mxu0 0.0
    %4566 = vmatpush1.msra.mxu0 0.0
    %4567 = vmatprep.subr.mxu0 0.0
    %4568 = vmatpush1.msra.mxu0 0.0
    %4569 = vmatprep.subr.mxu0 0.0
    %4570 = vmatpush1.msra.mxu0 0.0
    %4571 = vmatprep.subr.mxu0 0.0
    %4572 = vmatpush1.msra.mxu0 0.0
    %4573 = vmatprep.subr.mxu0 0.0
    %4574 = vmatpush1.msra.mxu0 0.0
    %4575 = vmatprep.mubr.f32.mxu0 0.0
    %4576 = vmatmul.mubr.f32.gmra.mrb[0].mxu0 %v4501
    %v4577 = vpop.f32.mrb[0].mxu0
    %v4578 = vadd.f32 0.0, %v4577
    %v4579 = vpop.f32.mrb[0].mxu0
    %v4580 = vadd.f32 0.0, %v4579
    %4581 = vdwg.mxu0
    %4582 = vmatprep.subr.mxu0 %v4509
    %4583 = vmatpush1.msra.mxu0 %v4507
    %4584 = vmatprep.subr.mxu0 0.0
    %4585 = vmatpush1.msra.mxu0 0.0
    %4586 = vmatprep.subr.mxu0 0.0
    %4587 = vmatpush1.msra.mxu0 0.0
    %4588 = vmatprep.subr.mxu0 0.0
    %4589 = vmatpush1.msra.mxu0 0.0
    %4590 = vmatprep.subr.mxu0 0.0
    %4591 = vmatpush1.msra.mxu0 0.0
    %4592 = vmatprep.subr.mxu0 0.0
    %4593 = vmatpush1.msra.mxu0 0.0
    %4594 = vmatprep.subr.mxu0 0.0
    %4595 = vmatpush1.msra.mxu0 0.0
    %4596 = vmatprep.subr.mxu0 0.0
    %4597 = vmatpush1.msra.mxu0 0.0
    %4598 = vmatprep.subr.mxu0 0.0
    %4599 = vmatpush1.msra.mxu0 0.0
    %4600 = vmatprep.subr.mxu0 0.0
    %4601 = vmatpush1.msra.mxu0 0.0
    %4602 = vmatprep.subr.mxu0 0.0
    %4603 = vmatpush1.msra.mxu0 0.0
    %4604 = vmatprep.subr.mxu0 0.0
    %4605 = vmatpush1.msra.mxu0 0.0
    %4606 = vmatprep.subr.mxu0 0.0
    %4607 = vmatpush1.msra.mxu0 0.0
    %4608 = vmatprep.subr.mxu0 0.0
    %4609 = vmatpush1.msra.mxu0 0.0
    %4610 = vmatprep.subr.mxu0 0.0
    %4611 = vmatpush1.msra.mxu0 0.0
    %4612 = vmatprep.subr.mxu0 0.0
    %4613 = vmatpush1.msra.mxu0 0.0
    %4614 = vmatprep.subr.mxu0 0.0
    %4615 = vmatpush1.msra.mxu0 0.0
    %4616 = vmatprep.subr.mxu0 0.0
    %4617 = vmatpush1.msra.mxu0 0.0
    %4618 = vmatprep.subr.mxu0 0.0
    %4619 = vmatpush1.msra.mxu0 0.0
    %4620 = vmatprep.subr.mxu0 0.0
    %4621 = vmatpush1.msra.mxu0 0.0
    %4622 = vmatprep.subr.mxu0 0.0
    %4623 = vmatpush1.msra.mxu0 0.0
    %4624 = vmatprep.subr.mxu0 0.0
    %4625 = vmatpush1.msra.mxu0 0.0
    %4626 = vmatprep.subr.mxu0 0.0
    %4627 = vmatpush1.msra.mxu0 0.0
    %4628 = vmatprep.subr.mxu0 0.0
    %4629 = vmatpush1.msra.mxu0 0.0
    %4630 = vmatprep.subr.mxu0 0.0
    %4631 = vmatpush1.msra.mxu0 0.0
    %4632 = vmatprep.subr.mxu0 0.0
    %4633 = vmatpush1.msra.mxu0 0.0
    %4634 = vmatprep.subr.mxu0 0.0
    %4635 = vmatpush1.msra.mxu0 0.0
    %4636 = vmatprep.subr.mxu0 0.0
    %4637 = vmatpush1.msra.mxu0 0.0
    %4638 = vmatprep.subr.mxu0 0.0
    %4639 = vmatpush1.msra.mxu0 0.0
    %4640 = vmatprep.subr.mxu0 0.0
    %4641 = vmatpush1.msra.mxu0 0.0
    %4642 = vmatprep.subr.mxu0 0.0
    %4643 = vmatpush1.msra.mxu0 0.0
    %4644 = vmatprep.subr.mxu0 0.0
    %4645 = vmatpush1.msra.mxu0 0.0
    %4646 = vmatprep.mubr.f32.mxu0 0.0
    %4647 = vmatmul.mubr.f32.gmra.mrb[0].mxu0 %v4501
    %v4648 = vpop.f32.mrb[0].mxu0
    %v4649 = vadd.f32 0.0, %v4648
    %v4650 = vpop.f32.mrb[0].mxu0
    %v4651 = vadd.f32 0.0, %v4650
    %4652 = vdwg.mxu0
    %v4653 = vadd.f32 %v4494, %v4578
    %v4654 = vadd.f32 %v4495, %v4580
    %v4655 = vadd.f32 %v4496, %v4649
    %v4656 = vadd.f32 %v4497, %v4651
    %4657 = vrot.lane.b32.xlu0 %v3690, 127
    %v4658 = vpop.permute.xlu0 %4657
    %4659 = vrot.lane.b32.xlu0 %v3694, 127
    %v4660 = vpop.permute.xlu0 %4659
    %4661 = vrot.lane.b32.xlu0 %v3691, 127
    %v4662 = vpop.permute.xlu0 %4661
    %4663 = vrot.lane.b32.xlu0 %v3695, 127
    %v4664 = vpop.permute.xlu0 %4663
    %vm4665 = vcmp.lt.s32.totalorder %v3707, 127
    %v4666 = vsel %vm4665, %v4662, %v4664
    %v4667 = vsel %vm4665, %v4660, %v4662
    %v4668 = vsel %vm4665, %v4658, %v4660
    %v4669 = vsel %vm4665, %v4664, %v4658
    %v4671 = vlaneseq
    %v4672 = vshrl.u32 %v4671, 7
    %v4673 = vsub.s32 0, %v4672
    %v4674 = vrot.slane %v81, %v4673
    %v4675 = vlaneseq
    %v4676 = vshrl.u32 %v4675, 7
    %v4677 = vsub.s32 1, %v4676
    %v4678 = vrot.slane %v81, %v4677
    %v4679 = vlaneseq
    %v4680 = vshrl.u32 %v4679, 7
    %v4681 = vsub.s32 2, %v4680
    %v4682 = vrot.slane %v81, %v4681
    %v4683 = vlaneseq
    %v4684 = vshrl.u32 %v4683, 7
    %v4685 = vsub.s32 3, %v4684
    %v4686 = vrot.slane %v81, %v4685
    %v4691 = vmul.f32 %v4668, %v4674
    %v4692 = vmul.f32 %v4667, %v4678
    %v4693 = vmul.f32 %v4666, %v4682
    %v4694 = vmul.f32 %v4669, %v4686
    %s4695 = scalar_lea.vmem %s4, 92
    %v4696 = vld [vmem:[%s4695] sm:$0xf]
    %v4698 = vsel %vm3780, %v4696, 0
    %v4701 = vsel %vm3784, %v4691, 0
    %v4704 = vsel %vm3784, %v4692, 0
    %v4707 = vsel %vm3784, %v4693, 0
    %v4710 = vsel %vm3784, %v4694, 0
    %4712 = vmatprep.subr.mxu0 %v4704
    %4713 = vmatpush1.msra.mxu0 %v4701
    %4714 = vmatprep.subr.mxu0 0.0
    %4715 = vmatpush1.msra.mxu0 0.0
    %4716 = vmatprep.subr.mxu0 0.0
    %4717 = vmatpush1.msra.mxu0 0.0
    %4718 = vmatprep.subr.mxu0 0.0
    %4719 = vmatpush1.msra.mxu0 0.0
    %4720 = vmatprep.subr.mxu0 0.0
    %4721 = vmatpush1.msra.mxu0 0.0
    %4722 = vmatprep.subr.mxu0 0.0
    %4723 = vmatpush1.msra.mxu0 0.0
    %4724 = vmatprep.subr.mxu0 0.0
    %4725 = vmatpush1.msra.mxu0 0.0
    %4726 = vmatprep.subr.mxu0 0.0
    %4727 = vmatpush1.msra.mxu0 0.0
    %4728 = vmatprep.subr.mxu0 0.0
    %4729 = vmatpush1.msra.mxu0 0.0
    %4730 = vmatprep.subr.mxu0 0.0
    %4731 = vmatpush1.msra.mxu0 0.0
    %4732 = vmatprep.subr.mxu0 0.0
    %4733 = vmatpush1.msra.mxu0 0.0
    %4734 = vmatprep.subr.mxu0 0.0
    %4735 = vmatpush1.msra.mxu0 0.0
    %4736 = vmatprep.subr.mxu0 0.0
    %4737 = vmatpush1.msra.mxu0 0.0
    %4738 = vmatprep.subr.mxu0 0.0
    %4739 = vmatpush1.msra.mxu0 0.0
    %4740 = vmatprep.subr.mxu0 0.0
    %4741 = vmatpush1.msra.mxu0 0.0
    %4742 = vmatprep.subr.mxu0 0.0
    %4743 = vmatpush1.msra.mxu0 0.0
    %4744 = vmatprep.subr.mxu0 0.0
    %4745 = vmatpush1.msra.mxu0 0.0
    %4746 = vmatprep.subr.mxu0 0.0
    %4747 = vmatpush1.msra.mxu0 0.0
    %4748 = vmatprep.subr.mxu0 0.0
    %4749 = vmatpush1.msra.mxu0 0.0
    %4750 = vmatprep.subr.mxu0 0.0
    %4751 = vmatpush1.msra.mxu0 0.0
    %4752 = vmatprep.subr.mxu0 0.0
    %4753 = vmatpush1.msra.mxu0 0.0
    %4754 = vmatprep.subr.mxu0 0.0
    %4755 = vmatpush1.msra.mxu0 0.0
    %4756 = vmatprep.subr.mxu0 0.0
    %4757 = vmatpush1.msra.mxu0 0.0
    %4758 = vmatprep.subr.mxu0 0.0
    %4759 = vmatpush1.msra.mxu0 0.0
    %4760 = vmatprep.subr.mxu0 0.0
    %4761 = vmatpush1.msra.mxu0 0.0
    %4762 = vmatprep.subr.mxu0 0.0
    %4763 = vmatpush1.msra.mxu0 0.0
    %4764 = vmatprep.subr.mxu0 0.0
    %4765 = vmatpush1.msra.mxu0 0.0
    %4766 = vmatprep.subr.mxu0 0.0
    %4767 = vmatpush1.msra.mxu0 0.0
    %4768 = vmatprep.subr.mxu0 0.0
    %4769 = vmatpush1.msra.mxu0 0.0
    %4770 = vmatprep.subr.mxu0 0.0
    %4771 = vmatpush1.msra.mxu0 0.0
    %4772 = vmatprep.subr.mxu0 0.0
    %4773 = vmatpush1.msra.mxu0 0.0
    %4774 = vmatprep.subr.mxu0 0.0
    %4775 = vmatpush1.msra.mxu0 0.0
    %4776 = vmatprep.mubr.f32.mxu0 0.0
    %4777 = vmatmul.mubr.f32.gmra.mrb[0].mxu0 %v4698
    %v4778 = vpop.f32.mrb[0].mxu0
    %v4779 = vadd.f32 0.0, %v4778
    %v4780 = vpop.f32.mrb[0].mxu0
    %v4781 = vadd.f32 0.0, %v4780
    %4782 = vdwg.mxu0
    %4783 = vmatprep.subr.mxu0 %v4710
    %4784 = vmatpush1.msra.mxu0 %v4707
    %4785 = vmatprep.subr.mxu0 0.0
    %4786 = vmatpush1.msra.mxu0 0.0
    %4787 = vmatprep.subr.mxu0 0.0
    %4788 = vmatpush1.msra.mxu0 0.0
    %4789 = vmatprep.subr.mxu0 0.0
    %4790 = vmatpush1.msra.mxu0 0.0
    %4791 = vmatprep.subr.mxu0 0.0
    %4792 = vmatpush1.msra.mxu0 0.0
    %4793 = vmatprep.subr.mxu0 0.0
    %4794 = vmatpush1.msra.mxu0 0.0
    %4795 = vmatprep.subr.mxu0 0.0
    %4796 = vmatpush1.msra.mxu0 0.0
    %4797 = vmatprep.subr.mxu0 0.0
    %4798 = vmatpush1.msra.mxu0 0.0
    %4799 = vmatprep.subr.mxu0 0.0
    %4800 = vmatpush1.msra.mxu0 0.0
    %4801 = vmatprep.subr.mxu0 0.0
    %4802 = vmatpush1.msra.mxu0 0.0
    %4803 = vmatprep.subr.mxu0 0.0
    %4804 = vmatpush1.msra.mxu0 0.0
    %4805 = vmatprep.subr.mxu0 0.0
    %4806 = vmatpush1.msra.mxu0 0.0
    %4807 = vmatprep.subr.mxu0 0.0
    %4808 = vmatpush1.msra.mxu0 0.0
    %4809 = vmatprep.subr.mxu0 0.0
    %4810 = vmatpush1.msra.mxu0 0.0
    %4811 = vmatprep.subr.mxu0 0.0
    %4812 = vmatpush1.msra.mxu0 0.0
    %4813 = vmatprep.subr.mxu0 0.0
    %4814 = vmatpush1.msra.mxu0 0.0
    %4815 = vmatprep.subr.mxu0 0.0
    %4816 = vmatpush1.msra.mxu0 0.0
    %4817 = vmatprep.subr.mxu0 0.0
    %4818 = vmatpush1.msra.mxu0 0.0
    %4819 = vmatprep.subr.mxu0 0.0
    %4820 = vmatpush1.msra.mxu0 0.0
    %4821 = vmatprep.subr.mxu0 0.0
    %4822 = vmatpush1.msra.mxu0 0.0
    %4823 = vmatprep.subr.mxu0 0.0
    %4824 = vmatpush1.msra.mxu0 0.0
    %4825 = vmatprep.subr.mxu0 0.0
    %4826 = vmatpush1.msra.mxu0 0.0
    %4827 = vmatprep.subr.mxu0 0.0
    %4828 = vmatpush1.msra.mxu0 0.0
    %4829 = vmatprep.subr.mxu0 0.0
    %4830 = vmatpush1.msra.mxu0 0.0
    %4831 = vmatprep.subr.mxu0 0.0
    %4832 = vmatpush1.msra.mxu0 0.0
    %4833 = vmatprep.subr.mxu0 0.0
    %4834 = vmatpush1.msra.mxu0 0.0
    %4835 = vmatprep.subr.mxu0 0.0
    %4836 = vmatpush1.msra.mxu0 0.0
    %4837 = vmatprep.subr.mxu0 0.0
    %4838 = vmatpush1.msra.mxu0 0.0
    %4839 = vmatprep.subr.mxu0 0.0
    %4840 = vmatpush1.msra.mxu0 0.0
    %4841 = vmatprep.subr.mxu0 0.0
    %4842 = vmatpush1.msra.mxu0 0.0
    %4843 = vmatprep.subr.mxu0 0.0
    %4844 = vmatpush1.msra.mxu0 0.0
    %4845 = vmatprep.subr.mxu0 0.0
    %4846 = vmatpush1.msra.mxu0 0.0
    %4847 = vmatprep.mubr.f32.mxu0 0.0
    %4848 = vmatmul.mubr.f32.gmra.mrb[0].mxu0 %v4698
    %v4849 = vpop.f32.mrb[0].mxu0
    %v4850 = vadd.f32 0.0, %v4849
    %v4851 = vpop.f32.mrb[0].mxu0
    %v4852 = vadd.f32 0.0, %v4851
    %4853 = vdwg.mxu0
    %v4854 = vadd.f32 %v4653, %v4779
    %v4855 = vadd.f32 %v4654, %v4781
    %v4856 = vadd.f32 %v4655, %v4850
    %v4857 = vadd.f32 %v4656, %v4852
    %4858 = vrot.lane.b32.xlu0 %v3690, 113
    %v4859 = vpop.permute.xlu0 %4858
    %4860 = vrot.lane.b32.xlu0 %v3694, 113
    %v4861 = vpop.permute.xlu0 %4860
    %4862 = vrot.lane.b32.xlu0 %v3691, 113
    %v4863 = vpop.permute.xlu0 %4862
    %4864 = vrot.lane.b32.xlu0 %v3695, 113
    %v4865 = vpop.permute.xlu0 %4864
    %vm4866 = vcmp.lt.s32.totalorder %v3707, 113
    %v4867 = vsel %vm4866, %v4863, %v4865
    %v4868 = vsel %vm4866, %v4861, %v4863
    %v4869 = vsel %vm4866, %v4859, %v4861
    %v4870 = vsel %vm4866, %v4865, %v4859
    %v4872 = vlaneseq
    %v4873 = vshrl.u32 %v4872, 7
    %v4874 = vsub.s32 0, %v4873
    %v4875 = vrot.slane %v83, %v4874
    %v4876 = vlaneseq
    %v4877 = vshrl.u32 %v4876, 7
    %v4878 = vsub.s32 1, %v4877
    %v4879 = vrot.slane %v83, %v4878
    %v4880 = vlaneseq
    %v4881 = vshrl.u32 %v4880, 7
    %v4882 = vsub.s32 2, %v4881
    %v4883 = vrot.slane %v83, %v4882
    %v4884 = vlaneseq
    %v4885 = vshrl.u32 %v4884, 7
    %v4886 = vsub.s32 3, %v4885
    %v4887 = vrot.slane %v83, %v4886
    %v4892 = vmul.f32 %v4869, %v4875
    %v4893 = vmul.f32 %v4868, %v4879
    %v4894 = vmul.f32 %v4867, %v4883
    %v4895 = vmul.f32 %v4870, %v4887
    %s4896 = scalar_lea.vmem %s4, 96
    %v4897 = vld [vmem:[%s4896] sm:$0xf]
    %v4899 = vsel %vm3780, %v4897, 0
    %v4902 = vsel %vm3784, %v4892, 0
    %v4905 = vsel %vm3784, %v4893, 0
    %v4908 = vsel %vm3784, %v4894, 0
    %v4911 = vsel %vm3784, %v4895, 0
    %4913 = vmatprep.subr.mxu0 %v4905
    %4914 = vmatpush1.msra.mxu0 %v4902
    %4915 = vmatprep.subr.mxu0 0.0
    %4916 = vmatpush1.msra.mxu0 0.0
    %4917 = vmatprep.subr.mxu0 0.0
    %4918 = vmatpush1.msra.mxu0 0.0
    %4919 = vmatprep.subr.mxu0 0.0
    %4920 = vmatpush1.msra.mxu0 0.0
    %4921 = vmatprep.subr.mxu0 0.0
    %4922 = vmatpush1.msra.mxu0 0.0
    %4923 = vmatprep.subr.mxu0 0.0
    %4924 = vmatpush1.msra.mxu0 0.0
    %4925 = vmatprep.subr.mxu0 0.0
    %4926 = vmatpush1.msra.mxu0 0.0
    %4927 = vmatprep.subr.mxu0 0.0
    %4928 = vmatpush1.msra.mxu0 0.0
    %4929 = vmatprep.subr.mxu0 0.0
    %4930 = vmatpush1.msra.mxu0 0.0
    %4931 = vmatprep.subr.mxu0 0.0
    %4932 = vmatpush1.msra.mxu0 0.0
    %4933 = vmatprep.subr.mxu0 0.0
    %4934 = vmatpush1.msra.mxu0 0.0
    %4935 = vmatprep.subr.mxu0 0.0
    %4936 = vmatpush1.msra.mxu0 0.0
    %4937 = vmatprep.subr.mxu0 0.0
    %4938 = vmatpush1.msra.mxu0 0.0
    %4939 = vmatprep.subr.mxu0 0.0
    %4940 = vmatpush1.msra.mxu0 0.0
    %4941 = vmatprep.subr.mxu0 0.0
    %4942 = vmatpush1.msra.mxu0 0.0
    %4943 = vmatprep.subr.mxu0 0.0
    %4944 = vmatpush1.msra.mxu0 0.0
    %4945 = vmatprep.subr.mxu0 0.0
    %4946 = vmatpush1.msra.mxu0 0.0
    %4947 = vmatprep.subr.mxu0 0.0
    %4948 = vmatpush1.msra.mxu0 0.0
    %4949 = vmatprep.subr.mxu0 0.0
    %4950 = vmatpush1.msra.mxu0 0.0
    %4951 = vmatprep.subr.mxu0 0.0
    %4952 = vmatpush1.msra.mxu0 0.0
    %4953 = vmatprep.subr.mxu0 0.0
    %4954 = vmatpush1.msra.mxu0 0.0
    %4955 = vmatprep.subr.mxu0 0.0
    %4956 = vmatpush1.msra.mxu0 0.0
    %4957 = vmatprep.subr.mxu0 0.0
    %4958 = vmatpush1.msra.mxu0 0.0
    %4959 = vmatprep.subr.mxu0 0.0
    %4960 = vmatpush1.msra.mxu0 0.0
    %4961 = vmatprep.subr.mxu0 0.0
    %4962 = vmatpush1.msra.mxu0 0.0
    %4963 = vmatprep.subr.mxu0 0.0
    %4964 = vmatpush1.msra.mxu0 0.0
    %4965 = vmatprep.subr.mxu0 0.0
    %4966 = vmatpush1.msra.mxu0 0.0
    %4967 = vmatprep.subr.mxu0 0.0
    %4968 = vmatpush1.msra.mxu0 0.0
    %4969 = vmatprep.subr.mxu0 0.0
    %4970 = vmatpush1.msra.mxu0 0.0
    %4971 = vmatprep.subr.mxu0 0.0
    %4972 = vmatpush1.msra.mxu0 0.0
    %4973 = vmatprep.subr.mxu0 0.0
    %4974 = vmatpush1.msra.mxu0 0.0
    %4975 = vmatprep.subr.mxu0 0.0
    %4976 = vmatpush1.msra.mxu0 0.0
    %4977 = vmatprep.mubr.f32.mxu0 0.0
    %4978 = vmatmul.mubr.f32.gmra.mrb[0].mxu0 %v4899
    %v4979 = vpop.f32.mrb[0].mxu0
    %v4980 = vadd.f32 0.0, %v4979
    %v4981 = vpop.f32.mrb[0].mxu0
    %v4982 = vadd.f32 0.0, %v4981
    %4983 = vdwg.mxu0
    %4984 = vmatprep.subr.mxu0 %v4911
    %4985 = vmatpush1.msra.mxu0 %v4908
    %4986 = vmatprep.subr.mxu0 0.0
    %4987 = vmatpush1.msra.mxu0 0.0
    %4988 = vmatprep.subr.mxu0 0.0
    %4989 = vmatpush1.msra.mxu0 0.0
    %4990 = vmatprep.subr.mxu0 0.0
    %4991 = vmatpush1.msra.mxu0 0.0
    %4992 = vmatprep.subr.mxu0 0.0
    %4993 = vmatpush1.msra.mxu0 0.0
    %4994 = vmatprep.subr.mxu0 0.0
    %4995 = vmatpush1.msra.mxu0 0.0
    %4996 = vmatprep.subr.mxu0 0.0
    %4997 = vmatpush1.msra.mxu0 0.0
    %4998 = vmatprep.subr.mxu0 0.0
    %4999 = vmatpush1.msra.mxu0 0.0
    %5000 = vmatprep.subr.mxu0 0.0
    %5001 = vmatpush1.msra.mxu0 0.0
    %5002 = vmatprep.subr.mxu0 0.0
    %5003 = vmatpush1.msra.mxu0 0.0
    %5004 = vmatprep.subr.mxu0 0.0
    %5005 = vmatpush1.msra.mxu0 0.0
    %5006 = vmatprep.subr.mxu0 0.0
    %5007 = vmatpush1.msra.mxu0 0.0
    %5008 = vmatprep.subr.mxu0 0.0
    %5009 = vmatpush1.msra.mxu0 0.0
    %5010 = vmatprep.subr.mxu0 0.0
    %5011 = vmatpush1.msra.mxu0 0.0
    %5012 = vmatprep.subr.mxu0 0.0
    %5013 = vmatpush1.msra.mxu0 0.0
    %5014 = vmatprep.subr.mxu0 0.0
    %5015 = vmatpush1.msra.mxu0 0.0
    %5016 = vmatprep.subr.mxu0 0.0
    %5017 = vmatpush1.msra.mxu0 0.0
    %5018 = vmatprep.subr.mxu0 0.0
    %5019 = vmatpush1.msra.mxu0 0.0
    %5020 = vmatprep.subr.mxu0 0.0
    %5021 = vmatpush1.msra.mxu0 0.0
    %5022 = vmatprep.subr.mxu0 0.0
    %5023 = vmatpush1.msra.mxu0 0.0
    %5024 = vmatprep.subr.mxu0 0.0
    %5025 = vmatpush1.msra.mxu0 0.0
    %5026 = vmatprep.subr.mxu0 0.0
    %5027 = vmatpush1.msra.mxu0 0.0
    %5028 = vmatprep.subr.mxu0 0.0
    %5029 = vmatpush1.msra.mxu0 0.0
    %5030 = vmatprep.subr.mxu0 0.0
    %5031 = vmatpush1.msra.mxu0 0.0
    %5032 = vmatprep.subr.mxu0 0.0
    %5033 = vmatpush1.msra.mxu0 0.0
    %5034 = vmatprep.subr.mxu0 0.0
    %5035 = vmatpush1.msra.mxu0 0.0
    %5036 = vmatprep.subr.mxu0 0.0
    %5037 = vmatpush1.msra.mxu0 0.0
    %5038 = vmatprep.subr.mxu0 0.0
    %5039 = vmatpush1.msra.mxu0 0.0
    %5040 = vmatprep.subr.mxu0 0.0
    %5041 = vmatpush1.msra.mxu0 0.0
    %5042 = vmatprep.subr.mxu0 0.0
    %5043 = vmatpush1.msra.mxu0 0.0
    %5044 = vmatprep.subr.mxu0 0.0
    %5045 = vmatpush1.msra.mxu0 0.0
    %5046 = vmatprep.subr.mxu0 0.0
    %5047 = vmatpush1.msra.mxu0 0.0
    %5048 = vmatprep.mubr.f32.mxu0 0.0
    %5049 = vmatmul.mubr.f32.gmra.mrb[0].mxu0 %v4899
    %v5050 = vpop.f32.mrb[0].mxu0
    %v5051 = vadd.f32 0.0, %v5050
    %v5052 = vpop.f32.mrb[0].mxu0
    %v5053 = vadd.f32 0.0, %v5052
    %5054 = vdwg.mxu0
    %v5055 = vadd.f32 %v4854, %v4980
    %v5056 = vadd.f32 %v4855, %v4982
    %v5057 = vadd.f32 %v4856, %v5051
    %v5058 = vadd.f32 %v4857, %v5053
    %5059 = vrot.lane.b32.xlu0 %v3690, 112
    %v5060 = vpop.permute.xlu0 %5059
    %5061 = vrot.lane.b32.xlu0 %v3694, 112
    %v5062 = vpop.permute.xlu0 %5061
    %5063 = vrot.lane.b32.xlu0 %v3691, 112
    %v5064 = vpop.permute.xlu0 %5063
    %5065 = vrot.lane.b32.xlu0 %v3695, 112
    %v5066 = vpop.permute.xlu0 %5065
    %vm5067 = vcmp.lt.s32.totalorder %v3707, 112
    %v5068 = vsel %vm5067, %v5064, %v5066
    %v5069 = vsel %vm5067, %v5062, %v5064
    %v5070 = vsel %vm5067, %v5060, %v5062
    %v5071 = vsel %vm5067, %v5066, %v5060
    %v5073 = vlaneseq
    %v5074 = vshrl.u32 %v5073, 7
    %v5075 = vsub.s32 0, %v5074
    %v5076 = vrot.slane %v85, %v5075
    %v5077 = vlaneseq
    %v5078 = vshrl.u32 %v5077, 7
    %v5079 = vsub.s32 1, %v5078
    %v5080 = vrot.slane %v85, %v5079
    %v5081 = vlaneseq
    %v5082 = vshrl.u32 %v5081, 7
    %v5083 = vsub.s32 2, %v5082
    %v5084 = vrot.slane %v85, %v5083
    %v5085 = vlaneseq
    %v5086 = vshrl.u32 %v5085, 7
    %v5087 = vsub.s32 3, %v5086
    %v5088 = vrot.slane %v85, %v5087
    %v5093 = vmul.f32 %v5070, %v5076
    %v5094 = vmul.f32 %v5069, %v5080
    %v5095 = vmul.f32 %v5068, %v5084
    %v5096 = vmul.f32 %v5071, %v5088
    %s5097 = scalar_lea.vmem %s4, 100
    %v5098 = vld [vmem:[%s5097] sm:$0xf]
    %v5100 = vsel %vm3780, %v5098, 0
    %v5103 = vsel %vm3784, %v5093, 0
    %v5106 = vsel %vm3784, %v5094, 0
    %v5109 = vsel %vm3784, %v5095, 0
    %v5112 = vsel %vm3784, %v5096, 0
    %5114 = vmatprep.subr.mxu0 %v5106
    %5115 = vmatpush1.msra.mxu0 %v5103
    %5116 = vmatprep.subr.mxu0 0.0
    %5117 = vmatpush1.msra.mxu0 0.0
    %5118 = vmatprep.subr.mxu0 0.0
    %5119 = vmatpush1.msra.mxu0 0.0
    %5120 = vmatprep.subr.mxu0 0.0
    %5121 = vmatpush1.msra.mxu0 0.0
    %5122 = vmatprep.subr.mxu0 0.0
    %5123 = vmatpush1.msra.mxu0 0.0
    %5124 = vmatprep.subr.mxu0 0.0
    %5125 = vmatpush1.msra.mxu0 0.0
    %5126 = vmatprep.subr.mxu0 0.0
    %5127 = vmatpush1.msra.mxu0 0.0
    %5128 = vmatprep.subr.mxu0 0.0
    %5129 = vmatpush1.msra.mxu0 0.0
    %5130 = vmatprep.subr.mxu0 0.0
    %5131 = vmatpush1.msra.mxu0 0.0
    %5132 = vmatprep.subr.mxu0 0.0
    %5133 = vmatpush1.msra.mxu0 0.0
    %5134 = vmatprep.subr.mxu0 0.0
    %5135 = vmatpush1.msra.mxu0 0.0
    %5136 = vmatprep.subr.mxu0 0.0
    %5137 = vmatpush1.msra.mxu0 0.0
    %5138 = vmatprep.subr.mxu0 0.0
    %5139 = vmatpush1.msra.mxu0 0.0
    %5140 = vmatprep.subr.mxu0 0.0
    %5141 = vmatpush1.msra.mxu0 0.0
    %5142 = vmatprep.subr.mxu0 0.0
    %5143 = vmatpush1.msra.mxu0 0.0
    %5144 = vmatprep.subr.mxu0 0.0
    %5145 = vmatpush1.msra.mxu0 0.0
    %5146 = vmatprep.subr.mxu0 0.0
    %5147 = vmatpush1.msra.mxu0 0.0
    %5148 = vmatprep.subr.mxu0 0.0
    %5149 = vmatpush1.msra.mxu0 0.0
    %5150 = vmatprep.subr.mxu0 0.0
    %5151 = vmatpush1.msra.mxu0 0.0
    %5152 = vmatprep.subr.mxu0 0.0
    %5153 = vmatpush1.msra.mxu0 0.0
    %5154 = vmatprep.subr.mxu0 0.0
    %5155 = vmatpush1.msra.mxu0 0.0
    %5156 = vmatprep.subr.mxu0 0.0
    %5157 = vmatpush1.msra.mxu0 0.0
    %5158 = vmatprep.subr.mxu0 0.0
    %5159 = vmatpush1.msra.mxu0 0.0
    %5160 = vmatprep.subr.mxu0 0.0
    %5161 = vmatpush1.msra.mxu0 0.0
    %5162 = vmatprep.subr.mxu0 0.0
    %5163 = vmatpush1.msra.mxu0 0.0
    %5164 = vmatprep.subr.mxu0 0.0
    %5165 = vmatpush1.msra.mxu0 0.0
    %5166 = vmatprep.subr.mxu0 0.0
    %5167 = vmatpush1.msra.mxu0 0.0
    %5168 = vmatprep.subr.mxu0 0.0
    %5169 = vmatpush1.msra.mxu0 0.0
    %5170 = vmatprep.subr.mxu0 0.0
    %5171 = vmatpush1.msra.mxu0 0.0
    %5172 = vmatprep.subr.mxu0 0.0
    %5173 = vmatpush1.msra.mxu0 0.0
    %5174 = vmatprep.subr.mxu0 0.0
    %5175 = vmatpush1.msra.mxu0 0.0
    %5176 = vmatprep.subr.mxu0 0.0
    %5177 = vmatpush1.msra.mxu0 0.0
    %5178 = vmatprep.mubr.f32.mxu0 0.0
    %5179 = vmatmul.mubr.f32.gmra.mrb[0].mxu0 %v5100
    %v5180 = vpop.f32.mrb[0].mxu0
    %v5181 = vadd.f32 0.0, %v5180
    %v5182 = vpop.f32.mrb[0].mxu0
    %v5183 = vadd.f32 0.0, %v5182
    %5184 = vdwg.mxu0
    %5185 = vmatprep.subr.mxu0 %v5112
    %5186 = vmatpush1.msra.mxu0 %v5109
    %5187 = vmatprep.subr.mxu0 0.0
    %5188 = vmatpush1.msra.mxu0 0.0
    %5189 = vmatprep.subr.mxu0 0.0
    %5190 = vmatpush1.msra.mxu0 0.0
    %5191 = vmatprep.subr.mxu0 0.0
    %5192 = vmatpush1.msra.mxu0 0.0
    %5193 = vmatprep.subr.mxu0 0.0
    %5194 = vmatpush1.msra.mxu0 0.0
    %5195 = vmatprep.subr.mxu0 0.0
    %5196 = vmatpush1.msra.mxu0 0.0
    %5197 = vmatprep.subr.mxu0 0.0
    %5198 = vmatpush1.msra.mxu0 0.0
    %5199 = vmatprep.subr.mxu0 0.0
    %5200 = vmatpush1.msra.mxu0 0.0
    %5201 = vmatprep.subr.mxu0 0.0
    %5202 = vmatpush1.msra.mxu0 0.0
    %5203 = vmatprep.subr.mxu0 0.0
    %5204 = vmatpush1.msra.mxu0 0.0
    %5205 = vmatprep.subr.mxu0 0.0
    %5206 = vmatpush1.msra.mxu0 0.0
    %5207 = vmatprep.subr.mxu0 0.0
    %5208 = vmatpush1.msra.mxu0 0.0
    %5209 = vmatprep.subr.mxu0 0.0
    %5210 = vmatpush1.msra.mxu0 0.0
    %5211 = vmatprep.subr.mxu0 0.0
    %5212 = vmatpush1.msra.mxu0 0.0
    %5213 = vmatprep.subr.mxu0 0.0
    %5214 = vmatpush1.msra.mxu0 0.0
    %5215 = vmatprep.subr.mxu0 0.0
    %5216 = vmatpush1.msra.mxu0 0.0
    %5217 = vmatprep.subr.mxu0 0.0
    %5218 = vmatpush1.msra.mxu0 0.0
    %5219 = vmatprep.subr.mxu0 0.0
    %5220 = vmatpush1.msra.mxu0 0.0
    %5221 = vmatprep.subr.mxu0 0.0
    %5222 = vmatpush1.msra.mxu0 0.0
    %5223 = vmatprep.subr.mxu0 0.0
    %5224 = vmatpush1.msra.mxu0 0.0
    %5225 = vmatprep.subr.mxu0 0.0
    %5226 = vmatpush1.msra.mxu0 0.0
    %5227 = vmatprep.subr.mxu0 0.0
    %5228 = vmatpush1.msra.mxu0 0.0
    %5229 = vmatprep.subr.mxu0 0.0
    %5230 = vmatpush1.msra.mxu0 0.0
    %5231 = vmatprep.subr.mxu0 0.0
    %5232 = vmatpush1.msra.mxu0 0.0
    %5233 = vmatprep.subr.mxu0 0.0
    %5234 = vmatpush1.msra.mxu0 0.0
    %5235 = vmatprep.subr.mxu0 0.0
    %5236 = vmatpush1.msra.mxu0 0.0
    %5237 = vmatprep.subr.mxu0 0.0
    %5238 = vmatpush1.msra.mxu0 0.0
    %5239 = vmatprep.subr.mxu0 0.0
    %5240 = vmatpush1.msra.mxu0 0.0
    %5241 = vmatprep.subr.mxu0 0.0
    %5242 = vmatpush1.msra.mxu0 0.0
    %5243 = vmatprep.subr.mxu0 0.0
    %5244 = vmatpush1.msra.mxu0 0.0
    %5245 = vmatprep.subr.mxu0 0.0
    %5246 = vmatpush1.msra.mxu0 0.0
    %5247 = vmatprep.subr.mxu0 0.0
    %5248 = vmatpush1.msra.mxu0 0.0
    %5249 = vmatprep.mubr.f32.mxu0 0.0
    %5250 = vmatmul.mubr.f32.gmra.mrb[0].mxu0 %v5100
    %v5251 = vpop.f32.mrb[0].mxu0
    %v5252 = vadd.f32 0.0, %v5251
    %v5253 = vpop.f32.mrb[0].mxu0
    %v5254 = vadd.f32 0.0, %v5253
    %5255 = vdwg.mxu0
    %v5256 = vadd.f32 %v5055, %v5181
    %v5257 = vadd.f32 %v5056, %v5183
    %v5258 = vadd.f32 %v5057, %v5252
    %v5259 = vadd.f32 %v5058, %v5254
    %5260 = vrot.lane.b32.xlu0 %v3690, 111
    %v5261 = vpop.permute.xlu0 %5260
    %5262 = vrot.lane.b32.xlu0 %v3694, 111
    %v5263 = vpop.permute.xlu0 %5262
    %5264 = vrot.lane.b32.xlu0 %v3691, 111
    %v5265 = vpop.permute.xlu0 %5264
    %5266 = vrot.lane.b32.xlu0 %v3695, 111
    %v5267 = vpop.permute.xlu0 %5266
    %vm5268 = vcmp.lt.s32.totalorder %v3707, 111
    %v5269 = vsel %vm5268, %v5265, %v5267
    %v5270 = vsel %vm5268, %v5263, %v5265
    %v5271 = vsel %vm5268, %v5261, %v5263
    %v5272 = vsel %vm5268, %v5267, %v5261
    %v5274 = vlaneseq
    %v5275 = vshrl.u32 %v5274, 7
    %v5276 = vsub.s32 0, %v5275
    %v5277 = vrot.slane %v87, %v5276
    %v5278 = vlaneseq
    %v5279 = vshrl.u32 %v5278, 7
    %v5280 = vsub.s32 1, %v5279
    %v5281 = vrot.slane %v87, %v5280
    %v5282 = vlaneseq
    %v5283 = vshrl.u32 %v5282, 7
    %v5284 = vsub.s32 2, %v5283
    %v5285 = vrot.slane %v87, %v5284
    %v5286 = vlaneseq
    %v5287 = vshrl.u32 %v5286, 7
    %v5288 = vsub.s32 3, %v5287
    %v5289 = vrot.slane %v87, %v5288
    %v5294 = vmul.f32 %v5271, %v5277
    %v5295 = vmul.f32 %v5270, %v5281
    %v5296 = vmul.f32 %v5269, %v5285
    %v5297 = vmul.f32 %v5272, %v5289
    %s5298 = scalar_lea.vmem %s4, 104
    %v5299 = vld [vmem:[%s5298] sm:$0xf]
    %v5301 = vsel %vm3780, %v5299, 0
    %v5304 = vsel %vm3784, %v5294, 0
    %v5307 = vsel %vm3784, %v5295, 0
    %v5310 = vsel %vm3784, %v5296, 0
    %v5313 = vsel %vm3784, %v5297, 0
    %5315 = vmatprep.subr.mxu0 %v5307
    %5316 = vmatpush1.msra.mxu0 %v5304
    %5317 = vmatprep.subr.mxu0 0.0
    %5318 = vmatpush1.msra.mxu0 0.0
    %5319 = vmatprep.subr.mxu0 0.0
    %5320 = vmatpush1.msra.mxu0 0.0
    %5321 = vmatprep.subr.mxu0 0.0
    %5322 = vmatpush1.msra.mxu0 0.0
    %5323 = vmatprep.subr.mxu0 0.0
    %5324 = vmatpush1.msra.mxu0 0.0
    %5325 = vmatprep.subr.mxu0 0.0
    %5326 = vmatpush1.msra.mxu0 0.0
    %5327 = vmatprep.subr.mxu0 0.0
    %5328 = vmatpush1.msra.mxu0 0.0
    %5329 = vmatprep.subr.mxu0 0.0
    %5330 = vmatpush1.msra.mxu0 0.0
    %5331 = vmatprep.subr.mxu0 0.0
    %5332 = vmatpush1.msra.mxu0 0.0
    %5333 = vmatprep.subr.mxu0 0.0
    %5334 = vmatpush1.msra.mxu0 0.0
    %5335 = vmatprep.subr.mxu0 0.0
    %5336 = vmatpush1.msra.mxu0 0.0
    %5337 = vmatprep.subr.mxu0 0.0
    %5338 = vmatpush1.msra.mxu0 0.0
    %5339 = vmatprep.subr.mxu0 0.0
    %5340 = vmatpush1.msra.mxu0 0.0
    %5341 = vmatprep.subr.mxu0 0.0
    %5342 = vmatpush1.msra.mxu0 0.0
    %5343 = vmatprep.subr.mxu0 0.0
    %5344 = vmatpush1.msra.mxu0 0.0
    %5345 = vmatprep.subr.mxu0 0.0
    %5346 = vmatpush1.msra.mxu0 0.0
    %5347 = vmatprep.subr.mxu0 0.0
    %5348 = vmatpush1.msra.mxu0 0.0
    %5349 = vmatprep.subr.mxu0 0.0
    %5350 = vmatpush1.msra.mxu0 0.0
    %5351 = vmatprep.subr.mxu0 0.0
    %5352 = vmatpush1.msra.mxu0 0.0
    %5353 = vmatprep.subr.mxu0 0.0
    %5354 = vmatpush1.msra.mxu0 0.0
    %5355 = vmatprep.subr.mxu0 0.0
    %5356 = vmatpush1.msra.mxu0 0.0
    %5357 = vmatprep.subr.mxu0 0.0
    %5358 = vmatpush1.msra.mxu0 0.0
    %5359 = vmatprep.subr.mxu0 0.0
    %5360 = vmatpush1.msra.mxu0 0.0
    %5361 = vmatprep.subr.mxu0 0.0
    %5362 = vmatpush1.msra.mxu0 0.0
    %5363 = vmatprep.subr.mxu0 0.0
    %5364 = vmatpush1.msra.mxu0 0.0
    %5365 = vmatprep.subr.mxu0 0.0
    %5366 = vmatpush1.msra.mxu0 0.0
    %5367 = vmatprep.subr.mxu0 0.0
    %5368 = vmatpush1.msra.mxu0 0.0
    %5369 = vmatprep.subr.mxu0 0.0
    %5370 = vmatpush1.msra.mxu0 0.0
    %5371 = vmatprep.subr.mxu0 0.0
    %5372 = vmatpush1.msra.mxu0 0.0
    %5373 = vmatprep.subr.mxu0 0.0
    %5374 = vmatpush1.msra.mxu0 0.0
    %5375 = vmatprep.subr.mxu0 0.0
    %5376 = vmatpush1.msra.mxu0 0.0
    %5377 = vmatprep.subr.mxu0 0.0
    %5378 = vmatpush1.msra.mxu0 0.0
    %5379 = vmatprep.mubr.f32.mxu0 0.0
    %5380 = vmatmul.mubr.f32.gmra.mrb[0].mxu0 %v5301
    %v5381 = vpop.f32.mrb[0].mxu0
    %v5382 = vadd.f32 0.0, %v5381
    %v5383 = vpop.f32.mrb[0].mxu0
    %v5384 = vadd.f32 0.0, %v5383
    %5385 = vdwg.mxu0
    %5386 = vmatprep.subr.mxu0 %v5313
    %5387 = vmatpush1.msra.mxu0 %v5310
    %5388 = vmatprep.subr.mxu0 0.0
    %5389 = vmatpush1.msra.mxu0 0.0
    %5390 = vmatprep.subr.mxu0 0.0
    %5391 = vmatpush1.msra.mxu0 0.0
    %5392 = vmatprep.subr.mxu0 0.0
    %5393 = vmatpush1.msra.mxu0 0.0
    %5394 = vmatprep.subr.mxu0 0.0
    %5395 = vmatpush1.msra.mxu0 0.0
    %5396 = vmatprep.subr.mxu0 0.0
    %5397 = vmatpush1.msra.mxu0 0.0
    %5398 = vmatprep.subr.mxu0 0.0
    %5399 = vmatpush1.msra.mxu0 0.0
    %5400 = vmatprep.subr.mxu0 0.0
    %5401 = vmatpush1.msra.mxu0 0.0
    %5402 = vmatprep.subr.mxu0 0.0
    %5403 = vmatpush1.msra.mxu0 0.0
    %5404 = vmatprep.subr.mxu0 0.0
    %5405 = vmatpush1.msra.mxu0 0.0
    %5406 = vmatprep.subr.mxu0 0.0
    %5407 = vmatpush1.msra.mxu0 0.0
    %5408 = vmatprep.subr.mxu0 0.0
    %5409 = vmatpush1.msra.mxu0 0.0
    %5410 = vmatprep.subr.mxu0 0.0
    %5411 = vmatpush1.msra.mxu0 0.0
    %5412 = vmatprep.subr.mxu0 0.0
    %5413 = vmatpush1.msra.mxu0 0.0
    %5414 = vmatprep.subr.mxu0 0.0
    %5415 = vmatpush1.msra.mxu0 0.0
    %5416 = vmatprep.subr.mxu0 0.0
    %5417 = vmatpush1.msra.mxu0 0.0
    %5418 = vmatprep.subr.mxu0 0.0
    %5419 = vmatpush1.msra.mxu0 0.0
    %5420 = vmatprep.subr.mxu0 0.0
    %5421 = vmatpush1.msra.mxu0 0.0
    %5422 = vmatprep.subr.mxu0 0.0
    %5423 = vmatpush1.msra.mxu0 0.0
    %5424 = vmatprep.subr.mxu0 0.0
    %5425 = vmatpush1.msra.mxu0 0.0
    %5426 = vmatprep.subr.mxu0 0.0
    %5427 = vmatpush1.msra.mxu0 0.0
    %5428 = vmatprep.subr.mxu0 0.0
    %5429 = vmatpush1.msra.mxu0 0.0
    %5430 = vmatprep.subr.mxu0 0.0
    %5431 = vmatpush1.msra.mxu0 0.0
    %5432 = vmatprep.subr.mxu0 0.0
    %5433 = vmatpush1.msra.mxu0 0.0
    %5434 = vmatprep.subr.mxu0 0.0
    %5435 = vmatpush1.msra.mxu0 0.0
    %5436 = vmatprep.subr.mxu0 0.0
    %5437 = vmatpush1.msra.mxu0 0.0
    %5438 = vmatprep.subr.mxu0 0.0
    %5439 = vmatpush1.msra.mxu0 0.0
    %5440 = vmatprep.subr.mxu0 0.0
    %5441 = vmatpush1.msra.mxu0 0.0
    %5442 = vmatprep.subr.mxu0 0.0
    %5443 = vmatpush1.msra.mxu0 0.0
    %5444 = vmatprep.subr.mxu0 0.0
    %5445 = vmatpush1.msra.mxu0 0.0
    %5446 = vmatprep.subr.mxu0 0.0
    %5447 = vmatpush1.msra.mxu0 0.0
    %5448 = vmatprep.subr.mxu0 0.0
    %5449 = vmatpush1.msra.mxu0 0.0
    %5450 = vmatprep.mubr.f32.mxu0 0.0
    %5451 = vmatmul.mubr.f32.gmra.mrb[0].mxu0 %v5301
    %v5452 = vpop.f32.mrb[0].mxu0
    %v5453 = vadd.f32 0.0, %v5452
    %v5454 = vpop.f32.mrb[0].mxu0
    %v5455 = vadd.f32 0.0, %v5454
    %5456 = vdwg.mxu0
    %v5457 = vadd.f32 %v5256, %v5382
    %v5458 = vadd.f32 %v5257, %v5384
    %v5459 = vadd.f32 %v5258, %v5453
    %v5460 = vadd.f32 %v5259, %v5455
    %s5461 = scalar_lea.vmem %s5, 8
    %v5462 = vld [vmem:[%s5461] sm:$0xf]
    %5464 = vset.pattern.permute.xlu0 0
    %5465 = vperm.xlu0 %5464, %v5462
    %v5466 = vpop.permute.xlu0 %5465
    %v5468 = vadd.f32 %v5457, %v5466
    %v5469 = vadd.f32 %v5458, %v5466
    %v5470 = vadd.f32 %v5459, %v5466
    %v5471 = vadd.f32 %v5460, %v5466
    %v5472 = vmax.f32 %v5468, 0.0
    %v5473 = vmax.f32 %v5469, 0.0
    %v5474 = vmax.f32 %v5470, 0.0
    %v5475 = vmax.f32 %v5471, 0.0
    %v5480 = vcombine.low %v5472, %v5473
    %v5481 = vcombine.low %v5474, %v5475
    %5484 = vst [vmem:[#allocation2] sm:$0xff] %v5480
    %5485 = vst [vmem:[#allocation2 + $0x8] sm:$0xff] %v5481
  $region41: #{_fused_forward.1} parent=0 // pred_fallthru
    _
  %p5486 = scmp.ge.s32.totalorder %s68, 3
  // Predicated region
  $region42: #{_fused_forward.1} parent=0 // pred_check
    %p5487 = pneg %p5486
  $region43: #{_fused_forward.1} parent=0 // pred_check_branch
    %5489 = sbr.rel (%p5487) target = $region45
  $region44: #{_fused_forward.1} parent=0 // pred_region
    %v5490 = vld [vmem:[#allocation2] sm:$0xff]
    %v5491 = vld [vmem:[#allocation2 + $0x8] sm:$0xff]
    %v5494 = vcombine.high %v5490, %v5490
    %v5495 = vcombine.high %v5491, %v5491
    %5498 = vrot.lane.b32.xlu0 %v5490, 17
    %v5499 = vpop.permute.xlu0 %5498
    %5500 = vrot.lane.b32.xlu0 %v5494, 17
    %v5501 = vpop.permute.xlu0 %5500
    %5502 = vrot.lane.b32.xlu0 %v5491, 17
    %v5503 = vpop.permute.xlu0 %5502
    %5504 = vrot.lane.b32.xlu0 %v5495, 17
    %v5505 = vpop.permute.xlu0 %5504
    %v5506 = vlaneseq
    %v5507 = vand.u32 %v5506, 127
    %vm5508 = vcmp.lt.s32.totalorder %v5507, 17
    %v5509 = vsel %vm5508, %v5503, %v5505
    %v5510 = vsel %vm5508, %v5501, %v5503
    %v5511 = vsel %vm5508, %v5499, %v5501
    %v5512 = vsel %vm5508, %v5505, %v5499
    %v5514 = vlaneseq
    %v5515 = vshrl.u32 %v5514, 7
    %v5516 = vsub.s32 0, %v5515
    %v5517 = vrot.slane %v73, %v5516
    %v5518 = vlaneseq
    %v5519 = vshrl.u32 %v5518, 7
    %v5520 = vsub.s32 1, %v5519
    %v5521 = vrot.slane %v73, %v5520
    %v5522 = vlaneseq
    %v5523 = vshrl.u32 %v5522, 7
    %v5524 = vsub.s32 2, %v5523
    %v5525 = vrot.slane %v73, %v5524
    %v5526 = vlaneseq
    %v5527 = vshrl.u32 %v5526, 7
    %v5528 = vsub.s32 3, %v5527
    %v5529 = vrot.slane %v73, %v5528
    %v5534 = vmul.f32 %v5512, %v5517
    %v5535 = vmul.f32 %v5511, %v5521
    %v5536 = vmul.f32 %v5510, %v5525
    %v5537 = vmul.f32 %v5509, %v5529
    %s5538 = scalar_lea.vmem %s4, 108
    %v5539 = vld [vmem:[%s5538] sm:$0xf]
    %5540 = vrot.lane.b32.xlu0 %v5490, 16
    %v5541 = vpop.permute.xlu0 %5540
    %5542 = vrot.lane.b32.xlu0 %v5494, 16
    %v5543 = vpop.permute.xlu0 %5542
    %5544 = vrot.lane.b32.xlu0 %v5491, 16
    %v5545 = vpop.permute.xlu0 %5544
    %5546 = vrot.lane.b32.xlu0 %v5495, 16
    %v5547 = vpop.permute.xlu0 %5546
    %vm5548 = vcmp.lt.s32.totalorder %v5507, 16
    %v5549 = vsel %vm5548, %v5545, %v5547
    %v5550 = vsel %vm5548, %v5543, %v5545
    %v5551 = vsel %vm5548, %v5541, %v5543
    %v5552 = vsel %vm5548, %v5547, %v5541
    %v5554 = vlaneseq
    %v5555 = vshrl.u32 %v5554, 7
    %v5556 = vsub.s32 0, %v5555
    %v5557 = vrot.slane %v75, %v5556
    %v5558 = vlaneseq
    %v5559 = vshrl.u32 %v5558, 7
    %v5560 = vsub.s32 1, %v5559
    %v5561 = vrot.slane %v75, %v5560
    %v5562 = vlaneseq
    %v5563 = vshrl.u32 %v5562, 7
    %v5564 = vsub.s32 2, %v5563
    %v5565 = vrot.slane %v75, %v5564
    %v5566 = vlaneseq
    %v5567 = vshrl.u32 %v5566, 7
    %v5568 = vsub.s32 3, %v5567
    %v5569 = vrot.slane %v75, %v5568
    %v5574 = vmul.f32 %v5552, %v5557
    %v5575 = vmul.f32 %v5551, %v5561
    %v5576 = vmul.f32 %v5550, %v5565
    %v5577 = vmul.f32 %v5549, %v5569
    %s5578 = scalar_lea.vmem %s4, 112
    %v5579 = vld [vmem:[%s5578] sm:$0xf]
    %vm5580 = vcmask 31744
    %v5582 = vsel %vm5580, %v5579, 0
    %vm5584 = vcmask 1043456
    %v5586 = vsel %vm5584, %v5574, 0
    %v5589 = vsel %vm5584, %v5575, 0
    %v5592 = vsel %vm5584, %v5576, 0
    %v5595 = vsel %vm5584, %v5577, 0
    %5597 = vmatprep.subr.mxu0 %v5589
    %5598 = vmatpush1.msra.mxu0 %v5586
    %5599 = vmatprep.subr.mxu0 0.0
    %5600 = vmatpush1.msra.mxu0 0.0
    %5601 = vmatprep.subr.mxu0 0.0
    %5602 = vmatpush1.msra.mxu0 0.0
    %5603 = vmatprep.subr.mxu0 0.0
    %5604 = vmatpush1.msra.mxu0 0.0
    %5605 = vmatprep.subr.mxu0 0.0
    %5606 = vmatpush1.msra.mxu0 0.0
    %5607 = vmatprep.subr.mxu0 0.0
    %5608 = vmatpush1.msra.mxu0 0.0
    %5609 = vmatprep.subr.mxu0 0.0
    %5610 = vmatpush1.msra.mxu0 0.0
    %5611 = vmatprep.subr.mxu0 0.0
    %5612 = vmatpush1.msra.mxu0 0.0
    %5613 = vmatprep.subr.mxu0 0.0
    %5614 = vmatpush1.msra.mxu0 0.0
    %5615 = vmatprep.subr.mxu0 0.0
    %5616 = vmatpush1.msra.mxu0 0.0
    %5617 = vmatprep.subr.mxu0 0.0
    %5618 = vmatpush1.msra.mxu0 0.0
    %5619 = vmatprep.subr.mxu0 0.0
    %5620 = vmatpush1.msra.mxu0 0.0
    %5621 = vmatprep.subr.mxu0 0.0
    %5622 = vmatpush1.msra.mxu0 0.0
    %5623 = vmatprep.subr.mxu0 0.0
    %5624 = vmatpush1.msra.mxu0 0.0
    %5625 = vmatprep.subr.mxu0 0.0
    %5626 = vmatpush1.msra.mxu0 0.0
    %5627 = vmatprep.subr.mxu0 0.0
    %5628 = vmatpush1.msra.mxu0 0.0
    %5629 = vmatprep.subr.mxu0 0.0
    %5630 = vmatpush1.msra.mxu0 0.0
    %5631 = vmatprep.subr.mxu0 0.0
    %5632 = vmatpush1.msra.mxu0 0.0
    %5633 = vmatprep.subr.mxu0 0.0
    %5634 = vmatpush1.msra.mxu0 0.0
    %5635 = vmatprep.subr.mxu0 0.0
    %5636 = vmatpush1.msra.mxu0 0.0
    %5637 = vmatprep.subr.mxu0 0.0
    %5638 = vmatpush1.msra.mxu0 0.0
    %5639 = vmatprep.subr.mxu0 0.0
    %5640 = vmatpush1.msra.mxu0 0.0
    %5641 = vmatprep.subr.mxu0 0.0
    %5642 = vmatpush1.msra.mxu0 0.0
    %5643 = vmatprep.subr.mxu0 0.0
    %5644 = vmatpush1.msra.mxu0 0.0
    %5645 = vmatprep.subr.mxu0 0.0
    %5646 = vmatpush1.msra.mxu0 0.0
    %5647 = vmatprep.subr.mxu0 0.0
    %5648 = vmatpush1.msra.mxu0 0.0
    %5649 = vmatprep.subr.mxu0 0.0
    %5650 = vmatpush1.msra.mxu0 0.0
    %5651 = vmatprep.subr.mxu0 0.0
    %5652 = vmatpush1.msra.mxu0 0.0
    %5653 = vmatprep.subr.mxu0 0.0
    %5654 = vmatpush1.msra.mxu0 0.0
    %5655 = vmatprep.subr.mxu0 0.0
    %5656 = vmatpush1.msra.mxu0 0.0
    %5657 = vmatprep.subr.mxu0 0.0
    %5658 = vmatpush1.msra.mxu0 0.0
    %5659 = vmatprep.subr.mxu0 0.0
    %5660 = vmatpush1.msra.mxu0 0.0
    %5661 = vmatprep.mubr.f32.mxu0 0.0
    %5662 = vmatmul.mubr.f32.gmra.mrb[0].mxu0 %v5582
    %v5663 = vpop.f32.mrb[0].mxu0
    %v5664 = vadd.f32 0.0, %v5663
    %v5665 = vpop.f32.mrb[0].mxu0
    %v5666 = vadd.f32 0.0, %v5665
    %5667 = vdwg.mxu0
    %5668 = vmatprep.subr.mxu0 %v5595
    %5669 = vmatpush1.msra.mxu0 %v5592
    %5670 = vmatprep.subr.mxu0 0.0
    %5671 = vmatpush1.msra.mxu0 0.0
    %5672 = vmatprep.subr.mxu0 0.0
    %5673 = vmatpush1.msra.mxu0 0.0
    %5674 = vmatprep.subr.mxu0 0.0
    %5675 = vmatpush1.msra.mxu0 0.0
    %5676 = vmatprep.subr.mxu0 0.0
    %5677 = vmatpush1.msra.mxu0 0.0
    %5678 = vmatprep.subr.mxu0 0.0
    %5679 = vmatpush1.msra.mxu0 0.0
    %5680 = vmatprep.subr.mxu0 0.0
    %5681 = vmatpush1.msra.mxu0 0.0
    %5682 = vmatprep.subr.mxu0 0.0
    %5683 = vmatpush1.msra.mxu0 0.0
    %5684 = vmatprep.subr.mxu0 0.0
    %5685 = vmatpush1.msra.mxu0 0.0
    %5686 = vmatprep.subr.mxu0 0.0
    %5687 = vmatpush1.msra.mxu0 0.0
    %5688 = vmatprep.subr.mxu0 0.0
    %5689 = vmatpush1.msra.mxu0 0.0
    %5690 = vmatprep.subr.mxu0 0.0
    %5691 = vmatpush1.msra.mxu0 0.0
    %5692 = vmatprep.subr.mxu0 0.0
    %5693 = vmatpush1.msra.mxu0 0.0
    %5694 = vmatprep.subr.mxu0 0.0
    %5695 = vmatpush1.msra.mxu0 0.0
    %5696 = vmatprep.subr.mxu0 0.0
    %5697 = vmatpush1.msra.mxu0 0.0
    %5698 = vmatprep.subr.mxu0 0.0
    %5699 = vmatpush1.msra.mxu0 0.0
    %5700 = vmatprep.subr.mxu0 0.0
    %5701 = vmatpush1.msra.mxu0 0.0
    %5702 = vmatprep.subr.mxu0 0.0
    %5703 = vmatpush1.msra.mxu0 0.0
    %5704 = vmatprep.subr.mxu0 0.0
    %5705 = vmatpush1.msra.mxu0 0.0
    %5706 = vmatprep.subr.mxu0 0.0
    %5707 = vmatpush1.msra.mxu0 0.0
    %5708 = vmatprep.subr.mxu0 0.0
    %5709 = vmatpush1.msra.mxu0 0.0
    %5710 = vmatprep.subr.mxu0 0.0
    %5711 = vmatpush1.msra.mxu0 0.0
    %5712 = vmatprep.subr.mxu0 0.0
    %5713 = vmatpush1.msra.mxu0 0.0
    %5714 = vmatprep.subr.mxu0 0.0
    %5715 = vmatpush1.msra.mxu0 0.0
    %5716 = vmatprep.subr.mxu0 0.0
    %5717 = vmatpush1.msra.mxu0 0.0
    %5718 = vmatprep.subr.mxu0 0.0
    %5719 = vmatpush1.msra.mxu0 0.0
    %5720 = vmatprep.subr.mxu0 0.0
    %5721 = vmatpush1.msra.mxu0 0.0
    %5722 = vmatprep.subr.mxu0 0.0
    %5723 = vmatpush1.msra.mxu0 0.0
    %5724 = vmatprep.subr.mxu0 0.0
    %5725 = vmatpush1.msra.mxu0 0.0
    %5726 = vmatprep.subr.mxu0 0.0
    %5727 = vmatpush1.msra.mxu0 0.0
    %5728 = vmatprep.subr.mxu0 0.0
    %5729 = vmatpush1.msra.mxu0 0.0
    %5730 = vmatprep.subr.mxu0 0.0
    %5731 = vmatpush1.msra.mxu0 0.0
    %5732 = vmatprep.mubr.f32.mxu0 0.0
    %5733 = vmatmul.mubr.f32.gmra.mrb[0].mxu0 %v5582
    %v5734 = vpop.f32.mrb[0].mxu0
    %v5735 = vadd.f32 0.0, %v5734
    %v5736 = vpop.f32.mrb[0].mxu0
    %v5737 = vadd.f32 0.0, %v5736
    %5738 = vdwg.mxu0
    %v5740 = vsel %vm5580, %v5539, 0
    %v5743 = vsel %vm5584, %v5534, 0
    %v5746 = vsel %vm5584, %v5535, 0
    %v5749 = vsel %vm5584, %v5536, 0
    %v5752 = vsel %vm5584, %v5537, 0
    %5754 = vmatprep.subr.mxu0 %v5746
    %5755 = vmatpush1.msra.mxu0 %v5743
    %5756 = vmatprep.subr.mxu0 0.0
    %5757 = vmatpush1.msra.mxu0 0.0
    %5758 = vmatprep.subr.mxu0 0.0
    %5759 = vmatpush1.msra.mxu0 0.0
    %5760 = vmatprep.subr.mxu0 0.0
    %5761 = vmatpush1.msra.mxu0 0.0
    %5762 = vmatprep.subr.mxu0 0.0
    %5763 = vmatpush1.msra.mxu0 0.0
    %5764 = vmatprep.subr.mxu0 0.0
    %5765 = vmatpush1.msra.mxu0 0.0
    %5766 = vmatprep.subr.mxu0 0.0
    %5767 = vmatpush1.msra.mxu0 0.0
    %5768 = vmatprep.subr.mxu0 0.0
    %5769 = vmatpush1.msra.mxu0 0.0
    %5770 = vmatprep.subr.mxu0 0.0
    %5771 = vmatpush1.msra.mxu0 0.0
    %5772 = vmatprep.subr.mxu0 0.0
    %5773 = vmatpush1.msra.mxu0 0.0
    %5774 = vmatprep.subr.mxu0 0.0
    %5775 = vmatpush1.msra.mxu0 0.0
    %5776 = vmatprep.subr.mxu0 0.0
    %5777 = vmatpush1.msra.mxu0 0.0
    %5778 = vmatprep.subr.mxu0 0.0
    %5779 = vmatpush1.msra.mxu0 0.0
    %5780 = vmatprep.subr.mxu0 0.0
    %5781 = vmatpush1.msra.mxu0 0.0
    %5782 = vmatprep.subr.mxu0 0.0
    %5783 = vmatpush1.msra.mxu0 0.0
    %5784 = vmatprep.subr.mxu0 0.0
    %5785 = vmatpush1.msra.mxu0 0.0
    %5786 = vmatprep.subr.mxu0 0.0
    %5787 = vmatpush1.msra.mxu0 0.0
    %5788 = vmatprep.subr.mxu0 0.0
    %5789 = vmatpush1.msra.mxu0 0.0
    %5790 = vmatprep.subr.mxu0 0.0
    %5791 = vmatpush1.msra.mxu0 0.0
    %5792 = vmatprep.subr.mxu0 0.0
    %5793 = vmatpush1.msra.mxu0 0.0
    %5794 = vmatprep.subr.mxu0 0.0
    %5795 = vmatpush1.msra.mxu0 0.0
    %5796 = vmatprep.subr.mxu0 0.0
    %5797 = vmatpush1.msra.mxu0 0.0
    %5798 = vmatprep.subr.mxu0 0.0
    %5799 = vmatpush1.msra.mxu0 0.0
    %5800 = vmatprep.subr.mxu0 0.0
    %5801 = vmatpush1.msra.mxu0 0.0
    %5802 = vmatprep.subr.mxu0 0.0
    %5803 = vmatpush1.msra.mxu0 0.0
    %5804 = vmatprep.subr.mxu0 0.0
    %5805 = vmatpush1.msra.mxu0 0.0
    %5806 = vmatprep.subr.mxu0 0.0
    %5807 = vmatpush1.msra.mxu0 0.0
    %5808 = vmatprep.subr.mxu0 0.0
    %5809 = vmatpush1.msra.mxu0 0.0
    %5810 = vmatprep.subr.mxu0 0.0
    %5811 = vmatpush1.msra.mxu0 0.0
    %5812 = vmatprep.subr.mxu0 0.0
    %5813 = vmatpush1.msra.mxu0 0.0
    %5814 = vmatprep.subr.mxu0 0.0
    %5815 = vmatpush1.msra.mxu0 0.0
    %5816 = vmatprep.subr.mxu0 0.0
    %5817 = vmatpush1.msra.mxu0 0.0
    %5818 = vmatprep.mubr.f32.mxu0 0.0
    %5819 = vmatmul.mubr.f32.gmra.mrb[0].mxu0 %v5740
    %v5820 = vpop.f32.mrb[0].mxu0
    %v5821 = vadd.f32 %v5664, %v5820
    %v5822 = vpop.f32.mrb[0].mxu0
    %v5823 = vadd.f32 %v5666, %v5822
    %5824 = vdwg.mxu0
    %5825 = vmatprep.subr.mxu0 %v5752
    %5826 = vmatpush1.msra.mxu0 %v5749
    %5827 = vmatprep.subr.mxu0 0.0
    %5828 = vmatpush1.msra.mxu0 0.0
    %5829 = vmatprep.subr.mxu0 0.0
    %5830 = vmatpush1.msra.mxu0 0.0
    %5831 = vmatprep.subr.mxu0 0.0
    %5832 = vmatpush1.msra.mxu0 0.0
    %5833 = vmatprep.subr.mxu0 0.0
    %5834 = vmatpush1.msra.mxu0 0.0
    %5835 = vmatprep.subr.mxu0 0.0
    %5836 = vmatpush1.msra.mxu0 0.0
    %5837 = vmatprep.subr.mxu0 0.0
    %5838 = vmatpush1.msra.mxu0 0.0
    %5839 = vmatprep.subr.mxu0 0.0
    %5840 = vmatpush1.msra.mxu0 0.0
    %5841 = vmatprep.subr.mxu0 0.0
    %5842 = vmatpush1.msra.mxu0 0.0
    %5843 = vmatprep.subr.mxu0 0.0
    %5844 = vmatpush1.msra.mxu0 0.0
    %5845 = vmatprep.subr.mxu0 0.0
    %5846 = vmatpush1.msra.mxu0 0.0
    %5847 = vmatprep.subr.mxu0 0.0
    %5848 = vmatpush1.msra.mxu0 0.0
    %5849 = vmatprep.subr.mxu0 0.0
    %5850 = vmatpush1.msra.mxu0 0.0
    %5851 = vmatprep.subr.mxu0 0.0
    %5852 = vmatpush1.msra.mxu0 0.0
    %5853 = vmatprep.subr.mxu0 0.0
    %5854 = vmatpush1.msra.mxu0 0.0
    %5855 = vmatprep.subr.mxu0 0.0
    %5856 = vmatpush1.msra.mxu0 0.0
    %5857 = vmatprep.subr.mxu0 0.0
    %5858 = vmatpush1.msra.mxu0 0.0
    %5859 = vmatprep.subr.mxu0 0.0
    %5860 = vmatpush1.msra.mxu0 0.0
    %5861 = vmatprep.subr.mxu0 0.0
    %5862 = vmatpush1.msra.mxu0 0.0
    %5863 = vmatprep.subr.mxu0 0.0
    %5864 = vmatpush1.msra.mxu0 0.0
    %5865 = vmatprep.subr.mxu0 0.0
    %5866 = vmatpush1.msra.mxu0 0.0
    %5867 = vmatprep.subr.mxu0 0.0
    %5868 = vmatpush1.msra.mxu0 0.0
    %5869 = vmatprep.subr.mxu0 0.0
    %5870 = vmatpush1.msra.mxu0 0.0
    %5871 = vmatprep.subr.mxu0 0.0
    %5872 = vmatpush1.msra.mxu0 0.0
    %5873 = vmatprep.subr.mxu0 0.0
    %5874 = vmatpush1.msra.mxu0 0.0
    %5875 = vmatprep.subr.mxu0 0.0
    %5876 = vmatpush1.msra.mxu0 0.0
    %5877 = vmatprep.subr.mxu0 0.0
    %5878 = vmatpush1.msra.mxu0 0.0
    %5879 = vmatprep.subr.mxu0 0.0
    %5880 = vmatpush1.msra.mxu0 0.0
    %5881 = vmatprep.subr.mxu0 0.0
    %5882 = vmatpush1.msra.mxu0 0.0
    %5883 = vmatprep.subr.mxu0 0.0
    %5884 = vmatpush1.msra.mxu0 0.0
    %5885 = vmatprep.subr.mxu0 0.0
    %5886 = vmatpush1.msra.mxu0 0.0
    %5887 = vmatprep.subr.mxu0 0.0
    %5888 = vmatpush1.msra.mxu0 0.0
    %5889 = vmatprep.mubr.f32.mxu0 0.0
    %5890 = vmatmul.mubr.f32.gmra.mrb[0].mxu0 %v5740
    %v5891 = vpop.f32.mrb[0].mxu0
    %v5892 = vadd.f32 %v5735, %v5891
    %v5893 = vpop.f32.mrb[0].mxu0
    %v5894 = vadd.f32 %v5737, %v5893
    %5895 = vdwg.mxu0
    %5896 = vrot.lane.b32.xlu0 %v5490, 15
    %v5897 = vpop.permute.xlu0 %5896
    %5898 = vrot.lane.b32.xlu0 %v5494, 15
    %v5899 = vpop.permute.xlu0 %5898
    %5900 = vrot.lane.b32.xlu0 %v5491, 15
    %v5901 = vpop.permute.xlu0 %5900
    %5902 = vrot.lane.b32.xlu0 %v5495, 15
    %v5903 = vpop.permute.xlu0 %5902
    %vm5904 = vcmp.lt.s32.totalorder %v5507, 15
    %v5905 = vsel %vm5904, %v5901, %v5903
    %v5906 = vsel %vm5904, %v5899, %v5901
    %v5907 = vsel %vm5904, %v5897, %v5899
    %v5908 = vsel %vm5904, %v5903, %v5897
    %v5910 = vlaneseq
    %v5911 = vshrl.u32 %v5910, 7
    %v5912 = vsub.s32 0, %v5911
    %v5913 = vrot.slane %v77, %v5912
    %v5914 = vlaneseq
    %v5915 = vshrl.u32 %v5914, 7
    %v5916 = vsub.s32 1, %v5915
    %v5917 = vrot.slane %v77, %v5916
    %v5918 = vlaneseq
    %v5919 = vshrl.u32 %v5918, 7
    %v5920 = vsub.s32 2, %v5919
    %v5921 = vrot.slane %v77, %v5920
    %v5922 = vlaneseq
    %v5923 = vshrl.u32 %v5922, 7
    %v5924 = vsub.s32 3, %v5923
    %v5925 = vrot.slane %v77, %v5924
    %v5930 = vmul.f32 %v5908, %v5913
    %v5931 = vmul.f32 %v5907, %v5917
    %v5932 = vmul.f32 %v5906, %v5921
    %v5933 = vmul.f32 %v5905, %v5925
    %s5934 = scalar_lea.vmem %s4, 116
    %v5935 = vld [vmem:[%s5934] sm:$0xf]
    %v5937 = vsel %vm5580, %v5935, 0
    %v5940 = vsel %vm5584, %v5930, 0
    %v5943 = vsel %vm5584, %v5931, 0
    %v5946 = vsel %vm5584, %v5932, 0
    %v5949 = vsel %vm5584, %v5933, 0
    %5951 = vmatprep.subr.mxu0 %v5943
    %5952 = vmatpush1.msra.mxu0 %v5940
    %5953 = vmatprep.subr.mxu0 0.0
    %5954 = vmatpush1.msra.mxu0 0.0
    %5955 = vmatprep.subr.mxu0 0.0
    %5956 = vmatpush1.msra.mxu0 0.0
    %5957 = vmatprep.subr.mxu0 0.0
    %5958 = vmatpush1.msra.mxu0 0.0
    %5959 = vmatprep.subr.mxu0 0.0
    %5960 = vmatpush1.msra.mxu0 0.0
    %5961 = vmatprep.subr.mxu0 0.0
    %5962 = vmatpush1.msra.mxu0 0.0
    %5963 = vmatprep.subr.mxu0 0.0
    %5964 = vmatpush1.msra.mxu0 0.0
    %5965 = vmatprep.subr.mxu0 0.0
    %5966 = vmatpush1.msra.mxu0 0.0
    %5967 = vmatprep.subr.mxu0 0.0
    %5968 = vmatpush1.msra.mxu0 0.0
    %5969 = vmatprep.subr.mxu0 0.0
    %5970 = vmatpush1.msra.mxu0 0.0
    %5971 = vmatprep.subr.mxu0 0.0
    %5972 = vmatpush1.msra.mxu0 0.0
    %5973 = vmatprep.subr.mxu0 0.0
    %5974 = vmatpush1.msra.mxu0 0.0
    %5975 = vmatprep.subr.mxu0 0.0
    %5976 = vmatpush1.msra.mxu0 0.0
    %5977 = vmatprep.subr.mxu0 0.0
    %5978 = vmatpush1.msra.mxu0 0.0
    %5979 = vmatprep.subr.mxu0 0.0
    %5980 = vmatpush1.msra.mxu0 0.0
    %5981 = vmatprep.subr.mxu0 0.0
    %5982 = vmatpush1.msra.mxu0 0.0
    %5983 = vmatprep.subr.mxu0 0.0
    %5984 = vmatpush1.msra.mxu0 0.0
    %5985 = vmatprep.subr.mxu0 0.0
    %5986 = vmatpush1.msra.mxu0 0.0
    %5987 = vmatprep.subr.mxu0 0.0
    %5988 = vmatpush1.msra.mxu0 0.0
    %5989 = vmatprep.subr.mxu0 0.0
    %5990 = vmatpush1.msra.mxu0 0.0
    %5991 = vmatprep.subr.mxu0 0.0
    %5992 = vmatpush1.msra.mxu0 0.0
    %5993 = vmatprep.subr.mxu0 0.0
    %5994 = vmatpush1.msra.mxu0 0.0
    %5995 = vmatprep.subr.mxu0 0.0
    %5996 = vmatpush1.msra.mxu0 0.0
    %5997 = vmatprep.subr.mxu0 0.0
    %5998 = vmatpush1.msra.mxu0 0.0
    %5999 = vmatprep.subr.mxu0 0.0
    %6000 = vmatpush1.msra.mxu0 0.0
    %6001 = vmatprep.subr.mxu0 0.0
    %6002 = vmatpush1.msra.mxu0 0.0
    %6003 = vmatprep.subr.mxu0 0.0
    %6004 = vmatpush1.msra.mxu0 0.0
    %6005 = vmatprep.subr.mxu0 0.0
    %6006 = vmatpush1.msra.mxu0 0.0
    %6007 = vmatprep.subr.mxu0 0.0
    %6008 = vmatpush1.msra.mxu0 0.0
    %6009 = vmatprep.subr.mxu0 0.0
    %6010 = vmatpush1.msra.mxu0 0.0
    %6011 = vmatprep.subr.mxu0 0.0
    %6012 = vmatpush1.msra.mxu0 0.0
    %6013 = vmatprep.subr.mxu0 0.0
    %6014 = vmatpush1.msra.mxu0 0.0
    %6015 = vmatprep.mubr.f32.mxu0 0.0
    %6016 = vmatmul.mubr.f32.gmra.mrb[0].mxu0 %v5937
    %v6017 = vpop.f32.mrb[0].mxu0
    %v6018 = vadd.f32 0.0, %v6017
    %v6019 = vpop.f32.mrb[0].mxu0
    %v6020 = vadd.f32 0.0, %v6019
    %6021 = vdwg.mxu0
    %6022 = vmatprep.subr.mxu0 %v5949
    %6023 = vmatpush1.msra.mxu0 %v5946
    %6024 = vmatprep.subr.mxu0 0.0
    %6025 = vmatpush1.msra.mxu0 0.0
    %6026 = vmatprep.subr.mxu0 0.0
    %6027 = vmatpush1.msra.mxu0 0.0
    %6028 = vmatprep.subr.mxu0 0.0
    %6029 = vmatpush1.msra.mxu0 0.0
    %6030 = vmatprep.subr.mxu0 0.0
    %6031 = vmatpush1.msra.mxu0 0.0
    %6032 = vmatprep.subr.mxu0 0.0
    %6033 = vmatpush1.msra.mxu0 0.0
    %6034 = vmatprep.subr.mxu0 0.0
    %6035 = vmatpush1.msra.mxu0 0.0
    %6036 = vmatprep.subr.mxu0 0.0
    %6037 = vmatpush1.msra.mxu0 0.0
    %6038 = vmatprep.subr.mxu0 0.0
    %6039 = vmatpush1.msra.mxu0 0.0
    %6040 = vmatprep.subr.mxu0 0.0
    %6041 = vmatpush1.msra.mxu0 0.0
    %6042 = vmatprep.subr.mxu0 0.0
    %6043 = vmatpush1.msra.mxu0 0.0
    %6044 = vmatprep.subr.mxu0 0.0
    %6045 = vmatpush1.msra.mxu0 0.0
    %6046 = vmatprep.subr.mxu0 0.0
    %6047 = vmatpush1.msra.mxu0 0.0
    %6048 = vmatprep.subr.mxu0 0.0
    %6049 = vmatpush1.msra.mxu0 0.0
    %6050 = vmatprep.subr.mxu0 0.0
    %6051 = vmatpush1.msra.mxu0 0.0
    %6052 = vmatprep.subr.mxu0 0.0
    %6053 = vmatpush1.msra.mxu0 0.0
    %6054 = vmatprep.subr.mxu0 0.0
    %6055 = vmatpush1.msra.mxu0 0.0
    %6056 = vmatprep.subr.mxu0 0.0
    %6057 = vmatpush1.msra.mxu0 0.0
    %6058 = vmatprep.subr.mxu0 0.0
    %6059 = vmatpush1.msra.mxu0 0.0
    %6060 = vmatprep.subr.mxu0 0.0
    %6061 = vmatpush1.msra.mxu0 0.0
    %6062 = vmatprep.subr.mxu0 0.0
    %6063 = vmatpush1.msra.mxu0 0.0
    %6064 = vmatprep.subr.mxu0 0.0
    %6065 = vmatpush1.msra.mxu0 0.0
    %6066 = vmatprep.subr.mxu0 0.0
    %6067 = vmatpush1.msra.mxu0 0.0
    %6068 = vmatprep.subr.mxu0 0.0
    %6069 = vmatpush1.msra.mxu0 0.0
    %6070 = vmatprep.subr.mxu0 0.0
    %6071 = vmatpush1.msra.mxu0 0.0
    %6072 = vmatprep.subr.mxu0 0.0
    %6073 = vmatpush1.msra.mxu0 0.0
    %6074 = vmatprep.subr.mxu0 0.0
    %6075 = vmatpush1.msra.mxu0 0.0
    %6076 = vmatprep.subr.mxu0 0.0
    %6077 = vmatpush1.msra.mxu0 0.0
    %6078 = vmatprep.subr.mxu0 0.0
    %6079 = vmatpush1.msra.mxu0 0.0
    %6080 = vmatprep.subr.mxu0 0.0
    %6081 = vmatpush1.msra.mxu0 0.0
    %6082 = vmatprep.subr.mxu0 0.0
    %6083 = vmatpush1.msra.mxu0 0.0
    %6084 = vmatprep.subr.mxu0 0.0
    %6085 = vmatpush1.msra.mxu0 0.0
    %6086 = vmatprep.mubr.f32.mxu0 0.0
    %6087 = vmatmul.mubr.f32.gmra.mrb[0].mxu0 %v5937
    %v6088 = vpop.f32.mrb[0].mxu0
    %v6089 = vadd.f32 0.0, %v6088
    %v6090 = vpop.f32.mrb[0].mxu0
    %v6091 = vadd.f32 0.0, %v6090
    %6092 = vdwg.mxu0
    %v6093 = vadd.f32 %v5821, %v6018
    %v6094 = vadd.f32 %v5823, %v6020
    %v6095 = vadd.f32 %v5892, %v6089
    %v6096 = vadd.f32 %v5894, %v6091
    %6097 = vrot.lane.b32.xlu0 %v5490, 1
    %v6098 = vpop.permute.xlu0 %6097
    %6099 = vrot.lane.b32.xlu0 %v5494, 1
    %v6100 = vpop.permute.xlu0 %6099
    %6101 = vrot.lane.b32.xlu0 %v5491, 1
    %v6102 = vpop.permute.xlu0 %6101
    %6103 = vrot.lane.b32.xlu0 %v5495, 1
    %v6104 = vpop.permute.xlu0 %6103
    %vm6105 = vcmp.lt.s32.totalorder %v5507, 1
    %v6106 = vsel %vm6105, %v6102, %v6104
    %v6107 = vsel %vm6105, %v6100, %v6102
    %v6108 = vsel %vm6105, %v6098, %v6100
    %v6109 = vsel %vm6105, %v6104, %v6098
    %v6111 = vlaneseq
    %v6112 = vshrl.u32 %v6111, 7
    %v6113 = vsub.s32 0, %v6112
    %v6114 = vrot.slane %v79, %v6113
    %v6115 = vlaneseq
    %v6116 = vshrl.u32 %v6115, 7
    %v6117 = vsub.s32 1, %v6116
    %v6118 = vrot.slane %v79, %v6117
    %v6119 = vlaneseq
    %v6120 = vshrl.u32 %v6119, 7
    %v6121 = vsub.s32 2, %v6120
    %v6122 = vrot.slane %v79, %v6121
    %v6123 = vlaneseq
    %v6124 = vshrl.u32 %v6123, 7
    %v6125 = vsub.s32 3, %v6124
    %v6126 = vrot.slane %v79, %v6125
    %v6131 = vmul.f32 %v6109, %v6114
    %v6132 = vmul.f32 %v6108, %v6118
    %v6133 = vmul.f32 %v6107, %v6122
    %v6134 = vmul.f32 %v6106, %v6126
    %s6135 = scalar_lea.vmem %s4, 120
    %v6136 = vld [vmem:[%s6135] sm:$0xf]
    %v6138 = vsel %vm5580, %v6136, 0
    %v6141 = vsel %vm5584, %v6131, 0
    %v6144 = vsel %vm5584, %v6132, 0
    %v6147 = vsel %vm5584, %v6133, 0
    %v6150 = vsel %vm5584, %v6134, 0
    %6152 = vmatprep.subr.mxu0 %v6144
    %6153 = vmatpush1.msra.mxu0 %v6141
    %6154 = vmatprep.subr.mxu0 0.0
    %6155 = vmatpush1.msra.mxu0 0.0
    %6156 = vmatprep.subr.mxu0 0.0
    %6157 = vmatpush1.msra.mxu0 0.0
    %6158 = vmatprep.subr.mxu0 0.0
    %6159 = vmatpush1.msra.mxu0 0.0
    %6160 = vmatprep.subr.mxu0 0.0
    %6161 = vmatpush1.msra.mxu0 0.0
    %6162 = vmatprep.subr.mxu0 0.0
    %6163 = vmatpush1.msra.mxu0 0.0
    %6164 = vmatprep.subr.mxu0 0.0
    %6165 = vmatpush1.msra.mxu0 0.0
    %6166 = vmatprep.subr.mxu0 0.0
    %6167 = vmatpush1.msra.mxu0 0.0
    %6168 = vmatprep.subr.mxu0 0.0
    %6169 = vmatpush1.msra.mxu0 0.0
    %6170 = vmatprep.subr.mxu0 0.0
    %6171 = vmatpush1.msra.mxu0 0.0
    %6172 = vmatprep.subr.mxu0 0.0
    %6173 = vmatpush1.msra.mxu0 0.0
    %6174 = vmatprep.subr.mxu0 0.0
    %6175 = vmatpush1.msra.mxu0 0.0
    %6176 = vmatprep.subr.mxu0 0.0
    %6177 = vmatpush1.msra.mxu0 0.0
    %6178 = vmatprep.subr.mxu0 0.0
    %6179 = vmatpush1.msra.mxu0 0.0
    %6180 = vmatprep.subr.mxu0 0.0
    %6181 = vmatpush1.msra.mxu0 0.0
    %6182 = vmatprep.subr.mxu0 0.0
    %6183 = vmatpush1.msra.mxu0 0.0
    %6184 = vmatprep.subr.mxu0 0.0
    %6185 = vmatpush1.msra.mxu0 0.0
    %6186 = vmatprep.subr.mxu0 0.0
    %6187 = vmatpush1.msra.mxu0 0.0
    %6188 = vmatprep.subr.mxu0 0.0
    %6189 = vmatpush1.msra.mxu0 0.0
    %6190 = vmatprep.subr.mxu0 0.0
    %6191 = vmatpush1.msra.mxu0 0.0
    %6192 = vmatprep.subr.mxu0 0.0
    %6193 = vmatpush1.msra.mxu0 0.0
    %6194 = vmatprep.subr.mxu0 0.0
    %6195 = vmatpush1.msra.mxu0 0.0
    %6196 = vmatprep.subr.mxu0 0.0
    %6197 = vmatpush1.msra.mxu0 0.0
    %6198 = vmatprep.subr.mxu0 0.0
    %6199 = vmatpush1.msra.mxu0 0.0
    %6200 = vmatprep.subr.mxu0 0.0
    %6201 = vmatpush1.msra.mxu0 0.0
    %6202 = vmatprep.subr.mxu0 0.0
    %6203 = vmatpush1.msra.mxu0 0.0
    %6204 = vmatprep.subr.mxu0 0.0
    %6205 = vmatpush1.msra.mxu0 0.0
    %6206 = vmatprep.subr.mxu0 0.0
    %6207 = vmatpush1.msra.mxu0 0.0
    %6208 = vmatprep.subr.mxu0 0.0
    %6209 = vmatpush1.msra.mxu0 0.0
    %6210 = vmatprep.subr.mxu0 0.0
    %6211 = vmatpush1.msra.mxu0 0.0
    %6212 = vmatprep.subr.mxu0 0.0
    %6213 = vmatpush1.msra.mxu0 0.0
    %6214 = vmatprep.subr.mxu0 0.0
    %6215 = vmatpush1.msra.mxu0 0.0
    %6216 = vmatprep.mubr.f32.mxu0 0.0
    %6217 = vmatmul.mubr.f32.gmra.mrb[0].mxu0 %v6138
    %v6218 = vpop.f32.mrb[0].mxu0
    %v6219 = vadd.f32 0.0, %v6218
    %v6220 = vpop.f32.mrb[0].mxu0
    %v6221 = vadd.f32 0.0, %v6220
    %6222 = vdwg.mxu0
    %6223 = vmatprep.subr.mxu0 %v6150
    %6224 = vmatpush1.msra.mxu0 %v6147
    %6225 = vmatprep.subr.mxu0 0.0
    %6226 = vmatpush1.msra.mxu0 0.0
    %6227 = vmatprep.subr.mxu0 0.0
    %6228 = vmatpush1.msra.mxu0 0.0
    %6229 = vmatprep.subr.mxu0 0.0
    %6230 = vmatpush1.msra.mxu0 0.0
    %6231 = vmatprep.subr.mxu0 0.0
    %6232 = vmatpush1.msra.mxu0 0.0
    %6233 = vmatprep.subr.mxu0 0.0
    %6234 = vmatpush1.msra.mxu0 0.0
    %6235 = vmatprep.subr.mxu0 0.0
    %6236 = vmatpush1.msra.mxu0 0.0
    %6237 = vmatprep.subr.mxu0 0.0
    %6238 = vmatpush1.msra.mxu0 0.0
    %6239 = vmatprep.subr.mxu0 0.0
    %6240 = vmatpush1.msra.mxu0 0.0
    %6241 = vmatprep.subr.mxu0 0.0
    %6242 = vmatpush1.msra.mxu0 0.0
    %6243 = vmatprep.subr.mxu0 0.0
    %6244 = vmatpush1.msra.mxu0 0.0
    %6245 = vmatprep.subr.mxu0 0.0
    %6246 = vmatpush1.msra.mxu0 0.0
    %6247 = vmatprep.subr.mxu0 0.0
    %6248 = vmatpush1.msra.mxu0 0.0
    %6249 = vmatprep.subr.mxu0 0.0
    %6250 = vmatpush1.msra.mxu0 0.0
    %6251 = vmatprep.subr.mxu0 0.0
    %6252 = vmatpush1.msra.mxu0 0.0
    %6253 = vmatprep.subr.mxu0 0.0
    %6254 = vmatpush1.msra.mxu0 0.0
    %6255 = vmatprep.subr.mxu0 0.0
    %6256 = vmatpush1.msra.mxu0 0.0
    %6257 = vmatprep.subr.mxu0 0.0
    %6258 = vmatpush1.msra.mxu0 0.0
    %6259 = vmatprep.subr.mxu0 0.0
    %6260 = vmatpush1.msra.mxu0 0.0
    %6261 = vmatprep.subr.mxu0 0.0
    %6262 = vmatpush1.msra.mxu0 0.0
    %6263 = vmatprep.subr.mxu0 0.0
    %6264 = vmatpush1.msra.mxu0 0.0
    %6265 = vmatprep.subr.mxu0 0.0
    %6266 = vmatpush1.msra.mxu0 0.0
    %6267 = vmatprep.subr.mxu0 0.0
    %6268 = vmatpush1.msra.mxu0 0.0
    %6269 = vmatprep.subr.mxu0 0.0
    %6270 = vmatpush1.msra.mxu0 0.0
    %6271 = vmatprep.subr.mxu0 0.0
    %6272 = vmatpush1.msra.mxu0 0.0
    %6273 = vmatprep.subr.mxu0 0.0
    %6274 = vmatpush1.msra.mxu0 0.0
    %6275 = vmatprep.subr.mxu0 0.0
    %6276 = vmatpush1.msra.mxu0 0.0
    %6277 = vmatprep.subr.mxu0 0.0
    %6278 = vmatpush1.msra.mxu0 0.0
    %6279 = vmatprep.subr.mxu0 0.0
    %6280 = vmatpush1.msra.mxu0 0.0
    %6281 = vmatprep.subr.mxu0 0.0
    %6282 = vmatpush1.msra.mxu0 0.0
    %6283 = vmatprep.subr.mxu0 0.0
    %6284 = vmatpush1.msra.mxu0 0.0
    %6285 = vmatprep.subr.mxu0 0.0
    %6286 = vmatpush1.msra.mxu0 0.0
    %6287 = vmatprep.mubr.f32.mxu0 0.0
    %6288 = vmatmul.mubr.f32.gmra.mrb[0].mxu0 %v6138
    %v6289 = vpop.f32.mrb[0].mxu0
    %v6290 = vadd.f32 0.0, %v6289
    %v6291 = vpop.f32.mrb[0].mxu0
    %v6292 = vadd.f32 0.0, %v6291
    %6293 = vdwg.mxu0
    %v6294 = vadd.f32 %v6093, %v6219
    %v6295 = vadd.f32 %v6094, %v6221
    %v6296 = vadd.f32 %v6095, %v6290
    %v6297 = vadd.f32 %v6096, %v6292
    %s6298 = scalar_lea.vmem %s4, 124
    %v6299 = vld [vmem:[%s6298] sm:$0xf]
    %v6301 = vsel %vm5580, %v6299, 0
    %v6303 = vsel %vm5584, %v5490, 0
    %v6305 = vsel %vm5584, %v5494, 0
    %v6307 = vsel %vm5584, %v5491, 0
    %v6309 = vsel %vm5584, %v5495, 0
    %6311 = vmatprep.subr.mxu0 %v6305
    %6312 = vmatpush1.msra.mxu0 %v6303
    %6313 = vmatprep.subr.mxu0 0.0
    %6314 = vmatpush1.msra.mxu0 0.0
    %6315 = vmatprep.subr.mxu0 0.0
    %6316 = vmatpush1.msra.mxu0 0.0
    %6317 = vmatprep.subr.mxu0 0.0
    %6318 = vmatpush1.msra.mxu0 0.0
    %6319 = vmatprep.subr.mxu0 0.0
    %6320 = vmatpush1.msra.mxu0 0.0
    %6321 = vmatprep.subr.mxu0 0.0
    %6322 = vmatpush1.msra.mxu0 0.0
    %6323 = vmatprep.subr.mxu0 0.0
    %6324 = vmatpush1.msra.mxu0 0.0
    %6325 = vmatprep.subr.mxu0 0.0
    %6326 = vmatpush1.msra.mxu0 0.0
    %6327 = vmatprep.subr.mxu0 0.0
    %6328 = vmatpush1.msra.mxu0 0.0
    %6329 = vmatprep.subr.mxu0 0.0
    %6330 = vmatpush1.msra.mxu0 0.0
    %6331 = vmatprep.subr.mxu0 0.0
    %6332 = vmatpush1.msra.mxu0 0.0
    %6333 = vmatprep.subr.mxu0 0.0
    %6334 = vmatpush1.msra.mxu0 0.0
    %6335 = vmatprep.subr.mxu0 0.0
    %6336 = vmatpush1.msra.mxu0 0.0
    %6337 = vmatprep.subr.mxu0 0.0
    %6338 = vmatpush1.msra.mxu0 0.0
    %6339 = vmatprep.subr.mxu0 0.0
    %6340 = vmatpush1.msra.mxu0 0.0
    %6341 = vmatprep.subr.mxu0 0.0
    %6342 = vmatpush1.msra.mxu0 0.0
    %6343 = vmatprep.subr.mxu0 0.0
    %6344 = vmatpush1.msra.mxu0 0.0
    %6345 = vmatprep.subr.mxu0 0.0
    %6346 = vmatpush1.msra.mxu0 0.0
    %6347 = vmatprep.subr.mxu0 0.0
    %6348 = vmatpush1.msra.mxu0 0.0
    %6349 = vmatprep.subr.mxu0 0.0
    %6350 = vmatpush1.msra.mxu0 0.0
    %6351 = vmatprep.subr.mxu0 0.0
    %6352 = vmatpush1.msra.mxu0 0.0
    %6353 = vmatprep.subr.mxu0 0.0
    %6354 = vmatpush1.msra.mxu0 0.0
    %6355 = vmatprep.subr.mxu0 0.0
    %6356 = vmatpush1.msra.mxu0 0.0
    %6357 = vmatprep.subr.mxu0 0.0
    %6358 = vmatpush1.msra.mxu0 0.0
    %6359 = vmatprep.subr.mxu0 0.0
    %6360 = vmatpush1.msra.mxu0 0.0
    %6361 = vmatprep.subr.mxu0 0.0
    %6362 = vmatpush1.msra.mxu0 0.0
    %6363 = vmatprep.subr.mxu0 0.0
    %6364 = vmatpush1.msra.mxu0 0.0
    %6365 = vmatprep.subr.mxu0 0.0
    %6366 = vmatpush1.msra.mxu0 0.0
    %6367 = vmatprep.subr.mxu0 0.0
    %6368 = vmatpush1.msra.mxu0 0.0
    %6369 = vmatprep.subr.mxu0 0.0
    %6370 = vmatpush1.msra.mxu0 0.0
    %6371 = vmatprep.subr.mxu0 0.0
    %6372 = vmatpush1.msra.mxu0 0.0
    %6373 = vmatprep.subr.mxu0 0.0
    %6374 = vmatpush1.msra.mxu0 0.0
    %6375 = vmatprep.mubr.f32.mxu0 0.0
    %6376 = vmatmul.mubr.f32.gmra.mrb[0].mxu0 %v6301
    %v6377 = vpop.f32.mrb[0].mxu0
    %v6378 = vadd.f32 0.0, %v6377
    %v6379 = vpop.f32.mrb[0].mxu0
    %v6380 = vadd.f32 0.0, %v6379
    %6381 = vdwg.mxu0
    %6382 = vmatprep.subr.mxu0 %v6309
    %6383 = vmatpush1.msra.mxu0 %v6307
    %6384 = vmatprep.subr.mxu0 0.0
    %6385 = vmatpush1.msra.mxu0 0.0
    %6386 = vmatprep.subr.mxu0 0.0
    %6387 = vmatpush1.msra.mxu0 0.0
    %6388 = vmatprep.subr.mxu0 0.0
    %6389 = vmatpush1.msra.mxu0 0.0
    %6390 = vmatprep.subr.mxu0 0.0
    %6391 = vmatpush1.msra.mxu0 0.0
    %6392 = vmatprep.subr.mxu0 0.0
    %6393 = vmatpush1.msra.mxu0 0.0
    %6394 = vmatprep.subr.mxu0 0.0
    %6395 = vmatpush1.msra.mxu0 0.0
    %6396 = vmatprep.subr.mxu0 0.0
    %6397 = vmatpush1.msra.mxu0 0.0
    %6398 = vmatprep.subr.mxu0 0.0
    %6399 = vmatpush1.msra.mxu0 0.0
    %6400 = vmatprep.subr.mxu0 0.0
    %6401 = vmatpush1.msra.mxu0 0.0
    %6402 = vmatprep.subr.mxu0 0.0
    %6403 = vmatpush1.msra.mxu0 0.0
    %6404 = vmatprep.subr.mxu0 0.0
    %6405 = vmatpush1.msra.mxu0 0.0
    %6406 = vmatprep.subr.mxu0 0.0
    %6407 = vmatpush1.msra.mxu0 0.0
    %6408 = vmatprep.subr.mxu0 0.0
    %6409 = vmatpush1.msra.mxu0 0.0
    %6410 = vmatprep.subr.mxu0 0.0
    %6411 = vmatpush1.msra.mxu0 0.0
    %6412 = vmatprep.subr.mxu0 0.0
    %6413 = vmatpush1.msra.mxu0 0.0
    %6414 = vmatprep.subr.mxu0 0.0
    %6415 = vmatpush1.msra.mxu0 0.0
    %6416 = vmatprep.subr.mxu0 0.0
    %6417 = vmatpush1.msra.mxu0 0.0
    %6418 = vmatprep.subr.mxu0 0.0
    %6419 = vmatpush1.msra.mxu0 0.0
    %6420 = vmatprep.subr.mxu0 0.0
    %6421 = vmatpush1.msra.mxu0 0.0
    %6422 = vmatprep.subr.mxu0 0.0
    %6423 = vmatpush1.msra.mxu0 0.0
    %6424 = vmatprep.subr.mxu0 0.0
    %6425 = vmatpush1.msra.mxu0 0.0
    %6426 = vmatprep.subr.mxu0 0.0
    %6427 = vmatpush1.msra.mxu0 0.0
    %6428 = vmatprep.subr.mxu0 0.0
    %6429 = vmatpush1.msra.mxu0 0.0
    %6430 = vmatprep.subr.mxu0 0.0
    %6431 = vmatpush1.msra.mxu0 0.0
    %6432 = vmatprep.subr.mxu0 0.0
    %6433 = vmatpush1.msra.mxu0 0.0
    %6434 = vmatprep.subr.mxu0 0.0
    %6435 = vmatpush1.msra.mxu0 0.0
    %6436 = vmatprep.subr.mxu0 0.0
    %6437 = vmatpush1.msra.mxu0 0.0
    %6438 = vmatprep.subr.mxu0 0.0
    %6439 = vmatpush1.msra.mxu0 0.0
    %6440 = vmatprep.subr.mxu0 0.0
    %6441 = vmatpush1.msra.mxu0 0.0
    %6442 = vmatprep.subr.mxu0 0.0
    %6443 = vmatpush1.msra.mxu0 0.0
    %6444 = vmatprep.subr.mxu0 0.0
    %6445 = vmatpush1.msra.mxu0 0.0
    %6446 = vmatprep.mubr.f32.mxu0 0.0
    %6447 = vmatmul.mubr.f32.gmra.mrb[0].mxu0 %v6301
    %v6448 = vpop.f32.mrb[0].mxu0
    %v6449 = vadd.f32 0.0, %v6448
    %v6450 = vpop.f32.mrb[0].mxu0
    %v6451 = vadd.f32 0.0, %v6450
    %6452 = vdwg.mxu0
    %v6453 = vadd.f32 %v6294, %v6378
    %v6454 = vadd.f32 %v6295, %v6380
    %v6455 = vadd.f32 %v6296, %v6449
    %v6456 = vadd.f32 %v6297, %v6451
    %6457 = vrot.lane.b32.xlu0 %v5490, 127
    %v6458 = vpop.permute.xlu0 %6457
    %6459 = vrot.lane.b32.xlu0 %v5494, 127
    %v6460 = vpop.permute.xlu0 %6459
    %6461 = vrot.lane.b32.xlu0 %v5491, 127
    %v6462 = vpop.permute.xlu0 %6461
    %6463 = vrot.lane.b32.xlu0 %v5495, 127
    %v6464 = vpop.permute.xlu0 %6463
    %vm6465 = vcmp.lt.s32.totalorder %v5507, 127
    %v6466 = vsel %vm6465, %v6462, %v6464
    %v6467 = vsel %vm6465, %v6460, %v6462
    %v6468 = vsel %vm6465, %v6458, %v6460
    %v6469 = vsel %vm6465, %v6464, %v6458
    %v6471 = vlaneseq
    %v6472 = vshrl.u32 %v6471, 7
    %v6473 = vsub.s32 0, %v6472
    %v6474 = vrot.slane %v81, %v6473
    %v6475 = vlaneseq
    %v6476 = vshrl.u32 %v6475, 7
    %v6477 = vsub.s32 1, %v6476
    %v6478 = vrot.slane %v81, %v6477
    %v6479 = vlaneseq
    %v6480 = vshrl.u32 %v6479, 7
    %v6481 = vsub.s32 2, %v6480
    %v6482 = vrot.slane %v81, %v6481
    %v6483 = vlaneseq
    %v6484 = vshrl.u32 %v6483, 7
    %v6485 = vsub.s32 3, %v6484
    %v6486 = vrot.slane %v81, %v6485
    %v6491 = vmul.f32 %v6468, %v6474
    %v6492 = vmul.f32 %v6467, %v6478
    %v6493 = vmul.f32 %v6466, %v6482
    %v6494 = vmul.f32 %v6469, %v6486
    %s6495 = scalar_lea.vmem %s4, 128
    %v6496 = vld [vmem:[%s6495] sm:$0xf]
    %v6498 = vsel %vm5580, %v6496, 0
    %v6501 = vsel %vm5584, %v6491, 0
    %v6504 = vsel %vm5584, %v6492, 0
    %v6507 = vsel %vm5584, %v6493, 0
    %v6510 = vsel %vm5584, %v6494, 0
    %6512 = vmatprep.subr.mxu0 %v6504
    %6513 = vmatpush1.msra.mxu0 %v6501
    %6514 = vmatprep.subr.mxu0 0.0
    %6515 = vmatpush1.msra.mxu0 0.0
    %6516 = vmatprep.subr.mxu0 0.0
    %6517 = vmatpush1.msra.mxu0 0.0
    %6518 = vmatprep.subr.mxu0 0.0
    %6519 = vmatpush1.msra.mxu0 0.0
    %6520 = vmatprep.subr.mxu0 0.0
    %6521 = vmatpush1.msra.mxu0 0.0
    %6522 = vmatprep.subr.mxu0 0.0
    %6523 = vmatpush1.msra.mxu0 0.0
    %6524 = vmatprep.subr.mxu0 0.0
    %6525 = vmatpush1.msra.mxu0 0.0
    %6526 = vmatprep.subr.mxu0 0.0
    %6527 = vmatpush1.msra.mxu0 0.0
    %6528 = vmatprep.subr.mxu0 0.0
    %6529 = vmatpush1.msra.mxu0 0.0
    %6530 = vmatprep.subr.mxu0 0.0
    %6531 = vmatpush1.msra.mxu0 0.0
    %6532 = vmatprep.subr.mxu0 0.0
    %6533 = vmatpush1.msra.mxu0 0.0
    %6534 = vmatprep.subr.mxu0 0.0
    %6535 = vmatpush1.msra.mxu0 0.0
    %6536 = vmatprep.subr.mxu0 0.0
    %6537 = vmatpush1.msra.mxu0 0.0
    %6538 = vmatprep.subr.mxu0 0.0
    %6539 = vmatpush1.msra.mxu0 0.0
    %6540 = vmatprep.subr.mxu0 0.0
    %6541 = vmatpush1.msra.mxu0 0.0
    %6542 = vmatprep.subr.mxu0 0.0
    %6543 = vmatpush1.msra.mxu0 0.0
    %6544 = vmatprep.subr.mxu0 0.0
    %6545 = vmatpush1.msra.mxu0 0.0
    %6546 = vmatprep.subr.mxu0 0.0
    %6547 = vmatpush1.msra.mxu0 0.0
    %6548 = vmatprep.subr.mxu0 0.0
    %6549 = vmatpush1.msra.mxu0 0.0
    %6550 = vmatprep.subr.mxu0 0.0
    %6551 = vmatpush1.msra.mxu0 0.0
    %6552 = vmatprep.subr.mxu0 0.0
    %6553 = vmatpush1.msra.mxu0 0.0
    %6554 = vmatprep.subr.mxu0 0.0
    %6555 = vmatpush1.msra.mxu0 0.0
    %6556 = vmatprep.subr.mxu0 0.0
    %6557 = vmatpush1.msra.mxu0 0.0
    %6558 = vmatprep.subr.mxu0 0.0
    %6559 = vmatpush1.msra.mxu0 0.0
    %6560 = vmatprep.subr.mxu0 0.0
    %6561 = vmatpush1.msra.mxu0 0.0
    %6562 = vmatprep.subr.mxu0 0.0
    %6563 = vmatpush1.msra.mxu0 0.0
    %6564 = vmatprep.subr.mxu0 0.0
    %6565 = vmatpush1.msra.mxu0 0.0
    %6566 = vmatprep.subr.mxu0 0.0
    %6567 = vmatpush1.msra.mxu0 0.0
    %6568 = vmatprep.subr.mxu0 0.0
    %6569 = vmatpush1.msra.mxu0 0.0
    %6570 = vmatprep.subr.mxu0 0.0
    %6571 = vmatpush1.msra.mxu0 0.0
    %6572 = vmatprep.subr.mxu0 0.0
    %6573 = vmatpush1.msra.mxu0 0.0
    %6574 = vmatprep.subr.mxu0 0.0
    %6575 = vmatpush1.msra.mxu0 0.0
    %6576 = vmatprep.mubr.f32.mxu0 0.0
    %6577 = vmatmul.mubr.f32.gmra.mrb[0].mxu0 %v6498
    %v6578 = vpop.f32.mrb[0].mxu0
    %v6579 = vadd.f32 0.0, %v6578
    %v6580 = vpop.f32.mrb[0].mxu0
    %v6581 = vadd.f32 0.0, %v6580
    %6582 = vdwg.mxu0
    %6583 = vmatprep.subr.mxu0 %v6510
    %6584 = vmatpush1.msra.mxu0 %v6507
    %6585 = vmatprep.subr.mxu0 0.0
    %6586 = vmatpush1.msra.mxu0 0.0
    %6587 = vmatprep.subr.mxu0 0.0
    %6588 = vmatpush1.msra.mxu0 0.0
    %6589 = vmatprep.subr.mxu0 0.0
    %6590 = vmatpush1.msra.mxu0 0.0
    %6591 = vmatprep.subr.mxu0 0.0
    %6592 = vmatpush1.msra.mxu0 0.0
    %6593 = vmatprep.subr.mxu0 0.0
    %6594 = vmatpush1.msra.mxu0 0.0
    %6595 = vmatprep.subr.mxu0 0.0
    %6596 = vmatpush1.msra.mxu0 0.0
    %6597 = vmatprep.subr.mxu0 0.0
    %6598 = vmatpush1.msra.mxu0 0.0
    %6599 = vmatprep.subr.mxu0 0.0
    %6600 = vmatpush1.msra.mxu0 0.0
    %6601 = vmatprep.subr.mxu0 0.0
    %6602 = vmatpush1.msra.mxu0 0.0
    %6603 = vmatprep.subr.mxu0 0.0
    %6604 = vmatpush1.msra.mxu0 0.0
    %6605 = vmatprep.subr.mxu0 0.0
    %6606 = vmatpush1.msra.mxu0 0.0
    %6607 = vmatprep.subr.mxu0 0.0
    %6608 = vmatpush1.msra.mxu0 0.0
    %6609 = vmatprep.subr.mxu0 0.0
    %6610 = vmatpush1.msra.mxu0 0.0
    %6611 = vmatprep.subr.mxu0 0.0
    %6612 = vmatpush1.msra.mxu0 0.0
    %6613 = vmatprep.subr.mxu0 0.0
    %6614 = vmatpush1.msra.mxu0 0.0
    %6615 = vmatprep.subr.mxu0 0.0
    %6616 = vmatpush1.msra.mxu0 0.0
    %6617 = vmatprep.subr.mxu0 0.0
    %6618 = vmatpush1.msra.mxu0 0.0
    %6619 = vmatprep.subr.mxu0 0.0
    %6620 = vmatpush1.msra.mxu0 0.0
    %6621 = vmatprep.subr.mxu0 0.0
    %6622 = vmatpush1.msra.mxu0 0.0
    %6623 = vmatprep.subr.mxu0 0.0
    %6624 = vmatpush1.msra.mxu0 0.0
    %6625 = vmatprep.subr.mxu0 0.0
    %6626 = vmatpush1.msra.mxu0 0.0
    %6627 = vmatprep.subr.mxu0 0.0
    %6628 = vmatpush1.msra.mxu0 0.0
    %6629 = vmatprep.subr.mxu0 0.0
    %6630 = vmatpush1.msra.mxu0 0.0
    %6631 = vmatprep.subr.mxu0 0.0
    %6632 = vmatpush1.msra.mxu0 0.0
    %6633 = vmatprep.subr.mxu0 0.0
    %6634 = vmatpush1.msra.mxu0 0.0
    %6635 = vmatprep.subr.mxu0 0.0
    %6636 = vmatpush1.msra.mxu0 0.0
    %6637 = vmatprep.subr.mxu0 0.0
    %6638 = vmatpush1.msra.mxu0 0.0
    %6639 = vmatprep.subr.mxu0 0.0
    %6640 = vmatpush1.msra.mxu0 0.0
    %6641 = vmatprep.subr.mxu0 0.0
    %6642 = vmatpush1.msra.mxu0 0.0
    %6643 = vmatprep.subr.mxu0 0.0
    %6644 = vmatpush1.msra.mxu0 0.0
    %6645 = vmatprep.subr.mxu0 0.0
    %6646 = vmatpush1.msra.mxu0 0.0
    %6647 = vmatprep.mubr.f32.mxu0 0.0
    %6648 = vmatmul.mubr.f32.gmra.mrb[0].mxu0 %v6498
    %v6649 = vpop.f32.mrb[0].mxu0
    %v6650 = vadd.f32 0.0, %v6649
    %v6651 = vpop.f32.mrb[0].mxu0
    %v6652 = vadd.f32 0.0, %v6651
    %6653 = vdwg.mxu0
    %v6654 = vadd.f32 %v6453, %v6579
    %v6655 = vadd.f32 %v6454, %v6581
    %v6656 = vadd.f32 %v6455, %v6650
    %v6657 = vadd.f32 %v6456, %v6652
    %6658 = vrot.lane.b32.xlu0 %v5490, 113
    %v6659 = vpop.permute.xlu0 %6658
    %6660 = vrot.lane.b32.xlu0 %v5494, 113
    %v6661 = vpop.permute.xlu0 %6660
    %6662 = vrot.lane.b32.xlu0 %v5491, 113
    %v6663 = vpop.permute.xlu0 %6662
    %6664 = vrot.lane.b32.xlu0 %v5495, 113
    %v6665 = vpop.permute.xlu0 %6664
    %vm6666 = vcmp.lt.s32.totalorder %v5507, 113
    %v6667 = vsel %vm6666, %v6663, %v6665
    %v6668 = vsel %vm6666, %v6661, %v6663
    %v6669 = vsel %vm6666, %v6659, %v6661
    %v6670 = vsel %vm6666, %v6665, %v6659
    %v6672 = vlaneseq
    %v6673 = vshrl.u32 %v6672, 7
    %v6674 = vsub.s32 0, %v6673
    %v6675 = vrot.slane %v83, %v6674
    %v6676 = vlaneseq
    %v6677 = vshrl.u32 %v6676, 7
    %v6678 = vsub.s32 1, %v6677
    %v6679 = vrot.slane %v83, %v6678
    %v6680 = vlaneseq
    %v6681 = vshrl.u32 %v6680, 7
    %v6682 = vsub.s32 2, %v6681
    %v6683 = vrot.slane %v83, %v6682
    %v6684 = vlaneseq
    %v6685 = vshrl.u32 %v6684, 7
    %v6686 = vsub.s32 3, %v6685
    %v6687 = vrot.slane %v83, %v6686
    %v6692 = vmul.f32 %v6669, %v6675
    %v6693 = vmul.f32 %v6668, %v6679
    %v6694 = vmul.f32 %v6667, %v6683
    %v6695 = vmul.f32 %v6670, %v6687
    %s6696 = scalar_lea.vmem %s4, 132
    %v6697 = vld [vmem:[%s6696] sm:$0xf]
    %v6699 = vsel %vm5580, %v6697, 0
    %v6702 = vsel %vm5584, %v6692, 0
    %v6705 = vsel %vm5584, %v6693, 0
    %v6708 = vsel %vm5584, %v6694, 0
    %v6711 = vsel %vm5584, %v6695, 0
    %6713 = vmatprep.subr.mxu0 %v6705
    %6714 = vmatpush1.msra.mxu0 %v6702
    %6715 = vmatprep.subr.mxu0 0.0
    %6716 = vmatpush1.msra.mxu0 0.0
    %6717 = vmatprep.subr.mxu0 0.0
    %6718 = vmatpush1.msra.mxu0 0.0
    %6719 = vmatprep.subr.mxu0 0.0
    %6720 = vmatpush1.msra.mxu0 0.0
    %6721 = vmatprep.subr.mxu0 0.0
    %6722 = vmatpush1.msra.mxu0 0.0
    %6723 = vmatprep.subr.mxu0 0.0
    %6724 = vmatpush1.msra.mxu0 0.0
    %6725 = vmatprep.subr.mxu0 0.0
    %6726 = vmatpush1.msra.mxu0 0.0
    %6727 = vmatprep.subr.mxu0 0.0
    %6728 = vmatpush1.msra.mxu0 0.0
    %6729 = vmatprep.subr.mxu0 0.0
    %6730 = vmatpush1.msra.mxu0 0.0
    %6731 = vmatprep.subr.mxu0 0.0
    %6732 = vmatpush1.msra.mxu0 0.0
    %6733 = vmatprep.subr.mxu0 0.0
    %6734 = vmatpush1.msra.mxu0 0.0
    %6735 = vmatprep.subr.mxu0 0.0
    %6736 = vmatpush1.msra.mxu0 0.0
    %6737 = vmatprep.subr.mxu0 0.0
    %6738 = vmatpush1.msra.mxu0 0.0
    %6739 = vmatprep.subr.mxu0 0.0
    %6740 = vmatpush1.msra.mxu0 0.0
    %6741 = vmatprep.subr.mxu0 0.0
    %6742 = vmatpush1.msra.mxu0 0.0
    %6743 = vmatprep.subr.mxu0 0.0
    %6744 = vmatpush1.msra.mxu0 0.0
    %6745 = vmatprep.subr.mxu0 0.0
    %6746 = vmatpush1.msra.mxu0 0.0
    %6747 = vmatprep.subr.mxu0 0.0
    %6748 = vmatpush1.msra.mxu0 0.0
    %6749 = vmatprep.subr.mxu0 0.0
    %6750 = vmatpush1.msra.mxu0 0.0
    %6751 = vmatprep.subr.mxu0 0.0
    %6752 = vmatpush1.msra.mxu0 0.0
    %6753 = vmatprep.subr.mxu0 0.0
    %6754 = vmatpush1.msra.mxu0 0.0
    %6755 = vmatprep.subr.mxu0 0.0
    %6756 = vmatpush1.msra.mxu0 0.0
    %6757 = vmatprep.subr.mxu0 0.0
    %6758 = vmatpush1.msra.mxu0 0.0
    %6759 = vmatprep.subr.mxu0 0.0
    %6760 = vmatpush1.msra.mxu0 0.0
    %6761 = vmatprep.subr.mxu0 0.0
    %6762 = vmatpush1.msra.mxu0 0.0
    %6763 = vmatprep.subr.mxu0 0.0
    %6764 = vmatpush1.msra.mxu0 0.0
    %6765 = vmatprep.subr.mxu0 0.0
    %6766 = vmatpush1.msra.mxu0 0.0
    %6767 = vmatprep.subr.mxu0 0.0
    %6768 = vmatpush1.msra.mxu0 0.0
    %6769 = vmatprep.subr.mxu0 0.0
    %6770 = vmatpush1.msra.mxu0 0.0
    %6771 = vmatprep.subr.mxu0 0.0
    %6772 = vmatpush1.msra.mxu0 0.0
    %6773 = vmatprep.subr.mxu0 0.0
    %6774 = vmatpush1.msra.mxu0 0.0
    %6775 = vmatprep.subr.mxu0 0.0
    %6776 = vmatpush1.msra.mxu0 0.0
    %6777 = vmatprep.mubr.f32.mxu0 0.0
    %6778 = vmatmul.mubr.f32.gmra.mrb[0].mxu0 %v6699
    %v6779 = vpop.f32.mrb[0].mxu0
    %v6780 = vadd.f32 0.0, %v6779
    %v6781 = vpop.f32.mrb[0].mxu0
    %v6782 = vadd.f32 0.0, %v6781
    %6783 = vdwg.mxu0
    %6784 = vmatprep.subr.mxu0 %v6711
    %6785 = vmatpush1.msra.mxu0 %v6708
    %6786 = vmatprep.subr.mxu0 0.0
    %6787 = vmatpush1.msra.mxu0 0.0
    %6788 = vmatprep.subr.mxu0 0.0
    %6789 = vmatpush1.msra.mxu0 0.0
    %6790 = vmatprep.subr.mxu0 0.0
    %6791 = vmatpush1.msra.mxu0 0.0
    %6792 = vmatprep.subr.mxu0 0.0
    %6793 = vmatpush1.msra.mxu0 0.0
    %6794 = vmatprep.subr.mxu0 0.0
    %6795 = vmatpush1.msra.mxu0 0.0
    %6796 = vmatprep.subr.mxu0 0.0
    %6797 = vmatpush1.msra.mxu0 0.0
    %6798 = vmatprep.subr.mxu0 0.0
    %6799 = vmatpush1.msra.mxu0 0.0
    %6800 = vmatprep.subr.mxu0 0.0
    %6801 = vmatpush1.msra.mxu0 0.0
    %6802 = vmatprep.subr.mxu0 0.0
    %6803 = vmatpush1.msra.mxu0 0.0
    %6804 = vmatprep.subr.mxu0 0.0
    %6805 = vmatpush1.msra.mxu0 0.0
    %6806 = vmatprep.subr.mxu0 0.0
    %6807 = vmatpush1.msra.mxu0 0.0
    %6808 = vmatprep.subr.mxu0 0.0
    %6809 = vmatpush1.msra.mxu0 0.0
    %6810 = vmatprep.subr.mxu0 0.0
    %6811 = vmatpush1.msra.mxu0 0.0
    %6812 = vmatprep.subr.mxu0 0.0
    %6813 = vmatpush1.msra.mxu0 0.0
    %6814 = vmatprep.subr.mxu0 0.0
    %6815 = vmatpush1.msra.mxu0 0.0
    %6816 = vmatprep.subr.mxu0 0.0
    %6817 = vmatpush1.msra.mxu0 0.0
    %6818 = vmatprep.subr.mxu0 0.0
    %6819 = vmatpush1.msra.mxu0 0.0
    %6820 = vmatprep.subr.mxu0 0.0
    %6821 = vmatpush1.msra.mxu0 0.0
    %6822 = vmatprep.subr.mxu0 0.0
    %6823 = vmatpush1.msra.mxu0 0.0
    %6824 = vmatprep.subr.mxu0 0.0
    %6825 = vmatpush1.msra.mxu0 0.0
    %6826 = vmatprep.subr.mxu0 0.0
    %6827 = vmatpush1.msra.mxu0 0.0
    %6828 = vmatprep.subr.mxu0 0.0
    %6829 = vmatpush1.msra.mxu0 0.0
    %6830 = vmatprep.subr.mxu0 0.0
    %6831 = vmatpush1.msra.mxu0 0.0
    %6832 = vmatprep.subr.mxu0 0.0
    %6833 = vmatpush1.msra.mxu0 0.0
    %6834 = vmatprep.subr.mxu0 0.0
    %6835 = vmatpush1.msra.mxu0 0.0
    %6836 = vmatprep.subr.mxu0 0.0
    %6837 = vmatpush1.msra.mxu0 0.0
    %6838 = vmatprep.subr.mxu0 0.0
    %6839 = vmatpush1.msra.mxu0 0.0
    %6840 = vmatprep.subr.mxu0 0.0
    %6841 = vmatpush1.msra.mxu0 0.0
    %6842 = vmatprep.subr.mxu0 0.0
    %6843 = vmatpush1.msra.mxu0 0.0
    %6844 = vmatprep.subr.mxu0 0.0
    %6845 = vmatpush1.msra.mxu0 0.0
    %6846 = vmatprep.subr.mxu0 0.0
    %6847 = vmatpush1.msra.mxu0 0.0
    %6848 = vmatprep.mubr.f32.mxu0 0.0
    %6849 = vmatmul.mubr.f32.gmra.mrb[0].mxu0 %v6699
    %v6850 = vpop.f32.mrb[0].mxu0
    %v6851 = vadd.f32 0.0, %v6850
    %v6852 = vpop.f32.mrb[0].mxu0
    %v6853 = vadd.f32 0.0, %v6852
    %6854 = vdwg.mxu0
    %v6855 = vadd.f32 %v6654, %v6780
    %v6856 = vadd.f32 %v6655, %v6782
    %v6857 = vadd.f32 %v6656, %v6851
    %v6858 = vadd.f32 %v6657, %v6853
    %6859 = vrot.lane.b32.xlu0 %v5490, 112
    %v6860 = vpop.permute.xlu0 %6859
    %6861 = vrot.lane.b32.xlu0 %v5494, 112
    %v6862 = vpop.permute.xlu0 %6861
    %6863 = vrot.lane.b32.xlu0 %v5491, 112
    %v6864 = vpop.permute.xlu0 %6863
    %6865 = vrot.lane.b32.xlu0 %v5495, 112
    %v6866 = vpop.permute.xlu0 %6865
    %vm6867 = vcmp.lt.s32.totalorder %v5507, 112
    %v6868 = vsel %vm6867, %v6864, %v6866
    %v6869 = vsel %vm6867, %v6862, %v6864
    %v6870 = vsel %vm6867, %v6860, %v6862
    %v6871 = vsel %vm6867, %v6866, %v6860
    %v6873 = vlaneseq
    %v6874 = vshrl.u32 %v6873, 7
    %v6875 = vsub.s32 0, %v6874
    %v6876 = vrot.slane %v85, %v6875
    %v6877 = vlaneseq
    %v6878 = vshrl.u32 %v6877, 7
    %v6879 = vsub.s32 1, %v6878
    %v6880 = vrot.slane %v85, %v6879
    %v6881 = vlaneseq
    %v6882 = vshrl.u32 %v6881, 7
    %v6883 = vsub.s32 2, %v6882
    %v6884 = vrot.slane %v85, %v6883
    %v6885 = vlaneseq
    %v6886 = vshrl.u32 %v6885, 7
    %v6887 = vsub.s32 3, %v6886
    %v6888 = vrot.slane %v85, %v6887
    %v6893 = vmul.f32 %v6870, %v6876
    %v6894 = vmul.f32 %v6869, %v6880
    %v6895 = vmul.f32 %v6868, %v6884
    %v6896 = vmul.f32 %v6871, %v6888
    %s6897 = scalar_lea.vmem %s4, 136
    %v6898 = vld [vmem:[%s6897] sm:$0xf]
    %v6900 = vsel %vm5580, %v6898, 0
    %v6903 = vsel %vm5584, %v6893, 0
    %v6906 = vsel %vm5584, %v6894, 0
    %v6909 = vsel %vm5584, %v6895, 0
    %v6912 = vsel %vm5584, %v6896, 0
    %6914 = vmatprep.subr.mxu0 %v6906
    %6915 = vmatpush1.msra.mxu0 %v6903
    %6916 = vmatprep.subr.mxu0 0.0
    %6917 = vmatpush1.msra.mxu0 0.0
    %6918 = vmatprep.subr.mxu0 0.0
    %6919 = vmatpush1.msra.mxu0 0.0
    %6920 = vmatprep.subr.mxu0 0.0
    %6921 = vmatpush1.msra.mxu0 0.0
    %6922 = vmatprep.subr.mxu0 0.0
    %6923 = vmatpush1.msra.mxu0 0.0
    %6924 = vmatprep.subr.mxu0 0.0
    %6925 = vmatpush1.msra.mxu0 0.0
    %6926 = vmatprep.subr.mxu0 0.0
    %6927 = vmatpush1.msra.mxu0 0.0
    %6928 = vmatprep.subr.mxu0 0.0
    %6929 = vmatpush1.msra.mxu0 0.0
    %6930 = vmatprep.subr.mxu0 0.0
    %6931 = vmatpush1.msra.mxu0 0.0
    %6932 = vmatprep.subr.mxu0 0.0
    %6933 = vmatpush1.msra.mxu0 0.0
    %6934 = vmatprep.subr.mxu0 0.0
    %6935 = vmatpush1.msra.mxu0 0.0
    %6936 = vmatprep.subr.mxu0 0.0
    %6937 = vmatpush1.msra.mxu0 0.0
    %6938 = vmatprep.subr.mxu0 0.0
    %6939 = vmatpush1.msra.mxu0 0.0
    %6940 = vmatprep.subr.mxu0 0.0
    %6941 = vmatpush1.msra.mxu0 0.0
    %6942 = vmatprep.subr.mxu0 0.0
    %6943 = vmatpush1.msra.mxu0 0.0
    %6944 = vmatprep.subr.mxu0 0.0
    %6945 = vmatpush1.msra.mxu0 0.0
    %6946 = vmatprep.subr.mxu0 0.0
    %6947 = vmatpush1.msra.mxu0 0.0
    %6948 = vmatprep.subr.mxu0 0.0
    %6949 = vmatpush1.msra.mxu0 0.0
    %6950 = vmatprep.subr.mxu0 0.0
    %6951 = vmatpush1.msra.mxu0 0.0
    %6952 = vmatprep.subr.mxu0 0.0
    %6953 = vmatpush1.msra.mxu0 0.0
    %6954 = vmatprep.subr.mxu0 0.0
    %6955 = vmatpush1.msra.mxu0 0.0
    %6956 = vmatprep.subr.mxu0 0.0
    %6957 = vmatpush1.msra.mxu0 0.0
    %6958 = vmatprep.subr.mxu0 0.0
    %6959 = vmatpush1.msra.mxu0 0.0
    %6960 = vmatprep.subr.mxu0 0.0
    %6961 = vmatpush1.msra.mxu0 0.0
    %6962 = vmatprep.subr.mxu0 0.0
    %6963 = vmatpush1.msra.mxu0 0.0
    %6964 = vmatprep.subr.mxu0 0.0
    %6965 = vmatpush1.msra.mxu0 0.0
    %6966 = vmatprep.subr.mxu0 0.0
    %6967 = vmatpush1.msra.mxu0 0.0
    %6968 = vmatprep.subr.mxu0 0.0
    %6969 = vmatpush1.msra.mxu0 0.0
    %6970 = vmatprep.subr.mxu0 0.0
    %6971 = vmatpush1.msra.mxu0 0.0
    %6972 = vmatprep.subr.mxu0 0.0
    %6973 = vmatpush1.msra.mxu0 0.0
    %6974 = vmatprep.subr.mxu0 0.0
    %6975 = vmatpush1.msra.mxu0 0.0
    %6976 = vmatprep.subr.mxu0 0.0
    %6977 = vmatpush1.msra.mxu0 0.0
    %6978 = vmatprep.mubr.f32.mxu0 0.0
    %6979 = vmatmul.mubr.f32.gmra.mrb[0].mxu0 %v6900
    %v6980 = vpop.f32.mrb[0].mxu0
    %v6981 = vadd.f32 0.0, %v6980
    %v6982 = vpop.f32.mrb[0].mxu0
    %v6983 = vadd.f32 0.0, %v6982
    %6984 = vdwg.mxu0
    %6985 = vmatprep.subr.mxu0 %v6912
    %6986 = vmatpush1.msra.mxu0 %v6909
    %6987 = vmatprep.subr.mxu0 0.0
    %6988 = vmatpush1.msra.mxu0 0.0
    %6989 = vmatprep.subr.mxu0 0.0
    %6990 = vmatpush1.msra.mxu0 0.0
    %6991 = vmatprep.subr.mxu0 0.0
    %6992 = vmatpush1.msra.mxu0 0.0
    %6993 = vmatprep.subr.mxu0 0.0
    %6994 = vmatpush1.msra.mxu0 0.0
    %6995 = vmatprep.subr.mxu0 0.0
    %6996 = vmatpush1.msra.mxu0 0.0
    %6997 = vmatprep.subr.mxu0 0.0
    %6998 = vmatpush1.msra.mxu0 0.0
    %6999 = vmatprep.subr.mxu0 0.0
    %7000 = vmatpush1.msra.mxu0 0.0
    %7001 = vmatprep.subr.mxu0 0.0
    %7002 = vmatpush1.msra.mxu0 0.0
    %7003 = vmatprep.subr.mxu0 0.0
    %7004 = vmatpush1.msra.mxu0 0.0
    %7005 = vmatprep.subr.mxu0 0.0
    %7006 = vmatpush1.msra.mxu0 0.0
    %7007 = vmatprep.subr.mxu0 0.0
    %7008 = vmatpush1.msra.mxu0 0.0
    %7009 = vmatprep.subr.mxu0 0.0
    %7010 = vmatpush1.msra.mxu0 0.0
    %7011 = vmatprep.subr.mxu0 0.0
    %7012 = vmatpush1.msra.mxu0 0.0
    %7013 = vmatprep.subr.mxu0 0.0
    %7014 = vmatpush1.msra.mxu0 0.0
    %7015 = vmatprep.subr.mxu0 0.0
    %7016 = vmatpush1.msra.mxu0 0.0
    %7017 = vmatprep.subr.mxu0 0.0
    %7018 = vmatpush1.msra.mxu0 0.0
    %7019 = vmatprep.subr.mxu0 0.0
    %7020 = vmatpush1.msra.mxu0 0.0
    %7021 = vmatprep.subr.mxu0 0.0
    %7022 = vmatpush1.msra.mxu0 0.0
    %7023 = vmatprep.subr.mxu0 0.0
    %7024 = vmatpush1.msra.mxu0 0.0
    %7025 = vmatprep.subr.mxu0 0.0
    %7026 = vmatpush1.msra.mxu0 0.0
    %7027 = vmatprep.subr.mxu0 0.0
    %7028 = vmatpush1.msra.mxu0 0.0
    %7029 = vmatprep.subr.mxu0 0.0
    %7030 = vmatpush1.msra.mxu0 0.0
    %7031 = vmatprep.subr.mxu0 0.0
    %7032 = vmatpush1.msra.mxu0 0.0
    %7033 = vmatprep.subr.mxu0 0.0
    %7034 = vmatpush1.msra.mxu0 0.0
    %7035 = vmatprep.subr.mxu0 0.0
    %7036 = vmatpush1.msra.mxu0 0.0
    %7037 = vmatprep.subr.mxu0 0.0
    %7038 = vmatpush1.msra.mxu0 0.0
    %7039 = vmatprep.subr.mxu0 0.0
    %7040 = vmatpush1.msra.mxu0 0.0
    %7041 = vmatprep.subr.mxu0 0.0
    %7042 = vmatpush1.msra.mxu0 0.0
    %7043 = vmatprep.subr.mxu0 0.0
    %7044 = vmatpush1.msra.mxu0 0.0
    %7045 = vmatprep.subr.mxu0 0.0
    %7046 = vmatpush1.msra.mxu0 0.0
    %7047 = vmatprep.subr.mxu0 0.0
    %7048 = vmatpush1.msra.mxu0 0.0
    %7049 = vmatprep.mubr.f32.mxu0 0.0
    %7050 = vmatmul.mubr.f32.gmra.mrb[0].mxu0 %v6900
    %v7051 = vpop.f32.mrb[0].mxu0
    %v7052 = vadd.f32 0.0, %v7051
    %v7053 = vpop.f32.mrb[0].mxu0
    %v7054 = vadd.f32 0.0, %v7053
    %7055 = vdwg.mxu0
    %v7056 = vadd.f32 %v6855, %v6981
    %v7057 = vadd.f32 %v6856, %v6983
    %v7058 = vadd.f32 %v6857, %v7052
    %v7059 = vadd.f32 %v6858, %v7054
    %7060 = vrot.lane.b32.xlu0 %v5490, 111
    %v7061 = vpop.permute.xlu0 %7060
    %7062 = vrot.lane.b32.xlu0 %v5494, 111
    %v7063 = vpop.permute.xlu0 %7062
    %7064 = vrot.lane.b32.xlu0 %v5491, 111
    %v7065 = vpop.permute.xlu0 %7064
    %7066 = vrot.lane.b32.xlu0 %v5495, 111
    %v7067 = vpop.permute.xlu0 %7066
    %vm7068 = vcmp.lt.s32.totalorder %v5507, 111
    %v7069 = vsel %vm7068, %v7065, %v7067
    %v7070 = vsel %vm7068, %v7063, %v7065
    %v7071 = vsel %vm7068, %v7061, %v7063
    %v7072 = vsel %vm7068, %v7067, %v7061
    %v7074 = vlaneseq
    %v7075 = vshrl.u32 %v7074, 7
    %v7076 = vsub.s32 0, %v7075
    %v7077 = vrot.slane %v87, %v7076
    %v7078 = vlaneseq
    %v7079 = vshrl.u32 %v7078, 7
    %v7080 = vsub.s32 1, %v7079
    %v7081 = vrot.slane %v87, %v7080
    %v7082 = vlaneseq
    %v7083 = vshrl.u32 %v7082, 7
    %v7084 = vsub.s32 2, %v7083
    %v7085 = vrot.slane %v87, %v7084
    %v7086 = vlaneseq
    %v7087 = vshrl.u32 %v7086, 7
    %v7088 = vsub.s32 3, %v7087
    %v7089 = vrot.slane %v87, %v7088
    %v7094 = vmul.f32 %v7071, %v7077
    %v7095 = vmul.f32 %v7070, %v7081
    %v7096 = vmul.f32 %v7069, %v7085
    %v7097 = vmul.f32 %v7072, %v7089
    %s7098 = scalar_lea.vmem %s4, 140
    %v7099 = vld [vmem:[%s7098] sm:$0xf]
    %v7101 = vsel %vm5580, %v7099, 0
    %v7104 = vsel %vm5584, %v7094, 0
    %v7107 = vsel %vm5584, %v7095, 0
    %v7110 = vsel %vm5584, %v7096, 0
    %v7113 = vsel %vm5584, %v7097, 0
    %7115 = vmatprep.subr.mxu0 %v7107
    %7116 = vmatpush1.msra.mxu0 %v7104
    %7117 = vmatprep.subr.mxu0 0.0
    %7118 = vmatpush1.msra.mxu0 0.0
    %7119 = vmatprep.subr.mxu0 0.0
    %7120 = vmatpush1.msra.mxu0 0.0
    %7121 = vmatprep.subr.mxu0 0.0
    %7122 = vmatpush1.msra.mxu0 0.0
    %7123 = vmatprep.subr.mxu0 0.0
    %7124 = vmatpush1.msra.mxu0 0.0
    %7125 = vmatprep.subr.mxu0 0.0
    %7126 = vmatpush1.msra.mxu0 0.0
    %7127 = vmatprep.subr.mxu0 0.0
    %7128 = vmatpush1.msra.mxu0 0.0
    %7129 = vmatprep.subr.mxu0 0.0
    %7130 = vmatpush1.msra.mxu0 0.0
    %7131 = vmatprep.subr.mxu0 0.0
    %7132 = vmatpush1.msra.mxu0 0.0
    %7133 = vmatprep.subr.mxu0 0.0
    %7134 = vmatpush1.msra.mxu0 0.0
    %7135 = vmatprep.subr.mxu0 0.0
    %7136 = vmatpush1.msra.mxu0 0.0
    %7137 = vmatprep.subr.mxu0 0.0
    %7138 = vmatpush1.msra.mxu0 0.0
    %7139 = vmatprep.subr.mxu0 0.0
    %7140 = vmatpush1.msra.mxu0 0.0
    %7141 = vmatprep.subr.mxu0 0.0
    %7142 = vmatpush1.msra.mxu0 0.0
    %7143 = vmatprep.subr.mxu0 0.0
    %7144 = vmatpush1.msra.mxu0 0.0
    %7145 = vmatprep.subr.mxu0 0.0
    %7146 = vmatpush1.msra.mxu0 0.0
    %7147 = vmatprep.subr.mxu0 0.0
    %7148 = vmatpush1.msra.mxu0 0.0
    %7149 = vmatprep.subr.mxu0 0.0
    %7150 = vmatpush1.msra.mxu0 0.0
    %7151 = vmatprep.subr.mxu0 0.0
    %7152 = vmatpush1.msra.mxu0 0.0
    %7153 = vmatprep.subr.mxu0 0.0
    %7154 = vmatpush1.msra.mxu0 0.0
    %7155 = vmatprep.subr.mxu0 0.0
    %7156 = vmatpush1.msra.mxu0 0.0
    %7157 = vmatprep.subr.mxu0 0.0
    %7158 = vmatpush1.msra.mxu0 0.0
    %7159 = vmatprep.subr.mxu0 0.0
    %7160 = vmatpush1.msra.mxu0 0.0
    %7161 = vmatprep.subr.mxu0 0.0
    %7162 = vmatpush1.msra.mxu0 0.0
    %7163 = vmatprep.subr.mxu0 0.0
    %7164 = vmatpush1.msra.mxu0 0.0
    %7165 = vmatprep.subr.mxu0 0.0
    %7166 = vmatpush1.msra.mxu0 0.0
    %7167 = vmatprep.subr.mxu0 0.0
    %7168 = vmatpush1.msra.mxu0 0.0
    %7169 = vmatprep.subr.mxu0 0.0
    %7170 = vmatpush1.msra.mxu0 0.0
    %7171 = vmatprep.subr.mxu0 0.0
    %7172 = vmatpush1.msra.mxu0 0.0
    %7173 = vmatprep.subr.mxu0 0.0
    %7174 = vmatpush1.msra.mxu0 0.0
    %7175 = vmatprep.subr.mxu0 0.0
    %7176 = vmatpush1.msra.mxu0 0.0
    %7177 = vmatprep.subr.mxu0 0.0
    %7178 = vmatpush1.msra.mxu0 0.0
    %7179 = vmatprep.mubr.f32.mxu0 0.0
    %7180 = vmatmul.mubr.f32.gmra.mrb[0].mxu0 %v7101
    %v7181 = vpop.f32.mrb[0].mxu0
    %v7182 = vadd.f32 0.0, %v7181
    %v7183 = vpop.f32.mrb[0].mxu0
    %v7184 = vadd.f32 0.0, %v7183
    %7185 = vdwg.mxu0
    %7186 = vmatprep.subr.mxu0 %v7113
    %7187 = vmatpush1.msra.mxu0 %v7110
    %7188 = vmatprep.subr.mxu0 0.0
    %7189 = vmatpush1.msra.mxu0 0.0
    %7190 = vmatprep.subr.mxu0 0.0
    %7191 = vmatpush1.msra.mxu0 0.0
    %7192 = vmatprep.subr.mxu0 0.0
    %7193 = vmatpush1.msra.mxu0 0.0
    %7194 = vmatprep.subr.mxu0 0.0
    %7195 = vmatpush1.msra.mxu0 0.0
    %7196 = vmatprep.subr.mxu0 0.0
    %7197 = vmatpush1.msra.mxu0 0.0
    %7198 = vmatprep.subr.mxu0 0.0
    %7199 = vmatpush1.msra.mxu0 0.0
    %7200 = vmatprep.subr.mxu0 0.0
    %7201 = vmatpush1.msra.mxu0 0.0
    %7202 = vmatprep.subr.mxu0 0.0
    %7203 = vmatpush1.msra.mxu0 0.0
    %7204 = vmatprep.subr.mxu0 0.0
    %7205 = vmatpush1.msra.mxu0 0.0
    %7206 = vmatprep.subr.mxu0 0.0
    %7207 = vmatpush1.msra.mxu0 0.0
    %7208 = vmatprep.subr.mxu0 0.0
    %7209 = vmatpush1.msra.mxu0 0.0
    %7210 = vmatprep.subr.mxu0 0.0
    %7211 = vmatpush1.msra.mxu0 0.0
    %7212 = vmatprep.subr.mxu0 0.0
    %7213 = vmatpush1.msra.mxu0 0.0
    %7214 = vmatprep.subr.mxu0 0.0
    %7215 = vmatpush1.msra.mxu0 0.0
    %7216 = vmatprep.subr.mxu0 0.0
    %7217 = vmatpush1.msra.mxu0 0.0
    %7218 = vmatprep.subr.mxu0 0.0
    %7219 = vmatpush1.msra.mxu0 0.0
    %7220 = vmatprep.subr.mxu0 0.0
    %7221 = vmatpush1.msra.mxu0 0.0
    %7222 = vmatprep.subr.mxu0 0.0
    %7223 = vmatpush1.msra.mxu0 0.0
    %7224 = vmatprep.subr.mxu0 0.0
    %7225 = vmatpush1.msra.mxu0 0.0
    %7226 = vmatprep.subr.mxu0 0.0
    %7227 = vmatpush1.msra.mxu0 0.0
    %7228 = vmatprep.subr.mxu0 0.0
    %7229 = vmatpush1.msra.mxu0 0.0
    %7230 = vmatprep.subr.mxu0 0.0
    %7231 = vmatpush1.msra.mxu0 0.0
    %7232 = vmatprep.subr.mxu0 0.0
    %7233 = vmatpush1.msra.mxu0 0.0
    %7234 = vmatprep.subr.mxu0 0.0
    %7235 = vmatpush1.msra.mxu0 0.0
    %7236 = vmatprep.subr.mxu0 0.0
    %7237 = vmatpush1.msra.mxu0 0.0
    %7238 = vmatprep.subr.mxu0 0.0
    %7239 = vmatpush1.msra.mxu0 0.0
    %7240 = vmatprep.subr.mxu0 0.0
    %7241 = vmatpush1.msra.mxu0 0.0
    %7242 = vmatprep.subr.mxu0 0.0
    %7243 = vmatpush1.msra.mxu0 0.0
    %7244 = vmatprep.subr.mxu0 0.0
    %7245 = vmatpush1.msra.mxu0 0.0
    %7246 = vmatprep.subr.mxu0 0.0
    %7247 = vmatpush1.msra.mxu0 0.0
    %7248 = vmatprep.subr.mxu0 0.0
    %7249 = vmatpush1.msra.mxu0 0.0
    %7250 = vmatprep.mubr.f32.mxu0 0.0
    %7251 = vmatmul.mubr.f32.gmra.mrb[0].mxu0 %v7101
    %v7252 = vpop.f32.mrb[0].mxu0
    %v7253 = vadd.f32 0.0, %v7252
    %v7254 = vpop.f32.mrb[0].mxu0
    %v7255 = vadd.f32 0.0, %v7254
    %7256 = vdwg.mxu0
    %v7257 = vadd.f32 %v7056, %v7182
    %v7258 = vadd.f32 %v7057, %v7184
    %v7259 = vadd.f32 %v7058, %v7253
    %v7260 = vadd.f32 %v7059, %v7255
    %s7261 = scalar_lea.vmem %s5, 12
    %v7262 = vld [vmem:[%s7261] sm:$0xf]
    %7264 = vset.pattern.permute.xlu0 0
    %7265 = vperm.xlu0 %7264, %v7262
    %v7266 = vpop.permute.xlu0 %7265
    %v7268 = vadd.f32 %v7257, %v7266
    %v7269 = vadd.f32 %v7258, %v7266
    %v7270 = vadd.f32 %v7259, %v7266
    %v7271 = vadd.f32 %v7260, %v7266
    %v7272 = vmax.f32 %v7268, 0.0
    %v7273 = vmax.f32 %v7269, 0.0
    %v7274 = vmax.f32 %v7270, 0.0
    %v7275 = vmax.f32 %v7271, 0.0
    %v7280 = vcombine.low %v7272, %v7273
    %v7281 = vcombine.low %v7274, %v7275
    %7284 = vst [vmem:[#allocation2] sm:$0xff] %v7280
    %7285 = vst [vmem:[#allocation2 + $0x8] sm:$0xff] %v7281
  $region45: #{_fused_forward.1} parent=0 // pred_fallthru
    _
  %v7286 = vld [vmem:[#allocation2] sm:$0xff]
  %v7287 = vld [vmem:[#allocation2 + $0x8] sm:$0xff]
  %v7288 = vld [vmem:[%s3] sm:$0xff]
  %v7291 = vcombine.high %v7286, %v7286
  %v7292 = vcombine.high %v7287, %v7287
  %v7296 = vcombine.high %v7288, %v7288
  %v7298 = vunpack.c.l.s4 1983009808
  %v7299 = vunpack.c.0.s8 %v7298
  %v7300 = vlaneseq
  %v7301 = vshrl.u32 %v7300, 7
  %v7302 = vsub.s32 %v7299, %v7301
  %v7303 = vrot.slane %v7288, %v7302
  %v7305 = vunpack.c.l.s4 1983009808
  %v7306 = vunpack.c.0.s8 %v7305
  %v7307 = vlaneseq
  %v7308 = vshrl.u32 %v7307, 7
  %v7309 = vsub.s32 %v7306, %v7308
  %v7310 = vrot.slane %v7296, %v7309
  %v7311 = vcombine.high %v7303, %v7303
  %v7312 = vcombine.high %v7310, %v7310
  %7317 = vmatprep.subr.mxu0 %v7311
  %7318 = vmatpush1.xpose.msra.mxu0 %v7303
  %7319 = vmatprep.subr.mxu0 0.0
  %7320 = vmatpush1.xpose.msra.mxu0 0.0
  %7321 = vmatprep.subr.mxu0 0.0
  %7322 = vmatpush1.xpose.msra.mxu0 0.0
  %7323 = vmatprep.subr.mxu0 0.0
  %7324 = vmatpush1.xpose.msra.mxu0 0.0
  %7325 = vmatprep.subr.mxu0 0.0
  %7326 = vmatpush1.xpose.msra.mxu0 0.0
  %7327 = vmatprep.subr.mxu0 0.0
  %7328 = vmatpush1.xpose.msra.mxu0 0.0
  %7329 = vmatprep.subr.mxu0 0.0
  %7330 = vmatpush1.xpose.msra.mxu0 0.0
  %7331 = vmatprep.subr.mxu0 0.0
  %7332 = vmatpush1.xpose.msra.mxu0 0.0
  %7333 = vmatprep.subr.mxu0 0.0
  %7334 = vmatpush1.xpose.msra.mxu0 0.0
  %7335 = vmatprep.subr.mxu0 0.0
  %7336 = vmatpush1.xpose.msra.mxu0 0.0
  %7337 = vmatprep.subr.mxu0 0.0
  %7338 = vmatpush1.xpose.msra.mxu0 0.0
  %7339 = vmatprep.subr.mxu0 0.0
  %7340 = vmatpush1.xpose.msra.mxu0 0.0
  %7341 = vmatprep.subr.mxu0 0.0
  %7342 = vmatpush1.xpose.msra.mxu0 0.0
  %7343 = vmatprep.subr.mxu0 0.0
  %7344 = vmatpush1.xpose.msra.mxu0 0.0
  %7345 = vmatprep.subr.mxu0 0.0
  %7346 = vmatpush1.xpose.msra.mxu0 0.0
  %7347 = vmatprep.subr.mxu0 0.0
  %7348 = vmatpush1.xpose.msra.mxu0 0.0
  %7349 = vmatprep.subr.mxu0 0.0
  %7350 = vmatpush1.xpose.msra.mxu0 0.0
  %7351 = vmatprep.subr.mxu0 0.0
  %7352 = vmatpush1.xpose.msra.mxu0 0.0
  %7353 = vmatprep.subr.mxu0 0.0
  %7354 = vmatpush1.xpose.msra.mxu0 0.0
  %7355 = vmatprep.subr.mxu0 0.0
  %7356 = vmatpush1.xpose.msra.mxu0 0.0
  %7357 = vmatprep.subr.mxu0 0.0
  %7358 = vmatpush1.xpose.msra.mxu0 0.0
  %7359 = vmatprep.subr.mxu0 0.0
  %7360 = vmatpush1.xpose.msra.mxu0 0.0
  %7361 = vmatprep.subr.mxu0 0.0
  %7362 = vmatpush1.xpose.msra.mxu0 0.0
  %7363 = vmatprep.subr.mxu0 0.0
  %7364 = vmatpush1.xpose.msra.mxu0 0.0
  %7365 = vmatprep.subr.mxu0 0.0
  %7366 = vmatpush1.xpose.msra.mxu0 0.0
  %7367 = vmatprep.subr.mxu0 0.0
  %7368 = vmatpush1.xpose.msra.mxu0 0.0
  %7369 = vmatprep.subr.mxu0 0.0
  %7370 = vmatpush1.xpose.msra.mxu0 0.0
  %7371 = vmatprep.subr.mxu0 0.0
  %7372 = vmatpush1.xpose.msra.mxu0 0.0
  %7373 = vmatprep.subr.mxu0 0.0
  %7374 = vmatpush1.xpose.msra.mxu0 0.0
  %7375 = vmatprep.subr.mxu0 0.0
  %7376 = vmatpush1.xpose.msra.mxu0 0.0
  %7377 = vmatprep.subr.mxu0 0.0
  %7378 = vmatpush1.xpose.msra.mxu0 0.0
  %7379 = vmatprep.subr.mxu0 0.0
  %7380 = vmatpush1.xpose.msra.mxu0 0.0
  %7381 = vmatprep.mubr.f32.mxu0 %v7291
  %7382 = vmatmul.mubr.f32.gmra.mrb[0].mxu0 %v7286
  %v7383 = vpop.f32.mrb[0].mxu0
  %v7384 = vadd.f32 0.0, %v7383
  %v7385 = vpop.f32.mrb[0].mxu0
  %7386 = vdwg.mxu0
  %7387 = vmatprep.subr.mxu0 %v7312
  %7388 = vmatpush1.xpose.msra.mxu0 %v7310
  %7389 = vmatprep.subr.mxu0 0.0
  %7390 = vmatpush1.xpose.msra.mxu0 0.0
  %7391 = vmatprep.subr.mxu0 0.0
  %7392 = vmatpush1.xpose.msra.mxu0 0.0
  %7393 = vmatprep.subr.mxu0 0.0
  %7394 = vmatpush1.xpose.msra.mxu0 0.0
  %7395 = vmatprep.subr.mxu0 0.0
  %7396 = vmatpush1.xpose.msra.mxu0 0.0
  %7397 = vmatprep.subr.mxu0 0.0
  %7398 = vmatpush1.xpose.msra.mxu0 0.0
  %7399 = vmatprep.subr.mxu0 0.0
  %7400 = vmatpush1.xpose.msra.mxu0 0.0
  %7401 = vmatprep.subr.mxu0 0.0
  %7402 = vmatpush1.xpose.msra.mxu0 0.0
  %7403 = vmatprep.subr.mxu0 0.0
  %7404 = vmatpush1.xpose.msra.mxu0 0.0
  %7405 = vmatprep.subr.mxu0 0.0
  %7406 = vmatpush1.xpose.msra.mxu0 0.0
  %7407 = vmatprep.subr.mxu0 0.0
  %7408 = vmatpush1.xpose.msra.mxu0 0.0
  %7409 = vmatprep.subr.mxu0 0.0
  %7410 = vmatpush1.xpose.msra.mxu0 0.0
  %7411 = vmatprep.subr.mxu0 0.0
  %7412 = vmatpush1.xpose.msra.mxu0 0.0
  %7413 = vmatprep.subr.mxu0 0.0
  %7414 = vmatpush1.xpose.msra.mxu0 0.0
  %7415 = vmatprep.subr.mxu0 0.0
  %7416 = vmatpush1.xpose.msra.mxu0 0.0
  %7417 = vmatprep.subr.mxu0 0.0
  %7418 = vmatpush1.xpose.msra.mxu0 0.0
  %7419 = vmatprep.subr.mxu0 0.0
  %7420 = vmatpush1.xpose.msra.mxu0 0.0
  %7421 = vmatprep.subr.mxu0 0.0
  %7422 = vmatpush1.xpose.msra.mxu0 0.0
  %7423 = vmatprep.subr.mxu0 0.0
  %7424 = vmatpush1.xpose.msra.mxu0 0.0
  %7425 = vmatprep.subr.mxu0 0.0
  %7426 = vmatpush1.xpose.msra.mxu0 0.0
  %7427 = vmatprep.subr.mxu0 0.0
  %7428 = vmatpush1.xpose.msra.mxu0 0.0
  %7429 = vmatprep.subr.mxu0 0.0
  %7430 = vmatpush1.xpose.msra.mxu0 0.0
  %7431 = vmatprep.subr.mxu0 0.0
  %7432 = vmatpush1.xpose.msra.mxu0 0.0
  %7433 = vmatprep.subr.mxu0 0.0
  %7434 = vmatpush1.xpose.msra.mxu0 0.0
  %7435 = vmatprep.subr.mxu0 0.0
  %7436 = vmatpush1.xpose.msra.mxu0 0.0
  %7437 = vmatprep.subr.mxu0 0.0
  %7438 = vmatpush1.xpose.msra.mxu0 0.0
  %7439 = vmatprep.subr.mxu0 0.0
  %7440 = vmatpush1.xpose.msra.mxu0 0.0
  %7441 = vmatprep.subr.mxu0 0.0
  %7442 = vmatpush1.xpose.msra.mxu0 0.0
  %7443 = vmatprep.subr.mxu0 0.0
  %7444 = vmatpush1.xpose.msra.mxu0 0.0
  %7445 = vmatprep.subr.mxu0 0.0
  %7446 = vmatpush1.xpose.msra.mxu0 0.0
  %7447 = vmatprep.subr.mxu0 0.0
  %7448 = vmatpush1.xpose.msra.mxu0 0.0
  %7449 = vmatprep.subr.mxu0 0.0
  %7450 = vmatpush1.xpose.msra.mxu0 0.0
  %7451 = vmatprep.mubr.f32.mxu0 %v7292
  %7452 = vmatmul.mubr.f32.gmra.mrb[0].mxu0 %v7287
  %v7453 = vpop.f32.mrb[0].mxu0
  %v7454 = vadd.f32 %v7384, %v7453
  %v7455 = vpop.f32.mrb[0].mxu0
  %7456 = vdwg.mxu0
  %v7457 = vld [vmem:[%s59] sm:$0xff]
  %v7458 = vld [vmem:[%s59 + $0x8] sm:$0x3]
  %v7459 = vld [vmem:[%s66] sm:$0xff]
  %v7460 = vld [vmem:[%s66 + $0x8] sm:$0x3]
  %7462 = vset.pattern.permute.xlu0 0
  %7463 = vperm.xlu0 %7462, %v7459
  %v7464 = vpop.permute.xlu0 %7463
  %7467 = vset.pattern.permute.xlu0 0
  %7468 = vperm.xlu0 %7467, %v7460
  %v7469 = vpop.permute.xlu0 %7468
  %vm7471 = vcmask 31744
  %v7473 = vsel %vm7471, %v7457, 0
  %v7476 = vsel %vm7471, %v7458, 0
  %vm7478 = vcmask 1043456
  %v7480 = vsel %vm7478, %v7454, 0
  %7482 = vmatprep.subr.mxu0 0.0
  %7483 = vmatpush1.msra.mxu0 %v7480
  %7484 = vmatprep.subr.mxu0 0.0
  %7485 = vmatpush1.msra.mxu0 0.0
  %7486 = vmatprep.subr.mxu0 0.0
  %7487 = vmatpush1.msra.mxu0 0.0
  %7488 = vmatprep.subr.mxu0 0.0
  %7489 = vmatpush1.msra.mxu0 0.0
  %7490 = vmatprep.subr.mxu0 0.0
  %7491 = vmatpush1.msra.mxu0 0.0
  %7492 = vmatprep.subr.mxu0 0.0
  %7493 = vmatpush1.msra.mxu0 0.0
  %7494 = vmatprep.subr.mxu0 0.0
  %7495 = vmatpush1.msra.mxu0 0.0
  %7496 = vmatprep.subr.mxu0 0.0
  %7497 = vmatpush1.msra.mxu0 0.0
  %7498 = vmatprep.subr.mxu0 0.0
  %7499 = vmatpush1.msra.mxu0 0.0
  %7500 = vmatprep.subr.mxu0 0.0
  %7501 = vmatpush1.msra.mxu0 0.0
  %7502 = vmatprep.subr.mxu0 0.0
  %7503 = vmatpush1.msra.mxu0 0.0
  %7504 = vmatprep.subr.mxu0 0.0
  %7505 = vmatpush1.msra.mxu0 0.0
  %7506 = vmatprep.subr.mxu0 0.0
  %7507 = vmatpush1.msra.mxu0 0.0
  %7508 = vmatprep.subr.mxu0 0.0
  %7509 = vmatpush1.msra.mxu0 0.0
  %7510 = vmatprep.subr.mxu0 0.0
  %7511 = vmatpush1.msra.mxu0 0.0
  %7512 = vmatprep.subr.mxu0 0.0
  %7513 = vmatpush1.msra.mxu0 0.0
  %7514 = vmatprep.subr.mxu0 0.0
  %7515 = vmatpush1.msra.mxu0 0.0
  %7516 = vmatprep.subr.mxu0 0.0
  %7517 = vmatpush1.msra.mxu0 0.0
  %7518 = vmatprep.subr.mxu0 0.0
  %7519 = vmatpush1.msra.mxu0 0.0
  %7520 = vmatprep.subr.mxu0 0.0
  %7521 = vmatpush1.msra.mxu0 0.0
  %7522 = vmatprep.subr.mxu0 0.0
  %7523 = vmatpush1.msra.mxu0 0.0
  %7524 = vmatprep.subr.mxu0 0.0
  %7525 = vmatpush1.msra.mxu0 0.0
  %7526 = vmatprep.subr.mxu0 0.0
  %7527 = vmatpush1.msra.mxu0 0.0
  %7528 = vmatprep.subr.mxu0 0.0
  %7529 = vmatpush1.msra.mxu0 0.0
  %7530 = vmatprep.subr.mxu0 0.0
  %7531 = vmatpush1.msra.mxu0 0.0
  %7532 = vmatprep.subr.mxu0 0.0
  %7533 = vmatpush1.msra.mxu0 0.0
  %7534 = vmatprep.subr.mxu0 0.0
  %7535 = vmatpush1.msra.mxu0 0.0
  %7536 = vmatprep.subr.mxu0 0.0
  %7537 = vmatpush1.msra.mxu0 0.0
  %7538 = vmatprep.subr.mxu0 0.0
  %7539 = vmatpush1.msra.mxu0 0.0
  %7540 = vmatprep.subr.mxu0 0.0
  %7541 = vmatpush1.msra.mxu0 0.0
  %7542 = vmatprep.subr.mxu0 0.0
  %7543 = vmatpush1.msra.mxu0 0.0
  %7544 = vmatprep.subr.mxu0 0.0
  %7545 = vmatpush1.msra.mxu0 0.0
  %7546 = vmatprep.mubr.f32.mxu0 0.0
  %7547 = vmatmul.mubr.f32.gmra.mrb[0].mxu0 %v7473
  %v7548 = vpop.f32.mrb[0].mxu0
  %v7549 = vadd.f32 %v7464, %v7548
  %v7550 = vpop.f32.mrb[0].mxu0
  %7551 = vmatprep.mubr.f32.mxu0 0.0
  %7552 = vmatmul.mubr.f32.gmra.mrb[0].mxu0 %v7476
  %v7553 = vpop.f32.mrb[0].mxu0
  %v7554 = vadd.f32 %v7469, %v7553
  %v7555 = vpop.f32.mrb[0].mxu0
  %7556 = vdwg.mxu0
  %vm7557 = vcmask 15360
  %7558 = vst.msk [vmem:[%s8] sm:$0xff] %vm7557, %v7549
  %vm7559 = vcmask 9216
  %7560 = vst.msk [vmem:[%s8 + $0x8] sm:$0x3] %vm7559, %v7554
  // Predicated region
  $region46: #{_fused_forward.1} parent=0 // pred_check
    _
  $region47: #{_fused_forward.1} parent=0 // pred_check_branch
    %7562 = sbr.rel (0) target = $region49
  $region48: #{_fused_forward.1} parent=0 // pred_region
    _
  $region49: #{_fused_forward.1} parent=0 // pred_fallthru
    _
  // Predicated region
  $region50: #{_fused_forward.1} parent=0 // pred_check
    _
  $region51: #{_fused_forward.1} parent=0 // pred_check_branch
    %7564 = sbr.rel (0) target = $region53
  $region52: #{_fused_forward.1} parent=0 // pred_region
    _
  $region53: #{_fused_forward.1} parent=0 // pred_fallthru
    _

</llo_original>
